<compile_context>
chip_gen: v6e
topology: v6e:2x2x1
jax: 0.10.0
libtpu: 0.0.40
codegen_flags: <defaults>
</compile_context>

<pallas_src>
from functools import partial

import numpy as np
import jax
import jax.numpy as jnp
from jax.experimental import pallas as pl
from jax.experimental.pallas import tpu as pltpu

BN_EPS = 1e-5

_VMEM_LIMIT = None


def vmem_limit_bytes():
    """Per-generation VMEM cap: ~48 MiB on v7x (64 MiB phys), ~100 MiB on v5e/v6e."""
    global _VMEM_LIMIT
    if _VMEM_LIMIT is None:
        try:
            cap = pltpu.get_tpu_info().vmem_capacity_bytes
        except Exception:
            cap = 64 * 1024 * 1024
        _VMEM_LIMIT = int(max(32 * 1024 * 1024,
                              min(cap - 16 * 1024 * 1024, 100 * 1024 * 1024)))
    return _VMEM_LIMIT


def _mosaic_params(n_parallel_axes):
    return pltpu.CompilerParams(
        dimension_semantics=("parallel",) * n_parallel_axes,
        vmem_limit_bytes=vmem_limit_bytes())


# ---------------------------------------------------------------------------
# Pallas kernels
# ---------------------------------------------------------------------------

def _conv_kernel(x_ref, w_ref, scale_ref, shift_ref, *rest,
                 taps, m, relu, add_res):
    """One grid step = one image.

    All kh*kw taps are an unrolled in-kernel loop of (M, Cin)@(Cin, Cout) MXU
    matmuls accumulated in f32 registers; the folded-BN affine, optional
    residual add and ReLU are fused into the epilogue (bf16 store).
    `taps` is a static tuple of (slab index, row offset).
    """
    if add_res:
        res_ref, o_ref = rest
    else:
        (o_ref,) = rest

    acc = None
    for t, (sid, roff) in enumerate(taps):
        xs = x_ref[0, sid, pl.ds(roff, m), :]                     # (M, Cin) bf16
        part = jnp.dot(xs, w_ref[t], preferred_element_type=jnp.float32)
        acc = part if acc is None else acc + part

    y = acc * scale_ref[...] + shift_ref[...]                     # folded BN (f32)
    if add_res:
        y = y + res_ref[0].astype(jnp.float32)
    if relu:
        y = jnp.maximum(y, 0.0)
    o_ref[0] = y.astype(o_ref.dtype)                              # bf16 out


def _root_kernel(*refs, n_children, relu, add_res):
    """Root 1x1 conv: K-split over the children (no channel concat).

    refs = x_0..x_{k-1}, w_0..w_{k-1}, scale, shift, [residual], out.
    """
    xs = refs[:n_children]
    ws = refs[n_children:2 * n_children]
    scale_ref = refs[2 * n_children]
    shift_ref = refs[2 * n_children + 1]
    rest = refs[2 * n_children + 2:]
    if add_res:
        res_ref, o_ref = rest
    else:
        (o_ref,) = rest

    acc = None
    for i in range(n_children):
        part = jnp.dot(xs[i][0], ws[i][...], preferred_element_type=jnp.float32)
        acc = part if acc is None else acc + part

    y = acc * scale_ref[...] + shift_ref[...]
    if add_res:
        y = y + res_ref[0].astype(jnp.float32)
    if relu:
        y = jnp.maximum(y, 0.0)
    o_ref[0] = y.astype(o_ref.dtype)


def _maxpool_kernel(x_ref, o_ref, *, s, c):
    """Elementwise max over the s*s stride phases, extracted in-kernel from a
    (1, Ho, s, Wo, s*C) relabel-reshaped block (no host-side phase stack)."""
    out = None
    for q in range(s):                          # vertical phase
        rows = x_ref[0, :, q, :, :]             # (Ho, Wo, s*C)
        for p_ in range(s):                     # horizontal phase
            v = rows[:, :, p_ * c:(p_ + 1) * c]
            out = v if out is None else jnp.maximum(out, v)
    o_ref[0] = out


# ---------------------------------------------------------------------------
# Conv2d + BN (+ residual) (+ ReLU) wrapper
# ---------------------------------------------------------------------------

def conv_bn(x, p, *, stride=1, padding=0, dilation=1, relu=True, residual=None):
    """Conv2d(bias=False) + folded eval-mode BatchNorm (+residual)(+ReLU), NHWC,
    as ONE Pallas kernel: a sum of per-tap (M, Cin)@(Cin, Cout) matmuls."""
    w, scale, shift = p["w"], p["scale"], p["shift"]
    kh, kw, cin, cout = w.shape
    N, H, W, C = x.shape
    assert C == cin
    s, d = stride, dilation

    Ho = (H + 2 * padding - d * (kh - 1) - 1) // s + 1
    Wo = (W + 2 * padding - d * (kw - 1) - 1) // s + 1
    M = Ho * Wo
    PH = (d * (kh - 1)) // s + Ho                  # rows per decimated slab

    # spatial padding so every (horizontal-tap, vertical-phase) slab is a
    # clean strided view of exactly (PH, Wo) positions
    Hp = (s - 1) + s * (PH - 1) + 1
    Wp = d * (kw - 1) + s * (Wo - 1) + 1
    pad_b = max(0, Hp - H - padding)
    pad_r = max(0, Wp - W - padding)
    xb = x.astype(jnp.bfloat16)                    # bf16 activations on the MXU
    xp = jnp.pad(xb, ((0, 0), (padding, pad_b), (padding, pad_r), (0, 0)))

    # decimated slab views + STATIC tap table (slab index, row offset)
    slab_views, taps, w_list = [], [], []
    for j in range(kw):                            # horizontal tap
        for a in range(s):                         # vertical stride phase
            tap_is = [i for i in range(kh) if (d * i) % s == a]
            if not tap_is:
                continue
            sl = xp[:, a::s, d * j::s, :][:, :PH, :Wo, :]
            slab_views.append(sl.reshape(N, PH * Wo, cin))
            sid = len(slab_views) - 1
            for i in tap_is:
                taps.append((sid, ((d * i) // s) * Wo))
                w_list.append(w[i, j])
    n_slab = len(slab_views)
    n_taps = len(taps)
    x_slabs = jnp.stack(slab_views, axis=1)                    # (N, n_slab, PH*Wo, Cin)
    w_taps = jnp.stack(w_list, axis=0).astype(jnp.bfloat16)    # (taps, Cin, Cout)

    scale2 = scale.reshape(1, cout).astype(jnp.float32)
    shift2 = shift.reshape(1, cout).astype(jnp.float32)

    add_res = residual is not None
    in_specs = [
        pl.BlockSpec((1, n_slab, PH * Wo, cin), lambda n: (n, 0, 0, 0)),
        pl.BlockSpec((n_taps, cin, cout), lambda n: (0, 0, 0)),
        pl.BlockSpec((1, cout), lambda n: (0, 0)),
        pl.BlockSpec((1, cout), lambda n: (0, 0)),
    ]
    inputs = [x_slabs, w_taps, scale2, shift2]
    if add_res:
        in_specs.append(pl.BlockSpec((1, M, cout), lambda n: (n, 0, 0)))
        inputs.append(residual.reshape(N, M, cout).astype(jnp.bfloat16))

    out = pl.pallas_call(
        partial(_conv_kernel, taps=tuple(taps), m=M, relu=relu, add_res=add_res),
        grid=(N,),
        in_specs=in_specs,
        out_specs=pl.BlockSpec((1, M, cout), lambda n: (n, 0, 0)),
        out_shape=jax.ShapeDtypeStruct((N, M, cout), jnp.bfloat16),
        compiler_params=_mosaic_params(1),
    )(*inputs)
    return out.reshape(N, Ho, Wo, cout)


def root_conv_bn(children, p, *, residual=None, relu=True):
    """Root 1x1 conv + BN (+residual)(+ReLU): channel concat replaced by a
    K-split reduction over children, accumulated in-kernel."""
    w, scale, shift = p["w"], p["scale"], p["shift"]      # w: (1, 1, sum(Cc), Cout)
    cout = w.shape[-1]
    N, Ho, Wo, _ = children[0].shape
    M = Ho * Wo

    xs, ws, off = [], [], 0
    for ch in children:
        cc = ch.shape[-1]
        xs.append(ch.reshape(N, M, cc).astype(jnp.bfloat16))
        ws.append(w[0, 0, off:off + cc, :].astype(jnp.bfloat16))
        off += cc
    assert off == w.shape[2]

    add_res = residual is not None
    in_specs = ([pl.BlockSpec((1, M, xi.shape[-1]), lambda n: (n, 0, 0)) for xi in xs]
                + [pl.BlockSpec(wi.shape, lambda n: (0, 0)) for wi in ws]
                + [pl.BlockSpec((1, cout), lambda n: (0, 0)),
                   pl.BlockSpec((1, cout), lambda n: (0, 0))])
    inputs = xs + ws + [scale.reshape(1, cout).astype(jnp.float32),
                        shift.reshape(1, cout).astype(jnp.float32)]
    if add_res:
        in_specs.append(pl.BlockSpec((1, M, cout), lambda n: (n, 0, 0)))
        inputs.append(residual.reshape(N, M, cout).astype(jnp.bfloat16))

    out = pl.pallas_call(
        partial(_root_kernel, n_children=len(xs), relu=relu, add_res=add_res),
        grid=(N,),
        in_specs=in_specs,
        out_specs=pl.BlockSpec((1, M, cout), lambda n: (n, 0, 0)),
        out_shape=jax.ShapeDtypeStruct((N, M, cout), jnp.bfloat16),
        compiler_params=_mosaic_params(1),
    )(*inputs)
    return out.reshape(N, Ho, Wo, cout)


def max_pool2d(x, s):
    """nn.MaxPool2d(s, stride=s), NHWC, phases reduced in-kernel."""
    if s == 1:
        return x
    N, H, W, C = x.shape
    Ho, Wo = H // s, W // s
    xv = x[:, :s * Ho, :s * Wo, :]
    # pure relabel (no data movement): (N, s*Ho, s*Wo, C) -> (N, Ho, s, Wo, s*C)
    x5 = xv.reshape(N, Ho, s, Wo, s * C)
    out = pl.pallas_call(
        partial(_maxpool_kernel, s=s, c=C),
        grid=(N,),
        in_specs=[pl.BlockSpec((1, Ho, s, Wo, s * C), lambda n: (n, 0, 0, 0, 0))],
        out_specs=pl.BlockSpec((1, Ho, Wo, C), lambda n: (n, 0, 0, 0)),
        out_shape=jax.ShapeDtypeStruct((N, Ho, Wo, C), x.dtype),
        compiler_params=_mosaic_params(1),
    )(x5)
    return out


# ---------------------------------------------------------------------------
# Module pieces (mirror the PyTorch Tree / Root forward)
# ---------------------------------------------------------------------------

# TODO(synk): `block` is a constructor argument not present in the provided
# source; synthesized here as the DLA BasicBlock (conv3x3/BN/ReLU ->
# conv3x3/BN, + residual, ReLU), which is what dla34 passes to Tree.
def basic_block_forward(p, x, residual=None, *, stride=1, dilation=1):
    if residual is None:
        residual = x
    out = conv_bn(x, p["conv1"], stride=stride, padding=dilation,
                  dilation=dilation, relu=True)
    out = conv_bn(out, p["conv2"], stride=1, padding=dilation,
                  dilation=dilation, relu=True, residual=residual)   # fused +res, ReLU
    return out


def root_forward(p, xs):
    # TODO(synk): root_kernel_size > 1 (extra padding before the 1x1 conv) is
    # not supported; dla34 always uses root_kernel_size=1.
    res = xs[0] if p["residual"] else None
    return root_conv_bn(xs, p["conv"], residual=res, relu=True)


def tree_forward(p, x, children=None):
    children = [] if children is None else children
    bottom = max_pool2d(x, p["stride"]) if p["stride"] > 1 else x
    if p["level_root"]:
        children.append(bottom)
    if p["levels"] == 1:
        residual = (conv_bn(bottom, p["project"], stride=1, padding=0, relu=False)
                    if p["project"] is not None else bottom)
        x1 = basic_block_forward(p["tree1"], x, residual,
                                 stride=p["stride"], dilation=p["dilation"])
        x2 = basic_block_forward(p["tree2"], x1, None,
                                 stride=1, dilation=p["dilation"])
        out = root_forward(p["root"], [x2, x1] + children)
    else:
        # For levels > 1 the projected residual computed by the PyTorch code is
        # overwritten inside the sub-tree (dead compute); skip it -- identical
        # output, one fewer kernel.
        x1 = tree_forward(p["tree1"], x)
        children.append(x1)
        out = tree_forward(p["tree2"], x1, children=children)
    return out


def tree_module_forward(params, x_nchw):
    x = jnp.transpose(x_nchw, (0, 2, 3, 1)).astype(jnp.bfloat16)   # NCHW -> NHWC
    y = tree_forward(params, x)
    return jnp.transpose(y, (0, 3, 1, 2)).astype(jnp.float32)      # NHWC -> NCHW


# ---------------------------------------------------------------------------
# Deterministic parameter construction (eval-mode BN folded to scale/shift)
# ---------------------------------------------------------------------------

def make_conv_bn_params(key, kh, kw, cin, cout):
    k = jax.random.split(key, 5)
    w = jax.random.normal(k[0], (kh, kw, cin, cout), jnp.float32) / np.sqrt(kh * kw * cin)
    gamma = 1.0 + 0.1 * jax.random.normal(k[1], (cout,), jnp.float32)
    beta = 0.1 * jax.random.normal(k[2], (cout,), jnp.float32)
    mean = 0.1 * jax.random.normal(k[3], (cout,), jnp.float32)
    var = 1.0 + 0.1 * jnp.abs(jax.random.normal(k[4], (cout,), jnp.float32))
    scale = gamma / jnp.sqrt(var + BN_EPS)
    shift = beta - mean * scale
    return {"w": w, "scale": scale, "shift": shift}


def make_block_params(key, cin, cout):
    k1, k2 = jax.random.split(key)
    return {"conv1": make_conv_bn_params(k1, 3, 3, cin, cout),
            "conv2": make_conv_bn_params(k2, 3, 3, cout, cout)}


def make_tree_params(key, levels, in_ch, out_ch, stride=1, level_root=False,
                     root_dim=0, root_kernel_size=1, dilation=1,
                     root_residual=False):
    if root_dim == 0:
        root_dim = 2 * out_ch
    if level_root:
        root_dim += in_ch
    k = jax.random.split(key, 4)
    p = {"levels": levels, "stride": stride, "level_root": level_root,
         "dilation": dilation}
    if levels == 1:
        p["tree1"] = make_block_params(k[0], in_ch, out_ch)
        p["tree2"] = make_block_params(k[1], out_ch, out_ch)
        p["root"] = {"conv": make_conv_bn_params(k[2], 1, 1, root_dim, out_ch),
                     "kernel_size": root_kernel_size,
                     "residual": root_residual}
    else:
        p["tree1"] = make_tree_params(k[0], levels - 1, in_ch, out_ch, stride,
                                      root_dim=0,
                                      root_kernel_size=root_kernel_size,
                                      dilation=dilation,
                                      root_residual=root_residual)
        p["tree2"] = make_tree_params(k[1], levels - 1, out_ch, out_ch,
                                      root_dim=root_dim + out_ch,
                                      root_kernel_size=root_kernel_size,
                                      dilation=dilation,
                                      root_residual=root_residual)
    p["project"] = (make_conv_bn_params(k[3], 1, 1, in_ch, out_ch)
                    if in_ch != out_ch else None)
    return p


# ---------------------------------------------------------------------------

if __name__ == "__main__":
    key = jax.random.PRNGKey(0)
    pkey, xkey = jax.random.split(key)

    # DLA-34 style stage: Tree(2, BasicBlock, 64, 128, 2, level_root=True)
    params = make_tree_params(pkey, levels=2, in_ch=64, out_ch=128,
                              stride=2, level_root=True)

    # input, NCHW like PyTorch: batch=2, 64 channels, 16x16 spatial
    x = jax.random.normal(xkey, (2, 64, 16, 16), jnp.float32)

    fwd = jax.jit(lambda inp: tree_module_forward(params, inp))
    y = fwd(x)
    jax.block_until_ready(y)

    assert y.shape == (2, 128, 8, 8), y.shape
    assert bool(jnp.all(jnp.isfinite(y)))
    print("KERNEL_OK")
</pallas_src>

<mosaic_0001>
module attributes {stable_mosaic.version = 11 : i64} {
  func.func @_conv_kernel(%arg0: i32, %arg1: memref<1x1x64x64xbf16, #tpu.memory_space<vmem>>, %arg2: memref<1x64x128xbf16, #tpu.memory_space<vmem>>, %arg3: memref<1x128xf32, #tpu.memory_space<vmem>>, %arg4: memref<1x128xf32, #tpu.memory_space<vmem>>, %arg5: memref<1x64x128xbf16, #tpu.memory_space<vmem>>) attributes {dimension_semantics = [#tpu.dimension_semantics<parallel>], iteration_bounds = array<i64: 2>, scalar_prefetch = 0 : i64, scratch_operands = 0 : i64, tpu.core_type = #tpu.core_type<tc>, window_params = [{transform_indices = @transform_0, window_bounds = array<i64: 1, 1, 64, 64>}, {pipeline_mode = #tpu.pipeline_mode<synchronous>, transform_indices = @transform_1, window_bounds = array<i64: 1, 64, 128>}, {pipeline_mode = #tpu.pipeline_mode<synchronous>, transform_indices = @transform_2, window_bounds = array<i64: 1, 128>}, {pipeline_mode = #tpu.pipeline_mode<synchronous>, transform_indices = @transform_3, window_bounds = array<i64: 1, 128>}, {transform_indices = @transform_4, window_bounds = array<i64: 1, 64, 128>}]} {
    %c0 = arith.constant 0 : index
    %c0_0 = arith.constant 0 : index
    %c0_1 = arith.constant 0 : index
    %c0_2 = arith.constant 0 : index
    %0 = vector.load %arg1[%c0, %c0_0, %c0_1, %c0_2] : memref<1x1x64x64xbf16, #tpu.memory_space<vmem>>, vector<1x1x64x64xbf16>
    %1 = vector.shape_cast %0 : vector<1x1x64x64xbf16> to vector<64x64xbf16>
    %c0_3 = arith.constant 0 : index
    %c0_4 = arith.constant 0 : index
    %c0_5 = arith.constant 0 : index
    %2 = vector.load %arg2[%c0_3, %c0_4, %c0_5] : memref<1x64x128xbf16, #tpu.memory_space<vmem>>, vector<1x64x128xbf16>
    %3 = vector.shape_cast %2 : vector<1x64x128xbf16> to vector<64x128xbf16>
    %cst = arith.constant dense<0.000000e+00> : vector<64x128xf32>
    %4 = tpu.matmul %1, %3, %cst {dimension_numbers = #tpu.dot_dimension_numbers<[1], [0], [0], [1], [0, 0, 1, 1], [], []>} : vector<64x64xbf16>, vector<64x128xbf16>, vector<64x128xf32> -> vector<64x128xf32>
    %c0_6 = arith.constant 0 : index
    %c0_7 = arith.constant 0 : index
    %5 = vector.load %arg3[%c0_6, %c0_7] : memref<1x128xf32, #tpu.memory_space<vmem>>, vector<1x128xf32>
    %6 = vector.broadcast %5 : vector<1x128xf32> to vector<64x128xf32>
    %7 = arith.mulf %4, %6 : vector<64x128xf32>
    %c0_8 = arith.constant 0 : index
    %c0_9 = arith.constant 0 : index
    %8 = vector.load %arg4[%c0_8, %c0_9] : memref<1x128xf32, #tpu.memory_space<vmem>>, vector<1x128xf32>
    %9 = vector.broadcast %8 : vector<1x128xf32> to vector<64x128xf32>
    %10 = arith.addf %7, %9 : vector<64x128xf32>
    %11 = arith.truncf %10 : vector<64x128xf32> to vector<64x128xbf16>
    %c0_10 = arith.constant 0 : index
    %c0_11 = arith.constant 0 : index
    %c0_12 = arith.constant 0 : index
    %12 = vector.load %arg5[%c0_10, %c0_11, %c0_12] : memref<1x64x128xbf16, #tpu.memory_space<vmem>>, vector<1x64x128xbf16>
    %13 = vector.shape_cast %12 : vector<1x64x128xbf16> to vector<64x128xbf16>
    %14 = vector.shape_cast %11 : vector<64x128xbf16> to vector<1x64x128xbf16>
    tpu.vector_store %arg5[%c0_10, %c0_11, %c0_12], %14 {strides = array<i32>} : memref<1x64x128xbf16, #tpu.memory_space<vmem>>, vector<1x64x128xbf16>,
    return
  }
  func.func @transform_0(%arg0: i32) -> (i32, i32, i32, i32) {
    %c0_i32 = arith.constant 0 : i32
    %c0_i32_0 = arith.constant 0 : i32
    %c0_i32_1 = arith.constant 0 : i32
    %c0_i32_2 = arith.constant 0 : i32
    return %arg0, %c0_i32, %c0_i32_0, %c0_i32_1 : i32, i32, i32, i32
  }
  func.func @transform_1(%arg0: i32) -> (i32, i32, i32) {
    %c0_i32 = arith.constant 0 : i32
    %c0_i32_0 = arith.constant 0 : i32
    %c0_i32_1 = arith.constant 0 : i32
    %c0_i32_2 = arith.constant 0 : i32
    return %c0_i32, %c0_i32_0, %c0_i32_1 : i32, i32, i32
  }
  func.func @transform_2(%arg0: i32) -> (i32, i32) {
    %c0_i32 = arith.constant 0 : i32
    %c0_i32_0 = arith.constant 0 : i32
    %c0_i32_1 = arith.constant 0 : i32
    return %c0_i32, %c0_i32_0 : i32, i32
  }
  func.func @transform_3(%arg0: i32) -> (i32, i32) {
    %c0_i32 = arith.constant 0 : i32
    %c0_i32_0 = arith.constant 0 : i32
    %c0_i32_1 = arith.constant 0 : i32
    return %c0_i32, %c0_i32_0 : i32, i32
  }
  func.func @transform_4(%arg0: i32) -> (i32, i32, i32) {
    %c0_i32 = arith.constant 0 : i32
    %c0_i32_0 = arith.constant 0 : i32
    %c0_i32_1 = arith.constant 0 : i32
    return %arg0, %c0_i32, %c0_i32_0 : i32, i32, i32
  }
}

module attributes {stable_mosaic.version = 11 : i64} {
  func.func @_maxpool_kernel(%arg0: i32, %arg1: memref<1x8x2x8x128xbf16, #tpu.memory_space<vmem>>, %arg2: memref<1x8x8x64xbf16, #tpu.memory_space<vmem>>) attributes {dimension_semantics = [#tpu.dimension_semantics<parallel>], iteration_bounds = array<i64: 2>, scalar_prefetch = 0 : i64, scratch_operands = 0 : i64, tpu.core_type = #tpu.core_type<tc>, window_params = [{transform_indices = @transform_0, window_bounds = array<i64: 1, 8, 2, 8, 128>}, {transform_indices = @transform_1, window_bounds = array<i64: 1, 8, 8, 64>}]} {
    %c0 = arith.constant 0 : index
    %c0_0 = arith.constant 0 : index
    %c0_1 = arith.constant 0 : index
    %c0_2 = arith.constant 0 : index
    %c0_3 = arith.constant 0 : index
    %0 = vector.load %arg1[%c0, %c0_0, %c0_1, %c0_2, %c0_3] : memref<1x8x2x8x128xbf16, #tpu.memory_space<vmem>>, vector<1x8x1x8x128xbf16>
    %1 = vector.shape_cast %0 : vector<1x8x1x8x128xbf16> to vector<8x8x128xbf16>
    %2 = vector.extract_strided_slice %1 {offsets = [0, 0, 0], sizes = [8, 8, 64], strides = [1, 1, 1]} : vector<8x8x128xbf16> to vector<8x8x64xbf16>
    %3 = vector.extract_strided_slice %1 {offsets = [0, 0, 64], sizes = [8, 8, 64], strides = [1, 1, 1]} : vector<8x8x128xbf16> to vector<8x8x64xbf16>
    %4 = arith.maximumf %2, %3 : vector<8x8x64xbf16>
    %c0_4 = arith.constant 0 : index
    %c0_5 = arith.constant 0 : index
    %c1 = arith.constant 1 : index
    %c0_6 = arith.constant 0 : index
    %c0_7 = arith.constant 0 : index
    %5 = vector.load %arg1[%c0_4, %c0_5, %c1, %c0_6, %c0_7] : memref<1x8x2x8x128xbf16, #tpu.memory_space<vmem>>, vector<1x8x1x8x128xbf16>
    %6 = vector.shape_cast %5 : vector<1x8x1x8x128xbf16> to vector<8x8x128xbf16>
    %7 = vector.extract_strided_slice %6 {offsets = [0, 0, 0], sizes = [8, 8, 64], strides = [1, 1, 1]} : vector<8x8x128xbf16> to vector<8x8x64xbf16>
    %8 = arith.maximumf %4, %7 : vector<8x8x64xbf16>
    %9 = vector.extract_strided_slice %6 {offsets = [0, 0, 64], sizes = [8, 8, 64], strides = [1, 1, 1]} : vector<8x8x128xbf16> to vector<8x8x64xbf16>
    %10 = arith.maximumf %8, %9 : vector<8x8x64xbf16>
    %c0_8 = arith.constant 0 : index
    %c0_9 = arith.constant 0 : index
    %c0_10 = arith.constant 0 : index
    %c0_11 = arith.constant 0 : index
    %11 = vector.load %arg2[%c0_8, %c0_9, %c0_10, %c0_11] : memref<1x8x8x64xbf16, #tpu.memory_space<vmem>>, vector<1x8x8x64xbf16>
    %12 = vector.shape_cast %11 : vector<1x8x8x64xbf16> to vector<8x8x64xbf16>
    %13 = vector.shape_cast %10 : vector<8x8x64xbf16> to vector<1x8x8x64xbf16>
    tpu.vector_store %arg2[%c0_8, %c0_9, %c0_10, %c0_11], %13 {strides = array<i32>} : memref<1x8x8x64xbf16, #tpu.memory_space<vmem>>, vector<1x8x8x64xbf16>,
    return
  }
  func.func @transform_0(%arg0: i32) -> (i32, i32, i32, i32, i32) {
    %c0_i32 = arith.constant 0 : i32
    %c0_i32_0 = arith.constant 0 : i32
    %c0_i32_1 = arith.constant 0 : i32
    %c0_i32_2 = arith.constant 0 : i32
    %c0_i32_3 = arith.constant 0 : i32
    return %arg0, %c0_i32, %c0_i32_0, %c0_i32_1, %c0_i32_2 : i32, i32, i32, i32, i32
  }
  func.func @transform_1(%arg0: i32) -> (i32, i32, i32, i32) {
    %c0_i32 = arith.constant 0 : i32
    %c0_i32_0 = arith.constant 0 : i32
    %c0_i32_1 = arith.constant 0 : i32
    %c0_i32_2 = arith.constant 0 : i32
    return %arg0, %c0_i32, %c0_i32_0, %c0_i32_1 : i32, i32, i32, i32
  }
}

module attributes {stable_mosaic.version = 11 : i64} {
  func.func @_conv_kernel(%arg0: i32, %arg1: memref<1x6x72x64xbf16, #tpu.memory_space<vmem>>, %arg2: memref<9x64x128xbf16, #tpu.memory_space<vmem>>, %arg3: memref<1x128xf32, #tpu.memory_space<vmem>>, %arg4: memref<1x128xf32, #tpu.memory_space<vmem>>, %arg5: memref<1x64x128xbf16, #tpu.memory_space<vmem>>) attributes {dimension_semantics = [#tpu.dimension_semantics<parallel>], iteration_bounds = array<i64: 2>, scalar_prefetch = 0 : i64, scratch_operands = 0 : i64, tpu.core_type = #tpu.core_type<tc>, window_params = [{transform_indices = @transform_0, window_bounds = array<i64: 1, 6, 72, 64>}, {pipeline_mode = #tpu.pipeline_mode<synchronous>, transform_indices = @transform_1, window_bounds = array<i64: 9, 64, 128>}, {pipeline_mode = #tpu.pipeline_mode<synchronous>, transform_indices = @transform_2, window_bounds = array<i64: 1, 128>}, {pipeline_mode = #tpu.pipeline_mode<synchronous>, transform_indices = @transform_3, window_bounds = array<i64: 1, 128>}, {transform_indices = @transform_4, window_bounds = array<i64: 1, 64, 128>}]} {
    %c0 = arith.constant 0 : index
    %c0_0 = arith.constant 0 : index
    %c0_1 = arith.constant 0 : index
    %c0_2 = arith.constant 0 : index
    %0 = vector.load %arg1[%c0, %c0_0, %c0_1, %c0_2] : memref<1x6x72x64xbf16, #tpu.memory_space<vmem>>, vector<1x1x64x64xbf16>
    %1 = vector.shape_cast %0 : vector<1x1x64x64xbf16> to vector<64x64xbf16>
    %c0_3 = arith.constant 0 : index
    %c0_4 = arith.constant 0 : index
    %c0_5 = arith.constant 0 : index
    %2 = vector.load %arg2[%c0_3, %c0_4, %c0_5] : memref<9x64x128xbf16, #tpu.memory_space<vmem>>, vector<1x64x128xbf16>
    %3 = vector.shape_cast %2 : vector<1x64x128xbf16> to vector<64x128xbf16>
    %cst = arith.constant dense<0.000000e+00> : vector<64x128xf32>
    %4 = tpu.matmul %1, %3, %cst {dimension_numbers = #tpu.dot_dimension_numbers<[1], [0], [0], [1], [0, 0, 1, 1], [], []>} : vector<64x64xbf16>, vector<64x128xbf16>, vector<64x128xf32> -> vector<64x128xf32>
    %c0_6 = arith.constant 0 : index
    %c0_7 = arith.constant 0 : index
    %c8 = arith.constant 8 : index
    %c0_8 = arith.constant 0 : index
    %5 = vector.load %arg1[%c0_6, %c0_7, %c8, %c0_8] : memref<1x6x72x64xbf16, #tpu.memory_space<vmem>>, vector<1x1x64x64xbf16>
    %6 = vector.shape_cast %5 : vector<1x1x64x64xbf16> to vector<64x64xbf16>
    %c1 = arith.constant 1 : index
    %c0_9 = arith.constant 0 : index
    %c0_10 = arith.constant 0 : index
    %7 = vector.load %arg2[%c1, %c0_9, %c0_10] : memref<9x64x128xbf16, #tpu.memory_space<vmem>>, vector<1x64x128xbf16>
    %8 = vector.shape_cast %7 : vector<1x64x128xbf16> to vector<64x128xbf16>
    %cst_11 = arith.constant dense<0.000000e+00> : vector<64x128xf32>
    %9 = tpu.matmul %6, %8, %cst_11 {dimension_numbers = #tpu.dot_dimension_numbers<[1], [0], [0], [1], [0, 0, 1, 1], [], []>} : vector<64x64xbf16>, vector<64x128xbf16>, vector<64x128xf32> -> vector<64x128xf32>
    %10 = arith.addf %4, %9 : vector<64x128xf32>
    %c0_12 = arith.constant 0 : index
    %c1_13 = arith.constant 1 : index
    %c0_14 = arith.constant 0 : index
    %c0_15 = arith.constant 0 : index
    %11 = vector.load %arg1[%c0_12, %c1_13, %c0_14, %c0_15] : memref<1x6x72x64xbf16, #tpu.memory_space<vmem>>, vector<1x1x64x64xbf16>
    %12 = vector.shape_cast %11 : vector<1x1x64x64xbf16> to vector<64x64xbf16>
    %c2 = arith.constant 2 : index
    %c0_16 = arith.constant 0 : index
    %c0_17 = arith.constant 0 : index
    %13 = vector.load %arg2[%c2, %c0_16, %c0_17] : memref<9x64x128xbf16, #tpu.memory_space<vmem>>, vector<1x64x128xbf16>
    %14 = vector.shape_cast %13 : vector<1x64x128xbf16> to vector<64x128xbf16>
    %cst_18 = arith.constant dense<0.000000e+00> : vector<64x128xf32>
    %15 = tpu.matmul %12, %14, %cst_18 {dimension_numbers = #tpu.dot_dimension_numbers<[1], [0], [0], [1], [0, 0, 1, 1], [], []>} : vector<64x64xbf16>, vector<64x128xbf16>, vector<64x128xf32> -> vector<64x128xf32>
    %16 = arith.addf %10, %15 : vector<64x128xf32>
    %c0_19 = arith.constant 0 : index
    %c2_20 = arith.constant 2 : index
    %c0_21 = arith.constant 0 : index
    %c0_22 = arith.constant 0 : index
    %17 = vector.load %arg1[%c0_19, %c2_20, %c0_21, %c0_22] : memref<1x6x72x64xbf16, #tpu.memory_space<vmem>>, vector<1x1x64x64xbf16>
    %18 = vector.shape_cast %17 : vector<1x1x64x64xbf16> to vector<64x64xbf16>
    %c3 = arith.constant 3 : index
    %c0_23 = arith.constant 0 : index
    %c0_24 = arith.constant 0 : index
    %19 = vector.load %arg2[%c3, %c0_23, %c0_24] : memref<9x64x128xbf16, #tpu.memory_space<vmem>>, vector<1x64x128xbf16>
    %20 = vector.shape_cast %19 : vector<1x64x128xbf16> to vector<64x128xbf16>
    %cst_25 = arith.constant dense<0.000000e+00> : vector<64x128xf32>
    %21 = tpu.matmul %18, %20, %cst_25 {dimension_numbers = #tpu.dot_dimension_numbers<[1], [0], [0], [1], [0, 0, 1, 1], [], []>} : vector<64x64xbf16>, vector<64x128xbf16>, vector<64x128xf32> -> vector<64x128xf32>
    %22 = arith.addf %16, %21 : vector<64x128xf32>
    %c0_26 = arith.constant 0 : index
    %c2_27 = arith.constant 2 : index
    %c8_28 = arith.constant 8 : index
    %c0_29 = arith.constant 0 : index
    %23 = vector.load %arg1[%c0_26, %c2_27, %c8_28, %c0_29] : memref<1x6x72x64xbf16, #tpu.memory_space<vmem>>, vector<1x1x64x64xbf16>
    %24 = vector.shape_cast %23 : vector<1x1x64x64xbf16> to vector<64x64xbf16>
    %c4 = arith.constant 4 : index
    %c0_30 = arith.constant 0 : index
    %c0_31 = arith.constant 0 : index
    %25 = vector.load %arg2[%c4, %c0_30, %c0_31] : memref<9x64x128xbf16, #tpu.memory_space<vmem>>, vector<1x64x128xbf16>
    %26 = vector.shape_cast %25 : vector<1x64x128xbf16> to vector<64x128xbf16>
    %cst_32 = arith.constant dense<0.000000e+00> : vector<64x128xf32>
    %27 = tpu.matmul %24, %26, %cst_32 {dimension_numbers = #tpu.dot_dimension_numbers<[1], [0], [0], [1], [0, 0, 1, 1], [], []>} : vector<64x64xbf16>, vector<64x128xbf16>, vector<64x128xf32> -> vector<64x128xf32>
    %28 = arith.addf %22, %27 : vector<64x128xf32>
    %c0_33 = arith.constant 0 : index
    %c3_34 = arith.constant 3 : index
    %c0_35 = arith.constant 0 : index
    %c0_36 = arith.constant 0 : index
    %29 = vector.load %arg1[%c0_33, %c3_34, %c0_35, %c0_36] : memref<1x6x72x64xbf16, #tpu.memory_space<vmem>>, vector<1x1x64x64xbf16>
    %30 = vector.shape_cast %29 : vector<1x1x64x64xbf16> to vector<64x64xbf16>
    %c5 = arith.constant 5 : index
    %c0_37 = arith.constant 0 : index
    %c0_38 = arith.constant 0 : index
    %31 = vector.load %arg2[%c5, %c0_37, %c0_38] : memref<9x64x128xbf16, #tpu.memory_space<vmem>>, vector<1x64x128xbf16>
    %32 = vector.shape_cast %31 : vector<1x64x128xbf16> to vector<64x128xbf16>
    %cst_39 = arith.constant dense<0.000000e+00> : vector<64x128xf32>
    %33 = tpu.matmul %30, %32, %cst_39 {dimension_numbers = #tpu.dot_dimension_numbers<[1], [0], [0], [1], [0, 0, 1, 1], [], []>} : vector<64x64xbf16>, vector<64x128xbf16>, vector<64x128xf32> -> vector<64x128xf32>
    %34 = arith.addf %28, %33 : vector<64x128xf32>
    %c0_40 = arith.constant 0 : index
    %c4_41 = arith.constant 4 : index
    %c0_42 = arith.constant 0 : index
    %c0_43 = arith.constant 0 : index
    %35 = vector.load %arg1[%c0_40, %c4_41, %c0_42, %c0_43] : memref<1x6x72x64xbf16, #tpu.memory_space<vmem>>, vector<1x1x64x64xbf16>
    %36 = vector.shape_cast %35 : vector<1x1x64x64xbf16> to vector<64x64xbf16>
    %c6 = arith.constant 6 : index
    %c0_44 = arith.constant 0 : index
    %c0_45 = arith.constant 0 : index
    %37 = vector.load %arg2[%c6, %c0_44, %c0_45] : memref<9x64x128xbf16, #tpu.memory_space<vmem>>, vector<1x64x128xbf16>
    %38 = vector.shape_cast %37 : vector<1x64x128xbf16> to vector<64x128xbf16>
    %cst_46 = arith.constant dense<0.000000e+00> : vector<64x128xf32>
    %39 = tpu.matmul %36, %38, %cst_46 {dimension_numbers = #tpu.dot_dimension_numbers<[1], [0], [0], [1], [0, 0, 1, 1], [], []>} : vector<64x64xbf16>, vector<64x128xbf16>, vector<64x128xf32> -> vector<64x128xf32>
    %40 = arith.addf %34, %39 : vector<64x128xf32>
    %c0_47 = arith.constant 0 : index
    %c4_48 = arith.constant 4 : index
    %c8_49 = arith.constant 8 : index
    %c0_50 = arith.constant 0 : index
    %41 = vector.load %arg1[%c0_47, %c4_48, %c8_49, %c0_50] : memref<1x6x72x64xbf16, #tpu.memory_space<vmem>>, vector<1x1x64x64xbf16>
    %42 = vector.shape_cast %41 : vector<1x1x64x64xbf16> to vector<64x64xbf16>
    %c7 = arith.constant 7 : index
    %c0_51 = arith.constant 0 : index
    %c0_52 = arith.constant 0 : index
    %43 = vector.load %arg2[%c7, %c0_51, %c0_52] : memref<9x64x128xbf16, #tpu.memory_space<vmem>>, vector<1x64x128xbf16>
    %44 = vector.shape_cast %43 : vector<1x64x128xbf16> to vector<64x128xbf16>
    %cst_53 = arith.constant dense<0.000000e+00> : vector<64x128xf32>
    %45 = tpu.matmul %42, %44, %cst_53 {dimension_numbers = #tpu.dot_dimension_numbers<[1], [0], [0], [1], [0, 0, 1, 1], [], []>} : vector<64x64xbf16>, vector<64x128xbf16>, vector<64x128xf32> -> vector<64x128xf32>
    %46 = arith.addf %40, %45 : vector<64x128xf32>
    %c0_54 = arith.constant 0 : index
    %c5_55 = arith.constant 5 : index
    %c0_56 = arith.constant 0 : index
    %c0_57 = arith.constant 0 : index
    %47 = vector.load %arg1[%c0_54, %c5_55, %c0_56, %c0_57] : memref<1x6x72x64xbf16, #tpu.memory_space<vmem>>, vector<1x1x64x64xbf16>
    %48 = vector.shape_cast %47 : vector<1x1x64x64xbf16> to vector<64x64xbf16>
    %c8_58 = arith.constant 8 : index
    %c0_59 = arith.constant 0 : index
    %c0_60 = arith.constant 0 : index
    %49 = vector.load %arg2[%c8_58, %c0_59, %c0_60] : memref<9x64x128xbf16, #tpu.memory_space<vmem>>, vector<1x64x128xbf16>
    %50 = vector.shape_cast %49 : vector<1x64x128xbf16> to vector<64x128xbf16>
    %cst_61 = arith.constant dense<0.000000e+00> : vector<64x128xf32>
    %51 = tpu.matmul %48, %50, %cst_61 {dimension_numbers = #tpu.dot_dimension_numbers<[1], [0], [0], [1], [0, 0, 1, 1], [], []>} : vector<64x64xbf16>, vector<64x128xbf16>, vector<64x128xf32> -> vector<64x128xf32>
    %52 = arith.addf %46, %51 : vector<64x128xf32>
    %c0_62 = arith.constant 0 : index
    %c0_63 = arith.constant 0 : index
    %53 = vector.load %arg3[%c0_62, %c0_63] : memref<1x128xf32, #tpu.memory_space<vmem>>, vector<1x128xf32>
    %54 = vector.broadcast %53 : vector<1x128xf32> to vector<64x128xf32>
    %55 = arith.mulf %52, %54 : vector<64x128xf32>
    %c0_64 = arith.constant 0 : index
    %c0_65 = arith.constant 0 : index
    %56 = vector.load %arg4[%c0_64, %c0_65] : memref<1x128xf32, #tpu.memory_space<vmem>>, vector<1x128xf32>
    %57 = vector.broadcast %56 : vector<1x128xf32> to vector<64x128xf32>
    %58 = arith.addf %55, %57 : vector<64x128xf32>
    %cst_66 = arith.constant 0.000000e+00 : f32
    %59 = vector.broadcast %cst_66 : f32 to vector<64x128xf32>
    %60 = arith.maximumf %58, %59 : vector<64x128xf32>
    %61 = arith.truncf %60 : vector<64x128xf32> to vector<64x128xbf16>
    %c0_67 = arith.constant 0 : index
    %c0_68 = arith.constant 0 : index
    %c0_69 = arith.constant 0 : index
    %62 = vector.load %arg5[%c0_67, %c0_68, %c0_69] : memref<1x64x128xbf16, #tpu.memory_space<vmem>>, vector<1x64x128xbf16>
    %63 = vector.shape_cast %62 : vector<1x64x128xbf16> to vector<64x128xbf16>
    %64 = vector.shape_cast %61 : vector<64x128xbf16> to vector<1x64x128xbf16>
    tpu.vector_store %arg5[%c0_67, %c0_68, %c0_69], %64 {strides = array<i32>} : memref<1x64x128xbf16, #tpu.memory_space<vmem>>, vector<1x64x128xbf16>,
    return
  }
  func.func @transform_0(%arg0: i32) -> (i32, i32, i32, i32) {
    %c0_i32 = arith.constant 0 : i32
    %c0_i32_0 = arith.constant 0 : i32
    %c0_i32_1 = arith.constant 0 : i32
    %c0_i32_2 = arith.constant 0 : i32
    return %arg0, %c0_i32, %c0_i32_0, %c0_i32_1 : i32, i32, i32, i32
  }
  func.func @transform_1(%arg0: i32) -> (i32, i32, i32) {
    %c0_i32 = arith.constant 0 : i32
    %c0_i32_0 = arith.constant 0 : i32
    %c0_i32_1 = arith.constant 0 : i32
    %c0_i32_2 = arith.constant 0 : i32
    return %c0_i32, %c0_i32_0, %c0_i32_1 : i32, i32, i32
  }
  func.func @transform_2(%arg0: i32) -> (i32, i32) {
    %c0_i32 = arith.constant 0 : i32
    %c0_i32_0 = arith.constant 0 : i32
    %c0_i32_1 = arith.constant 0 : i32
    return %c0_i32, %c0_i32_0 : i32, i32
  }
  func.func @transform_3(%arg0: i32) -> (i32, i32) {
    %c0_i32 = arith.constant 0 : i32
    %c0_i32_0 = arith.constant 0 : i32
    %c0_i32_1 = arith.constant 0 : i32
    return %c0_i32, %c0_i32_0 : i32, i32
  }
  func.func @transform_4(%arg0: i32) -> (i32, i32, i32) {
    %c0_i32 = arith.constant 0 : i32
    %c0_i32_0 = arith.constant 0 : i32
    %c0_i32_1 = arith.constant 0 : i32
    return %arg0, %c0_i32, %c0_i32_0 : i32, i32, i32
  }
}

module attributes {stable_mosaic.version = 11 : i64} {
  func.func @_conv_kernel(%arg0: i32, %arg1: memref<1x3x80x128xbf16, #tpu.memory_space<vmem>>, %arg2: memref<9x128x128xbf16, #tpu.memory_space<vmem>>, %arg3: memref<1x128xf32, #tpu.memory_space<vmem>>, %arg4: memref<1x128xf32, #tpu.memory_space<vmem>>, %arg5: memref<1x64x128xbf16, #tpu.memory_space<vmem>>, %arg6: memref<1x64x128xbf16, #tpu.memory_space<vmem>>) attributes {dimension_semantics = [#tpu.dimension_semantics<parallel>], iteration_bounds = array<i64: 2>, scalar_prefetch = 0 : i64, scratch_operands = 0 : i64, tpu.core_type = #tpu.core_type<tc>, window_params = [{transform_indices = @transform_0, window_bounds = array<i64: 1, 3, 80, 128>}, {pipeline_mode = #tpu.pipeline_mode<synchronous>, transform_indices = @transform_1, window_bounds = array<i64: 9, 128, 128>}, {pipeline_mode = #tpu.pipeline_mode<synchronous>, transform_indices = @transform_2, window_bounds = array<i64: 1, 128>}, {pipeline_mode = #tpu.pipeline_mode<synchronous>, transform_indices = @transform_3, window_bounds = array<i64: 1, 128>}, {transform_indices = @transform_4, window_bounds = array<i64: 1, 64, 128>}, {transform_indices = @transform_5, window_bounds = array<i64: 1, 64, 128>}]} {
    %c0 = arith.constant 0 : index
    %c0_0 = arith.constant 0 : index
    %c0_1 = arith.constant 0 : index
    %c0_2 = arith.constant 0 : index
    %0 = vector.load %arg1[%c0, %c0_0, %c0_1, %c0_2] : memref<1x3x80x128xbf16, #tpu.memory_space<vmem>>, vector<1x1x64x128xbf16>
    %1 = vector.shape_cast %0 : vector<1x1x64x128xbf16> to vector<64x128xbf16>
    %c0_3 = arith.constant 0 : index
    %c0_4 = arith.constant 0 : index
    %c0_5 = arith.constant 0 : index
    %2 = vector.load %arg2[%c0_3, %c0_4, %c0_5] : memref<9x128x128xbf16, #tpu.memory_space<vmem>>, vector<1x128x128xbf16>
    %3 = vector.shape_cast %2 : vector<1x128x128xbf16> to vector<128x128xbf16>
    %cst = arith.constant dense<0.000000e+00> : vector<64x128xf32>
    %4 = tpu.matmul %1, %3, %cst {dimension_numbers = #tpu.dot_dimension_numbers<[1], [0], [0], [1], [0, 0, 1, 1], [], []>} : vector<64x128xbf16>, vector<128x128xbf16>, vector<64x128xf32> -> vector<64x128xf32>
    %c0_6 = arith.constant 0 : index
    %c0_7 = arith.constant 0 : index
    %c8 = arith.constant 8 : index
    %c0_8 = arith.constant 0 : index
    %5 = vector.load %arg1[%c0_6, %c0_7, %c8, %c0_8] : memref<1x3x80x128xbf16, #tpu.memory_space<vmem>>, vector<1x1x64x128xbf16>
    %6 = vector.shape_cast %5 : vector<1x1x64x128xbf16> to vector<64x128xbf16>
    %c1 = arith.constant 1 : index
    %c0_9 = arith.constant 0 : index
    %c0_10 = arith.constant 0 : index
    %7 = vector.load %arg2[%c1, %c0_9, %c0_10] : memref<9x128x128xbf16, #tpu.memory_space<vmem>>, vector<1x128x128xbf16>
    %8 = vector.shape_cast %7 : vector<1x128x128xbf16> to vector<128x128xbf16>
    %cst_11 = arith.constant dense<0.000000e+00> : vector<64x128xf32>
    %9 = tpu.matmul %6, %8, %cst_11 {dimension_numbers = #tpu.dot_dimension_numbers<[1], [0], [0], [1], [0, 0, 1, 1], [], []>} : vector<64x128xbf16>, vector<128x128xbf16>, vector<64x128xf32> -> vector<64x128xf32>
    %10 = arith.addf %4, %9 : vector<64x128xf32>
    %c0_12 = arith.constant 0 : index
    %c0_13 = arith.constant 0 : index
    %c16 = arith.constant 16 : index
    %c0_14 = arith.constant 0 : index
    %11 = vector.load %arg1[%c0_12, %c0_13, %c16, %c0_14] : memref<1x3x80x128xbf16, #tpu.memory_space<vmem>>, vector<1x1x64x128xbf16>
    %12 = vector.shape_cast %11 : vector<1x1x64x128xbf16> to vector<64x128xbf16>
    %c2 = arith.constant 2 : index
    %c0_15 = arith.constant 0 : index
    %c0_16 = arith.constant 0 : index
    %13 = vector.load %arg2[%c2, %c0_15, %c0_16] : memref<9x128x128xbf16, #tpu.memory_space<vmem>>, vector<1x128x128xbf16>
    %14 = vector.shape_cast %13 : vector<1x128x128xbf16> to vector<128x128xbf16>
    %cst_17 = arith.constant dense<0.000000e+00> : vector<64x128xf32>
    %15 = tpu.matmul %12, %14, %cst_17 {dimension_numbers = #tpu.dot_dimension_numbers<[1], [0], [0], [1], [0, 0, 1, 1], [], []>} : vector<64x128xbf16>, vector<128x128xbf16>, vector<64x128xf32> -> vector<64x128xf32>
    %16 = arith.addf %10, %15 : vector<64x128xf32>
    %c0_18 = arith.constant 0 : index
    %c1_19 = arith.constant 1 : index
    %c0_20 = arith.constant 0 : index
    %c0_21 = arith.constant 0 : index
    %17 = vector.load %arg1[%c0_18, %c1_19, %c0_20, %c0_21] : memref<1x3x80x128xbf16, #tpu.memory_space<vmem>>, vector<1x1x64x128xbf16>
    %18 = vector.shape_cast %17 : vector<1x1x64x128xbf16> to vector<64x128xbf16>
    %c3 = arith.constant 3 : index
    %c0_22 = arith.constant 0 : index
    %c0_23 = arith.constant 0 : index
    %19 = vector.load %arg2[%c3, %c0_22, %c0_23] : memref<9x128x128xbf16, #tpu.memory_space<vmem>>, vector<1x128x128xbf16>
    %20 = vector.shape_cast %19 : vector<1x128x128xbf16> to vector<128x128xbf16>
    %cst_24 = arith.constant dense<0.000000e+00> : vector<64x128xf32>
    %21 = tpu.matmul %18, %20, %cst_24 {dimension_numbers = #tpu.dot_dimension_numbers<[1], [0], [0], [1], [0, 0, 1, 1], [], []>} : vector<64x128xbf16>, vector<128x128xbf16>, vector<64x128xf32> -> vector<64x128xf32>
    %22 = arith.addf %16, %21 : vector<64x128xf32>
    %c0_25 = arith.constant 0 : index
    %c1_26 = arith.constant 1 : index
    %c8_27 = arith.constant 8 : index
    %c0_28 = arith.constant 0 : index
    %23 = vector.load %arg1[%c0_25, %c1_26, %c8_27, %c0_28] : memref<1x3x80x128xbf16, #tpu.memory_space<vmem>>, vector<1x1x64x128xbf16>
    %24 = vector.shape_cast %23 : vector<1x1x64x128xbf16> to vector<64x128xbf16>
    %c4 = arith.constant 4 : index
    %c0_29 = arith.constant 0 : index
    %c0_30 = arith.constant 0 : index
    %25 = vector.load %arg2[%c4, %c0_29, %c0_30] : memref<9x128x128xbf16, #tpu.memory_space<vmem>>, vector<1x128x128xbf16>
    %26 = vector.shape_cast %25 : vector<1x128x128xbf16> to vector<128x128xbf16>
    %cst_31 = arith.constant dense<0.000000e+00> : vector<64x128xf32>
    %27 = tpu.matmul %24, %26, %cst_31 {dimension_numbers = #tpu.dot_dimension_numbers<[1], [0], [0], [1], [0, 0, 1, 1], [], []>} : vector<64x128xbf16>, vector<128x128xbf16>, vector<64x128xf32> -> vector<64x128xf32>
    %28 = arith.addf %22, %27 : vector<64x128xf32>
    %c0_32 = arith.constant 0 : index
    %c1_33 = arith.constant 1 : index
    %c16_34 = arith.constant 16 : index
    %c0_35 = arith.constant 0 : index
    %29 = vector.load %arg1[%c0_32, %c1_33, %c16_34, %c0_35] : memref<1x3x80x128xbf16, #tpu.memory_space<vmem>>, vector<1x1x64x128xbf16>
    %30 = vector.shape_cast %29 : vector<1x1x64x128xbf16> to vector<64x128xbf16>
    %c5 = arith.constant 5 : index
    %c0_36 = arith.constant 0 : index
    %c0_37 = arith.constant 0 : index
    %31 = vector.load %arg2[%c5, %c0_36, %c0_37] : memref<9x128x128xbf16, #tpu.memory_space<vmem>>, vector<1x128x128xbf16>
    %32 = vector.shape_cast %31 : vector<1x128x128xbf16> to vector<128x128xbf16>
    %cst_38 = arith.constant dense<0.000000e+00> : vector<64x128xf32>
    %33 = tpu.matmul %30, %32, %cst_38 {dimension_numbers = #tpu.dot_dimension_numbers<[1], [0], [0], [1], [0, 0, 1, 1], [], []>} : vector<64x128xbf16>, vector<128x128xbf16>, vector<64x128xf32> -> vector<64x128xf32>
    %34 = arith.addf %28, %33 : vector<64x128xf32>
    %c0_39 = arith.constant 0 : index
    %c2_40 = arith.constant 2 : index
    %c0_41 = arith.constant 0 : index
    %c0_42 = arith.constant 0 : index
    %35 = vector.load %arg1[%c0_39, %c2_40, %c0_41, %c0_42] : memref<1x3x80x128xbf16, #tpu.memory_space<vmem>>, vector<1x1x64x128xbf16>
    %36 = vector.shape_cast %35 : vector<1x1x64x128xbf16> to vector<64x128xbf16>
    %c6 = arith.constant 6 : index
    %c0_43 = arith.constant 0 : index
    %c0_44 = arith.constant 0 : index
    %37 = vector.load %arg2[%c6, %c0_43, %c0_44] : memref<9x128x128xbf16, #tpu.memory_space<vmem>>, vector<1x128x128xbf16>
    %38 = vector.shape_cast %37 : vector<1x128x128xbf16> to vector<128x128xbf16>
    %cst_45 = arith.constant dense<0.000000e+00> : vector<64x128xf32>
    %39 = tpu.matmul %36, %38, %cst_45 {dimension_numbers = #tpu.dot_dimension_numbers<[1], [0], [0], [1], [0, 0, 1, 1], [], []>} : vector<64x128xbf16>, vector<128x128xbf16>, vector<64x128xf32> -> vector<64x128xf32>
    %40 = arith.addf %34, %39 : vector<64x128xf32>
    %c0_46 = arith.constant 0 : index
    %c2_47 = arith.constant 2 : index
    %c8_48 = arith.constant 8 : index
    %c0_49 = arith.constant 0 : index
    %41 = vector.load %arg1[%c0_46, %c2_47, %c8_48, %c0_49] : memref<1x3x80x128xbf16, #tpu.memory_space<vmem>>, vector<1x1x64x128xbf16>
    %42 = vector.shape_cast %41 : vector<1x1x64x128xbf16> to vector<64x128xbf16>
    %c7 = arith.constant 7 : index
    %c0_50 = arith.constant 0 : index
    %c0_51 = arith.constant 0 : index
    %43 = vector.load %arg2[%c7, %c0_50, %c0_51] : memref<9x128x128xbf16, #tpu.memory_space<vmem>>, vector<1x128x128xbf16>
    %44 = vector.shape_cast %43 : vector<1x128x128xbf16> to vector<128x128xbf16>
    %cst_52 = arith.constant dense<0.000000e+00> : vector<64x128xf32>
    %45 = tpu.matmul %42, %44, %cst_52 {dimension_numbers = #tpu.dot_dimension_numbers<[1], [0], [0], [1], [0, 0, 1, 1], [], []>} : vector<64x128xbf16>, vector<128x128xbf16>, vector<64x128xf32> -> vector<64x128xf32>
    %46 = arith.addf %40, %45 : vector<64x128xf32>
    %c0_53 = arith.constant 0 : index
    %c2_54 = arith.constant 2 : index
    %c16_55 = arith.constant 16 : index
    %c0_56 = arith.constant 0 : index
    %47 = vector.load %arg1[%c0_53, %c2_54, %c16_55, %c0_56] : memref<1x3x80x128xbf16, #tpu.memory_space<vmem>>, vector<1x1x64x128xbf16>
    %48 = vector.shape_cast %47 : vector<1x1x64x128xbf16> to vector<64x128xbf16>
    %c8_57 = arith.constant 8 : index
    %c0_58 = arith.constant 0 : index
    %c0_59 = arith.constant 0 : index
    %49 = vector.load %arg2[%c8_57, %c0_58, %c0_59] : memref<9x128x128xbf16, #tpu.memory_space<vmem>>, vector<1x128x128xbf16>
    %50 = vector.shape_cast %49 : vector<1x128x128xbf16> to vector<128x128xbf16>
    %cst_60 = arith.constant dense<0.000000e+00> : vector<64x128xf32>
    %51 = tpu.matmul %48, %50, %cst_60 {dimension_numbers = #tpu.dot_dimension_numbers<[1], [0], [0], [1], [0, 0, 1, 1], [], []>} : vector<64x128xbf16>, vector<128x128xbf16>, vector<64x128xf32> -> vector<64x128xf32>
    %52 = arith.addf %46, %51 : vector<64x128xf32>
    %c0_61 = arith.constant 0 : index
    %c0_62 = arith.constant 0 : index
    %53 = vector.load %arg3[%c0_61, %c0_62] : memref<1x128xf32, #tpu.memory_space<vmem>>, vector<1x128xf32>
    %54 = vector.broadcast %53 : vector<1x128xf32> to vector<64x128xf32>
    %55 = arith.mulf %52, %54 : vector<64x128xf32>
    %c0_63 = arith.constant 0 : index
    %c0_64 = arith.constant 0 : index
    %56 = vector.load %arg4[%c0_63, %c0_64] : memref<1x128xf32, #tpu.memory_space<vmem>>, vector<1x128xf32>
    %57 = vector.broadcast %56 : vector<1x128xf32> to vector<64x128xf32>
    %58 = arith.addf %55, %57 : vector<64x128xf32>
    %c0_65 = arith.constant 0 : index
    %c0_66 = arith.constant 0 : index
    %c0_67 = arith.constant 0 : index
    %59 = vector.load %arg5[%c0_65, %c0_66, %c0_67] : memref<1x64x128xbf16, #tpu.memory_space<vmem>>, vector<1x64x128xbf16>
    %60 = vector.shape_cast %59 : vector<1x64x128xbf16> to vector<64x128xbf16>
    %61 = arith.extf %60 : vector<64x128xbf16> to vector<64x128xf32>
    %62 = arith.addf %58, %61 : vector<64x128xf32>
    %cst_68 = arith.constant 0.000000e+00 : f32
    %63 = vector.broadcast %cst_68 : f32 to vector<64x128xf32>
    %64 = arith.maximumf %62, %63 : vector<64x128xf32>
    %65 = arith.truncf %64 : vector<64x128xf32> to vector<64x128xbf16>
    %c0_69 = arith.constant 0 : index
    %c0_70 = arith.constant 0 : index
    %c0_71 = arith.constant 0 : index
    %66 = vector.load %arg6[%c0_69, %c0_70, %c0_71] : memref<1x64x128xbf16, #tpu.memory_space<vmem>>, vector<1x64x128xbf16>
    %67 = vector.shape_cast %66 : vector<1x64x128xbf16> to vector<64x128xbf16>
    %68 = vector.shape_cast %65 : vector<64x128xbf16> to vector<1x64x128xbf16>
    tpu.vector_store %arg6[%c0_69, %c0_70, %c0_71], %68 {strides = array<i32>} : memref<1x64x128xbf16, #tpu.memory_space<vmem>>, vector<1x64x128xbf16>,
    return
  }
  func.func @transform_0(%arg0: i32) -> (i32, i32, i32, i32) {
    %c0_i32 = arith.constant 0 : i32
    %c0_i32_0 = arith.constant 0 : i32
    %c0_i32_1 = arith.constant 0 : i32
    %c0_i32_2 = arith.constant 0 : i32
    return %arg0, %c0_i32, %c0_i32_0, %c0_i32_1 : i32, i32, i32, i32
  }
  func.func @transform_1(%arg0: i32) -> (i32, i32, i32) {
    %c0_i32 = arith.constant 0 : i32
    %c0_i32_0 = arith.constant 0 : i32
    %c0_i32_1 = arith.constant 0 : i32
    %c0_i32_2 = arith.constant 0 : i32
    return %c0_i32, %c0_i32_0, %c0_i32_1 : i32, i32, i32
  }
  func.func @transform_2(%arg0: i32) -> (i32, i32) {
    %c0_i32 = arith.constant 0 : i32
    %c0_i32_0 = arith.constant 0 : i32
    %c0_i32_1 = arith.constant 0 : i32
    return %c0_i32, %c0_i32_0 : i32, i32
  }
  func.func @transform_3(%arg0: i32) -> (i32, i32) {
    %c0_i32 = arith.constant 0 : i32
    %c0_i32_0 = arith.constant 0 : i32
    %c0_i32_1 = arith.constant 0 : i32
    return %c0_i32, %c0_i32_0 : i32, i32
  }
  func.func @transform_4(%arg0: i32) -> (i32, i32, i32) {
    %c0_i32 = arith.constant 0 : i32
    %c0_i32_0 = arith.constant 0 : i32
    %c0_i32_1 = arith.constant 0 : i32
    return %arg0, %c0_i32, %c0_i32_0 : i32, i32, i32
  }
  func.func @transform_5(%arg0: i32) -> (i32, i32, i32) {
    %c0_i32 = arith.constant 0 : i32
    %c0_i32_0 = arith.constant 0 : i32
    %c0_i32_1 = arith.constant 0 : i32
    return %arg0, %c0_i32, %c0_i32_0 : i32, i32, i32
  }
}

module attributes {stable_mosaic.version = 11 : i64} {
  func.func @_conv_kernel(%arg0: i32, %arg1: memref<1x3x80x128xbf16, #tpu.memory_space<vmem>>, %arg2: memref<9x128x128xbf16, #tpu.memory_space<vmem>>, %arg3: memref<1x128xf32, #tpu.memory_space<vmem>>, %arg4: memref<1x128xf32, #tpu.memory_space<vmem>>, %arg5: memref<1x64x128xbf16, #tpu.memory_space<vmem>>) attributes {dimension_semantics = [#tpu.dimension_semantics<parallel>], iteration_bounds = array<i64: 2>, scalar_prefetch = 0 : i64, scratch_operands = 0 : i64, tpu.core_type = #tpu.core_type<tc>, window_params = [{transform_indices = @transform_0, window_bounds = array<i64: 1, 3, 80, 128>}, {pipeline_mode = #tpu.pipeline_mode<synchronous>, transform_indices = @transform_1, window_bounds = array<i64: 9, 128, 128>}, {pipeline_mode = #tpu.pipeline_mode<synchronous>, transform_indices = @transform_2, window_bounds = array<i64: 1, 128>}, {pipeline_mode = #tpu.pipeline_mode<synchronous>, transform_indices = @transform_3, window_bounds = array<i64: 1, 128>}, {transform_indices = @transform_4, window_bounds = array<i64: 1, 64, 128>}]} {
    %c0 = arith.constant 0 : index
    %c0_0 = arith.constant 0 : index
    %c0_1 = arith.constant 0 : index
    %c0_2 = arith.constant 0 : index
    %0 = vector.load %arg1[%c0, %c0_0, %c0_1, %c0_2] : memref<1x3x80x128xbf16, #tpu.memory_space<vmem>>, vector<1x1x64x128xbf16>
    %1 = vector.shape_cast %0 : vector<1x1x64x128xbf16> to vector<64x128xbf16>
    %c0_3 = arith.constant 0 : index
    %c0_4 = arith.constant 0 : index
    %c0_5 = arith.constant 0 : index
    %2 = vector.load %arg2[%c0_3, %c0_4, %c0_5] : memref<9x128x128xbf16, #tpu.memory_space<vmem>>, vector<1x128x128xbf16>
    %3 = vector.shape_cast %2 : vector<1x128x128xbf16> to vector<128x128xbf16>
    %cst = arith.constant dense<0.000000e+00> : vector<64x128xf32>
    %4 = tpu.matmul %1, %3, %cst {dimension_numbers = #tpu.dot_dimension_numbers<[1], [0], [0], [1], [0, 0, 1, 1], [], []>} : vector<64x128xbf16>, vector<128x128xbf16>, vector<64x128xf32> -> vector<64x128xf32>
    %c0_6 = arith.constant 0 : index
    %c0_7 = arith.constant 0 : index
    %c8 = arith.constant 8 : index
    %c0_8 = arith.constant 0 : index
    %5 = vector.load %arg1[%c0_6, %c0_7, %c8, %c0_8] : memref<1x3x80x128xbf16, #tpu.memory_space<vmem>>, vector<1x1x64x128xbf16>
    %6 = vector.shape_cast %5 : vector<1x1x64x128xbf16> to vector<64x128xbf16>
    %c1 = arith.constant 1 : index
    %c0_9 = arith.constant 0 : index
    %c0_10 = arith.constant 0 : index
    %7 = vector.load %arg2[%c1, %c0_9, %c0_10] : memref<9x128x128xbf16, #tpu.memory_space<vmem>>, vector<1x128x128xbf16>
    %8 = vector.shape_cast %7 : vector<1x128x128xbf16> to vector<128x128xbf16>
    %cst_11 = arith.constant dense<0.000000e+00> : vector<64x128xf32>
    %9 = tpu.matmul %6, %8, %cst_11 {dimension_numbers = #tpu.dot_dimension_numbers<[1], [0], [0], [1], [0, 0, 1, 1], [], []>} : vector<64x128xbf16>, vector<128x128xbf16>, vector<64x128xf32> -> vector<64x128xf32>
    %10 = arith.addf %4, %9 : vector<64x128xf32>
    %c0_12 = arith.constant 0 : index
    %c0_13 = arith.constant 0 : index
    %c16 = arith.constant 16 : index
    %c0_14 = arith.constant 0 : index
    %11 = vector.load %arg1[%c0_12, %c0_13, %c16, %c0_14] : memref<1x3x80x128xbf16, #tpu.memory_space<vmem>>, vector<1x1x64x128xbf16>
    %12 = vector.shape_cast %11 : vector<1x1x64x128xbf16> to vector<64x128xbf16>
    %c2 = arith.constant 2 : index
    %c0_15 = arith.constant 0 : index
    %c0_16 = arith.constant 0 : index
    %13 = vector.load %arg2[%c2, %c0_15, %c0_16] : memref<9x128x128xbf16, #tpu.memory_space<vmem>>, vector<1x128x128xbf16>
    %14 = vector.shape_cast %13 : vector<1x128x128xbf16> to vector<128x128xbf16>
    %cst_17 = arith.constant dense<0.000000e+00> : vector<64x128xf32>
    %15 = tpu.matmul %12, %14, %cst_17 {dimension_numbers = #tpu.dot_dimension_numbers<[1], [0], [0], [1], [0, 0, 1, 1], [], []>} : vector<64x128xbf16>, vector<128x128xbf16>, vector<64x128xf32> -> vector<64x128xf32>
    %16 = arith.addf %10, %15 : vector<64x128xf32>
    %c0_18 = arith.constant 0 : index
    %c1_19 = arith.constant 1 : index
    %c0_20 = arith.constant 0 : index
    %c0_21 = arith.constant 0 : index
    %17 = vector.load %arg1[%c0_18, %c1_19, %c0_20, %c0_21] : memref<1x3x80x128xbf16, #tpu.memory_space<vmem>>, vector<1x1x64x128xbf16>
    %18 = vector.shape_cast %17 : vector<1x1x64x128xbf16> to vector<64x128xbf16>
    %c3 = arith.constant 3 : index
    %c0_22 = arith.constant 0 : index
    %c0_23 = arith.constant 0 : index
    %19 = vector.load %arg2[%c3, %c0_22, %c0_23] : memref<9x128x128xbf16, #tpu.memory_space<vmem>>, vector<1x128x128xbf16>
    %20 = vector.shape_cast %19 : vector<1x128x128xbf16> to vector<128x128xbf16>
    %cst_24 = arith.constant dense<0.000000e+00> : vector<64x128xf32>
    %21 = tpu.matmul %18, %20, %cst_24 {dimension_numbers = #tpu.dot_dimension_numbers<[1], [0], [0], [1], [0, 0, 1, 1], [], []>} : vector<64x128xbf16>, vector<128x128xbf16>, vector<64x128xf32> -> vector<64x128xf32>
    %22 = arith.addf %16, %21 : vector<64x128xf32>
    %c0_25 = arith.constant 0 : index
    %c1_26 = arith.constant 1 : index
    %c8_27 = arith.constant 8 : index
    %c0_28 = arith.constant 0 : index
    %23 = vector.load %arg1[%c0_25, %c1_26, %c8_27, %c0_28] : memref<1x3x80x128xbf16, #tpu.memory_space<vmem>>, vector<1x1x64x128xbf16>
    %24 = vector.shape_cast %23 : vector<1x1x64x128xbf16> to vector<64x128xbf16>
    %c4 = arith.constant 4 : index
    %c0_29 = arith.constant 0 : index
    %c0_30 = arith.constant 0 : index
    %25 = vector.load %arg2[%c4, %c0_29, %c0_30] : memref<9x128x128xbf16, #tpu.memory_space<vmem>>, vector<1x128x128xbf16>
    %26 = vector.shape_cast %25 : vector<1x128x128xbf16> to vector<128x128xbf16>
    %cst_31 = arith.constant dense<0.000000e+00> : vector<64x128xf32>
    %27 = tpu.matmul %24, %26, %cst_31 {dimension_numbers = #tpu.dot_dimension_numbers<[1], [0], [0], [1], [0, 0, 1, 1], [], []>} : vector<64x128xbf16>, vector<128x128xbf16>, vector<64x128xf32> -> vector<64x128xf32>
    %28 = arith.addf %22, %27 : vector<64x128xf32>
    %c0_32 = arith.constant 0 : index
    %c1_33 = arith.constant 1 : index
    %c16_34 = arith.constant 16 : index
    %c0_35 = arith.constant 0 : index
    %29 = vector.load %arg1[%c0_32, %c1_33, %c16_34, %c0_35] : memref<1x3x80x128xbf16, #tpu.memory_space<vmem>>, vector<1x1x64x128xbf16>
    %30 = vector.shape_cast %29 : vector<1x1x64x128xbf16> to vector<64x128xbf16>
    %c5 = arith.constant 5 : index
    %c0_36 = arith.constant 0 : index
    %c0_37 = arith.constant 0 : index
    %31 = vector.load %arg2[%c5, %c0_36, %c0_37] : memref<9x128x128xbf16, #tpu.memory_space<vmem>>, vector<1x128x128xbf16>
    %32 = vector.shape_cast %31 : vector<1x128x128xbf16> to vector<128x128xbf16>
    %cst_38 = arith.constant dense<0.000000e+00> : vector<64x128xf32>
    %33 = tpu.matmul %30, %32, %cst_38 {dimension_numbers = #tpu.dot_dimension_numbers<[1], [0], [0], [1], [0, 0, 1, 1], [], []>} : vector<64x128xbf16>, vector<128x128xbf16>, vector<64x128xf32> -> vector<64x128xf32>
    %34 = arith.addf %28, %33 : vector<64x128xf32>
    %c0_39 = arith.constant 0 : index
    %c2_40 = arith.constant 2 : index
    %c0_41 = arith.constant 0 : index
    %c0_42 = arith.constant 0 : index
    %35 = vector.load %arg1[%c0_39, %c2_40, %c0_41, %c0_42] : memref<1x3x80x128xbf16, #tpu.memory_space<vmem>>, vector<1x1x64x128xbf16>
    %36 = vector.shape_cast %35 : vector<1x1x64x128xbf16> to vector<64x128xbf16>
    %c6 = arith.constant 6 : index
    %c0_43 = arith.constant 0 : index
    %c0_44 = arith.constant 0 : index
    %37 = vector.load %arg2[%c6, %c0_43, %c0_44] : memref<9x128x128xbf16, #tpu.memory_space<vmem>>, vector<1x128x128xbf16>
    %38 = vector.shape_cast %37 : vector<1x128x128xbf16> to vector<128x128xbf16>
    %cst_45 = arith.constant dense<0.000000e+00> : vector<64x128xf32>
    %39 = tpu.matmul %36, %38, %cst_45 {dimension_numbers = #tpu.dot_dimension_numbers<[1], [0], [0], [1], [0, 0, 1, 1], [], []>} : vector<64x128xbf16>, vector<128x128xbf16>, vector<64x128xf32> -> vector<64x128xf32>
    %40 = arith.addf %34, %39 : vector<64x128xf32>
    %c0_46 = arith.constant 0 : index
    %c2_47 = arith.constant 2 : index
    %c8_48 = arith.constant 8 : index
    %c0_49 = arith.constant 0 : index
    %41 = vector.load %arg1[%c0_46, %c2_47, %c8_48, %c0_49] : memref<1x3x80x128xbf16, #tpu.memory_space<vmem>>, vector<1x1x64x128xbf16>
    %42 = vector.shape_cast %41 : vector<1x1x64x128xbf16> to vector<64x128xbf16>
    %c7 = arith.constant 7 : index
    %c0_50 = arith.constant 0 : index
    %c0_51 = arith.constant 0 : index
    %43 = vector.load %arg2[%c7, %c0_50, %c0_51] : memref<9x128x128xbf16, #tpu.memory_space<vmem>>, vector<1x128x128xbf16>
    %44 = vector.shape_cast %43 : vector<1x128x128xbf16> to vector<128x128xbf16>
    %cst_52 = arith.constant dense<0.000000e+00> : vector<64x128xf32>
    %45 = tpu.matmul %42, %44, %cst_52 {dimension_numbers = #tpu.dot_dimension_numbers<[1], [0], [0], [1], [0, 0, 1, 1], [], []>} : vector<64x128xbf16>, vector<128x128xbf16>, vector<64x128xf32> -> vector<64x128xf32>
    %46 = arith.addf %40, %45 : vector<64x128xf32>
    %c0_53 = arith.constant 0 : index
    %c2_54 = arith.constant 2 : index
    %c16_55 = arith.constant 16 : index
    %c0_56 = arith.constant 0 : index
    %47 = vector.load %arg1[%c0_53, %c2_54, %c16_55, %c0_56] : memref<1x3x80x128xbf16, #tpu.memory_space<vmem>>, vector<1x1x64x128xbf16>
    %48 = vector.shape_cast %47 : vector<1x1x64x128xbf16> to vector<64x128xbf16>
    %c8_57 = arith.constant 8 : index
    %c0_58 = arith.constant 0 : index
    %c0_59 = arith.constant 0 : index
    %49 = vector.load %arg2[%c8_57, %c0_58, %c0_59] : memref<9x128x128xbf16, #tpu.memory_space<vmem>>, vector<1x128x128xbf16>
    %50 = vector.shape_cast %49 : vector<1x128x128xbf16> to vector<128x128xbf16>
    %cst_60 = arith.constant dense<0.000000e+00> : vector<64x128xf32>
    %51 = tpu.matmul %48, %50, %cst_60 {dimension_numbers = #tpu.dot_dimension_numbers<[1], [0], [0], [1], [0, 0, 1, 1], [], []>} : vector<64x128xbf16>, vector<128x128xbf16>, vector<64x128xf32> -> vector<64x128xf32>
    %52 = arith.addf %46, %51 : vector<64x128xf32>
    %c0_61 = arith.constant 0 : index
    %c0_62 = arith.constant 0 : index
    %53 = vector.load %arg3[%c0_61, %c0_62] : memref<1x128xf32, #tpu.memory_space<vmem>>, vector<1x128xf32>
    %54 = vector.broadcast %53 : vector<1x128xf32> to vector<64x128xf32>
    %55 = arith.mulf %52, %54 : vector<64x128xf32>
    %c0_63 = arith.constant 0 : index
    %c0_64 = arith.constant 0 : index
    %56 = vector.load %arg4[%c0_63, %c0_64] : memref<1x128xf32, #tpu.memory_space<vmem>>, vector<1x128xf32>
    %57 = vector.broadcast %56 : vector<1x128xf32> to vector<64x128xf32>
    %58 = arith.addf %55, %57 : vector<64x128xf32>
    %cst_65 = arith.constant 0.000000e+00 : f32
    %59 = vector.broadcast %cst_65 : f32 to vector<64x128xf32>
    %60 = arith.maximumf %58, %59 : vector<64x128xf32>
    %61 = arith.truncf %60 : vector<64x128xf32> to vector<64x128xbf16>
    %c0_66 = arith.constant 0 : index
    %c0_67 = arith.constant 0 : index
    %c0_68 = arith.constant 0 : index
    %62 = vector.load %arg5[%c0_66, %c0_67, %c0_68] : memref<1x64x128xbf16, #tpu.memory_space<vmem>>, vector<1x64x128xbf16>
    %63 = vector.shape_cast %62 : vector<1x64x128xbf16> to vector<64x128xbf16>
    %64 = vector.shape_cast %61 : vector<64x128xbf16> to vector<1x64x128xbf16>
    tpu.vector_store %arg5[%c0_66, %c0_67, %c0_68], %64 {strides = array<i32>} : memref<1x64x128xbf16, #tpu.memory_space<vmem>>, vector<1x64x128xbf16>,
    return
  }
  func.func @transform_0(%arg0: i32) -> (i32, i32, i32, i32) {
    %c0_i32 = arith.constant 0 : i32
    %c0_i32_0 = arith.constant 0 : i32
    %c0_i32_1 = arith.constant 0 : i32
    %c0_i32_2 = arith.constant 0 : i32
    return %arg0, %c0_i32, %c0_i32_0, %c0_i32_1 : i32, i32, i32, i32
  }
  func.func @transform_1(%arg0: i32) -> (i32, i32, i32) {
    %c0_i32 = arith.constant 0 : i32
    %c0_i32_0 = arith.constant 0 : i32
    %c0_i32_1 = arith.constant 0 : i32
    %c0_i32_2 = arith.constant 0 : i32
    return %c0_i32, %c0_i32_0, %c0_i32_1 : i32, i32, i32
  }
  func.func @transform_2(%arg0: i32) -> (i32, i32) {
    %c0_i32 = arith.constant 0 : i32
    %c0_i32_0 = arith.constant 0 : i32
    %c0_i32_1 = arith.constant 0 : i32
    return %c0_i32, %c0_i32_0 : i32, i32
  }
  func.func @transform_3(%arg0: i32) -> (i32, i32) {
    %c0_i32 = arith.constant 0 : i32
    %c0_i32_0 = arith.constant 0 : i32
    %c0_i32_1 = arith.constant 0 : i32
    return %c0_i32, %c0_i32_0 : i32, i32
  }
  func.func @transform_4(%arg0: i32) -> (i32, i32, i32) {
    %c0_i32 = arith.constant 0 : i32
    %c0_i32_0 = arith.constant 0 : i32
    %c0_i32_1 = arith.constant 0 : i32
    return %arg0, %c0_i32, %c0_i32_0 : i32, i32, i32
  }
}

module attributes {stable_mosaic.version = 11 : i64} {
  func.func @_root_kernel(%arg0: i32, %arg1: memref<1x64x128xbf16, #tpu.memory_space<vmem>>, %arg2: memref<1x64x128xbf16, #tpu.memory_space<vmem>>, %arg3: memref<128x128xbf16, #tpu.memory_space<vmem>>, %arg4: memref<128x128xbf16, #tpu.memory_space<vmem>>, %arg5: memref<1x128xf32, #tpu.memory_space<vmem>>, %arg6: memref<1x128xf32, #tpu.memory_space<vmem>>, %arg7: memref<1x64x128xbf16, #tpu.memory_space<vmem>>) attributes {dimension_semantics = [#tpu.dimension_semantics<parallel>], iteration_bounds = array<i64: 2>, scalar_prefetch = 0 : i64, scratch_operands = 0 : i64, tpu.core_type = #tpu.core_type<tc>, window_params = [{transform_indices = @transform_0, window_bounds = array<i64: 1, 64, 128>}, {transform_indices = @transform_1, window_bounds = array<i64: 1, 64, 128>}, {pipeline_mode = #tpu.pipeline_mode<synchronous>, transform_indices = @transform_2, window_bounds = array<i64: 128, 128>}, {pipeline_mode = #tpu.pipeline_mode<synchronous>, transform_indices = @transform_3, window_bounds = array<i64: 128, 128>}, {pipeline_mode = #tpu.pipeline_mode<synchronous>, transform_indices = @transform_4, window_bounds = array<i64: 1, 128>}, {pipeline_mode = #tpu.pipeline_mode<synchronous>, transform_indices = @transform_5, window_bounds = array<i64: 1, 128>}, {transform_indices = @transform_6, window_bounds = array<i64: 1, 64, 128>}]} {
    %c0 = arith.constant 0 : index
    %c0_0 = arith.constant 0 : index
    %c0_1 = arith.constant 0 : index
    %0 = vector.load %arg1[%c0, %c0_0, %c0_1] : memref<1x64x128xbf16, #tpu.memory_space<vmem>>, vector<1x64x128xbf16>
    %1 = vector.shape_cast %0 : vector<1x64x128xbf16> to vector<64x128xbf16>
    %c0_2 = arith.constant 0 : index
    %c0_3 = arith.constant 0 : index
    %2 = vector.load %arg3[%c0_2, %c0_3] : memref<128x128xbf16, #tpu.memory_space<vmem>>, vector<128x128xbf16>
    %cst = arith.constant dense<0.000000e+00> : vector<64x128xf32>
    %3 = tpu.matmul %1, %2, %cst {dimension_numbers = #tpu.dot_dimension_numbers<[1], [0], [0], [1], [0, 0, 1, 1], [], []>} : vector<64x128xbf16>, vector<128x128xbf16>, vector<64x128xf32> -> vector<64x128xf32>
    %c0_4 = arith.constant 0 : index
    %c0_5 = arith.constant 0 : index
    %c0_6 = arith.constant 0 : index
    %4 = vector.load %arg2[%c0_4, %c0_5, %c0_6] : memref<1x64x128xbf16, #tpu.memory_space<vmem>>, vector<1x64x128xbf16>
    %5 = vector.shape_cast %4 : vector<1x64x128xbf16> to vector<64x128xbf16>
    %c0_7 = arith.constant 0 : index
    %c0_8 = arith.constant 0 : index
    %6 = vector.load %arg4[%c0_7, %c0_8] : memref<128x128xbf16, #tpu.memory_space<vmem>>, vector<128x128xbf16>
    %cst_9 = arith.constant dense<0.000000e+00> : vector<64x128xf32>
    %7 = tpu.matmul %5, %6, %cst_9 {dimension_numbers = #tpu.dot_dimension_numbers<[1], [0], [0], [1], [0, 0, 1, 1], [], []>} : vector<64x128xbf16>, vector<128x128xbf16>, vector<64x128xf32> -> vector<64x128xf32>
    %8 = arith.addf %3, %7 : vector<64x128xf32>
    %c0_10 = arith.constant 0 : index
    %c0_11 = arith.constant 0 : index
    %9 = vector.load %arg5[%c0_10, %c0_11] : memref<1x128xf32, #tpu.memory_space<vmem>>, vector<1x128xf32>
    %10 = vector.broadcast %9 : vector<1x128xf32> to vector<64x128xf32>
    %11 = arith.mulf %8, %10 : vector<64x128xf32>
    %c0_12 = arith.constant 0 : index
    %c0_13 = arith.constant 0 : index
    %12 = vector.load %arg6[%c0_12, %c0_13] : memref<1x128xf32, #tpu.memory_space<vmem>>, vector<1x128xf32>
    %13 = vector.broadcast %12 : vector<1x128xf32> to vector<64x128xf32>
    %14 = arith.addf %11, %13 : vector<64x128xf32>
    %cst_14 = arith.constant 0.000000e+00 : f32
    %15 = vector.broadcast %cst_14 : f32 to vector<64x128xf32>
    %16 = arith.maximumf %14, %15 : vector<64x128xf32>
    %17 = arith.truncf %16 : vector<64x128xf32> to vector<64x128xbf16>
    %c0_15 = arith.constant 0 : index
    %c0_16 = arith.constant 0 : index
    %c0_17 = arith.constant 0 : index
    %18 = vector.load %arg7[%c0_15, %c0_16, %c0_17] : memref<1x64x128xbf16, #tpu.memory_space<vmem>>, vector<1x64x128xbf16>
    %19 = vector.shape_cast %18 : vector<1x64x128xbf16> to vector<64x128xbf16>
    %20 = vector.shape_cast %17 : vector<64x128xbf16> to vector<1x64x128xbf16>
    tpu.vector_store %arg7[%c0_15, %c0_16, %c0_17], %20 {strides = array<i32>} : memref<1x64x128xbf16, #tpu.memory_space<vmem>>, vector<1x64x128xbf16>,
    return
  }
  func.func @transform_0(%arg0: i32) -> (i32, i32, i32) {
    %c0_i32 = arith.constant 0 : i32
    %c0_i32_0 = arith.constant 0 : i32
    %c0_i32_1 = arith.constant 0 : i32
    return %arg0, %c0_i32, %c0_i32_0 : i32, i32, i32
  }
  func.func @transform_1(%arg0: i32) -> (i32, i32, i32) {
    %c0_i32 = arith.constant 0 : i32
    %c0_i32_0 = arith.constant 0 : i32
    %c0_i32_1 = arith.constant 0 : i32
    return %arg0, %c0_i32, %c0_i32_0 : i32, i32, i32
  }
  func.func @transform_2(%arg0: i32) -> (i32, i32) {
    %c0_i32 = arith.constant 0 : i32
    %c0_i32_0 = arith.constant 0 : i32
    %c0_i32_1 = arith.constant 0 : i32
    return %c0_i32, %c0_i32_0 : i32, i32
  }
  func.func @transform_3(%arg0: i32) -> (i32, i32) {
    %c0_i32 = arith.constant 0 : i32
    %c0_i32_0 = arith.constant 0 : i32
    %c0_i32_1 = arith.constant 0 : i32
    return %c0_i32, %c0_i32_0 : i32, i32
  }
  func.func @transform_4(%arg0: i32) -> (i32, i32) {
    %c0_i32 = arith.constant 0 : i32
    %c0_i32_0 = arith.constant 0 : i32
    %c0_i32_1 = arith.constant 0 : i32
    return %c0_i32, %c0_i32_0 : i32, i32
  }
  func.func @transform_5(%arg0: i32) -> (i32, i32) {
    %c0_i32 = arith.constant 0 : i32
    %c0_i32_0 = arith.constant 0 : i32
    %c0_i32_1 = arith.constant 0 : i32
    return %c0_i32, %c0_i32_0 : i32, i32
  }
  func.func @transform_6(%arg0: i32) -> (i32, i32, i32) {
    %c0_i32 = arith.constant 0 : i32
    %c0_i32_0 = arith.constant 0 : i32
    %c0_i32_1 = arith.constant 0 : i32
    return %arg0, %c0_i32, %c0_i32_0 : i32, i32, i32
  }
}

module attributes {stable_mosaic.version = 11 : i64} {
  func.func @_root_kernel(%arg0: i32, %arg1: memref<1x64x128xbf16, #tpu.memory_space<vmem>>, %arg2: memref<1x64x128xbf16, #tpu.memory_space<vmem>>, %arg3: memref<1x64x64xbf16, #tpu.memory_space<vmem>>, %arg4: memref<1x64x128xbf16, #tpu.memory_space<vmem>>, %arg5: memref<128x128xbf16, #tpu.memory_space<vmem>>, %arg6: memref<128x128xbf16, #tpu.memory_space<vmem>>, %arg7: memref<64x128xbf16, #tpu.memory_space<vmem>>, %arg8: memref<128x128xbf16, #tpu.memory_space<vmem>>, %arg9: memref<1x128xf32, #tpu.memory_space<vmem>>, %arg10: memref<1x128xf32, #tpu.memory_space<vmem>>, %arg11: memref<1x64x128xbf16, #tpu.memory_space<vmem>>) attributes {dimension_semantics = [#tpu.dimension_semantics<parallel>], iteration_bounds = array<i64: 2>, scalar_prefetch = 0 : i64, scratch_operands = 0 : i64, tpu.core_type = #tpu.core_type<tc>, window_params = [{transform_indices = @transform_0, window_bounds = array<i64: 1, 64, 128>}, {transform_indices = @transform_1, window_bounds = array<i64: 1, 64, 128>}, {transform_indices = @transform_2, window_bounds = array<i64: 1, 64, 64>}, {transform_indices = @transform_3, window_bounds = array<i64: 1, 64, 128>}, {pipeline_mode = #tpu.pipeline_mode<synchronous>, transform_indices = @transform_4, window_bounds = array<i64: 128, 128>}, {pipeline_mode = #tpu.pipeline_mode<synchronous>, transform_indices = @transform_5, window_bounds = array<i64: 128, 128>}, {pipeline_mode = #tpu.pipeline_mode<synchronous>, transform_indices = @transform_6, window_bounds = array<i64: 64, 128>}, {pipeline_mode = #tpu.pipeline_mode<synchronous>, transform_indices = @transform_7, window_bounds = array<i64: 128, 128>}, {pipeline_mode = #tpu.pipeline_mode<synchronous>, transform_indices = @transform_8, window_bounds = array<i64: 1, 128>}, {pipeline_mode = #tpu.pipeline_mode<synchronous>, transform_indices = @transform_9, window_bounds = array<i64: 1, 128>}, {transform_indices = @transform_10, window_bounds = array<i64: 1, 64, 128>}]} {
    %c0 = arith.constant 0 : index
    %c0_0 = arith.constant 0 : index
    %c0_1 = arith.constant 0 : index
    %0 = vector.load %arg1[%c0, %c0_0, %c0_1] : memref<1x64x128xbf16, #tpu.memory_space<vmem>>, vector<1x64x128xbf16>
    %1 = vector.shape_cast %0 : vector<1x64x128xbf16> to vector<64x128xbf16>
    %c0_2 = arith.constant 0 : index
    %c0_3 = arith.constant 0 : index
    %2 = vector.load %arg5[%c0_2, %c0_3] : memref<128x128xbf16, #tpu.memory_space<vmem>>, vector<128x128xbf16>
    %cst = arith.constant dense<0.000000e+00> : vector<64x128xf32>
    %3 = tpu.matmul %1, %2, %cst {dimension_numbers = #tpu.dot_dimension_numbers<[1], [0], [0], [1], [0, 0, 1, 1], [], []>} : vector<64x128xbf16>, vector<128x128xbf16>, vector<64x128xf32> -> vector<64x128xf32>
    %c0_4 = arith.constant 0 : index
    %c0_5 = arith.constant 0 : index
    %c0_6 = arith.constant 0 : index
    %4 = vector.load %arg2[%c0_4, %c0_5, %c0_6] : memref<1x64x128xbf16, #tpu.memory_space<vmem>>, vector<1x64x128xbf16>
    %5 = vector.shape_cast %4 : vector<1x64x128xbf16> to vector<64x128xbf16>
    %c0_7 = arith.constant 0 : index
    %c0_8 = arith.constant 0 : index
    %6 = vector.load %arg6[%c0_7, %c0_8] : memref<128x128xbf16, #tpu.memory_space<vmem>>, vector<128x128xbf16>
    %cst_9 = arith.constant dense<0.000000e+00> : vector<64x128xf32>
    %7 = tpu.matmul %5, %6, %cst_9 {dimension_numbers = #tpu.dot_dimension_numbers<[1], [0], [0], [1], [0, 0, 1, 1], [], []>} : vector<64x128xbf16>, vector<128x128xbf16>, vector<64x128xf32> -> vector<64x128xf32>
    %8 = arith.addf %3, %7 : vector<64x128xf32>
    %c0_10 = arith.constant 0 : index
    %c0_11 = arith.constant 0 : index
    %c0_12 = arith.constant 0 : index
    %9 = vector.load %arg3[%c0_10, %c0_11, %c0_12] : memref<1x64x64xbf16, #tpu.memory_space<vmem>>, vector<1x64x64xbf16>
    %10 = vector.shape_cast %9 : vector<1x64x64xbf16> to vector<64x64xbf16>
    %c0_13 = arith.constant 0 : index
    %c0_14 = arith.constant 0 : index
    %11 = vector.load %arg7[%c0_13, %c0_14] : memref<64x128xbf16, #tpu.memory_space<vmem>>, vector<64x128xbf16>
    %cst_15 = arith.constant dense<0.000000e+00> : vector<64x128xf32>
    %12 = tpu.matmul %10, %11, %cst_15 {dimension_numbers = #tpu.dot_dimension_numbers<[1], [0], [0], [1], [0, 0, 1, 1], [], []>} : vector<64x64xbf16>, vector<64x128xbf16>, vector<64x128xf32> -> vector<64x128xf32>
    %13 = arith.addf %8, %12 : vector<64x128xf32>
    %c0_16 = arith.constant 0 : index
    %c0_17 = arith.constant 0 : index
    %c0_18 = arith.constant 0 : index
    %14 = vector.load %arg4[%c0_16, %c0_17, %c0_18] : memref<1x64x128xbf16, #tpu.memory_space<vmem>>, vector<1x64x128xbf16>
    %15 = vector.shape_cast %14 : vector<1x64x128xbf16> to vector<64x128xbf16>
    %c0_19 = arith.constant 0 : index
    %c0_20 = arith.constant 0 : index
    %16 = vector.load %arg8[%c0_19, %c0_20] : memref<128x128xbf16, #tpu.memory_space<vmem>>, vector<128x128xbf16>
    %cst_21 = arith.constant dense<0.000000e+00> : vector<64x128xf32>
    %17 = tpu.matmul %15, %16, %cst_21 {dimension_numbers = #tpu.dot_dimension_numbers<[1], [0], [0], [1], [0, 0, 1, 1], [], []>} : vector<64x128xbf16>, vector<128x128xbf16>, vector<64x128xf32> -> vector<64x128xf32>
    %18 = arith.addf %13, %17 : vector<64x128xf32>
    %c0_22 = arith.constant 0 : index
    %c0_23 = arith.constant 0 : index
    %19 = vector.load %arg9[%c0_22, %c0_23] : memref<1x128xf32, #tpu.memory_space<vmem>>, vector<1x128xf32>
    %20 = vector.broadcast %19 : vector<1x128xf32> to vector<64x128xf32>
    %21 = arith.mulf %18, %20 : vector<64x128xf32>
    %c0_24 = arith.constant 0 : index
    %c0_25 = arith.constant 0 : index
    %22 = vector.load %arg10[%c0_24, %c0_25] : memref<1x128xf32, #tpu.memory_space<vmem>>, vector<1x128xf32>
    %23 = vector.broadcast %22 : vector<1x128xf32> to vector<64x128xf32>
    %24 = arith.addf %21, %23 : vector<64x128xf32>
    %cst_26 = arith.constant 0.000000e+00 : f32
    %25 = vector.broadcast %cst_26 : f32 to vector<64x128xf32>
    %26 = arith.maximumf %24, %25 : vector<64x128xf32>
    %27 = arith.truncf %26 : vector<64x128xf32> to vector<64x128xbf16>
    %c0_27 = arith.constant 0 : index
    %c0_28 = arith.constant 0 : index
    %c0_29 = arith.constant 0 : index
    %28 = vector.load %arg11[%c0_27, %c0_28, %c0_29] : memref<1x64x128xbf16, #tpu.memory_space<vmem>>, vector<1x64x128xbf16>
    %29 = vector.shape_cast %28 : vector<1x64x128xbf16> to vector<64x128xbf16>
    %30 = vector.shape_cast %27 : vector<64x128xbf16> to vector<1x64x128xbf16>
    tpu.vector_store %arg11[%c0_27, %c0_28, %c0_29], %30 {strides = array<i32>} : memref<1x64x128xbf16, #tpu.memory_space<vmem>>, vector<1x64x128xbf16>,
    return
  }
  func.func @transform_0(%arg0: i32) -> (i32, i32, i32) {
    %c0_i32 = arith.constant 0 : i32
    %c0_i32_0 = arith.constant 0 : i32
    %c0_i32_1 = arith.constant 0 : i32
    return %arg0, %c0_i32, %c0_i32_0 : i32, i32, i32
  }
  func.func @transform_1(%arg0: i32) -> (i32, i32, i32) {
    %c0_i32 = arith.constant 0 : i32
    %c0_i32_0 = arith.constant 0 : i32
    %c0_i32_1 = arith.constant 0 : i32
    return %arg0, %c0_i32, %c0_i32_0 : i32, i32, i32
  }
  func.func @transform_2(%arg0: i32) -> (i32, i32, i32) {
    %c0_i32 = arith.constant 0 : i32
    %c0_i32_0 = arith.constant 0 : i32
    %c0_i32_1 = arith.constant 0 : i32
    return %arg0, %c0_i32, %c0_i32_0 : i32, i32, i32
  }
  func.func @transform_3(%arg0: i32) -> (i32, i32, i32) {
    %c0_i32 = arith.constant 0 : i32
    %c0_i32_0 = arith.constant 0 : i32
    %c0_i32_1 = arith.constant 0 : i32
    return %arg0, %c0_i32, %c0_i32_0 : i32, i32, i32
  }
  func.func @transform_4(%arg0: i32) -> (i32, i32) {
    %c0_i32 = arith.constant 0 : i32
    %c0_i32_0 = arith.constant 0 : i32
    %c0_i32_1 = arith.constant 0 : i32
    return %c0_i32, %c0_i32_0 : i32, i32
  }
  func.func @transform_5(%arg0: i32) -> (i32, i32) {
    %c0_i32 = arith.constant 0 : i32
    %c0_i32_0 = arith.constant 0 : i32
    %c0_i32_1 = arith.constant 0 : i32
    return %c0_i32, %c0_i32_0 : i32, i32
  }
  func.func @transform_6(%arg0: i32) -> (i32, i32) {
    %c0_i32 = arith.constant 0 : i32
    %c0_i32_0 = arith.constant 0 : i32
    %c0_i32_1 = arith.constant 0 : i32
    return %c0_i32, %c0_i32_0 : i32, i32
  }
  func.func @transform_7(%arg0: i32) -> (i32, i32) {
    %c0_i32 = arith.constant 0 : i32
    %c0_i32_0 = arith.constant 0 : i32
    %c0_i32_1 = arith.constant 0 : i32
    return %c0_i32, %c0_i32_0 : i32, i32
  }
  func.func @transform_8(%arg0: i32) -> (i32, i32) {
    %c0_i32 = arith.constant 0 : i32
    %c0_i32_0 = arith.constant 0 : i32
    %c0_i32_1 = arith.constant 0 : i32
    return %c0_i32, %c0_i32_0 : i32, i32
  }
  func.func @transform_9(%arg0: i32) -> (i32, i32) {
    %c0_i32 = arith.constant 0 : i32
    %c0_i32_0 = arith.constant 0 : i32
    %c0_i32_1 = arith.constant 0 : i32
    return %c0_i32, %c0_i32_0 : i32, i32
  }
  func.func @transform_10(%arg0: i32) -> (i32, i32, i32) {
    %c0_i32 = arith.constant 0 : i32
    %c0_i32_0 = arith.constant 0 : i32
    %c0_i32_1 = arith.constant 0 : i32
    return %arg0, %c0_i32, %c0_i32_0 : i32, i32, i32
  }
}

</mosaic_0001>

<llo_original>
// kernel: _lambda_.14
$region0: #{_lambda_.14}
  #allocation0 [shape = 'u32[]', space=smem, size = 0x4, offset = 0x4, fixed_abs, tag = 'smem constant byte address 0x4 - core index']
  #allocation1 [shape = 'u32[144,128]{1,0:T(1,128)}', space=vmem, size = 0x12000, scoped, tag = 'internal scratch']
  %s0 = inlined_call_operand.vmem [shape: bf16[2,1,64,64], index: 0, kind: input, shape index: {}]
  %s1 = inlined_call_operand.vmem [shape: bf16[1,64,128], index: 1, kind: input, shape index: {}]
  %s2 = inlined_call_operand.vmem [shape: f32[1,128], index: 2, kind: input, shape index: {}]
  %s3 = inlined_call_operand.vmem [shape: f32[1,128], index: 3, kind: input, shape index: {}]
  %s4 = inlined_call_operand.vmem [shape: bf16[2,64,128], index: 4, kind: output, shape index: {}]
  %s5 = sld [smem:[#allocation0]]
  $region49: #{_lambda_.14} parent=0
    _
  %s7 = ssub.s32 1, %s5
  %s8 = scalar_select 0, %s7, %s5
  loop: start=0, step=1, limit=4
  $region2: #{_lambda_.14} parent=0 // loop_pre_header
    _
  $region3: #{_lambda_.14} parent=0 // loop_header
    %s10 = sphi 0, %s14
    %p11 = scmp.ge.s32.totalorder %s10, 4
    %s20 = sphi 0, %s22
    %s23 = sphi 0, %s20
    %s24 = sphi 0, %s23
    %s40 = sphi 0, %s24
    %s44 = sphi 0, %s44
    %s46 = sphi 0, %s44
    %s47 = sphi 0, %s46
    %s61 = sphi 0, %s47
    %s65 = sphi 0, %s65
    %s67 = sphi 0, %s65
    %s68 = sphi 0, %s67
    %s82 = sphi 0, %s68
    %s86 = sphi 0, %s86
    %s88 = sphi 0, %s86
    %s89 = sphi 0, %s88
    %s103 = sphi 0, %s89
    %s109 = sphi 0, %s111
    %s112 = sphi 0, %s109
    %s113 = sphi 0, %s112
    %s129 = sphi 0, %s113
  $region4: #{_lambda_.14} parent=0 // loop_header_branch
    %13 = sbr.rel (%p11) target = $region8
  $region5: #{_lambda_.14} parent=0 // loop_body
    %s15 = ssub.s32 %s10, 1
    %s16 = ssub.s32 %s10, 2
    %s17 = sadd.s32 %s10, 1
    %s18 = ssub.s32 %s10, %s17
    %p19 = scmp.eq.s32.totalorder %s18, 0
    %s21 = sadd.s32 %s20, 1
    %s22 = scalar_select %p19, %s20, %s21
    %p25 = pneg %p19
    %p26 = scmp.eq.s32.totalorder %s10, 1
    %p27 = por %p25, %p26
    %p28 = scmp.ne.s32.totalorder %s20, %s23
    %p29 = scmp.eq.s32.totalorder %s10, 0
    %p30 = por %p28, %p29
    %p31 = scmp.ne.s32.totalorder %s20, %s23
    %p32 = scmp.eq.s32.totalorder %s15, 1
    %p33 = por %p31, %p32
    %p34 = scmp.ne.s32.totalorder %s23, %s24
    %p35 = scmp.eq.s32.totalorder %s15, 0
    %p36 = por %p34, %p35
    %p37 = scmp.ne.s32.totalorder %s23, %s24
    %p38 = scmp.eq.s32.totalorder %s16, 1
    %p39 = por %p37, %p38
    %p41 = scmp.ne.s32.totalorder %s24, %s40
    %p42 = scmp.eq.s32.totalorder %s16, 0
    %p43 = por %p41, %p42
    %s45 = sadd.s32 %s44, 1
    %p48 = scmp.eq.s32.totalorder %s10, 1
    %p49 = scmp.ne.s32.totalorder %s44, %s46
    %p50 = scmp.eq.s32.totalorder %s10, 0
    %p51 = por %p49, %p50
    %p52 = scmp.ne.s32.totalorder %s44, %s46
    %p53 = scmp.eq.s32.totalorder %s15, 1
    %p54 = por %p52, %p53
    %p55 = scmp.ne.s32.totalorder %s46, %s47
    %p56 = scmp.eq.s32.totalorder %s15, 0
    %p57 = por %p55, %p56
    %p58 = scmp.ne.s32.totalorder %s46, %s47
    %p59 = scmp.eq.s32.totalorder %s16, 1
    %p60 = por %p58, %p59
    %p62 = scmp.ne.s32.totalorder %s47, %s61
    %p63 = scmp.eq.s32.totalorder %s16, 0
    %p64 = por %p62, %p63
    %s66 = sadd.s32 %s65, 1
    %p69 = scmp.eq.s32.totalorder %s10, 1
    %p70 = scmp.ne.s32.totalorder %s65, %s67
    %p71 = scmp.eq.s32.totalorder %s10, 0
    %p72 = por %p70, %p71
    %p73 = scmp.ne.s32.totalorder %s65, %s67
    %p74 = scmp.eq.s32.totalorder %s15, 1
    %p75 = por %p73, %p74
    %p76 = scmp.ne.s32.totalorder %s67, %s68
    %p77 = scmp.eq.s32.totalorder %s15, 0
    %p78 = por %p76, %p77
    %p79 = scmp.ne.s32.totalorder %s67, %s68
    %p80 = scmp.eq.s32.totalorder %s16, 1
    %p81 = por %p79, %p80
    %p83 = scmp.ne.s32.totalorder %s68, %s82
    %p84 = scmp.eq.s32.totalorder %s16, 0
    %p85 = por %p83, %p84
    %s87 = sadd.s32 %s86, 1
    %p90 = scmp.eq.s32.totalorder %s10, 1
    %p91 = scmp.ne.s32.totalorder %s86, %s88
    %p92 = scmp.eq.s32.totalorder %s10, 0
    %p93 = por %p91, %p92
    %p94 = scmp.ne.s32.totalorder %s86, %s88
    %p95 = scmp.eq.s32.totalorder %s15, 1
    %p96 = por %p94, %p95
    %p97 = scmp.ne.s32.totalorder %s88, %s89
    %p98 = scmp.eq.s32.totalorder %s15, 0
    %p99 = por %p97, %p98
    %p100 = scmp.ne.s32.totalorder %s88, %s89
    %p101 = scmp.eq.s32.totalorder %s16, 1
    %p102 = por %p100, %p101
    %p104 = scmp.ne.s32.totalorder %s89, %s103
    %p105 = scmp.eq.s32.totalorder %s16, 0
    %p106 = por %p104, %p105
    %s107 = ssub.s32 %s10, %s17
    %p108 = scmp.eq.s32.totalorder %s107, 0
    %s110 = sadd.s32 %s109, 1
    %s111 = scalar_select %p108, %s109, %s110
    %p114 = pneg %p108
    %p115 = scmp.eq.s32.totalorder %s10, 1
    %p116 = por %p114, %p115
    %p117 = scmp.ne.s32.totalorder %s109, %s112
    %p118 = scmp.eq.s32.totalorder %s10, 0
    %p119 = por %p117, %p118
    %p120 = scmp.ne.s32.totalorder %s109, %s112
    %p121 = scmp.eq.s32.totalorder %s15, 1
    %p122 = por %p120, %p121
    %p123 = scmp.ne.s32.totalorder %s112, %s113
    %p124 = scmp.eq.s32.totalorder %s15, 0
    %p125 = por %p123, %p124
    %p126 = scmp.ne.s32.totalorder %s112, %s113
    %p127 = scmp.eq.s32.totalorder %s16, 1
    %p128 = por %p126, %p127
    %p130 = scmp.ne.s32.totalorder %s113, %s129
    %p131 = scmp.eq.s32.totalorder %s16, 0
    %p132 = por %p130, %p131
    %p133 = scmp.le.s32.totalorder 1, %s10
    %p134 = scmp.lt.s32.totalorder %s10, 3
    %p135 = pnand %p133, %p134
    %p136 = pneg %p135
    // Predicated region
    $region9: #{_lambda_.14} parent=5 // pred_check
      _
    $region10: #{_lambda_.14} parent=5 // pred_check_branch
      %138 = sbr.rel (%p135) target = $region12
    $region11: #{_lambda_.14} parent=5 // pred_region
      %s139 = ssub.s32 %s10, 1
      // Predicated region
      $region13: #{_lambda_.14} parent=11 // pred_check
        %p140 = pneg %p57
      $region14: #{_lambda_.14} parent=11 // pred_check_branch
        %142 = sbr.rel (%p140) target = $region16
      $region15: #{_lambda_.14} parent=11 // pred_region
        _
      $region16: #{_lambda_.14} parent=11 // pred_fallthru
        _
      // Predicated region
      $region17: #{_lambda_.14} parent=11 // pred_check
        %p143 = pneg %p78
      $region18: #{_lambda_.14} parent=11 // pred_check_branch
        %145 = sbr.rel (%p143) target = $region20
      $region19: #{_lambda_.14} parent=11 // pred_region
        _
      $region20: #{_lambda_.14} parent=11 // pred_fallthru
        _
      // Predicated region
      $region21: #{_lambda_.14} parent=11 // pred_check
        %p146 = pneg %p99
      $region22: #{_lambda_.14} parent=11 // pred_check_branch
        %148 = sbr.rel (%p146) target = $region24
      $region23: #{_lambda_.14} parent=11 // pred_region
        _
      $region24: #{_lambda_.14} parent=11 // pred_fallthru
        _
    $region12: #{_lambda_.14} parent=5 // pred_fallthru
      _
    %p149 = scmp.lt.s32.totalorder %s10, 2
    // Predicated region
    $region25: #{_lambda_.14} parent=5 // pred_check
      %p150 = pneg %p149
    $region26: #{_lambda_.14} parent=5 // pred_check_branch
      %152 = sbr.rel (%p150) target = $region28
    $region27: #{_lambda_.14} parent=5 // pred_region
      // Predicated region
      $region29: #{_lambda_.14} parent=27 // pred_check
        %p153 = pneg %p30
      $region30: #{_lambda_.14} parent=27 // pred_check_branch
        %155 = sbr.rel (%p153) target = $region32
      $region31: #{_lambda_.14} parent=27 // pred_region
        %p156 = scmp.lt.s32.totalorder %s10, 1
        %s157 = scalar_select %p156, %s10, 1
        %s158 = smul.addr %s157, 8
        %s159 = smul.addr %s158, 4
        %s160 = scalar_lea.vmem %s0, %s159
      $region32: #{_lambda_.14} parent=27 // pred_fallthru
        _
    $region28: #{_lambda_.14} parent=5 // pred_fallthru
      _
    %p161 = scmp.le.s32.totalorder 1, %s10
    %p162 = scmp.lt.s32.totalorder %s10, 3
    %p163 = pnand %p161, %p162
    %p164 = pneg %p163
    // Predicated region
    $region33: #{_lambda_.14} parent=5 // pred_check
      _
    $region34: #{_lambda_.14} parent=5 // pred_check_branch
      %166 = sbr.rel (%p163) target = $region36
    $region35: #{_lambda_.14} parent=5 // pred_region
      %s167 = ssub.s32 %s10, 1
      %p168 = scmp.lt.s32.totalorder %s15, 1
      %s169 = scalar_select %p168, %s15, 1
      %s170 = smul.addr %s169, 8
      %s171 = smul.addr %s170, 4
      %s172 = scalar_lea.vmem %s0, %s171
      %p173 = pneg %p36
      %p174 = pneg %p33
      %p175 = pneg %p57
      %p176 = pneg %p54
      %p177 = pneg %p78
      %p178 = pneg %p75
      %p179 = pneg %p99
      %p180 = pneg %p96
      %p181 = pneg %p125
      %p182 = pneg %p122
      %p183 = scmp.lt.s32.totalorder %s15, 1
      %s184 = scalar_select %p183, %s15, 1
      %s185 = smul.addr %s184, 8
      %s186 = smul.addr %s185, 4
      %s187 = scalar_lea.vmem %s4, %s186
      %p188 = scmp.lt.s32.totalorder %s15, 1
      %s189 = scalar_select %p188, %s15, 1
      %s190 = smul.addr %s189, 8
      %s191 = smul.addr %s190, 4
      %s192 = scalar_lea.vmem %s0, %s191
      %p193 = scmp.lt.s32.totalorder %s15, 1
      %s194 = scalar_select %p193, %s15, 1
      %s195 = smul.addr %s194, 8
      %s196 = smul.addr %s195, 4
      %s197 = scalar_lea.vmem %s4, %s196
      %v199 = vld [vmem:[%s192] sm:$0xf]
      %v200 = vld [vmem:[%s192 + $0x4] sm:$0xf]
      %v201 = vld [vmem:[%s192 + $0x8] sm:$0xf]
      %v202 = vld [vmem:[%s192 + $0xc] sm:$0xf]
      %v203 = vld [vmem:[%s192 + $0x10] sm:$0xf]
      %v204 = vld [vmem:[%s192 + $0x14] sm:$0xf]
      %v205 = vld [vmem:[%s192 + $0x18] sm:$0xf]
      %v206 = vld [vmem:[%s192 + $0x1c] sm:$0xf]
      %v207 = vld [vmem:[%s1] sm:$0xf]
      %v208 = vld [vmem:[%s1 + $0x4] sm:$0xf]
      %v209 = vld [vmem:[%s1 + $0x8] sm:$0xf]
      %v210 = vld [vmem:[%s1 + $0xc] sm:$0xf]
      %v211 = vld [vmem:[%s1 + $0x10] sm:$0xf]
      %v212 = vld [vmem:[%s1 + $0x14] sm:$0xf]
      %v213 = vld [vmem:[%s1 + $0x18] sm:$0xf]
      %v214 = vld [vmem:[%s1 + $0x1c] sm:$0xf]
      %v223 = vunpack.c.l.b16 %v199
      %v224 = vunpack.c.l.b16 %v200
      %v225 = vunpack.c.l.b16 %v201
      %v226 = vunpack.c.l.b16 %v202
      %v227 = vunpack.c.l.b16 %v203
      %v228 = vunpack.c.l.b16 %v204
      %v229 = vunpack.c.l.b16 %v205
      %v230 = vunpack.c.l.b16 %v206
      %v231 = vpack.c.b16 %v224, %v223
      %v232 = vpack.c.b16 %v226, %v225
      %v233 = vpack.c.b16 %v228, %v227
      %v234 = vpack.c.b16 %v230, %v229
      %v243 = vunpack.c.l.b16 %v207
      %v244 = vunpack.c.l.b16 %v208
      %v245 = vunpack.c.l.b16 %v209
      %v246 = vunpack.c.l.b16 %v210
      %v247 = vunpack.c.l.b16 %v211
      %v248 = vunpack.c.l.b16 %v212
      %v249 = vunpack.c.l.b16 %v213
      %v250 = vunpack.c.l.b16 %v214
      %v251 = vpack.c.b16 %v244, %v243
      %v252 = vpack.c.b16 %v246, %v245
      %v253 = vpack.c.b16 %v248, %v247
      %v254 = vpack.c.b16 %v250, %v249
      %vm259 = vcmask 523264
      %v261 = vsel %vm259, %v231, 0
      %v264 = vsel %vm259, %v232, 0
      %v267 = vsel %vm259, %v233, 0
      %v270 = vsel %vm259, %v234, 0
      %272 = vmatprep.subr.bf16.mxu0 0
      %273 = vmatpush1.bf16.msra.mxu0 0
      %274 = vmatprep.subr.bf16.mxu0 0
      %275 = vmatpush1.bf16.msra.mxu0 0
      %276 = vmatprep.subr.bf16.mxu0 0
      %277 = vmatpush1.bf16.msra.mxu0 0
      %278 = vmatprep.subr.bf16.mxu0 0
      %279 = vmatpush1.bf16.msra.mxu0 0
      %280 = vmatprep.subr.bf16.mxu0 0
      %281 = vmatpush1.bf16.msra.mxu0 %v254
      %282 = vmatprep.subr.bf16.mxu0 0
      %283 = vmatpush1.bf16.msra.mxu0 %v253
      %284 = vmatprep.subr.bf16.mxu0 0
      %285 = vmatpush1.bf16.msra.mxu0 %v252
      %286 = vmatprep.subr.bf16.mxu0 0
      %287 = vmatpush1.bf16.msra.mxu0 %v251
      %288 = vmatprep.subr.bf16.mxu0 0
      %289 = vmatpush2.bf16.msra.mxu0 0
      %290 = vmatprep.subr.bf16.mxu0 0
      %291 = vmatpush2.bf16.msra.mxu0 0
      %292 = vmatprep.subr.bf16.mxu0 0
      %293 = vmatpush2.bf16.msra.mxu0 0
      %294 = vmatprep.subr.bf16.mxu0 0
      %295 = vmatpush2.bf16.msra.mxu0 0
      %296 = vmatprep.subr.bf16.mxu0 0
      %297 = vmatpush2.bf16.msra.mxu0 0
      %298 = vmatprep.subr.bf16.mxu0 0
      %299 = vmatpush2.bf16.msra.mxu0 0
      %300 = vmatprep.subr.bf16.mxu0 0
      %301 = vmatpush2.bf16.msra.mxu0 0
      %302 = vmatprep.subr.bf16.mxu0 0
      %303 = vmatpush2.bf16.msra.mxu0 0
      %304 = vmatprep.mubr.bf16.mxu0 0
      %305 = vmatmul.mubr.bf16.gmra.mxu0 %v261
      %v306 = vpop.f32.mrf.mxu0
      %v307 = vadd.f32 0.0, %v306
      %v308 = vpop.f32.mrf.mxu0
      %v309 = vpop.f32.mrf.mxu0
      %v310 = vadd.f32 0.0, %v309
      %v311 = vpop.f32.mrf.mxu0
      %312 = vmatprep.mubr.bf16.mxu0 0
      %313 = vmatmul.mubr.bf16.gmra.mxu0 %v264
      %v314 = vpop.f32.mrf.mxu0
      %v315 = vadd.f32 0.0, %v314
      %v316 = vpop.f32.mrf.mxu0
      %v317 = vpop.f32.mrf.mxu0
      %v318 = vadd.f32 0.0, %v317
      %v319 = vpop.f32.mrf.mxu0
      %320 = vmatprep.mubr.bf16.mxu0 0
      %321 = vmatmul.mubr.bf16.gmra.mxu0 %v267
      %v322 = vpop.f32.mrf.mxu0
      %v323 = vadd.f32 0.0, %v322
      %v324 = vpop.f32.mrf.mxu0
      %v325 = vpop.f32.mrf.mxu0
      %v326 = vadd.f32 0.0, %v325
      %v327 = vpop.f32.mrf.mxu0
      %328 = vmatprep.mubr.bf16.mxu0 0
      %329 = vmatmul.mubr.bf16.gmra.mxu0 %v270
      %v330 = vpop.f32.mrf.mxu0
      %v331 = vadd.f32 0.0, %v330
      %v332 = vpop.f32.mrf.mxu0
      %v333 = vpop.f32.mrf.mxu0
      %v334 = vadd.f32 0.0, %v333
      %v335 = vpop.f32.mrf.mxu0
      %336 = vdwg.mxu0
      %v337 = vld [vmem:[%s2] sm:$0x1]
      %v339 = vlaneseq
      %v340 = vshrl.u32 %v339, 7
      %v341 = vsub.s32 0, %v340
      %v342 = vrot.slane %v337, %v341
      %v344 = vmul.f32 %v307, %v342
      %v345 = vmul.f32 %v310, %v342
      %v346 = vmul.f32 %v315, %v342
      %v347 = vmul.f32 %v318, %v342
      %v348 = vmul.f32 %v323, %v342
      %v349 = vmul.f32 %v326, %v342
      %v350 = vmul.f32 %v331, %v342
      %v351 = vmul.f32 %v334, %v342
      %v352 = vld [vmem:[%s3] sm:$0x1]
      %v354 = vlaneseq
      %v355 = vshrl.u32 %v354, 7
      %v356 = vsub.s32 0, %v355
      %v357 = vrot.slane %v352, %v356
      %v359 = vadd.f32 %v344, %v357
      %v360 = vadd.f32 %v345, %v357
      %v361 = vadd.f32 %v346, %v357
      %v362 = vadd.f32 %v347, %v357
      %v363 = vadd.f32 %v348, %v357
      %v364 = vadd.f32 %v349, %v357
      %v365 = vadd.f32 %v350, %v357
      %v366 = vadd.f32 %v351, %v357
      %v367 = vpack.c.bf16 %v360, %v359
      %v368 = vpack.c.bf16 %v362, %v361
      %v369 = vpack.c.bf16 %v364, %v363
      %v370 = vpack.c.bf16 %v366, %v365
      %v375 = vunpack.c.l.b16 %v367
      %v376 = vunpack.c.h.b16 %v367
      %v377 = vunpack.c.l.b16 %v368
      %v378 = vunpack.c.h.b16 %v368
      %v379 = vunpack.c.l.b16 %v369
      %v380 = vunpack.c.h.b16 %v369
      %v381 = vunpack.c.l.b16 %v370
      %v382 = vunpack.c.h.b16 %v370
      %v383 = vpack.c.b16 %v375, %v375
      %v384 = vpack.c.b16 %v376, %v376
      %v385 = vpack.c.b16 %v377, %v377
      %v386 = vpack.c.b16 %v378, %v378
      %v387 = vpack.c.b16 %v379, %v379
      %v388 = vpack.c.b16 %v380, %v380
      %v389 = vpack.c.b16 %v381, %v381
      %v390 = vpack.c.b16 %v382, %v382
      %399 = vst [vmem:[%s197] sm:$0xf] %v383
      %400 = vst [vmem:[%s197 + $0x4] sm:$0xf] %v384
      %401 = vst [vmem:[%s197 + $0x8] sm:$0xf] %v385
      %402 = vst [vmem:[%s197 + $0xc] sm:$0xf] %v386
      %403 = vst [vmem:[%s197 + $0x10] sm:$0xf] %v387
      %404 = vst [vmem:[%s197 + $0x14] sm:$0xf] %v388
      %405 = vst [vmem:[%s197 + $0x18] sm:$0xf] %v389
      %406 = vst [vmem:[%s197 + $0x1c] sm:$0xf] %v390
      %p407 = scmp.lt.s32.totalorder %s15, 1
      %s408 = scalar_select %p407, %s15, 1
      %s409 = smul.addr %s408, 8
      %s410 = smul.addr %s409, 4
      %s411 = scalar_lea.vmem %s4, %s410
      // Predicated region
      $region37: #{_lambda_.14} parent=35 // pred_check
        %p412 = pneg %p122
      $region38: #{_lambda_.14} parent=35 // pred_check_branch
        %414 = sbr.rel (%p412) target = $region40
      $region39: #{_lambda_.14} parent=35 // pred_region
        _
      $region40: #{_lambda_.14} parent=35 // pred_fallthru
        _
    $region36: #{_lambda_.14} parent=5 // pred_fallthru
      _
    %p415 = scmp.le.s32.totalorder 2, %s10
    // Predicated region
    $region41: #{_lambda_.14} parent=5 // pred_check
      %p416 = pneg %p415
    $region42: #{_lambda_.14} parent=5 // pred_check_branch
      %418 = sbr.rel (%p416) target = $region44
    $region43: #{_lambda_.14} parent=5 // pred_region
      %s419 = ssub.s32 %s10, 2
      // Predicated region
      $region45: #{_lambda_.14} parent=43 // pred_check
        %p420 = pneg %p128
      $region46: #{_lambda_.14} parent=43 // pred_check_branch
        %422 = sbr.rel (%p420) target = $region48
      $region47: #{_lambda_.14} parent=43 // pred_region
        %p423 = scmp.lt.s32.totalorder %s16, 1
        %s424 = scalar_select %p423, %s16, 1
        %s425 = smul.addr %s424, 8
        %s426 = smul.addr %s425, 4
        %s427 = scalar_lea.vmem %s4, %s426
      $region48: #{_lambda_.14} parent=43 // pred_fallthru
        _
    $region44: #{_lambda_.14} parent=5 // pred_fallthru
      _
  $region6: #{_lambda_.14} parent=0 // loop_footer
    %s14 = sadd.s32 1, %s10
  $region7: #{_lambda_.14} parent=0 // loop_footer_branch
    %9 = sbr.rel target = $region3
  $region8: #{_lambda_.14} parent=0 // loop_exit
    _

// kernel: _lambda_.13
$region0: #{_lambda_.13}
  #allocation0 [shape = 'u32[]', space=smem, size = 0x4, offset = 0x4, fixed_abs, tag = 'smem constant byte address 0x4 - core index']
  #allocation1 [shape = 'u32[144,128]{1,0:T(1,128)}', space=vmem, size = 0x12000, scoped, tag = 'internal scratch']
  %s0 = inlined_call_operand.vmem [shape: bf16[2,8,2,8,128], index: 0, kind: input, shape index: {}]
  %s1 = inlined_call_operand.vmem [shape: bf16[2,8,8,64], index: 1, kind: output, shape index: {}]
  %s2 = sld [smem:[#allocation0]]
  $region37: #{_lambda_.13} parent=0
    _
  %s4 = ssub.s32 1, %s2
  %s5 = scalar_select 0, %s4, %s2
  loop: start=0, step=1, limit=4
  $region2: #{_lambda_.13} parent=0 // loop_pre_header
    _
  $region3: #{_lambda_.13} parent=0 // loop_header
    %s7 = sphi 0, %s11
    %p8 = scmp.ge.s32.totalorder %s7, 4
    %s17 = sphi 0, %s19
    %s20 = sphi 0, %s17
    %s21 = sphi 0, %s20
    %s37 = sphi 0, %s21
    %s43 = sphi 0, %s45
    %s46 = sphi 0, %s43
    %s47 = sphi 0, %s46
    %s63 = sphi 0, %s47
  $region4: #{_lambda_.13} parent=0 // loop_header_branch
    %10 = sbr.rel (%p8) target = $region8
  $region5: #{_lambda_.13} parent=0 // loop_body
    %s12 = ssub.s32 %s7, 1
    %s13 = ssub.s32 %s7, 2
    %s14 = sadd.s32 %s7, 1
    %s15 = ssub.s32 %s7, %s14
    %p16 = scmp.eq.s32.totalorder %s15, 0
    %s18 = sadd.s32 %s17, 1
    %s19 = scalar_select %p16, %s17, %s18
    %p22 = pneg %p16
    %p23 = scmp.eq.s32.totalorder %s7, 1
    %p24 = por %p22, %p23
    %p25 = scmp.ne.s32.totalorder %s17, %s20
    %p26 = scmp.eq.s32.totalorder %s7, 0
    %p27 = por %p25, %p26
    %p28 = scmp.ne.s32.totalorder %s17, %s20
    %p29 = scmp.eq.s32.totalorder %s12, 1
    %p30 = por %p28, %p29
    %p31 = scmp.ne.s32.totalorder %s20, %s21
    %p32 = scmp.eq.s32.totalorder %s12, 0
    %p33 = por %p31, %p32
    %p34 = scmp.ne.s32.totalorder %s20, %s21
    %p35 = scmp.eq.s32.totalorder %s13, 1
    %p36 = por %p34, %p35
    %p38 = scmp.ne.s32.totalorder %s21, %s37
    %p39 = scmp.eq.s32.totalorder %s13, 0
    %p40 = por %p38, %p39
    %s41 = ssub.s32 %s7, %s14
    %p42 = scmp.eq.s32.totalorder %s41, 0
    %s44 = sadd.s32 %s43, 1
    %s45 = scalar_select %p42, %s43, %s44
    %p48 = pneg %p42
    %p49 = scmp.eq.s32.totalorder %s7, 1
    %p50 = por %p48, %p49
    %p51 = scmp.ne.s32.totalorder %s43, %s46
    %p52 = scmp.eq.s32.totalorder %s7, 0
    %p53 = por %p51, %p52
    %p54 = scmp.ne.s32.totalorder %s43, %s46
    %p55 = scmp.eq.s32.totalorder %s12, 1
    %p56 = por %p54, %p55
    %p57 = scmp.ne.s32.totalorder %s46, %s47
    %p58 = scmp.eq.s32.totalorder %s12, 0
    %p59 = por %p57, %p58
    %p60 = scmp.ne.s32.totalorder %s46, %s47
    %p61 = scmp.eq.s32.totalorder %s13, 1
    %p62 = por %p60, %p61
    %p64 = scmp.ne.s32.totalorder %s47, %s63
    %p65 = scmp.eq.s32.totalorder %s13, 0
    %p66 = por %p64, %p65
    %p67 = scmp.le.s32.totalorder 1, %s7
    %p68 = scmp.lt.s32.totalorder %s7, 3
    %p69 = pnand %p67, %p68
    %p70 = pneg %p69
    // Predicated region
    $region9: #{_lambda_.13} parent=5 // pred_check
      _
    $region10: #{_lambda_.13} parent=5 // pred_check_branch
      %72 = sbr.rel (%p69) target = $region12
    $region11: #{_lambda_.13} parent=5 // pred_region
      %s73 = ssub.s32 %s7, 1
    $region12: #{_lambda_.13} parent=5 // pred_fallthru
      _
    %p74 = scmp.lt.s32.totalorder %s7, 2
    // Predicated region
    $region13: #{_lambda_.13} parent=5 // pred_check
      %p75 = pneg %p74
    $region14: #{_lambda_.13} parent=5 // pred_check_branch
      %77 = sbr.rel (%p75) target = $region16
    $region15: #{_lambda_.13} parent=5 // pred_region
      // Predicated region
      $region17: #{_lambda_.13} parent=15 // pred_check
        %p78 = pneg %p27
      $region18: #{_lambda_.13} parent=15 // pred_check_branch
        %80 = sbr.rel (%p78) target = $region20
      $region19: #{_lambda_.13} parent=15 // pred_region
        %p81 = scmp.lt.s32.totalorder %s7, 1
        %s82 = scalar_select %p81, %s7, 1
        %s83 = smul.addr %s82, 16
        %s84 = smul.addr %s83, 4
        %s85 = scalar_lea.vmem %s0, %s84
      $region20: #{_lambda_.13} parent=15 // pred_fallthru
        _
    $region16: #{_lambda_.13} parent=5 // pred_fallthru
      _
    %p86 = scmp.le.s32.totalorder 1, %s7
    %p87 = scmp.lt.s32.totalorder %s7, 3
    %p88 = pnand %p86, %p87
    %p89 = pneg %p88
    // Predicated region
    $region21: #{_lambda_.13} parent=5 // pred_check
      _
    $region22: #{_lambda_.13} parent=5 // pred_check_branch
      %91 = sbr.rel (%p88) target = $region24
    $region23: #{_lambda_.13} parent=5 // pred_region
      %s92 = ssub.s32 %s7, 1
      %p93 = scmp.lt.s32.totalorder %s12, 1
      %s94 = scalar_select %p93, %s12, 1
      %s95 = smul.addr %s94, 16
      %s96 = smul.addr %s95, 4
      %s97 = scalar_lea.vmem %s0, %s96
      %p98 = pneg %p33
      %p99 = pneg %p30
      %p100 = pneg %p59
      %p101 = pneg %p56
      %p102 = scmp.lt.s32.totalorder %s12, 1
      %s103 = scalar_select %p102, %s12, 1
      %s104 = smul.addr %s103, 8
      %s105 = smul.addr %s104, 4
      %s106 = scalar_lea.vmem %s1, %s105
      %p107 = scmp.lt.s32.totalorder %s12, 1
      %s108 = scalar_select %p107, %s12, 1
      %s109 = smul.addr %s108, 16
      %s110 = smul.addr %s109, 4
      %s111 = scalar_lea.vmem %s0, %s110
      %p112 = scmp.lt.s32.totalorder %s12, 1
      %s113 = scalar_select %p112, %s12, 1
      %s114 = smul.addr %s113, 8
      %s115 = smul.addr %s114, 4
      %s116 = scalar_lea.vmem %s1, %s115
      %v117 = vld [vmem:[%s111] sm:$0xf]
      %v118 = vld [vmem:[%s111 + $0x8] sm:$0xf]
      %v119 = vld [vmem:[%s111 + $0x10] sm:$0xf]
      %v120 = vld [vmem:[%s111 + $0x18] sm:$0xf]
      %v121 = vld [vmem:[%s111 + $0x20] sm:$0xf]
      %v122 = vld [vmem:[%s111 + $0x28] sm:$0xf]
      %v123 = vld [vmem:[%s111 + $0x30] sm:$0xf]
      %v124 = vld [vmem:[%s111 + $0x38] sm:$0xf]
      %133 = vrot.lane.b32.xlu0 %v117, 64
      %v134 = vpop.permute.xlu0 %133
      %135 = vrot.lane.b32.xlu0 %v118, 64
      %v136 = vpop.permute.xlu0 %135
      %137 = vrot.lane.b32.xlu0 %v119, 64
      %v138 = vpop.permute.xlu0 %137
      %139 = vrot.lane.b32.xlu0 %v120, 64
      %v140 = vpop.permute.xlu0 %139
      %141 = vrot.lane.b32.xlu0 %v121, 64
      %v142 = vpop.permute.xlu0 %141
      %143 = vrot.lane.b32.xlu0 %v122, 64
      %v144 = vpop.permute.xlu0 %143
      %145 = vrot.lane.b32.xlu0 %v123, 64
      %v146 = vpop.permute.xlu0 %145
      %147 = vrot.lane.b32.xlu0 %v124, 64
      %v148 = vpop.permute.xlu0 %147
      %v157 = vmax.bf16 %v117, %v134
      %v158 = vmax.bf16 %v118, %v136
      %v159 = vmax.bf16 %v119, %v138
      %v160 = vmax.bf16 %v120, %v140
      %v161 = vmax.bf16 %v121, %v142
      %v162 = vmax.bf16 %v122, %v144
      %v163 = vmax.bf16 %v123, %v146
      %v164 = vmax.bf16 %v124, %v148
      %s165 = scalar_lea.vmem %s111, 4
      %v166 = vld [vmem:[%s165] sm:$0xf]
      %v167 = vld [vmem:[%s165 + $0x8] sm:$0xf]
      %v168 = vld [vmem:[%s165 + $0x10] sm:$0xf]
      %v169 = vld [vmem:[%s165 + $0x18] sm:$0xf]
      %v170 = vld [vmem:[%s165 + $0x20] sm:$0xf]
      %v171 = vld [vmem:[%s165 + $0x28] sm:$0xf]
      %v172 = vld [vmem:[%s165 + $0x30] sm:$0xf]
      %v173 = vld [vmem:[%s165 + $0x38] sm:$0xf]
      %v174 = vmax.bf16 %v157, %v166
      %v175 = vmax.bf16 %v158, %v167
      %v176 = vmax.bf16 %v159, %v168
      %v177 = vmax.bf16 %v160, %v169
      %v178 = vmax.bf16 %v161, %v170
      %v179 = vmax.bf16 %v162, %v171
      %v180 = vmax.bf16 %v163, %v172
      %v181 = vmax.bf16 %v164, %v173
      %190 = vrot.lane.b32.xlu0 %v166, 64
      %v191 = vpop.permute.xlu0 %190
      %192 = vrot.lane.b32.xlu0 %v167, 64
      %v193 = vpop.permute.xlu0 %192
      %194 = vrot.lane.b32.xlu0 %v168, 64
      %v195 = vpop.permute.xlu0 %194
      %196 = vrot.lane.b32.xlu0 %v169, 64
      %v197 = vpop.permute.xlu0 %196
      %198 = vrot.lane.b32.xlu0 %v170, 64
      %v199 = vpop.permute.xlu0 %198
      %200 = vrot.lane.b32.xlu0 %v171, 64
      %v201 = vpop.permute.xlu0 %200
      %202 = vrot.lane.b32.xlu0 %v172, 64
      %v203 = vpop.permute.xlu0 %202
      %204 = vrot.lane.b32.xlu0 %v173, 64
      %v205 = vpop.permute.xlu0 %204
      %v214 = vmax.bf16 %v174, %v191
      %v215 = vmax.bf16 %v175, %v193
      %v216 = vmax.bf16 %v176, %v195
      %v217 = vmax.bf16 %v177, %v197
      %v218 = vmax.bf16 %v178, %v199
      %v219 = vmax.bf16 %v179, %v201
      %v220 = vmax.bf16 %v180, %v203
      %v221 = vmax.bf16 %v181, %v205
      %vm222 = vcmask 519168
      %223 = vst.msk [vmem:[%s116] sm:$0xf] %vm222, %v214
      %224 = vst.msk [vmem:[%s116 + $0x4] sm:$0xf] %vm222, %v215
      %225 = vst.msk [vmem:[%s116 + $0x8] sm:$0xf] %vm222, %v216
      %226 = vst.msk [vmem:[%s116 + $0xc] sm:$0xf] %vm222, %v217
      %227 = vst.msk [vmem:[%s116 + $0x10] sm:$0xf] %vm222, %v218
      %228 = vst.msk [vmem:[%s116 + $0x14] sm:$0xf] %vm222, %v219
      %229 = vst.msk [vmem:[%s116 + $0x18] sm:$0xf] %vm222, %v220
      %230 = vst.msk [vmem:[%s116 + $0x1c] sm:$0xf] %vm222, %v221
      %p231 = scmp.lt.s32.totalorder %s12, 1
      %s232 = scalar_select %p231, %s12, 1
      %s233 = smul.addr %s232, 8
      %s234 = smul.addr %s233, 4
      %s235 = scalar_lea.vmem %s1, %s234
      // Predicated region
      $region25: #{_lambda_.13} parent=23 // pred_check
        %p236 = pneg %p56
      $region26: #{_lambda_.13} parent=23 // pred_check_branch
        %238 = sbr.rel (%p236) target = $region28
      $region27: #{_lambda_.13} parent=23 // pred_region
        _
      $region28: #{_lambda_.13} parent=23 // pred_fallthru
        _
    $region24: #{_lambda_.13} parent=5 // pred_fallthru
      _
    %p239 = scmp.le.s32.totalorder 2, %s7
    // Predicated region
    $region29: #{_lambda_.13} parent=5 // pred_check
      %p240 = pneg %p239
    $region30: #{_lambda_.13} parent=5 // pred_check_branch
      %242 = sbr.rel (%p240) target = $region32
    $region31: #{_lambda_.13} parent=5 // pred_region
      %s243 = ssub.s32 %s7, 2
      // Predicated region
      $region33: #{_lambda_.13} parent=31 // pred_check
        %p244 = pneg %p62
      $region34: #{_lambda_.13} parent=31 // pred_check_branch
        %246 = sbr.rel (%p244) target = $region36
      $region35: #{_lambda_.13} parent=31 // pred_region
        %p247 = scmp.lt.s32.totalorder %s13, 1
        %s248 = scalar_select %p247, %s13, 1
        %s249 = smul.addr %s248, 8
        %s250 = smul.addr %s249, 4
        %s251 = scalar_lea.vmem %s1, %s250
      $region36: #{_lambda_.13} parent=31 // pred_fallthru
        _
    $region32: #{_lambda_.13} parent=5 // pred_fallthru
      _
  $region6: #{_lambda_.13} parent=0 // loop_footer
    %s11 = sadd.s32 1, %s7
  $region7: #{_lambda_.13} parent=0 // loop_footer_branch
    %6 = sbr.rel target = $region3
  $region8: #{_lambda_.13} parent=0 // loop_exit
    _

// kernel: _lambda_.19
$region0: #{_lambda_.19}
  #allocation0 [shape = 'u32[]', space=smem, size = 0x4, offset = 0x4, fixed_abs, tag = 'smem constant byte address 0x4 - core index']
  #allocation1 [shape = 'u32[144,128]{1,0:T(1,128)}', space=vmem, size = 0x12000, scoped, tag = 'internal scratch']
  %s0 = inlined_call_operand.vmem [shape: bf16[2,64,128], index: 0, kind: input, shape index: {}]
  %s1 = inlined_call_operand.vmem [shape: bf16[2,64,128], index: 1, kind: input, shape index: {}]
  %s2 = inlined_call_operand.vmem [shape: bf16[128,128], index: 2, kind: input, shape index: {}]
  %s3 = inlined_call_operand.vmem [shape: bf16[128,128], index: 3, kind: input, shape index: {}]
  %s4 = inlined_call_operand.vmem [shape: f32[1,128], index: 4, kind: input, shape index: {}]
  %s5 = inlined_call_operand.vmem [shape: f32[1,128], index: 5, kind: input, shape index: {}]
  %s6 = inlined_call_operand.vmem [shape: bf16[2,64,128], index: 6, kind: output, shape index: {}]
  %s7 = sld [smem:[#allocation0]]
  $region57: #{_lambda_.19} parent=0
    _
  %s9 = ssub.s32 1, %s7
  %s10 = scalar_select 0, %s9, %s7
  loop: start=0, step=1, limit=4
  $region2: #{_lambda_.19} parent=0 // loop_pre_header
    _
  $region3: #{_lambda_.19} parent=0 // loop_header
    %s12 = sphi 0, %s16
    %p13 = scmp.ge.s32.totalorder %s12, 4
    %s22 = sphi 0, %s24
    %s25 = sphi 0, %s22
    %s26 = sphi 0, %s25
    %s42 = sphi 0, %s26
    %s48 = sphi 0, %s50
    %s51 = sphi 0, %s48
    %s52 = sphi 0, %s51
    %s68 = sphi 0, %s52
    %s72 = sphi 0, %s72
    %s74 = sphi 0, %s72
    %s75 = sphi 0, %s74
    %s89 = sphi 0, %s75
    %s93 = sphi 0, %s93
    %s95 = sphi 0, %s93
    %s96 = sphi 0, %s95
    %s110 = sphi 0, %s96
    %s114 = sphi 0, %s114
    %s116 = sphi 0, %s114
    %s117 = sphi 0, %s116
    %s131 = sphi 0, %s117
    %s135 = sphi 0, %s135
    %s137 = sphi 0, %s135
    %s138 = sphi 0, %s137
    %s152 = sphi 0, %s138
    %s158 = sphi 0, %s160
    %s161 = sphi 0, %s158
    %s162 = sphi 0, %s161
    %s178 = sphi 0, %s162
  $region4: #{_lambda_.19} parent=0 // loop_header_branch
    %15 = sbr.rel (%p13) target = $region8
  $region5: #{_lambda_.19} parent=0 // loop_body
    %s17 = ssub.s32 %s12, 1
    %s18 = ssub.s32 %s12, 2
    %s19 = sadd.s32 %s12, 1
    %s20 = ssub.s32 %s12, %s19
    %p21 = scmp.eq.s32.totalorder %s20, 0
    %s23 = sadd.s32 %s22, 1
    %s24 = scalar_select %p21, %s22, %s23
    %p27 = pneg %p21
    %p28 = scmp.eq.s32.totalorder %s12, 1
    %p29 = por %p27, %p28
    %p30 = scmp.ne.s32.totalorder %s22, %s25
    %p31 = scmp.eq.s32.totalorder %s12, 0
    %p32 = por %p30, %p31
    %p33 = scmp.ne.s32.totalorder %s22, %s25
    %p34 = scmp.eq.s32.totalorder %s17, 1
    %p35 = por %p33, %p34
    %p36 = scmp.ne.s32.totalorder %s25, %s26
    %p37 = scmp.eq.s32.totalorder %s17, 0
    %p38 = por %p36, %p37
    %p39 = scmp.ne.s32.totalorder %s25, %s26
    %p40 = scmp.eq.s32.totalorder %s18, 1
    %p41 = por %p39, %p40
    %p43 = scmp.ne.s32.totalorder %s26, %s42
    %p44 = scmp.eq.s32.totalorder %s18, 0
    %p45 = por %p43, %p44
    %s46 = ssub.s32 %s12, %s19
    %p47 = scmp.eq.s32.totalorder %s46, 0
    %s49 = sadd.s32 %s48, 1
    %s50 = scalar_select %p47, %s48, %s49
    %p53 = pneg %p47
    %p54 = scmp.eq.s32.totalorder %s12, 1
    %p55 = por %p53, %p54
    %p56 = scmp.ne.s32.totalorder %s48, %s51
    %p57 = scmp.eq.s32.totalorder %s12, 0
    %p58 = por %p56, %p57
    %p59 = scmp.ne.s32.totalorder %s48, %s51
    %p60 = scmp.eq.s32.totalorder %s17, 1
    %p61 = por %p59, %p60
    %p62 = scmp.ne.s32.totalorder %s51, %s52
    %p63 = scmp.eq.s32.totalorder %s17, 0
    %p64 = por %p62, %p63
    %p65 = scmp.ne.s32.totalorder %s51, %s52
    %p66 = scmp.eq.s32.totalorder %s18, 1
    %p67 = por %p65, %p66
    %p69 = scmp.ne.s32.totalorder %s52, %s68
    %p70 = scmp.eq.s32.totalorder %s18, 0
    %p71 = por %p69, %p70
    %s73 = sadd.s32 %s72, 1
    %p76 = scmp.eq.s32.totalorder %s12, 1
    %p77 = scmp.ne.s32.totalorder %s72, %s74
    %p78 = scmp.eq.s32.totalorder %s12, 0
    %p79 = por %p77, %p78
    %p80 = scmp.ne.s32.totalorder %s72, %s74
    %p81 = scmp.eq.s32.totalorder %s17, 1
    %p82 = por %p80, %p81
    %p83 = scmp.ne.s32.totalorder %s74, %s75
    %p84 = scmp.eq.s32.totalorder %s17, 0
    %p85 = por %p83, %p84
    %p86 = scmp.ne.s32.totalorder %s74, %s75
    %p87 = scmp.eq.s32.totalorder %s18, 1
    %p88 = por %p86, %p87
    %p90 = scmp.ne.s32.totalorder %s75, %s89
    %p91 = scmp.eq.s32.totalorder %s18, 0
    %p92 = por %p90, %p91
    %s94 = sadd.s32 %s93, 1
    %p97 = scmp.eq.s32.totalorder %s12, 1
    %p98 = scmp.ne.s32.totalorder %s93, %s95
    %p99 = scmp.eq.s32.totalorder %s12, 0
    %p100 = por %p98, %p99
    %p101 = scmp.ne.s32.totalorder %s93, %s95
    %p102 = scmp.eq.s32.totalorder %s17, 1
    %p103 = por %p101, %p102
    %p104 = scmp.ne.s32.totalorder %s95, %s96
    %p105 = scmp.eq.s32.totalorder %s17, 0
    %p106 = por %p104, %p105
    %p107 = scmp.ne.s32.totalorder %s95, %s96
    %p108 = scmp.eq.s32.totalorder %s18, 1
    %p109 = por %p107, %p108
    %p111 = scmp.ne.s32.totalorder %s96, %s110
    %p112 = scmp.eq.s32.totalorder %s18, 0
    %p113 = por %p111, %p112
    %s115 = sadd.s32 %s114, 1
    %p118 = scmp.eq.s32.totalorder %s12, 1
    %p119 = scmp.ne.s32.totalorder %s114, %s116
    %p120 = scmp.eq.s32.totalorder %s12, 0
    %p121 = por %p119, %p120
    %p122 = scmp.ne.s32.totalorder %s114, %s116
    %p123 = scmp.eq.s32.totalorder %s17, 1
    %p124 = por %p122, %p123
    %p125 = scmp.ne.s32.totalorder %s116, %s117
    %p126 = scmp.eq.s32.totalorder %s17, 0
    %p127 = por %p125, %p126
    %p128 = scmp.ne.s32.totalorder %s116, %s117
    %p129 = scmp.eq.s32.totalorder %s18, 1
    %p130 = por %p128, %p129
    %p132 = scmp.ne.s32.totalorder %s117, %s131
    %p133 = scmp.eq.s32.totalorder %s18, 0
    %p134 = por %p132, %p133
    %s136 = sadd.s32 %s135, 1
    %p139 = scmp.eq.s32.totalorder %s12, 1
    %p140 = scmp.ne.s32.totalorder %s135, %s137
    %p141 = scmp.eq.s32.totalorder %s12, 0
    %p142 = por %p140, %p141
    %p143 = scmp.ne.s32.totalorder %s135, %s137
    %p144 = scmp.eq.s32.totalorder %s17, 1
    %p145 = por %p143, %p144
    %p146 = scmp.ne.s32.totalorder %s137, %s138
    %p147 = scmp.eq.s32.totalorder %s17, 0
    %p148 = por %p146, %p147
    %p149 = scmp.ne.s32.totalorder %s137, %s138
    %p150 = scmp.eq.s32.totalorder %s18, 1
    %p151 = por %p149, %p150
    %p153 = scmp.ne.s32.totalorder %s138, %s152
    %p154 = scmp.eq.s32.totalorder %s18, 0
    %p155 = por %p153, %p154
    %s156 = ssub.s32 %s12, %s19
    %p157 = scmp.eq.s32.totalorder %s156, 0
    %s159 = sadd.s32 %s158, 1
    %s160 = scalar_select %p157, %s158, %s159
    %p163 = pneg %p157
    %p164 = scmp.eq.s32.totalorder %s12, 1
    %p165 = por %p163, %p164
    %p166 = scmp.ne.s32.totalorder %s158, %s161
    %p167 = scmp.eq.s32.totalorder %s12, 0
    %p168 = por %p166, %p167
    %p169 = scmp.ne.s32.totalorder %s158, %s161
    %p170 = scmp.eq.s32.totalorder %s17, 1
    %p171 = por %p169, %p170
    %p172 = scmp.ne.s32.totalorder %s161, %s162
    %p173 = scmp.eq.s32.totalorder %s17, 0
    %p174 = por %p172, %p173
    %p175 = scmp.ne.s32.totalorder %s161, %s162
    %p176 = scmp.eq.s32.totalorder %s18, 1
    %p177 = por %p175, %p176
    %p179 = scmp.ne.s32.totalorder %s162, %s178
    %p180 = scmp.eq.s32.totalorder %s18, 0
    %p181 = por %p179, %p180
    %p182 = scmp.le.s32.totalorder 1, %s12
    %p183 = scmp.lt.s32.totalorder %s12, 3
    %p184 = pnand %p182, %p183
    %p185 = pneg %p184
    // Predicated region
    $region9: #{_lambda_.19} parent=5 // pred_check
      _
    $region10: #{_lambda_.19} parent=5 // pred_check_branch
      %187 = sbr.rel (%p184) target = $region12
    $region11: #{_lambda_.19} parent=5 // pred_region
      %s188 = ssub.s32 %s12, 1
      // Predicated region
      $region13: #{_lambda_.19} parent=11 // pred_check
        %p189 = pneg %p85
      $region14: #{_lambda_.19} parent=11 // pred_check_branch
        %191 = sbr.rel (%p189) target = $region16
      $region15: #{_lambda_.19} parent=11 // pred_region
        _
      $region16: #{_lambda_.19} parent=11 // pred_fallthru
        _
      // Predicated region
      $region17: #{_lambda_.19} parent=11 // pred_check
        %p192 = pneg %p106
      $region18: #{_lambda_.19} parent=11 // pred_check_branch
        %194 = sbr.rel (%p192) target = $region20
      $region19: #{_lambda_.19} parent=11 // pred_region
        _
      $region20: #{_lambda_.19} parent=11 // pred_fallthru
        _
      // Predicated region
      $region21: #{_lambda_.19} parent=11 // pred_check
        %p195 = pneg %p127
      $region22: #{_lambda_.19} parent=11 // pred_check_branch
        %197 = sbr.rel (%p195) target = $region24
      $region23: #{_lambda_.19} parent=11 // pred_region
        _
      $region24: #{_lambda_.19} parent=11 // pred_fallthru
        _
      // Predicated region
      $region25: #{_lambda_.19} parent=11 // pred_check
        %p198 = pneg %p148
      $region26: #{_lambda_.19} parent=11 // pred_check_branch
        %200 = sbr.rel (%p198) target = $region28
      $region27: #{_lambda_.19} parent=11 // pred_region
        _
      $region28: #{_lambda_.19} parent=11 // pred_fallthru
        _
    $region12: #{_lambda_.19} parent=5 // pred_fallthru
      _
    %p201 = scmp.lt.s32.totalorder %s12, 2
    // Predicated region
    $region29: #{_lambda_.19} parent=5 // pred_check
      %p202 = pneg %p201
    $region30: #{_lambda_.19} parent=5 // pred_check_branch
      %204 = sbr.rel (%p202) target = $region32
    $region31: #{_lambda_.19} parent=5 // pred_region
      // Predicated region
      $region33: #{_lambda_.19} parent=31 // pred_check
        %p205 = pneg %p32
      $region34: #{_lambda_.19} parent=31 // pred_check_branch
        %207 = sbr.rel (%p205) target = $region36
      $region35: #{_lambda_.19} parent=31 // pred_region
        %p208 = scmp.lt.s32.totalorder %s12, 1
        %s209 = scalar_select %p208, %s12, 1
        %s210 = smul.addr %s209, 8
        %s211 = smul.addr %s210, 4
        %s212 = scalar_lea.vmem %s0, %s211
      $region36: #{_lambda_.19} parent=31 // pred_fallthru
        _
      // Predicated region
      $region37: #{_lambda_.19} parent=31 // pred_check
        %p213 = pneg %p58
      $region38: #{_lambda_.19} parent=31 // pred_check_branch
        %215 = sbr.rel (%p213) target = $region40
      $region39: #{_lambda_.19} parent=31 // pred_region
        %p216 = scmp.lt.s32.totalorder %s12, 1
        %s217 = scalar_select %p216, %s12, 1
        %s218 = smul.addr %s217, 8
        %s219 = smul.addr %s218, 4
        %s220 = scalar_lea.vmem %s1, %s219
      $region40: #{_lambda_.19} parent=31 // pred_fallthru
        _
    $region32: #{_lambda_.19} parent=5 // pred_fallthru
      _
    %p221 = scmp.le.s32.totalorder 1, %s12
    %p222 = scmp.lt.s32.totalorder %s12, 3
    %p223 = pnand %p221, %p222
    %p224 = pneg %p223
    // Predicated region
    $region41: #{_lambda_.19} parent=5 // pred_check
      _
    $region42: #{_lambda_.19} parent=5 // pred_check_branch
      %226 = sbr.rel (%p223) target = $region44
    $region43: #{_lambda_.19} parent=5 // pred_region
      %s227 = ssub.s32 %s12, 1
      %p228 = scmp.lt.s32.totalorder %s17, 1
      %s229 = scalar_select %p228, %s17, 1
      %s230 = smul.addr %s229, 8
      %s231 = smul.addr %s230, 4
      %s232 = scalar_lea.vmem %s0, %s231
      %p233 = pneg %p38
      %p234 = pneg %p35
      %p235 = scmp.lt.s32.totalorder %s17, 1
      %s236 = scalar_select %p235, %s17, 1
      %s237 = smul.addr %s236, 8
      %s238 = smul.addr %s237, 4
      %s239 = scalar_lea.vmem %s1, %s238
      %p240 = pneg %p64
      %p241 = pneg %p61
      %p242 = pneg %p85
      %p243 = pneg %p82
      %p244 = pneg %p106
      %p245 = pneg %p103
      %p246 = pneg %p127
      %p247 = pneg %p124
      %p248 = pneg %p148
      %p249 = pneg %p145
      %p250 = pneg %p174
      %p251 = pneg %p171
      %p252 = scmp.lt.s32.totalorder %s17, 1
      %s253 = scalar_select %p252, %s17, 1
      %s254 = smul.addr %s253, 8
      %s255 = smul.addr %s254, 4
      %s256 = scalar_lea.vmem %s6, %s255
      %p257 = scmp.lt.s32.totalorder %s17, 1
      %s258 = scalar_select %p257, %s17, 1
      %s259 = smul.addr %s258, 8
      %s260 = smul.addr %s259, 4
      %s261 = scalar_lea.vmem %s0, %s260
      %p262 = scmp.lt.s32.totalorder %s17, 1
      %s263 = scalar_select %p262, %s17, 1
      %s264 = smul.addr %s263, 8
      %s265 = smul.addr %s264, 4
      %s266 = scalar_lea.vmem %s1, %s265
      %p267 = scmp.lt.s32.totalorder %s17, 1
      %s268 = scalar_select %p267, %s17, 1
      %s269 = smul.addr %s268, 8
      %s270 = smul.addr %s269, 4
      %s271 = scalar_lea.vmem %s6, %s270
      %v273 = vld [vmem:[%s261] sm:$0xf]
      %v274 = vld [vmem:[%s261 + $0x4] sm:$0xf]
      %v275 = vld [vmem:[%s261 + $0x8] sm:$0xf]
      %v276 = vld [vmem:[%s261 + $0xc] sm:$0xf]
      %v277 = vld [vmem:[%s261 + $0x10] sm:$0xf]
      %v278 = vld [vmem:[%s261 + $0x14] sm:$0xf]
      %v279 = vld [vmem:[%s261 + $0x18] sm:$0xf]
      %v280 = vld [vmem:[%s261 + $0x1c] sm:$0xf]
      %v281 = vld [vmem:[%s2] sm:$0xf]
      %v282 = vld [vmem:[%s2 + $0x4] sm:$0xf]
      %v283 = vld [vmem:[%s2 + $0x8] sm:$0xf]
      %v284 = vld [vmem:[%s2 + $0xc] sm:$0xf]
      %v285 = vld [vmem:[%s2 + $0x10] sm:$0xf]
      %v286 = vld [vmem:[%s2 + $0x14] sm:$0xf]
      %v287 = vld [vmem:[%s2 + $0x18] sm:$0xf]
      %v288 = vld [vmem:[%s2 + $0x1c] sm:$0xf]
      %v289 = vld [vmem:[%s2 + $0x20] sm:$0xf]
      %v290 = vld [vmem:[%s2 + $0x24] sm:$0xf]
      %v291 = vld [vmem:[%s2 + $0x28] sm:$0xf]
      %v292 = vld [vmem:[%s2 + $0x2c] sm:$0xf]
      %v293 = vld [vmem:[%s2 + $0x30] sm:$0xf]
      %v294 = vld [vmem:[%s2 + $0x34] sm:$0xf]
      %v295 = vld [vmem:[%s2 + $0x38] sm:$0xf]
      %v296 = vld [vmem:[%s2 + $0x3c] sm:$0xf]
      %v297 = vld [vmem:[%s266] sm:$0xf]
      %v298 = vld [vmem:[%s266 + $0x4] sm:$0xf]
      %v299 = vld [vmem:[%s266 + $0x8] sm:$0xf]
      %v300 = vld [vmem:[%s266 + $0xc] sm:$0xf]
      %v301 = vld [vmem:[%s266 + $0x10] sm:$0xf]
      %v302 = vld [vmem:[%s266 + $0x14] sm:$0xf]
      %v303 = vld [vmem:[%s266 + $0x18] sm:$0xf]
      %v304 = vld [vmem:[%s266 + $0x1c] sm:$0xf]
      %v305 = vld [vmem:[%s3] sm:$0xf]
      %v306 = vld [vmem:[%s3 + $0x4] sm:$0xf]
      %v307 = vld [vmem:[%s3 + $0x8] sm:$0xf]
      %v308 = vld [vmem:[%s3 + $0xc] sm:$0xf]
      %v309 = vld [vmem:[%s3 + $0x10] sm:$0xf]
      %v310 = vld [vmem:[%s3 + $0x14] sm:$0xf]
      %v311 = vld [vmem:[%s3 + $0x18] sm:$0xf]
      %v312 = vld [vmem:[%s3 + $0x1c] sm:$0xf]
      %v313 = vld [vmem:[%s3 + $0x20] sm:$0xf]
      %v314 = vld [vmem:[%s3 + $0x24] sm:$0xf]
      %v315 = vld [vmem:[%s3 + $0x28] sm:$0xf]
      %v316 = vld [vmem:[%s3 + $0x2c] sm:$0xf]
      %v317 = vld [vmem:[%s3 + $0x30] sm:$0xf]
      %v318 = vld [vmem:[%s3 + $0x34] sm:$0xf]
      %v319 = vld [vmem:[%s3 + $0x38] sm:$0xf]
      %v320 = vld [vmem:[%s3 + $0x3c] sm:$0xf]
      %v329 = vunpack.c.l.b16 %v297
      %v330 = vunpack.c.l.b16 %v298
      %v331 = vunpack.c.l.b16 %v299
      %v332 = vunpack.c.l.b16 %v300
      %v333 = vunpack.c.l.b16 %v301
      %v334 = vunpack.c.l.b16 %v302
      %v335 = vunpack.c.l.b16 %v303
      %v336 = vunpack.c.l.b16 %v304
      %v337 = vpack.c.b16 %v330, %v329
      %v338 = vpack.c.b16 %v332, %v331
      %v339 = vpack.c.b16 %v334, %v333
      %v340 = vpack.c.b16 %v336, %v335
      %v361 = vunpack.c.l.b16 %v305
      %v362 = vunpack.c.l.b16 %v306
      %v363 = vunpack.c.l.b16 %v307
      %v364 = vunpack.c.l.b16 %v308
      %v365 = vunpack.c.l.b16 %v309
      %v366 = vunpack.c.l.b16 %v310
      %v367 = vunpack.c.l.b16 %v311
      %v368 = vunpack.c.l.b16 %v312
      %v369 = vunpack.c.l.b16 %v313
      %v370 = vunpack.c.l.b16 %v314
      %v371 = vunpack.c.l.b16 %v315
      %v372 = vunpack.c.l.b16 %v316
      %v373 = vunpack.c.l.b16 %v317
      %v374 = vunpack.c.l.b16 %v318
      %v375 = vunpack.c.l.b16 %v319
      %v376 = vunpack.c.l.b16 %v320
      %v377 = vpack.c.b16 %v362, %v361
      %v378 = vpack.c.b16 %v364, %v363
      %v379 = vpack.c.b16 %v366, %v365
      %v380 = vpack.c.b16 %v368, %v367
      %v381 = vpack.c.b16 %v370, %v369
      %v382 = vpack.c.b16 %v372, %v371
      %v383 = vpack.c.b16 %v374, %v373
      %v384 = vpack.c.b16 %v376, %v375
      %393 = vmatprep.subr.bf16.mxu0 0
      %394 = vmatpush1.bf16.msra.mxu0 %v384
      %395 = vmatprep.subr.bf16.mxu0 0
      %396 = vmatpush1.bf16.msra.mxu0 %v383
      %397 = vmatprep.subr.bf16.mxu0 0
      %398 = vmatpush1.bf16.msra.mxu0 %v382
      %399 = vmatprep.subr.bf16.mxu0 0
      %400 = vmatpush1.bf16.msra.mxu0 %v381
      %401 = vmatprep.subr.bf16.mxu0 0
      %402 = vmatpush1.bf16.msra.mxu0 %v380
      %403 = vmatprep.subr.bf16.mxu0 0
      %404 = vmatpush1.bf16.msra.mxu0 %v379
      %405 = vmatprep.subr.bf16.mxu0 0
      %406 = vmatpush1.bf16.msra.mxu0 %v378
      %407 = vmatprep.subr.bf16.mxu0 0
      %408 = vmatpush1.bf16.msra.mxu0 %v377
      %409 = vmatprep.subr.bf16.mxu0 0
      %410 = vmatpush2.bf16.msra.mxu0 0
      %411 = vmatprep.subr.bf16.mxu0 0
      %412 = vmatpush2.bf16.msra.mxu0 0
      %413 = vmatprep.subr.bf16.mxu0 0
      %414 = vmatpush2.bf16.msra.mxu0 0
      %415 = vmatprep.subr.bf16.mxu0 0
      %416 = vmatpush2.bf16.msra.mxu0 0
      %417 = vmatprep.subr.bf16.mxu0 0
      %418 = vmatpush2.bf16.msra.mxu0 0
      %419 = vmatprep.subr.bf16.mxu0 0
      %420 = vmatpush2.bf16.msra.mxu0 0
      %421 = vmatprep.subr.bf16.mxu0 0
      %422 = vmatpush2.bf16.msra.mxu0 0
      %423 = vmatprep.subr.bf16.mxu0 0
      %424 = vmatpush2.bf16.msra.mxu0 0
      %425 = vmatprep.mubr.bf16.mxu0 0
      %426 = vmatmul.mubr.bf16.gmra.mxu0 %v337
      %v427 = vpop.f32.mrf.mxu0
      %v428 = vadd.f32 0.0, %v427
      %v429 = vpop.f32.mrf.mxu0
      %v430 = vpop.f32.mrf.mxu0
      %v431 = vadd.f32 0.0, %v430
      %v432 = vpop.f32.mrf.mxu0
      %433 = vmatprep.mubr.bf16.mxu0 0
      %434 = vmatmul.mubr.bf16.gmra.mxu0 %v338
      %v435 = vpop.f32.mrf.mxu0
      %v436 = vadd.f32 0.0, %v435
      %v437 = vpop.f32.mrf.mxu0
      %v438 = vpop.f32.mrf.mxu0
      %v439 = vadd.f32 0.0, %v438
      %v440 = vpop.f32.mrf.mxu0
      %441 = vmatprep.mubr.bf16.mxu0 0
      %442 = vmatmul.mubr.bf16.gmra.mxu0 %v339
      %v443 = vpop.f32.mrf.mxu0
      %v444 = vadd.f32 0.0, %v443
      %v445 = vpop.f32.mrf.mxu0
      %v446 = vpop.f32.mrf.mxu0
      %v447 = vadd.f32 0.0, %v446
      %v448 = vpop.f32.mrf.mxu0
      %449 = vmatprep.mubr.bf16.mxu0 0
      %450 = vmatmul.mubr.bf16.gmra.mxu0 %v340
      %v451 = vpop.f32.mrf.mxu0
      %v452 = vadd.f32 0.0, %v451
      %v453 = vpop.f32.mrf.mxu0
      %v454 = vpop.f32.mrf.mxu0
      %v455 = vadd.f32 0.0, %v454
      %v456 = vpop.f32.mrf.mxu0
      %457 = vdwg.mxu0
      %v466 = vunpack.c.l.b16 %v273
      %v467 = vunpack.c.l.b16 %v274
      %v468 = vunpack.c.l.b16 %v275
      %v469 = vunpack.c.l.b16 %v276
      %v470 = vunpack.c.l.b16 %v277
      %v471 = vunpack.c.l.b16 %v278
      %v472 = vunpack.c.l.b16 %v279
      %v473 = vunpack.c.l.b16 %v280
      %v474 = vpack.c.b16 %v467, %v466
      %v475 = vpack.c.b16 %v469, %v468
      %v476 = vpack.c.b16 %v471, %v470
      %v477 = vpack.c.b16 %v473, %v472
      %v498 = vunpack.c.l.b16 %v281
      %v499 = vunpack.c.l.b16 %v282
      %v500 = vunpack.c.l.b16 %v283
      %v501 = vunpack.c.l.b16 %v284
      %v502 = vunpack.c.l.b16 %v285
      %v503 = vunpack.c.l.b16 %v286
      %v504 = vunpack.c.l.b16 %v287
      %v505 = vunpack.c.l.b16 %v288
      %v506 = vunpack.c.l.b16 %v289
      %v507 = vunpack.c.l.b16 %v290
      %v508 = vunpack.c.l.b16 %v291
      %v509 = vunpack.c.l.b16 %v292
      %v510 = vunpack.c.l.b16 %v293
      %v511 = vunpack.c.l.b16 %v294
      %v512 = vunpack.c.l.b16 %v295
      %v513 = vunpack.c.l.b16 %v296
      %v514 = vpack.c.b16 %v499, %v498
      %v515 = vpack.c.b16 %v501, %v500
      %v516 = vpack.c.b16 %v503, %v502
      %v517 = vpack.c.b16 %v505, %v504
      %v518 = vpack.c.b16 %v507, %v506
      %v519 = vpack.c.b16 %v509, %v508
      %v520 = vpack.c.b16 %v511, %v510
      %v521 = vpack.c.b16 %v513, %v512
      %530 = vmatprep.subr.bf16.mxu0 0
      %531 = vmatpush1.bf16.msra.mxu0 %v521
      %532 = vmatprep.subr.bf16.mxu0 0
      %533 = vmatpush1.bf16.msra.mxu0 %v520
      %534 = vmatprep.subr.bf16.mxu0 0
      %535 = vmatpush1.bf16.msra.mxu0 %v519
      %536 = vmatprep.subr.bf16.mxu0 0
      %537 = vmatpush1.bf16.msra.mxu0 %v518
      %538 = vmatprep.subr.bf16.mxu0 0
      %539 = vmatpush1.bf16.msra.mxu0 %v517
      %540 = vmatprep.subr.bf16.mxu0 0
      %541 = vmatpush1.bf16.msra.mxu0 %v516
      %542 = vmatprep.subr.bf16.mxu0 0
      %543 = vmatpush1.bf16.msra.mxu0 %v515
      %544 = vmatprep.subr.bf16.mxu0 0
      %545 = vmatpush1.bf16.msra.mxu0 %v514
      %546 = vmatprep.subr.bf16.mxu0 0
      %547 = vmatpush2.bf16.msra.mxu0 0
      %548 = vmatprep.subr.bf16.mxu0 0
      %549 = vmatpush2.bf16.msra.mxu0 0
      %550 = vmatprep.subr.bf16.mxu0 0
      %551 = vmatpush2.bf16.msra.mxu0 0
      %552 = vmatprep.subr.bf16.mxu0 0
      %553 = vmatpush2.bf16.msra.mxu0 0
      %554 = vmatprep.subr.bf16.mxu0 0
      %555 = vmatpush2.bf16.msra.mxu0 0
      %556 = vmatprep.subr.bf16.mxu0 0
      %557 = vmatpush2.bf16.msra.mxu0 0
      %558 = vmatprep.subr.bf16.mxu0 0
      %559 = vmatpush2.bf16.msra.mxu0 0
      %560 = vmatprep.subr.bf16.mxu0 0
      %561 = vmatpush2.bf16.msra.mxu0 0
      %562 = vmatprep.mubr.bf16.mxu0 0
      %563 = vmatmul.mubr.bf16.gmra.mxu0 %v474
      %v564 = vpop.f32.mrf.mxu0
      %v565 = vadd.f32 %v428, %v564
      %v566 = vpop.f32.mrf.mxu0
      %v567 = vpop.f32.mrf.mxu0
      %v568 = vadd.f32 %v431, %v567
      %v569 = vpop.f32.mrf.mxu0
      %570 = vmatprep.mubr.bf16.mxu0 0
      %571 = vmatmul.mubr.bf16.gmra.mxu0 %v475
      %v572 = vpop.f32.mrf.mxu0
      %v573 = vadd.f32 %v436, %v572
      %v574 = vpop.f32.mrf.mxu0
      %v575 = vpop.f32.mrf.mxu0
      %v576 = vadd.f32 %v439, %v575
      %v577 = vpop.f32.mrf.mxu0
      %578 = vmatprep.mubr.bf16.mxu0 0
      %579 = vmatmul.mubr.bf16.gmra.mxu0 %v476
      %v580 = vpop.f32.mrf.mxu0
      %v581 = vadd.f32 %v444, %v580
      %v582 = vpop.f32.mrf.mxu0
      %v583 = vpop.f32.mrf.mxu0
      %v584 = vadd.f32 %v447, %v583
      %v585 = vpop.f32.mrf.mxu0
      %586 = vmatprep.mubr.bf16.mxu0 0
      %587 = vmatmul.mubr.bf16.gmra.mxu0 %v477
      %v588 = vpop.f32.mrf.mxu0
      %v589 = vadd.f32 %v452, %v588
      %v590 = vpop.f32.mrf.mxu0
      %v591 = vpop.f32.mrf.mxu0
      %v592 = vadd.f32 %v455, %v591
      %v593 = vpop.f32.mrf.mxu0
      %594 = vdwg.mxu0
      %v595 = vld [vmem:[%s4] sm:$0x1]
      %v597 = vlaneseq
      %v598 = vshrl.u32 %v597, 7
      %v599 = vsub.s32 0, %v598
      %v600 = vrot.slane %v595, %v599
      %v602 = vmul.f32 %v565, %v600
      %v603 = vmul.f32 %v568, %v600
      %v604 = vmul.f32 %v573, %v600
      %v605 = vmul.f32 %v576, %v600
      %v606 = vmul.f32 %v581, %v600
      %v607 = vmul.f32 %v584, %v600
      %v608 = vmul.f32 %v589, %v600
      %v609 = vmul.f32 %v592, %v600
      %v610 = vld [vmem:[%s5] sm:$0x1]
      %v612 = vlaneseq
      %v613 = vshrl.u32 %v612, 7
      %v614 = vsub.s32 0, %v613
      %v615 = vrot.slane %v610, %v614
      %v617 = vadd.f32 %v602, %v615
      %v618 = vadd.f32 %v603, %v615
      %v619 = vadd.f32 %v604, %v615
      %v620 = vadd.f32 %v605, %v615
      %v621 = vadd.f32 %v606, %v615
      %v622 = vadd.f32 %v607, %v615
      %v623 = vadd.f32 %v608, %v615
      %v624 = vadd.f32 %v609, %v615
      %v625 = vmax.f32 %v617, 0.0
      %v626 = vmax.f32 %v618, 0.0
      %v627 = vmax.f32 %v619, 0.0
      %v628 = vmax.f32 %v620, 0.0
      %v629 = vmax.f32 %v621, 0.0
      %v630 = vmax.f32 %v622, 0.0
      %v631 = vmax.f32 %v623, 0.0
      %v632 = vmax.f32 %v624, 0.0
      %v633 = vpack.c.bf16 %v626, %v625
      %v634 = vpack.c.bf16 %v628, %v627
      %v635 = vpack.c.bf16 %v630, %v629
      %v636 = vpack.c.bf16 %v632, %v631
      %v641 = vunpack.c.l.b16 %v633
      %v642 = vunpack.c.h.b16 %v633
      %v643 = vunpack.c.l.b16 %v634
      %v644 = vunpack.c.h.b16 %v634
      %v645 = vunpack.c.l.b16 %v635
      %v646 = vunpack.c.h.b16 %v635
      %v647 = vunpack.c.l.b16 %v636
      %v648 = vunpack.c.h.b16 %v636
      %v649 = vpack.c.b16 %v641, %v641
      %v650 = vpack.c.b16 %v642, %v642
      %v651 = vpack.c.b16 %v643, %v643
      %v652 = vpack.c.b16 %v644, %v644
      %v653 = vpack.c.b16 %v645, %v645
      %v654 = vpack.c.b16 %v646, %v646
      %v655 = vpack.c.b16 %v647, %v647
      %v656 = vpack.c.b16 %v648, %v648
      %665 = vst [vmem:[%s271] sm:$0xf] %v649
      %666 = vst [vmem:[%s271 + $0x4] sm:$0xf] %v650
      %667 = vst [vmem:[%s271 + $0x8] sm:$0xf] %v651
      %668 = vst [vmem:[%s271 + $0xc] sm:$0xf] %v652
      %669 = vst [vmem:[%s271 + $0x10] sm:$0xf] %v653
      %670 = vst [vmem:[%s271 + $0x14] sm:$0xf] %v654
      %671 = vst [vmem:[%s271 + $0x18] sm:$0xf] %v655
      %672 = vst [vmem:[%s271 + $0x1c] sm:$0xf] %v656
      %p673 = scmp.lt.s32.totalorder %s17, 1
      %s674 = scalar_select %p673, %s17, 1
      %s675 = smul.addr %s674, 8
      %s676 = smul.addr %s675, 4
      %s677 = scalar_lea.vmem %s6, %s676
      // Predicated region
      $region45: #{_lambda_.19} parent=43 // pred_check
        %p678 = pneg %p171
      $region46: #{_lambda_.19} parent=43 // pred_check_branch
        %680 = sbr.rel (%p678) target = $region48
      $region47: #{_lambda_.19} parent=43 // pred_region
        _
      $region48: #{_lambda_.19} parent=43 // pred_fallthru
        _
    $region44: #{_lambda_.19} parent=5 // pred_fallthru
      _
    %p681 = scmp.le.s32.totalorder 2, %s12
    // Predicated region
    $region49: #{_lambda_.19} parent=5 // pred_check
      %p682 = pneg %p681
    $region50: #{_lambda_.19} parent=5 // pred_check_branch
      %684 = sbr.rel (%p682) target = $region52
    $region51: #{_lambda_.19} parent=5 // pred_region
      %s685 = ssub.s32 %s12, 2
      // Predicated region
      $region53: #{_lambda_.19} parent=51 // pred_check
        %p686 = pneg %p177
      $region54: #{_lambda_.19} parent=51 // pred_check_branch
        %688 = sbr.rel (%p686) target = $region56
      $region55: #{_lambda_.19} parent=51 // pred_region
        %p689 = scmp.lt.s32.totalorder %s18, 1
        %s690 = scalar_select %p689, %s18, 1
        %s691 = smul.addr %s690, 8
        %s692 = smul.addr %s691, 4
        %s693 = scalar_lea.vmem %s6, %s692
      $region56: #{_lambda_.19} parent=51 // pred_fallthru
        _
    $region52: #{_lambda_.19} parent=5 // pred_fallthru
      _
  $region6: #{_lambda_.19} parent=0 // loop_footer
    %s16 = sadd.s32 1, %s12
  $region7: #{_lambda_.19} parent=0 // loop_footer_branch
    %11 = sbr.rel target = $region3
  $region8: #{_lambda_.19} parent=0 // loop_exit
    _

// kernel: _lambda_.15
$region0: #{_lambda_.15}
  #allocation0 [shape = 'u32[]', space=smem, size = 0x4, offset = 0x4, fixed_abs, tag = 'smem constant byte address 0x4 - core index']
  #allocation1 [shape = 'u32[144,128]{1,0:T(1,128)}', space=vmem, size = 0x12000, scoped, tag = 'internal scratch']
  %s0 = inlined_call_operand.vmem [shape: bf16[2,6,72,64], index: 0, kind: input, shape index: {}]
  %s1 = inlined_call_operand.vmem [shape: bf16[9,64,128], index: 1, kind: input, shape index: {}]
  %s2 = inlined_call_operand.vmem [shape: f32[1,128], index: 2, kind: input, shape index: {}]
  %s3 = inlined_call_operand.vmem [shape: f32[1,128], index: 3, kind: input, shape index: {}]
  %s4 = inlined_call_operand.vmem [shape: bf16[2,64,128], index: 4, kind: output, shape index: {}]
  %s5 = sld [smem:[#allocation0]]
  $region49: #{_lambda_.15} parent=0
    _
  %s7 = ssub.s32 1, %s5
  %s8 = scalar_select 0, %s7, %s5
  loop: start=0, step=1, limit=4
  $region2: #{_lambda_.15} parent=0 // loop_pre_header
    _
  $region3: #{_lambda_.15} parent=0 // loop_header
    %s10 = sphi 0, %s14
    %p11 = scmp.ge.s32.totalorder %s10, 4
    %s20 = sphi 0, %s22
    %s23 = sphi 0, %s20
    %s24 = sphi 0, %s23
    %s40 = sphi 0, %s24
    %s44 = sphi 0, %s44
    %s46 = sphi 0, %s44
    %s47 = sphi 0, %s46
    %s61 = sphi 0, %s47
    %s65 = sphi 0, %s65
    %s67 = sphi 0, %s65
    %s68 = sphi 0, %s67
    %s82 = sphi 0, %s68
    %s86 = sphi 0, %s86
    %s88 = sphi 0, %s86
    %s89 = sphi 0, %s88
    %s103 = sphi 0, %s89
    %s109 = sphi 0, %s111
    %s112 = sphi 0, %s109
    %s113 = sphi 0, %s112
    %s129 = sphi 0, %s113
  $region4: #{_lambda_.15} parent=0 // loop_header_branch
    %13 = sbr.rel (%p11) target = $region8
  $region5: #{_lambda_.15} parent=0 // loop_body
    %s15 = ssub.s32 %s10, 1
    %s16 = ssub.s32 %s10, 2
    %s17 = sadd.s32 %s10, 1
    %s18 = ssub.s32 %s10, %s17
    %p19 = scmp.eq.s32.totalorder %s18, 0
    %s21 = sadd.s32 %s20, 1
    %s22 = scalar_select %p19, %s20, %s21
    %p25 = pneg %p19
    %p26 = scmp.eq.s32.totalorder %s10, 1
    %p27 = por %p25, %p26
    %p28 = scmp.ne.s32.totalorder %s20, %s23
    %p29 = scmp.eq.s32.totalorder %s10, 0
    %p30 = por %p28, %p29
    %p31 = scmp.ne.s32.totalorder %s20, %s23
    %p32 = scmp.eq.s32.totalorder %s15, 1
    %p33 = por %p31, %p32
    %p34 = scmp.ne.s32.totalorder %s23, %s24
    %p35 = scmp.eq.s32.totalorder %s15, 0
    %p36 = por %p34, %p35
    %p37 = scmp.ne.s32.totalorder %s23, %s24
    %p38 = scmp.eq.s32.totalorder %s16, 1
    %p39 = por %p37, %p38
    %p41 = scmp.ne.s32.totalorder %s24, %s40
    %p42 = scmp.eq.s32.totalorder %s16, 0
    %p43 = por %p41, %p42
    %s45 = sadd.s32 %s44, 1
    %p48 = scmp.eq.s32.totalorder %s10, 1
    %p49 = scmp.ne.s32.totalorder %s44, %s46
    %p50 = scmp.eq.s32.totalorder %s10, 0
    %p51 = por %p49, %p50
    %p52 = scmp.ne.s32.totalorder %s44, %s46
    %p53 = scmp.eq.s32.totalorder %s15, 1
    %p54 = por %p52, %p53
    %p55 = scmp.ne.s32.totalorder %s46, %s47
    %p56 = scmp.eq.s32.totalorder %s15, 0
    %p57 = por %p55, %p56
    %p58 = scmp.ne.s32.totalorder %s46, %s47
    %p59 = scmp.eq.s32.totalorder %s16, 1
    %p60 = por %p58, %p59
    %p62 = scmp.ne.s32.totalorder %s47, %s61
    %p63 = scmp.eq.s32.totalorder %s16, 0
    %p64 = por %p62, %p63
    %s66 = sadd.s32 %s65, 1
    %p69 = scmp.eq.s32.totalorder %s10, 1
    %p70 = scmp.ne.s32.totalorder %s65, %s67
    %p71 = scmp.eq.s32.totalorder %s10, 0
    %p72 = por %p70, %p71
    %p73 = scmp.ne.s32.totalorder %s65, %s67
    %p74 = scmp.eq.s32.totalorder %s15, 1
    %p75 = por %p73, %p74
    %p76 = scmp.ne.s32.totalorder %s67, %s68
    %p77 = scmp.eq.s32.totalorder %s15, 0
    %p78 = por %p76, %p77
    %p79 = scmp.ne.s32.totalorder %s67, %s68
    %p80 = scmp.eq.s32.totalorder %s16, 1
    %p81 = por %p79, %p80
    %p83 = scmp.ne.s32.totalorder %s68, %s82
    %p84 = scmp.eq.s32.totalorder %s16, 0
    %p85 = por %p83, %p84
    %s87 = sadd.s32 %s86, 1
    %p90 = scmp.eq.s32.totalorder %s10, 1
    %p91 = scmp.ne.s32.totalorder %s86, %s88
    %p92 = scmp.eq.s32.totalorder %s10, 0
    %p93 = por %p91, %p92
    %p94 = scmp.ne.s32.totalorder %s86, %s88
    %p95 = scmp.eq.s32.totalorder %s15, 1
    %p96 = por %p94, %p95
    %p97 = scmp.ne.s32.totalorder %s88, %s89
    %p98 = scmp.eq.s32.totalorder %s15, 0
    %p99 = por %p97, %p98
    %p100 = scmp.ne.s32.totalorder %s88, %s89
    %p101 = scmp.eq.s32.totalorder %s16, 1
    %p102 = por %p100, %p101
    %p104 = scmp.ne.s32.totalorder %s89, %s103
    %p105 = scmp.eq.s32.totalorder %s16, 0
    %p106 = por %p104, %p105
    %s107 = ssub.s32 %s10, %s17
    %p108 = scmp.eq.s32.totalorder %s107, 0
    %s110 = sadd.s32 %s109, 1
    %s111 = scalar_select %p108, %s109, %s110
    %p114 = pneg %p108
    %p115 = scmp.eq.s32.totalorder %s10, 1
    %p116 = por %p114, %p115
    %p117 = scmp.ne.s32.totalorder %s109, %s112
    %p118 = scmp.eq.s32.totalorder %s10, 0
    %p119 = por %p117, %p118
    %p120 = scmp.ne.s32.totalorder %s109, %s112
    %p121 = scmp.eq.s32.totalorder %s15, 1
    %p122 = por %p120, %p121
    %p123 = scmp.ne.s32.totalorder %s112, %s113
    %p124 = scmp.eq.s32.totalorder %s15, 0
    %p125 = por %p123, %p124
    %p126 = scmp.ne.s32.totalorder %s112, %s113
    %p127 = scmp.eq.s32.totalorder %s16, 1
    %p128 = por %p126, %p127
    %p130 = scmp.ne.s32.totalorder %s113, %s129
    %p131 = scmp.eq.s32.totalorder %s16, 0
    %p132 = por %p130, %p131
    %p133 = scmp.le.s32.totalorder 1, %s10
    %p134 = scmp.lt.s32.totalorder %s10, 3
    %p135 = pnand %p133, %p134
    %p136 = pneg %p135
    // Predicated region
    $region9: #{_lambda_.15} parent=5 // pred_check
      _
    $region10: #{_lambda_.15} parent=5 // pred_check_branch
      %138 = sbr.rel (%p135) target = $region12
    $region11: #{_lambda_.15} parent=5 // pred_region
      %s139 = ssub.s32 %s10, 1
      // Predicated region
      $region13: #{_lambda_.15} parent=11 // pred_check
        %p140 = pneg %p57
      $region14: #{_lambda_.15} parent=11 // pred_check_branch
        %142 = sbr.rel (%p140) target = $region16
      $region15: #{_lambda_.15} parent=11 // pred_region
        _
      $region16: #{_lambda_.15} parent=11 // pred_fallthru
        _
      // Predicated region
      $region17: #{_lambda_.15} parent=11 // pred_check
        %p143 = pneg %p78
      $region18: #{_lambda_.15} parent=11 // pred_check_branch
        %145 = sbr.rel (%p143) target = $region20
      $region19: #{_lambda_.15} parent=11 // pred_region
        _
      $region20: #{_lambda_.15} parent=11 // pred_fallthru
        _
      // Predicated region
      $region21: #{_lambda_.15} parent=11 // pred_check
        %p146 = pneg %p99
      $region22: #{_lambda_.15} parent=11 // pred_check_branch
        %148 = sbr.rel (%p146) target = $region24
      $region23: #{_lambda_.15} parent=11 // pred_region
        _
      $region24: #{_lambda_.15} parent=11 // pred_fallthru
        _
    $region12: #{_lambda_.15} parent=5 // pred_fallthru
      _
    %p149 = scmp.lt.s32.totalorder %s10, 2
    // Predicated region
    $region25: #{_lambda_.15} parent=5 // pred_check
      %p150 = pneg %p149
    $region26: #{_lambda_.15} parent=5 // pred_check_branch
      %152 = sbr.rel (%p150) target = $region28
    $region27: #{_lambda_.15} parent=5 // pred_region
      // Predicated region
      $region29: #{_lambda_.15} parent=27 // pred_check
        %p153 = pneg %p30
      $region30: #{_lambda_.15} parent=27 // pred_check_branch
        %155 = sbr.rel (%p153) target = $region32
      $region31: #{_lambda_.15} parent=27 // pred_region
        %p156 = scmp.lt.s32.totalorder %s10, 1
        %s157 = scalar_select %p156, %s10, 1
        %s158 = smul.addr %s157, 54
        %s159 = smul.addr %s158, 4
        %s160 = scalar_lea.vmem %s0, %s159
      $region32: #{_lambda_.15} parent=27 // pred_fallthru
        _
    $region28: #{_lambda_.15} parent=5 // pred_fallthru
      _
    %p161 = scmp.le.s32.totalorder 1, %s10
    %p162 = scmp.lt.s32.totalorder %s10, 3
    %p163 = pnand %p161, %p162
    %p164 = pneg %p163
    // Predicated region
    $region33: #{_lambda_.15} parent=5 // pred_check
      _
    $region34: #{_lambda_.15} parent=5 // pred_check_branch
      %166 = sbr.rel (%p163) target = $region36
    $region35: #{_lambda_.15} parent=5 // pred_region
      %s167 = ssub.s32 %s10, 1
      %p168 = scmp.lt.s32.totalorder %s15, 1
      %s169 = scalar_select %p168, %s15, 1
      %s170 = smul.addr %s169, 54
      %s171 = smul.addr %s170, 4
      %s172 = scalar_lea.vmem %s0, %s171
      %p173 = pneg %p36
      %p174 = pneg %p33
      %p175 = pneg %p57
      %p176 = pneg %p54
      %p177 = pneg %p78
      %p178 = pneg %p75
      %p179 = pneg %p99
      %p180 = pneg %p96
      %p181 = pneg %p125
      %p182 = pneg %p122
      %p183 = scmp.lt.s32.totalorder %s15, 1
      %s184 = scalar_select %p183, %s15, 1
      %s185 = smul.addr %s184, 8
      %s186 = smul.addr %s185, 4
      %s187 = scalar_lea.vmem %s4, %s186
      %p188 = scmp.lt.s32.totalorder %s15, 1
      %s189 = scalar_select %p188, %s15, 1
      %s190 = smul.addr %s189, 54
      %s191 = smul.addr %s190, 4
      %s192 = scalar_lea.vmem %s0, %s191
      %p193 = scmp.lt.s32.totalorder %s15, 1
      %s194 = scalar_select %p193, %s15, 1
      %s195 = smul.addr %s194, 8
      %s196 = smul.addr %s195, 4
      %s197 = scalar_lea.vmem %s4, %s196
      %v199 = vld [vmem:[%s192] sm:$0xf]
      %v200 = vld [vmem:[%s192 + $0x4] sm:$0xf]
      %v201 = vld [vmem:[%s192 + $0x8] sm:$0xf]
      %v202 = vld [vmem:[%s192 + $0xc] sm:$0xf]
      %v203 = vld [vmem:[%s192 + $0x10] sm:$0xf]
      %v204 = vld [vmem:[%s192 + $0x14] sm:$0xf]
      %v205 = vld [vmem:[%s192 + $0x18] sm:$0xf]
      %v206 = vld [vmem:[%s192 + $0x1c] sm:$0xf]
      %v207 = vld [vmem:[%s1] sm:$0xf]
      %v208 = vld [vmem:[%s1 + $0x4] sm:$0xf]
      %v209 = vld [vmem:[%s1 + $0x8] sm:$0xf]
      %v210 = vld [vmem:[%s1 + $0xc] sm:$0xf]
      %v211 = vld [vmem:[%s1 + $0x10] sm:$0xf]
      %v212 = vld [vmem:[%s1 + $0x14] sm:$0xf]
      %v213 = vld [vmem:[%s1 + $0x18] sm:$0xf]
      %v214 = vld [vmem:[%s1 + $0x1c] sm:$0xf]
      %v215 = vld [vmem:[%s192 + $0x20] sm:$0xf]
      %s216 = scalar_lea.vmem %s1, 32
      %v217 = vld [vmem:[%s216] sm:$0xf]
      %v218 = vld [vmem:[%s216 + $0x4] sm:$0xf]
      %v219 = vld [vmem:[%s216 + $0x8] sm:$0xf]
      %v220 = vld [vmem:[%s216 + $0xc] sm:$0xf]
      %v221 = vld [vmem:[%s216 + $0x10] sm:$0xf]
      %v222 = vld [vmem:[%s216 + $0x14] sm:$0xf]
      %v223 = vld [vmem:[%s216 + $0x18] sm:$0xf]
      %v224 = vld [vmem:[%s216 + $0x1c] sm:$0xf]
      %v233 = vunpack.c.l.b16 %v200
      %v234 = vunpack.c.l.b16 %v201
      %v235 = vunpack.c.l.b16 %v202
      %v236 = vunpack.c.l.b16 %v203
      %v237 = vunpack.c.l.b16 %v204
      %v238 = vunpack.c.l.b16 %v205
      %v239 = vunpack.c.l.b16 %v206
      %v240 = vunpack.c.l.b16 %v215
      %v241 = vpack.c.b16 %v234, %v233
      %v242 = vpack.c.b16 %v236, %v235
      %v243 = vpack.c.b16 %v238, %v237
      %v244 = vpack.c.b16 %v240, %v239
      %v253 = vunpack.c.l.b16 %v217
      %v254 = vunpack.c.l.b16 %v218
      %v255 = vunpack.c.l.b16 %v219
      %v256 = vunpack.c.l.b16 %v220
      %v257 = vunpack.c.l.b16 %v221
      %v258 = vunpack.c.l.b16 %v222
      %v259 = vunpack.c.l.b16 %v223
      %v260 = vunpack.c.l.b16 %v224
      %v261 = vpack.c.b16 %v254, %v253
      %v262 = vpack.c.b16 %v256, %v255
      %v263 = vpack.c.b16 %v258, %v257
      %v264 = vpack.c.b16 %v260, %v259
      %vm269 = vcmask 523264
      %v271 = vsel %vm269, %v241, 0
      %v274 = vsel %vm269, %v242, 0
      %v277 = vsel %vm269, %v243, 0
      %v280 = vsel %vm269, %v244, 0
      %282 = vmatprep.subr.bf16.mxu0 0
      %283 = vmatpush1.bf16.msra.mxu0 0
      %284 = vmatprep.subr.bf16.mxu0 0
      %285 = vmatpush1.bf16.msra.mxu0 0
      %286 = vmatprep.subr.bf16.mxu0 0
      %287 = vmatpush1.bf16.msra.mxu0 0
      %288 = vmatprep.subr.bf16.mxu0 0
      %289 = vmatpush1.bf16.msra.mxu0 0
      %290 = vmatprep.subr.bf16.mxu0 0
      %291 = vmatpush1.bf16.msra.mxu0 %v264
      %292 = vmatprep.subr.bf16.mxu0 0
      %293 = vmatpush1.bf16.msra.mxu0 %v263
      %294 = vmatprep.subr.bf16.mxu0 0
      %295 = vmatpush1.bf16.msra.mxu0 %v262
      %296 = vmatprep.subr.bf16.mxu0 0
      %297 = vmatpush1.bf16.msra.mxu0 %v261
      %298 = vmatprep.subr.bf16.mxu0 0
      %299 = vmatpush2.bf16.msra.mxu0 0
      %300 = vmatprep.subr.bf16.mxu0 0
      %301 = vmatpush2.bf16.msra.mxu0 0
      %302 = vmatprep.subr.bf16.mxu0 0
      %303 = vmatpush2.bf16.msra.mxu0 0
      %304 = vmatprep.subr.bf16.mxu0 0
      %305 = vmatpush2.bf16.msra.mxu0 0
      %306 = vmatprep.subr.bf16.mxu0 0
      %307 = vmatpush2.bf16.msra.mxu0 0
      %308 = vmatprep.subr.bf16.mxu0 0
      %309 = vmatpush2.bf16.msra.mxu0 0
      %310 = vmatprep.subr.bf16.mxu0 0
      %311 = vmatpush2.bf16.msra.mxu0 0
      %312 = vmatprep.subr.bf16.mxu0 0
      %313 = vmatpush2.bf16.msra.mxu0 0
      %314 = vmatprep.mubr.bf16.mxu0 0
      %315 = vmatmul.mubr.bf16.gmra.mxu0 %v271
      %v316 = vpop.f32.mrf.mxu0
      %v317 = vadd.f32 0.0, %v316
      %v318 = vpop.f32.mrf.mxu0
      %v319 = vpop.f32.mrf.mxu0
      %v320 = vadd.f32 0.0, %v319
      %v321 = vpop.f32.mrf.mxu0
      %322 = vmatprep.mubr.bf16.mxu0 0
      %323 = vmatmul.mubr.bf16.gmra.mxu0 %v274
      %v324 = vpop.f32.mrf.mxu0
      %v325 = vadd.f32 0.0, %v324
      %v326 = vpop.f32.mrf.mxu0
      %v327 = vpop.f32.mrf.mxu0
      %v328 = vadd.f32 0.0, %v327
      %v329 = vpop.f32.mrf.mxu0
      %330 = vmatprep.mubr.bf16.mxu0 0
      %331 = vmatmul.mubr.bf16.gmra.mxu0 %v277
      %v332 = vpop.f32.mrf.mxu0
      %v333 = vadd.f32 0.0, %v332
      %v334 = vpop.f32.mrf.mxu0
      %v335 = vpop.f32.mrf.mxu0
      %v336 = vadd.f32 0.0, %v335
      %v337 = vpop.f32.mrf.mxu0
      %338 = vmatprep.mubr.bf16.mxu0 0
      %339 = vmatmul.mubr.bf16.gmra.mxu0 %v280
      %v340 = vpop.f32.mrf.mxu0
      %v341 = vadd.f32 0.0, %v340
      %v342 = vpop.f32.mrf.mxu0
      %v343 = vpop.f32.mrf.mxu0
      %v344 = vadd.f32 0.0, %v343
      %v345 = vpop.f32.mrf.mxu0
      %346 = vdwg.mxu0
      %v348 = vunpack.c.l.b16 %v199
      %v349 = vpack.c.b16 %v233, %v348
      %v350 = vpack.c.b16 %v235, %v234
      %v351 = vpack.c.b16 %v237, %v236
      %v352 = vpack.c.b16 %v239, %v238
      %v361 = vunpack.c.l.b16 %v207
      %v362 = vunpack.c.l.b16 %v208
      %v363 = vunpack.c.l.b16 %v209
      %v364 = vunpack.c.l.b16 %v210
      %v365 = vunpack.c.l.b16 %v211
      %v366 = vunpack.c.l.b16 %v212
      %v367 = vunpack.c.l.b16 %v213
      %v368 = vunpack.c.l.b16 %v214
      %v369 = vpack.c.b16 %v362, %v361
      %v370 = vpack.c.b16 %v364, %v363
      %v371 = vpack.c.b16 %v366, %v365
      %v372 = vpack.c.b16 %v368, %v367
      %v378 = vsel %vm269, %v349, 0
      %v381 = vsel %vm269, %v350, 0
      %v384 = vsel %vm269, %v351, 0
      %v387 = vsel %vm269, %v352, 0
      %389 = vmatprep.subr.bf16.mxu0 0
      %390 = vmatpush1.bf16.msra.mxu0 0
      %391 = vmatprep.subr.bf16.mxu0 0
      %392 = vmatpush1.bf16.msra.mxu0 0
      %393 = vmatprep.subr.bf16.mxu0 0
      %394 = vmatpush1.bf16.msra.mxu0 0
      %395 = vmatprep.subr.bf16.mxu0 0
      %396 = vmatpush1.bf16.msra.mxu0 0
      %397 = vmatprep.subr.bf16.mxu0 0
      %398 = vmatpush1.bf16.msra.mxu0 %v372
      %399 = vmatprep.subr.bf16.mxu0 0
      %400 = vmatpush1.bf16.msra.mxu0 %v371
      %401 = vmatprep.subr.bf16.mxu0 0
      %402 = vmatpush1.bf16.msra.mxu0 %v370
      %403 = vmatprep.subr.bf16.mxu0 0
      %404 = vmatpush1.bf16.msra.mxu0 %v369
      %405 = vmatprep.subr.bf16.mxu0 0
      %406 = vmatpush2.bf16.msra.mxu0 0
      %407 = vmatprep.subr.bf16.mxu0 0
      %408 = vmatpush2.bf16.msra.mxu0 0
      %409 = vmatprep.subr.bf16.mxu0 0
      %410 = vmatpush2.bf16.msra.mxu0 0
      %411 = vmatprep.subr.bf16.mxu0 0
      %412 = vmatpush2.bf16.msra.mxu0 0
      %413 = vmatprep.subr.bf16.mxu0 0
      %414 = vmatpush2.bf16.msra.mxu0 0
      %415 = vmatprep.subr.bf16.mxu0 0
      %416 = vmatpush2.bf16.msra.mxu0 0
      %417 = vmatprep.subr.bf16.mxu0 0
      %418 = vmatpush2.bf16.msra.mxu0 0
      %419 = vmatprep.subr.bf16.mxu0 0
      %420 = vmatpush2.bf16.msra.mxu0 0
      %421 = vmatprep.mubr.bf16.mxu0 0
      %422 = vmatmul.mubr.bf16.gmra.mxu0 %v378
      %v423 = vpop.f32.mrf.mxu0
      %v424 = vadd.f32 %v317, %v423
      %v425 = vpop.f32.mrf.mxu0
      %v426 = vpop.f32.mrf.mxu0
      %v427 = vadd.f32 %v320, %v426
      %v428 = vpop.f32.mrf.mxu0
      %429 = vmatprep.mubr.bf16.mxu0 0
      %430 = vmatmul.mubr.bf16.gmra.mxu0 %v381
      %v431 = vpop.f32.mrf.mxu0
      %v432 = vadd.f32 %v325, %v431
      %v433 = vpop.f32.mrf.mxu0
      %v434 = vpop.f32.mrf.mxu0
      %v435 = vadd.f32 %v328, %v434
      %v436 = vpop.f32.mrf.mxu0
      %437 = vmatprep.mubr.bf16.mxu0 0
      %438 = vmatmul.mubr.bf16.gmra.mxu0 %v384
      %v439 = vpop.f32.mrf.mxu0
      %v440 = vadd.f32 %v333, %v439
      %v441 = vpop.f32.mrf.mxu0
      %v442 = vpop.f32.mrf.mxu0
      %v443 = vadd.f32 %v336, %v442
      %v444 = vpop.f32.mrf.mxu0
      %445 = vmatprep.mubr.bf16.mxu0 0
      %446 = vmatmul.mubr.bf16.gmra.mxu0 %v387
      %v447 = vpop.f32.mrf.mxu0
      %v448 = vadd.f32 %v341, %v447
      %v449 = vpop.f32.mrf.mxu0
      %v450 = vpop.f32.mrf.mxu0
      %v451 = vadd.f32 %v344, %v450
      %v452 = vpop.f32.mrf.mxu0
      %453 = vdwg.mxu0
      %s454 = scalar_lea.vmem %s192, 36
      %v455 = vld [vmem:[%s454] sm:$0xf]
      %v456 = vld [vmem:[%s454 + $0x4] sm:$0xf]
      %v457 = vld [vmem:[%s454 + $0x8] sm:$0xf]
      %v458 = vld [vmem:[%s454 + $0xc] sm:$0xf]
      %v459 = vld [vmem:[%s454 + $0x10] sm:$0xf]
      %v460 = vld [vmem:[%s454 + $0x14] sm:$0xf]
      %v461 = vld [vmem:[%s454 + $0x18] sm:$0xf]
      %v462 = vld [vmem:[%s454 + $0x1c] sm:$0xf]
      %s463 = scalar_lea.vmem %s1, 64
      %v464 = vld [vmem:[%s463] sm:$0xf]
      %v465 = vld [vmem:[%s463 + $0x4] sm:$0xf]
      %v466 = vld [vmem:[%s463 + $0x8] sm:$0xf]
      %v467 = vld [vmem:[%s463 + $0xc] sm:$0xf]
      %v468 = vld [vmem:[%s463 + $0x10] sm:$0xf]
      %v469 = vld [vmem:[%s463 + $0x14] sm:$0xf]
      %v470 = vld [vmem:[%s463 + $0x18] sm:$0xf]
      %v471 = vld [vmem:[%s463 + $0x1c] sm:$0xf]
      %v480 = vunpack.c.l.b16 %v455
      %v481 = vunpack.c.l.b16 %v456
      %v482 = vunpack.c.l.b16 %v457
      %v483 = vunpack.c.l.b16 %v458
      %v484 = vunpack.c.l.b16 %v459
      %v485 = vunpack.c.l.b16 %v460
      %v486 = vunpack.c.l.b16 %v461
      %v487 = vunpack.c.l.b16 %v462
      %v488 = vpack.c.b16 %v481, %v480
      %v489 = vpack.c.b16 %v483, %v482
      %v490 = vpack.c.b16 %v485, %v484
      %v491 = vpack.c.b16 %v487, %v486
      %v500 = vunpack.c.l.b16 %v464
      %v501 = vunpack.c.l.b16 %v465
      %v502 = vunpack.c.l.b16 %v466
      %v503 = vunpack.c.l.b16 %v467
      %v504 = vunpack.c.l.b16 %v468
      %v505 = vunpack.c.l.b16 %v469
      %v506 = vunpack.c.l.b16 %v470
      %v507 = vunpack.c.l.b16 %v471
      %v508 = vpack.c.b16 %v501, %v500
      %v509 = vpack.c.b16 %v503, %v502
      %v510 = vpack.c.b16 %v505, %v504
      %v511 = vpack.c.b16 %v507, %v506
      %v517 = vsel %vm269, %v488, 0
      %v520 = vsel %vm269, %v489, 0
      %v523 = vsel %vm269, %v490, 0
      %v526 = vsel %vm269, %v491, 0
      %528 = vmatprep.subr.bf16.mxu0 0
      %529 = vmatpush1.bf16.msra.mxu0 0
      %530 = vmatprep.subr.bf16.mxu0 0
      %531 = vmatpush1.bf16.msra.mxu0 0
      %532 = vmatprep.subr.bf16.mxu0 0
      %533 = vmatpush1.bf16.msra.mxu0 0
      %534 = vmatprep.subr.bf16.mxu0 0
      %535 = vmatpush1.bf16.msra.mxu0 0
      %536 = vmatprep.subr.bf16.mxu0 0
      %537 = vmatpush1.bf16.msra.mxu0 %v511
      %538 = vmatprep.subr.bf16.mxu0 0
      %539 = vmatpush1.bf16.msra.mxu0 %v510
      %540 = vmatprep.subr.bf16.mxu0 0
      %541 = vmatpush1.bf16.msra.mxu0 %v509
      %542 = vmatprep.subr.bf16.mxu0 0
      %543 = vmatpush1.bf16.msra.mxu0 %v508
      %544 = vmatprep.subr.bf16.mxu0 0
      %545 = vmatpush2.bf16.msra.mxu0 0
      %546 = vmatprep.subr.bf16.mxu0 0
      %547 = vmatpush2.bf16.msra.mxu0 0
      %548 = vmatprep.subr.bf16.mxu0 0
      %549 = vmatpush2.bf16.msra.mxu0 0
      %550 = vmatprep.subr.bf16.mxu0 0
      %551 = vmatpush2.bf16.msra.mxu0 0
      %552 = vmatprep.subr.bf16.mxu0 0
      %553 = vmatpush2.bf16.msra.mxu0 0
      %554 = vmatprep.subr.bf16.mxu0 0
      %555 = vmatpush2.bf16.msra.mxu0 0
      %556 = vmatprep.subr.bf16.mxu0 0
      %557 = vmatpush2.bf16.msra.mxu0 0
      %558 = vmatprep.subr.bf16.mxu0 0
      %559 = vmatpush2.bf16.msra.mxu0 0
      %560 = vmatprep.mubr.bf16.mxu0 0
      %561 = vmatmul.mubr.bf16.gmra.mxu0 %v517
      %v562 = vpop.f32.mrf.mxu0
      %v563 = vadd.f32 0.0, %v562
      %v564 = vpop.f32.mrf.mxu0
      %v565 = vpop.f32.mrf.mxu0
      %v566 = vadd.f32 0.0, %v565
      %v567 = vpop.f32.mrf.mxu0
      %568 = vmatprep.mubr.bf16.mxu0 0
      %569 = vmatmul.mubr.bf16.gmra.mxu0 %v520
      %v570 = vpop.f32.mrf.mxu0
      %v571 = vadd.f32 0.0, %v570
      %v572 = vpop.f32.mrf.mxu0
      %v573 = vpop.f32.mrf.mxu0
      %v574 = vadd.f32 0.0, %v573
      %v575 = vpop.f32.mrf.mxu0
      %576 = vmatprep.mubr.bf16.mxu0 0
      %577 = vmatmul.mubr.bf16.gmra.mxu0 %v523
      %v578 = vpop.f32.mrf.mxu0
      %v579 = vadd.f32 0.0, %v578
      %v580 = vpop.f32.mrf.mxu0
      %v581 = vpop.f32.mrf.mxu0
      %v582 = vadd.f32 0.0, %v581
      %v583 = vpop.f32.mrf.mxu0
      %584 = vmatprep.mubr.bf16.mxu0 0
      %585 = vmatmul.mubr.bf16.gmra.mxu0 %v526
      %v586 = vpop.f32.mrf.mxu0
      %v587 = vadd.f32 0.0, %v586
      %v588 = vpop.f32.mrf.mxu0
      %v589 = vpop.f32.mrf.mxu0
      %v590 = vadd.f32 0.0, %v589
      %v591 = vpop.f32.mrf.mxu0
      %592 = vdwg.mxu0
      %v593 = vadd.f32 %v424, %v563
      %v594 = vadd.f32 %v427, %v566
      %v595 = vadd.f32 %v432, %v571
      %v596 = vadd.f32 %v435, %v574
      %v597 = vadd.f32 %v440, %v579
      %v598 = vadd.f32 %v443, %v582
      %v599 = vadd.f32 %v448, %v587
      %v600 = vadd.f32 %v451, %v590
      %s601 = scalar_lea.vmem %s192, 72
      %v602 = vld [vmem:[%s601] sm:$0xf]
      %v603 = vld [vmem:[%s601 + $0x4] sm:$0xf]
      %v604 = vld [vmem:[%s601 + $0x8] sm:$0xf]
      %v605 = vld [vmem:[%s601 + $0xc] sm:$0xf]
      %v606 = vld [vmem:[%s601 + $0x10] sm:$0xf]
      %v607 = vld [vmem:[%s601 + $0x14] sm:$0xf]
      %v608 = vld [vmem:[%s601 + $0x18] sm:$0xf]
      %v609 = vld [vmem:[%s601 + $0x1c] sm:$0xf]
      %s610 = scalar_lea.vmem %s1, 96
      %v611 = vld [vmem:[%s610] sm:$0xf]
      %v612 = vld [vmem:[%s610 + $0x4] sm:$0xf]
      %v613 = vld [vmem:[%s610 + $0x8] sm:$0xf]
      %v614 = vld [vmem:[%s610 + $0xc] sm:$0xf]
      %v615 = vld [vmem:[%s610 + $0x10] sm:$0xf]
      %v616 = vld [vmem:[%s610 + $0x14] sm:$0xf]
      %v617 = vld [vmem:[%s610 + $0x18] sm:$0xf]
      %v618 = vld [vmem:[%s610 + $0x1c] sm:$0xf]
      %v627 = vunpack.c.l.b16 %v602
      %v628 = vunpack.c.l.b16 %v603
      %v629 = vunpack.c.l.b16 %v604
      %v630 = vunpack.c.l.b16 %v605
      %v631 = vunpack.c.l.b16 %v606
      %v632 = vunpack.c.l.b16 %v607
      %v633 = vunpack.c.l.b16 %v608
      %v634 = vunpack.c.l.b16 %v609
      %v635 = vpack.c.b16 %v628, %v627
      %v636 = vpack.c.b16 %v630, %v629
      %v637 = vpack.c.b16 %v632, %v631
      %v638 = vpack.c.b16 %v634, %v633
      %v647 = vunpack.c.l.b16 %v611
      %v648 = vunpack.c.l.b16 %v612
      %v649 = vunpack.c.l.b16 %v613
      %v650 = vunpack.c.l.b16 %v614
      %v651 = vunpack.c.l.b16 %v615
      %v652 = vunpack.c.l.b16 %v616
      %v653 = vunpack.c.l.b16 %v617
      %v654 = vunpack.c.l.b16 %v618
      %v655 = vpack.c.b16 %v648, %v647
      %v656 = vpack.c.b16 %v650, %v649
      %v657 = vpack.c.b16 %v652, %v651
      %v658 = vpack.c.b16 %v654, %v653
      %v664 = vsel %vm269, %v635, 0
      %v667 = vsel %vm269, %v636, 0
      %v670 = vsel %vm269, %v637, 0
      %v673 = vsel %vm269, %v638, 0
      %675 = vmatprep.subr.bf16.mxu0 0
      %676 = vmatpush1.bf16.msra.mxu0 0
      %677 = vmatprep.subr.bf16.mxu0 0
      %678 = vmatpush1.bf16.msra.mxu0 0
      %679 = vmatprep.subr.bf16.mxu0 0
      %680 = vmatpush1.bf16.msra.mxu0 0
      %681 = vmatprep.subr.bf16.mxu0 0
      %682 = vmatpush1.bf16.msra.mxu0 0
      %683 = vmatprep.subr.bf16.mxu0 0
      %684 = vmatpush1.bf16.msra.mxu0 %v658
      %685 = vmatprep.subr.bf16.mxu0 0
      %686 = vmatpush1.bf16.msra.mxu0 %v657
      %687 = vmatprep.subr.bf16.mxu0 0
      %688 = vmatpush1.bf16.msra.mxu0 %v656
      %689 = vmatprep.subr.bf16.mxu0 0
      %690 = vmatpush1.bf16.msra.mxu0 %v655
      %691 = vmatprep.subr.bf16.mxu0 0
      %692 = vmatpush2.bf16.msra.mxu0 0
      %693 = vmatprep.subr.bf16.mxu0 0
      %694 = vmatpush2.bf16.msra.mxu0 0
      %695 = vmatprep.subr.bf16.mxu0 0
      %696 = vmatpush2.bf16.msra.mxu0 0
      %697 = vmatprep.subr.bf16.mxu0 0
      %698 = vmatpush2.bf16.msra.mxu0 0
      %699 = vmatprep.subr.bf16.mxu0 0
      %700 = vmatpush2.bf16.msra.mxu0 0
      %701 = vmatprep.subr.bf16.mxu0 0
      %702 = vmatpush2.bf16.msra.mxu0 0
      %703 = vmatprep.subr.bf16.mxu0 0
      %704 = vmatpush2.bf16.msra.mxu0 0
      %705 = vmatprep.subr.bf16.mxu0 0
      %706 = vmatpush2.bf16.msra.mxu0 0
      %707 = vmatprep.mubr.bf16.mxu0 0
      %708 = vmatmul.mubr.bf16.gmra.mxu0 %v664
      %v709 = vpop.f32.mrf.mxu0
      %v710 = vadd.f32 0.0, %v709
      %v711 = vpop.f32.mrf.mxu0
      %v712 = vpop.f32.mrf.mxu0
      %v713 = vadd.f32 0.0, %v712
      %v714 = vpop.f32.mrf.mxu0
      %715 = vmatprep.mubr.bf16.mxu0 0
      %716 = vmatmul.mubr.bf16.gmra.mxu0 %v667
      %v717 = vpop.f32.mrf.mxu0
      %v718 = vadd.f32 0.0, %v717
      %v719 = vpop.f32.mrf.mxu0
      %v720 = vpop.f32.mrf.mxu0
      %v721 = vadd.f32 0.0, %v720
      %v722 = vpop.f32.mrf.mxu0
      %723 = vmatprep.mubr.bf16.mxu0 0
      %724 = vmatmul.mubr.bf16.gmra.mxu0 %v670
      %v725 = vpop.f32.mrf.mxu0
      %v726 = vadd.f32 0.0, %v725
      %v727 = vpop.f32.mrf.mxu0
      %v728 = vpop.f32.mrf.mxu0
      %v729 = vadd.f32 0.0, %v728
      %v730 = vpop.f32.mrf.mxu0
      %731 = vmatprep.mubr.bf16.mxu0 0
      %732 = vmatmul.mubr.bf16.gmra.mxu0 %v673
      %v733 = vpop.f32.mrf.mxu0
      %v734 = vadd.f32 0.0, %v733
      %v735 = vpop.f32.mrf.mxu0
      %v736 = vpop.f32.mrf.mxu0
      %v737 = vadd.f32 0.0, %v736
      %v738 = vpop.f32.mrf.mxu0
      %739 = vdwg.mxu0
      %v740 = vadd.f32 %v593, %v710
      %v741 = vadd.f32 %v594, %v713
      %v742 = vadd.f32 %v595, %v718
      %v743 = vadd.f32 %v596, %v721
      %v744 = vadd.f32 %v597, %v726
      %v745 = vadd.f32 %v598, %v729
      %v746 = vadd.f32 %v599, %v734
      %v747 = vadd.f32 %v600, %v737
      %v748 = vld [vmem:[%s601 + $0x4] sm:$0xf]
      %v749 = vld [vmem:[%s601 + $0x8] sm:$0xf]
      %v750 = vld [vmem:[%s601 + $0xc] sm:$0xf]
      %v751 = vld [vmem:[%s601 + $0x10] sm:$0xf]
      %v752 = vld [vmem:[%s601 + $0x14] sm:$0xf]
      %v753 = vld [vmem:[%s601 + $0x18] sm:$0xf]
      %v754 = vld [vmem:[%s601 + $0x1c] sm:$0xf]
      %v755 = vld [vmem:[%s601 + $0x20] sm:$0xf]
      %s756 = scalar_lea.vmem %s1, 128
      %v757 = vld [vmem:[%s756] sm:$0xf]
      %v758 = vld [vmem:[%s756 + $0x4] sm:$0xf]
      %v759 = vld [vmem:[%s756 + $0x8] sm:$0xf]
      %v760 = vld [vmem:[%s756 + $0xc] sm:$0xf]
      %v761 = vld [vmem:[%s756 + $0x10] sm:$0xf]
      %v762 = vld [vmem:[%s756 + $0x14] sm:$0xf]
      %v763 = vld [vmem:[%s756 + $0x18] sm:$0xf]
      %v764 = vld [vmem:[%s756 + $0x1c] sm:$0xf]
      %v773 = vunpack.c.l.b16 %v748
      %v774 = vunpack.c.l.b16 %v749
      %v775 = vunpack.c.l.b16 %v750
      %v776 = vunpack.c.l.b16 %v751
      %v777 = vunpack.c.l.b16 %v752
      %v778 = vunpack.c.l.b16 %v753
      %v779 = vunpack.c.l.b16 %v754
      %v780 = vunpack.c.l.b16 %v755
      %v781 = vpack.c.b16 %v774, %v773
      %v782 = vpack.c.b16 %v776, %v775
      %v783 = vpack.c.b16 %v778, %v777
      %v784 = vpack.c.b16 %v780, %v779
      %v793 = vunpack.c.l.b16 %v757
      %v794 = vunpack.c.l.b16 %v758
      %v795 = vunpack.c.l.b16 %v759
      %v796 = vunpack.c.l.b16 %v760
      %v797 = vunpack.c.l.b16 %v761
      %v798 = vunpack.c.l.b16 %v762
      %v799 = vunpack.c.l.b16 %v763
      %v800 = vunpack.c.l.b16 %v764
      %v801 = vpack.c.b16 %v794, %v793
      %v802 = vpack.c.b16 %v796, %v795
      %v803 = vpack.c.b16 %v798, %v797
      %v804 = vpack.c.b16 %v800, %v799
      %v810 = vsel %vm269, %v781, 0
      %v813 = vsel %vm269, %v782, 0
      %v816 = vsel %vm269, %v783, 0
      %v819 = vsel %vm269, %v784, 0
      %821 = vmatprep.subr.bf16.mxu0 0
      %822 = vmatpush1.bf16.msra.mxu0 0
      %823 = vmatprep.subr.bf16.mxu0 0
      %824 = vmatpush1.bf16.msra.mxu0 0
      %825 = vmatprep.subr.bf16.mxu0 0
      %826 = vmatpush1.bf16.msra.mxu0 0
      %827 = vmatprep.subr.bf16.mxu0 0
      %828 = vmatpush1.bf16.msra.mxu0 0
      %829 = vmatprep.subr.bf16.mxu0 0
      %830 = vmatpush1.bf16.msra.mxu0 %v804
      %831 = vmatprep.subr.bf16.mxu0 0
      %832 = vmatpush1.bf16.msra.mxu0 %v803
      %833 = vmatprep.subr.bf16.mxu0 0
      %834 = vmatpush1.bf16.msra.mxu0 %v802
      %835 = vmatprep.subr.bf16.mxu0 0
      %836 = vmatpush1.bf16.msra.mxu0 %v801
      %837 = vmatprep.subr.bf16.mxu0 0
      %838 = vmatpush2.bf16.msra.mxu0 0
      %839 = vmatprep.subr.bf16.mxu0 0
      %840 = vmatpush2.bf16.msra.mxu0 0
      %841 = vmatprep.subr.bf16.mxu0 0
      %842 = vmatpush2.bf16.msra.mxu0 0
      %843 = vmatprep.subr.bf16.mxu0 0
      %844 = vmatpush2.bf16.msra.mxu0 0
      %845 = vmatprep.subr.bf16.mxu0 0
      %846 = vmatpush2.bf16.msra.mxu0 0
      %847 = vmatprep.subr.bf16.mxu0 0
      %848 = vmatpush2.bf16.msra.mxu0 0
      %849 = vmatprep.subr.bf16.mxu0 0
      %850 = vmatpush2.bf16.msra.mxu0 0
      %851 = vmatprep.subr.bf16.mxu0 0
      %852 = vmatpush2.bf16.msra.mxu0 0
      %853 = vmatprep.mubr.bf16.mxu0 0
      %854 = vmatmul.mubr.bf16.gmra.mxu0 %v810
      %v855 = vpop.f32.mrf.mxu0
      %v856 = vadd.f32 0.0, %v855
      %v857 = vpop.f32.mrf.mxu0
      %v858 = vpop.f32.mrf.mxu0
      %v859 = vadd.f32 0.0, %v858
      %v860 = vpop.f32.mrf.mxu0
      %861 = vmatprep.mubr.bf16.mxu0 0
      %862 = vmatmul.mubr.bf16.gmra.mxu0 %v813
      %v863 = vpop.f32.mrf.mxu0
      %v864 = vadd.f32 0.0, %v863
      %v865 = vpop.f32.mrf.mxu0
      %v866 = vpop.f32.mrf.mxu0
      %v867 = vadd.f32 0.0, %v866
      %v868 = vpop.f32.mrf.mxu0
      %869 = vmatprep.mubr.bf16.mxu0 0
      %870 = vmatmul.mubr.bf16.gmra.mxu0 %v816
      %v871 = vpop.f32.mrf.mxu0
      %v872 = vadd.f32 0.0, %v871
      %v873 = vpop.f32.mrf.mxu0
      %v874 = vpop.f32.mrf.mxu0
      %v875 = vadd.f32 0.0, %v874
      %v876 = vpop.f32.mrf.mxu0
      %877 = vmatprep.mubr.bf16.mxu0 0
      %878 = vmatmul.mubr.bf16.gmra.mxu0 %v819
      %v879 = vpop.f32.mrf.mxu0
      %v880 = vadd.f32 0.0, %v879
      %v881 = vpop.f32.mrf.mxu0
      %v882 = vpop.f32.mrf.mxu0
      %v883 = vadd.f32 0.0, %v882
      %v884 = vpop.f32.mrf.mxu0
      %885 = vdwg.mxu0
      %v886 = vadd.f32 %v740, %v856
      %v887 = vadd.f32 %v741, %v859
      %v888 = vadd.f32 %v742, %v864
      %v889 = vadd.f32 %v743, %v867
      %v890 = vadd.f32 %v744, %v872
      %v891 = vadd.f32 %v745, %v875
      %v892 = vadd.f32 %v746, %v880
      %v893 = vadd.f32 %v747, %v883
      %s894 = scalar_lea.vmem %s192, 108
      %v895 = vld [vmem:[%s894] sm:$0xf]
      %v896 = vld [vmem:[%s894 + $0x4] sm:$0xf]
      %v897 = vld [vmem:[%s894 + $0x8] sm:$0xf]
      %v898 = vld [vmem:[%s894 + $0xc] sm:$0xf]
      %v899 = vld [vmem:[%s894 + $0x10] sm:$0xf]
      %v900 = vld [vmem:[%s894 + $0x14] sm:$0xf]
      %v901 = vld [vmem:[%s894 + $0x18] sm:$0xf]
      %v902 = vld [vmem:[%s894 + $0x1c] sm:$0xf]
      %s903 = scalar_lea.vmem %s1, 160
      %v904 = vld [vmem:[%s903] sm:$0xf]
      %v905 = vld [vmem:[%s903 + $0x4] sm:$0xf]
      %v906 = vld [vmem:[%s903 + $0x8] sm:$0xf]
      %v907 = vld [vmem:[%s903 + $0xc] sm:$0xf]
      %v908 = vld [vmem:[%s903 + $0x10] sm:$0xf]
      %v909 = vld [vmem:[%s903 + $0x14] sm:$0xf]
      %v910 = vld [vmem:[%s903 + $0x18] sm:$0xf]
      %v911 = vld [vmem:[%s903 + $0x1c] sm:$0xf]
      %v920 = vunpack.c.l.b16 %v895
      %v921 = vunpack.c.l.b16 %v896
      %v922 = vunpack.c.l.b16 %v897
      %v923 = vunpack.c.l.b16 %v898
      %v924 = vunpack.c.l.b16 %v899
      %v925 = vunpack.c.l.b16 %v900
      %v926 = vunpack.c.l.b16 %v901
      %v927 = vunpack.c.l.b16 %v902
      %v928 = vpack.c.b16 %v921, %v920
      %v929 = vpack.c.b16 %v923, %v922
      %v930 = vpack.c.b16 %v925, %v924
      %v931 = vpack.c.b16 %v927, %v926
      %v940 = vunpack.c.l.b16 %v904
      %v941 = vunpack.c.l.b16 %v905
      %v942 = vunpack.c.l.b16 %v906
      %v943 = vunpack.c.l.b16 %v907
      %v944 = vunpack.c.l.b16 %v908
      %v945 = vunpack.c.l.b16 %v909
      %v946 = vunpack.c.l.b16 %v910
      %v947 = vunpack.c.l.b16 %v911
      %v948 = vpack.c.b16 %v941, %v940
      %v949 = vpack.c.b16 %v943, %v942
      %v950 = vpack.c.b16 %v945, %v944
      %v951 = vpack.c.b16 %v947, %v946
      %v957 = vsel %vm269, %v928, 0
      %v960 = vsel %vm269, %v929, 0
      %v963 = vsel %vm269, %v930, 0
      %v966 = vsel %vm269, %v931, 0
      %968 = vmatprep.subr.bf16.mxu0 0
      %969 = vmatpush1.bf16.msra.mxu0 0
      %970 = vmatprep.subr.bf16.mxu0 0
      %971 = vmatpush1.bf16.msra.mxu0 0
      %972 = vmatprep.subr.bf16.mxu0 0
      %973 = vmatpush1.bf16.msra.mxu0 0
      %974 = vmatprep.subr.bf16.mxu0 0
      %975 = vmatpush1.bf16.msra.mxu0 0
      %976 = vmatprep.subr.bf16.mxu0 0
      %977 = vmatpush1.bf16.msra.mxu0 %v951
      %978 = vmatprep.subr.bf16.mxu0 0
      %979 = vmatpush1.bf16.msra.mxu0 %v950
      %980 = vmatprep.subr.bf16.mxu0 0
      %981 = vmatpush1.bf16.msra.mxu0 %v949
      %982 = vmatprep.subr.bf16.mxu0 0
      %983 = vmatpush1.bf16.msra.mxu0 %v948
      %984 = vmatprep.subr.bf16.mxu0 0
      %985 = vmatpush2.bf16.msra.mxu0 0
      %986 = vmatprep.subr.bf16.mxu0 0
      %987 = vmatpush2.bf16.msra.mxu0 0
      %988 = vmatprep.subr.bf16.mxu0 0
      %989 = vmatpush2.bf16.msra.mxu0 0
      %990 = vmatprep.subr.bf16.mxu0 0
      %991 = vmatpush2.bf16.msra.mxu0 0
      %992 = vmatprep.subr.bf16.mxu0 0
      %993 = vmatpush2.bf16.msra.mxu0 0
      %994 = vmatprep.subr.bf16.mxu0 0
      %995 = vmatpush2.bf16.msra.mxu0 0
      %996 = vmatprep.subr.bf16.mxu0 0
      %997 = vmatpush2.bf16.msra.mxu0 0
      %998 = vmatprep.subr.bf16.mxu0 0
      %999 = vmatpush2.bf16.msra.mxu0 0
      %1000 = vmatprep.mubr.bf16.mxu0 0
      %1001 = vmatmul.mubr.bf16.gmra.mxu0 %v957
      %v1002 = vpop.f32.mrf.mxu0
      %v1003 = vadd.f32 0.0, %v1002
      %v1004 = vpop.f32.mrf.mxu0
      %v1005 = vpop.f32.mrf.mxu0
      %v1006 = vadd.f32 0.0, %v1005
      %v1007 = vpop.f32.mrf.mxu0
      %1008 = vmatprep.mubr.bf16.mxu0 0
      %1009 = vmatmul.mubr.bf16.gmra.mxu0 %v960
      %v1010 = vpop.f32.mrf.mxu0
      %v1011 = vadd.f32 0.0, %v1010
      %v1012 = vpop.f32.mrf.mxu0
      %v1013 = vpop.f32.mrf.mxu0
      %v1014 = vadd.f32 0.0, %v1013
      %v1015 = vpop.f32.mrf.mxu0
      %1016 = vmatprep.mubr.bf16.mxu0 0
      %1017 = vmatmul.mubr.bf16.gmra.mxu0 %v963
      %v1018 = vpop.f32.mrf.mxu0
      %v1019 = vadd.f32 0.0, %v1018
      %v1020 = vpop.f32.mrf.mxu0
      %v1021 = vpop.f32.mrf.mxu0
      %v1022 = vadd.f32 0.0, %v1021
      %v1023 = vpop.f32.mrf.mxu0
      %1024 = vmatprep.mubr.bf16.mxu0 0
      %1025 = vmatmul.mubr.bf16.gmra.mxu0 %v966
      %v1026 = vpop.f32.mrf.mxu0
      %v1027 = vadd.f32 0.0, %v1026
      %v1028 = vpop.f32.mrf.mxu0
      %v1029 = vpop.f32.mrf.mxu0
      %v1030 = vadd.f32 0.0, %v1029
      %v1031 = vpop.f32.mrf.mxu0
      %1032 = vdwg.mxu0
      %v1033 = vadd.f32 %v886, %v1003
      %v1034 = vadd.f32 %v887, %v1006
      %v1035 = vadd.f32 %v888, %v1011
      %v1036 = vadd.f32 %v889, %v1014
      %v1037 = vadd.f32 %v890, %v1019
      %v1038 = vadd.f32 %v891, %v1022
      %v1039 = vadd.f32 %v892, %v1027
      %v1040 = vadd.f32 %v893, %v1030
      %s1041 = scalar_lea.vmem %s192, 144
      %v1042 = vld [vmem:[%s1041] sm:$0xf]
      %v1043 = vld [vmem:[%s1041 + $0x4] sm:$0xf]
      %v1044 = vld [vmem:[%s1041 + $0x8] sm:$0xf]
      %v1045 = vld [vmem:[%s1041 + $0xc] sm:$0xf]
      %v1046 = vld [vmem:[%s1041 + $0x10] sm:$0xf]
      %v1047 = vld [vmem:[%s1041 + $0x14] sm:$0xf]
      %v1048 = vld [vmem:[%s1041 + $0x18] sm:$0xf]
      %v1049 = vld [vmem:[%s1041 + $0x1c] sm:$0xf]
      %s1050 = scalar_lea.vmem %s1, 192
      %v1051 = vld [vmem:[%s1050] sm:$0xf]
      %v1052 = vld [vmem:[%s1050 + $0x4] sm:$0xf]
      %v1053 = vld [vmem:[%s1050 + $0x8] sm:$0xf]
      %v1054 = vld [vmem:[%s1050 + $0xc] sm:$0xf]
      %v1055 = vld [vmem:[%s1050 + $0x10] sm:$0xf]
      %v1056 = vld [vmem:[%s1050 + $0x14] sm:$0xf]
      %v1057 = vld [vmem:[%s1050 + $0x18] sm:$0xf]
      %v1058 = vld [vmem:[%s1050 + $0x1c] sm:$0xf]
      %v1067 = vunpack.c.l.b16 %v1042
      %v1068 = vunpack.c.l.b16 %v1043
      %v1069 = vunpack.c.l.b16 %v1044
      %v1070 = vunpack.c.l.b16 %v1045
      %v1071 = vunpack.c.l.b16 %v1046
      %v1072 = vunpack.c.l.b16 %v1047
      %v1073 = vunpack.c.l.b16 %v1048
      %v1074 = vunpack.c.l.b16 %v1049
      %v1075 = vpack.c.b16 %v1068, %v1067
      %v1076 = vpack.c.b16 %v1070, %v1069
      %v1077 = vpack.c.b16 %v1072, %v1071
      %v1078 = vpack.c.b16 %v1074, %v1073
      %v1087 = vunpack.c.l.b16 %v1051
      %v1088 = vunpack.c.l.b16 %v1052
      %v1089 = vunpack.c.l.b16 %v1053
      %v1090 = vunpack.c.l.b16 %v1054
      %v1091 = vunpack.c.l.b16 %v1055
      %v1092 = vunpack.c.l.b16 %v1056
      %v1093 = vunpack.c.l.b16 %v1057
      %v1094 = vunpack.c.l.b16 %v1058
      %v1095 = vpack.c.b16 %v1088, %v1087
      %v1096 = vpack.c.b16 %v1090, %v1089
      %v1097 = vpack.c.b16 %v1092, %v1091
      %v1098 = vpack.c.b16 %v1094, %v1093
      %v1104 = vsel %vm269, %v1075, 0
      %v1107 = vsel %vm269, %v1076, 0
      %v1110 = vsel %vm269, %v1077, 0
      %v1113 = vsel %vm269, %v1078, 0
      %1115 = vmatprep.subr.bf16.mxu0 0
      %1116 = vmatpush1.bf16.msra.mxu0 0
      %1117 = vmatprep.subr.bf16.mxu0 0
      %1118 = vmatpush1.bf16.msra.mxu0 0
      %1119 = vmatprep.subr.bf16.mxu0 0
      %1120 = vmatpush1.bf16.msra.mxu0 0
      %1121 = vmatprep.subr.bf16.mxu0 0
      %1122 = vmatpush1.bf16.msra.mxu0 0
      %1123 = vmatprep.subr.bf16.mxu0 0
      %1124 = vmatpush1.bf16.msra.mxu0 %v1098
      %1125 = vmatprep.subr.bf16.mxu0 0
      %1126 = vmatpush1.bf16.msra.mxu0 %v1097
      %1127 = vmatprep.subr.bf16.mxu0 0
      %1128 = vmatpush1.bf16.msra.mxu0 %v1096
      %1129 = vmatprep.subr.bf16.mxu0 0
      %1130 = vmatpush1.bf16.msra.mxu0 %v1095
      %1131 = vmatprep.subr.bf16.mxu0 0
      %1132 = vmatpush2.bf16.msra.mxu0 0
      %1133 = vmatprep.subr.bf16.mxu0 0
      %1134 = vmatpush2.bf16.msra.mxu0 0
      %1135 = vmatprep.subr.bf16.mxu0 0
      %1136 = vmatpush2.bf16.msra.mxu0 0
      %1137 = vmatprep.subr.bf16.mxu0 0
      %1138 = vmatpush2.bf16.msra.mxu0 0
      %1139 = vmatprep.subr.bf16.mxu0 0
      %1140 = vmatpush2.bf16.msra.mxu0 0
      %1141 = vmatprep.subr.bf16.mxu0 0
      %1142 = vmatpush2.bf16.msra.mxu0 0
      %1143 = vmatprep.subr.bf16.mxu0 0
      %1144 = vmatpush2.bf16.msra.mxu0 0
      %1145 = vmatprep.subr.bf16.mxu0 0
      %1146 = vmatpush2.bf16.msra.mxu0 0
      %1147 = vmatprep.mubr.bf16.mxu0 0
      %1148 = vmatmul.mubr.bf16.gmra.mxu0 %v1104
      %v1149 = vpop.f32.mrf.mxu0
      %v1150 = vadd.f32 0.0, %v1149
      %v1151 = vpop.f32.mrf.mxu0
      %v1152 = vpop.f32.mrf.mxu0
      %v1153 = vadd.f32 0.0, %v1152
      %v1154 = vpop.f32.mrf.mxu0
      %1155 = vmatprep.mubr.bf16.mxu0 0
      %1156 = vmatmul.mubr.bf16.gmra.mxu0 %v1107
      %v1157 = vpop.f32.mrf.mxu0
      %v1158 = vadd.f32 0.0, %v1157
      %v1159 = vpop.f32.mrf.mxu0
      %v1160 = vpop.f32.mrf.mxu0
      %v1161 = vadd.f32 0.0, %v1160
      %v1162 = vpop.f32.mrf.mxu0
      %1163 = vmatprep.mubr.bf16.mxu0 0
      %1164 = vmatmul.mubr.bf16.gmra.mxu0 %v1110
      %v1165 = vpop.f32.mrf.mxu0
      %v1166 = vadd.f32 0.0, %v1165
      %v1167 = vpop.f32.mrf.mxu0
      %v1168 = vpop.f32.mrf.mxu0
      %v1169 = vadd.f32 0.0, %v1168
      %v1170 = vpop.f32.mrf.mxu0
      %1171 = vmatprep.mubr.bf16.mxu0 0
      %1172 = vmatmul.mubr.bf16.gmra.mxu0 %v1113
      %v1173 = vpop.f32.mrf.mxu0
      %v1174 = vadd.f32 0.0, %v1173
      %v1175 = vpop.f32.mrf.mxu0
      %v1176 = vpop.f32.mrf.mxu0
      %v1177 = vadd.f32 0.0, %v1176
      %v1178 = vpop.f32.mrf.mxu0
      %1179 = vdwg.mxu0
      %v1180 = vadd.f32 %v1033, %v1150
      %v1181 = vadd.f32 %v1034, %v1153
      %v1182 = vadd.f32 %v1035, %v1158
      %v1183 = vadd.f32 %v1036, %v1161
      %v1184 = vadd.f32 %v1037, %v1166
      %v1185 = vadd.f32 %v1038, %v1169
      %v1186 = vadd.f32 %v1039, %v1174
      %v1187 = vadd.f32 %v1040, %v1177
      %v1188 = vld [vmem:[%s1041 + $0x4] sm:$0xf]
      %v1189 = vld [vmem:[%s1041 + $0x8] sm:$0xf]
      %v1190 = vld [vmem:[%s1041 + $0xc] sm:$0xf]
      %v1191 = vld [vmem:[%s1041 + $0x10] sm:$0xf]
      %v1192 = vld [vmem:[%s1041 + $0x14] sm:$0xf]
      %v1193 = vld [vmem:[%s1041 + $0x18] sm:$0xf]
      %v1194 = vld [vmem:[%s1041 + $0x1c] sm:$0xf]
      %v1195 = vld [vmem:[%s1041 + $0x20] sm:$0xf]
      %s1196 = scalar_lea.vmem %s1, 224
      %v1197 = vld [vmem:[%s1196] sm:$0xf]
      %v1198 = vld [vmem:[%s1196 + $0x4] sm:$0xf]
      %v1199 = vld [vmem:[%s1196 + $0x8] sm:$0xf]
      %v1200 = vld [vmem:[%s1196 + $0xc] sm:$0xf]
      %v1201 = vld [vmem:[%s1196 + $0x10] sm:$0xf]
      %v1202 = vld [vmem:[%s1196 + $0x14] sm:$0xf]
      %v1203 = vld [vmem:[%s1196 + $0x18] sm:$0xf]
      %v1204 = vld [vmem:[%s1196 + $0x1c] sm:$0xf]
      %v1213 = vunpack.c.l.b16 %v1188
      %v1214 = vunpack.c.l.b16 %v1189
      %v1215 = vunpack.c.l.b16 %v1190
      %v1216 = vunpack.c.l.b16 %v1191
      %v1217 = vunpack.c.l.b16 %v1192
      %v1218 = vunpack.c.l.b16 %v1193
      %v1219 = vunpack.c.l.b16 %v1194
      %v1220 = vunpack.c.l.b16 %v1195
      %v1221 = vpack.c.b16 %v1214, %v1213
      %v1222 = vpack.c.b16 %v1216, %v1215
      %v1223 = vpack.c.b16 %v1218, %v1217
      %v1224 = vpack.c.b16 %v1220, %v1219
      %v1233 = vunpack.c.l.b16 %v1197
      %v1234 = vunpack.c.l.b16 %v1198
      %v1235 = vunpack.c.l.b16 %v1199
      %v1236 = vunpack.c.l.b16 %v1200
      %v1237 = vunpack.c.l.b16 %v1201
      %v1238 = vunpack.c.l.b16 %v1202
      %v1239 = vunpack.c.l.b16 %v1203
      %v1240 = vunpack.c.l.b16 %v1204
      %v1241 = vpack.c.b16 %v1234, %v1233
      %v1242 = vpack.c.b16 %v1236, %v1235
      %v1243 = vpack.c.b16 %v1238, %v1237
      %v1244 = vpack.c.b16 %v1240, %v1239
      %v1250 = vsel %vm269, %v1221, 0
      %v1253 = vsel %vm269, %v1222, 0
      %v1256 = vsel %vm269, %v1223, 0
      %v1259 = vsel %vm269, %v1224, 0
      %1261 = vmatprep.subr.bf16.mxu0 0
      %1262 = vmatpush1.bf16.msra.mxu0 0
      %1263 = vmatprep.subr.bf16.mxu0 0
      %1264 = vmatpush1.bf16.msra.mxu0 0
      %1265 = vmatprep.subr.bf16.mxu0 0
      %1266 = vmatpush1.bf16.msra.mxu0 0
      %1267 = vmatprep.subr.bf16.mxu0 0
      %1268 = vmatpush1.bf16.msra.mxu0 0
      %1269 = vmatprep.subr.bf16.mxu0 0
      %1270 = vmatpush1.bf16.msra.mxu0 %v1244
      %1271 = vmatprep.subr.bf16.mxu0 0
      %1272 = vmatpush1.bf16.msra.mxu0 %v1243
      %1273 = vmatprep.subr.bf16.mxu0 0
      %1274 = vmatpush1.bf16.msra.mxu0 %v1242
      %1275 = vmatprep.subr.bf16.mxu0 0
      %1276 = vmatpush1.bf16.msra.mxu0 %v1241
      %1277 = vmatprep.subr.bf16.mxu0 0
      %1278 = vmatpush2.bf16.msra.mxu0 0
      %1279 = vmatprep.subr.bf16.mxu0 0
      %1280 = vmatpush2.bf16.msra.mxu0 0
      %1281 = vmatprep.subr.bf16.mxu0 0
      %1282 = vmatpush2.bf16.msra.mxu0 0
      %1283 = vmatprep.subr.bf16.mxu0 0
      %1284 = vmatpush2.bf16.msra.mxu0 0
      %1285 = vmatprep.subr.bf16.mxu0 0
      %1286 = vmatpush2.bf16.msra.mxu0 0
      %1287 = vmatprep.subr.bf16.mxu0 0
      %1288 = vmatpush2.bf16.msra.mxu0 0
      %1289 = vmatprep.subr.bf16.mxu0 0
      %1290 = vmatpush2.bf16.msra.mxu0 0
      %1291 = vmatprep.subr.bf16.mxu0 0
      %1292 = vmatpush2.bf16.msra.mxu0 0
      %1293 = vmatprep.mubr.bf16.mxu0 0
      %1294 = vmatmul.mubr.bf16.gmra.mxu0 %v1250
      %v1295 = vpop.f32.mrf.mxu0
      %v1296 = vadd.f32 0.0, %v1295
      %v1297 = vpop.f32.mrf.mxu0
      %v1298 = vpop.f32.mrf.mxu0
      %v1299 = vadd.f32 0.0, %v1298
      %v1300 = vpop.f32.mrf.mxu0
      %1301 = vmatprep.mubr.bf16.mxu0 0
      %1302 = vmatmul.mubr.bf16.gmra.mxu0 %v1253
      %v1303 = vpop.f32.mrf.mxu0
      %v1304 = vadd.f32 0.0, %v1303
      %v1305 = vpop.f32.mrf.mxu0
      %v1306 = vpop.f32.mrf.mxu0
      %v1307 = vadd.f32 0.0, %v1306
      %v1308 = vpop.f32.mrf.mxu0
      %1309 = vmatprep.mubr.bf16.mxu0 0
      %1310 = vmatmul.mubr.bf16.gmra.mxu0 %v1256
      %v1311 = vpop.f32.mrf.mxu0
      %v1312 = vadd.f32 0.0, %v1311
      %v1313 = vpop.f32.mrf.mxu0
      %v1314 = vpop.f32.mrf.mxu0
      %v1315 = vadd.f32 0.0, %v1314
      %v1316 = vpop.f32.mrf.mxu0
      %1317 = vmatprep.mubr.bf16.mxu0 0
      %1318 = vmatmul.mubr.bf16.gmra.mxu0 %v1259
      %v1319 = vpop.f32.mrf.mxu0
      %v1320 = vadd.f32 0.0, %v1319
      %v1321 = vpop.f32.mrf.mxu0
      %v1322 = vpop.f32.mrf.mxu0
      %v1323 = vadd.f32 0.0, %v1322
      %v1324 = vpop.f32.mrf.mxu0
      %1325 = vdwg.mxu0
      %v1326 = vadd.f32 %v1180, %v1296
      %v1327 = vadd.f32 %v1181, %v1299
      %v1328 = vadd.f32 %v1182, %v1304
      %v1329 = vadd.f32 %v1183, %v1307
      %v1330 = vadd.f32 %v1184, %v1312
      %v1331 = vadd.f32 %v1185, %v1315
      %v1332 = vadd.f32 %v1186, %v1320
      %v1333 = vadd.f32 %v1187, %v1323
      %s1334 = scalar_lea.vmem %s192, 180
      %v1335 = vld [vmem:[%s1334] sm:$0xf]
      %v1336 = vld [vmem:[%s1334 + $0x4] sm:$0xf]
      %v1337 = vld [vmem:[%s1334 + $0x8] sm:$0xf]
      %v1338 = vld [vmem:[%s1334 + $0xc] sm:$0xf]
      %v1339 = vld [vmem:[%s1334 + $0x10] sm:$0xf]
      %v1340 = vld [vmem:[%s1334 + $0x14] sm:$0xf]
      %v1341 = vld [vmem:[%s1334 + $0x18] sm:$0xf]
      %v1342 = vld [vmem:[%s1334 + $0x1c] sm:$0xf]
      %s1343 = scalar_lea.vmem %s1, 256
      %v1344 = vld [vmem:[%s1343] sm:$0xf]
      %v1345 = vld [vmem:[%s1343 + $0x4] sm:$0xf]
      %v1346 = vld [vmem:[%s1343 + $0x8] sm:$0xf]
      %v1347 = vld [vmem:[%s1343 + $0xc] sm:$0xf]
      %v1348 = vld [vmem:[%s1343 + $0x10] sm:$0xf]
      %v1349 = vld [vmem:[%s1343 + $0x14] sm:$0xf]
      %v1350 = vld [vmem:[%s1343 + $0x18] sm:$0xf]
      %v1351 = vld [vmem:[%s1343 + $0x1c] sm:$0xf]
      %v1360 = vunpack.c.l.b16 %v1335
      %v1361 = vunpack.c.l.b16 %v1336
      %v1362 = vunpack.c.l.b16 %v1337
      %v1363 = vunpack.c.l.b16 %v1338
      %v1364 = vunpack.c.l.b16 %v1339
      %v1365 = vunpack.c.l.b16 %v1340
      %v1366 = vunpack.c.l.b16 %v1341
      %v1367 = vunpack.c.l.b16 %v1342
      %v1368 = vpack.c.b16 %v1361, %v1360
      %v1369 = vpack.c.b16 %v1363, %v1362
      %v1370 = vpack.c.b16 %v1365, %v1364
      %v1371 = vpack.c.b16 %v1367, %v1366
      %v1380 = vunpack.c.l.b16 %v1344
      %v1381 = vunpack.c.l.b16 %v1345
      %v1382 = vunpack.c.l.b16 %v1346
      %v1383 = vunpack.c.l.b16 %v1347
      %v1384 = vunpack.c.l.b16 %v1348
      %v1385 = vunpack.c.l.b16 %v1349
      %v1386 = vunpack.c.l.b16 %v1350
      %v1387 = vunpack.c.l.b16 %v1351
      %v1388 = vpack.c.b16 %v1381, %v1380
      %v1389 = vpack.c.b16 %v1383, %v1382
      %v1390 = vpack.c.b16 %v1385, %v1384
      %v1391 = vpack.c.b16 %v1387, %v1386
      %v1397 = vsel %vm269, %v1368, 0
      %v1400 = vsel %vm269, %v1369, 0
      %v1403 = vsel %vm269, %v1370, 0
      %v1406 = vsel %vm269, %v1371, 0
      %1408 = vmatprep.subr.bf16.mxu0 0
      %1409 = vmatpush1.bf16.msra.mxu0 0
      %1410 = vmatprep.subr.bf16.mxu0 0
      %1411 = vmatpush1.bf16.msra.mxu0 0
      %1412 = vmatprep.subr.bf16.mxu0 0
      %1413 = vmatpush1.bf16.msra.mxu0 0
      %1414 = vmatprep.subr.bf16.mxu0 0
      %1415 = vmatpush1.bf16.msra.mxu0 0
      %1416 = vmatprep.subr.bf16.mxu0 0
      %1417 = vmatpush1.bf16.msra.mxu0 %v1391
      %1418 = vmatprep.subr.bf16.mxu0 0
      %1419 = vmatpush1.bf16.msra.mxu0 %v1390
      %1420 = vmatprep.subr.bf16.mxu0 0
      %1421 = vmatpush1.bf16.msra.mxu0 %v1389
      %1422 = vmatprep.subr.bf16.mxu0 0
      %1423 = vmatpush1.bf16.msra.mxu0 %v1388
      %1424 = vmatprep.subr.bf16.mxu0 0
      %1425 = vmatpush2.bf16.msra.mxu0 0
      %1426 = vmatprep.subr.bf16.mxu0 0
      %1427 = vmatpush2.bf16.msra.mxu0 0
      %1428 = vmatprep.subr.bf16.mxu0 0
      %1429 = vmatpush2.bf16.msra.mxu0 0
      %1430 = vmatprep.subr.bf16.mxu0 0
      %1431 = vmatpush2.bf16.msra.mxu0 0
      %1432 = vmatprep.subr.bf16.mxu0 0
      %1433 = vmatpush2.bf16.msra.mxu0 0
      %1434 = vmatprep.subr.bf16.mxu0 0
      %1435 = vmatpush2.bf16.msra.mxu0 0
      %1436 = vmatprep.subr.bf16.mxu0 0
      %1437 = vmatpush2.bf16.msra.mxu0 0
      %1438 = vmatprep.subr.bf16.mxu0 0
      %1439 = vmatpush2.bf16.msra.mxu0 0
      %1440 = vmatprep.mubr.bf16.mxu0 0
      %1441 = vmatmul.mubr.bf16.gmra.mxu0 %v1397
      %v1442 = vpop.f32.mrf.mxu0
      %v1443 = vadd.f32 0.0, %v1442
      %v1444 = vpop.f32.mrf.mxu0
      %v1445 = vpop.f32.mrf.mxu0
      %v1446 = vadd.f32 0.0, %v1445
      %v1447 = vpop.f32.mrf.mxu0
      %1448 = vmatprep.mubr.bf16.mxu0 0
      %1449 = vmatmul.mubr.bf16.gmra.mxu0 %v1400
      %v1450 = vpop.f32.mrf.mxu0
      %v1451 = vadd.f32 0.0, %v1450
      %v1452 = vpop.f32.mrf.mxu0
      %v1453 = vpop.f32.mrf.mxu0
      %v1454 = vadd.f32 0.0, %v1453
      %v1455 = vpop.f32.mrf.mxu0
      %1456 = vmatprep.mubr.bf16.mxu0 0
      %1457 = vmatmul.mubr.bf16.gmra.mxu0 %v1403
      %v1458 = vpop.f32.mrf.mxu0
      %v1459 = vadd.f32 0.0, %v1458
      %v1460 = vpop.f32.mrf.mxu0
      %v1461 = vpop.f32.mrf.mxu0
      %v1462 = vadd.f32 0.0, %v1461
      %v1463 = vpop.f32.mrf.mxu0
      %1464 = vmatprep.mubr.bf16.mxu0 0
      %1465 = vmatmul.mubr.bf16.gmra.mxu0 %v1406
      %v1466 = vpop.f32.mrf.mxu0
      %v1467 = vadd.f32 0.0, %v1466
      %v1468 = vpop.f32.mrf.mxu0
      %v1469 = vpop.f32.mrf.mxu0
      %v1470 = vadd.f32 0.0, %v1469
      %v1471 = vpop.f32.mrf.mxu0
      %1472 = vdwg.mxu0
      %v1473 = vadd.f32 %v1326, %v1443
      %v1474 = vadd.f32 %v1327, %v1446
      %v1475 = vadd.f32 %v1328, %v1451
      %v1476 = vadd.f32 %v1329, %v1454
      %v1477 = vadd.f32 %v1330, %v1459
      %v1478 = vadd.f32 %v1331, %v1462
      %v1479 = vadd.f32 %v1332, %v1467
      %v1480 = vadd.f32 %v1333, %v1470
      %v1481 = vld [vmem:[%s2] sm:$0x1]
      %v1483 = vlaneseq
      %v1484 = vshrl.u32 %v1483, 7
      %v1485 = vsub.s32 0, %v1484
      %v1486 = vrot.slane %v1481, %v1485
      %v1488 = vmul.f32 %v1473, %v1486
      %v1489 = vmul.f32 %v1474, %v1486
      %v1490 = vmul.f32 %v1475, %v1486
      %v1491 = vmul.f32 %v1476, %v1486
      %v1492 = vmul.f32 %v1477, %v1486
      %v1493 = vmul.f32 %v1478, %v1486
      %v1494 = vmul.f32 %v1479, %v1486
      %v1495 = vmul.f32 %v1480, %v1486
      %v1496 = vld [vmem:[%s3] sm:$0x1]
      %v1498 = vlaneseq
      %v1499 = vshrl.u32 %v1498, 7
      %v1500 = vsub.s32 0, %v1499
      %v1501 = vrot.slane %v1496, %v1500
      %v1503 = vadd.f32 %v1488, %v1501
      %v1504 = vadd.f32 %v1489, %v1501
      %v1505 = vadd.f32 %v1490, %v1501
      %v1506 = vadd.f32 %v1491, %v1501
      %v1507 = vadd.f32 %v1492, %v1501
      %v1508 = vadd.f32 %v1493, %v1501
      %v1509 = vadd.f32 %v1494, %v1501
      %v1510 = vadd.f32 %v1495, %v1501
      %v1511 = vmax.f32 %v1503, 0.0
      %v1512 = vmax.f32 %v1504, 0.0
      %v1513 = vmax.f32 %v1505, 0.0
      %v1514 = vmax.f32 %v1506, 0.0
      %v1515 = vmax.f32 %v1507, 0.0
      %v1516 = vmax.f32 %v1508, 0.0
      %v1517 = vmax.f32 %v1509, 0.0
      %v1518 = vmax.f32 %v1510, 0.0
      %v1519 = vpack.c.bf16 %v1512, %v1511
      %v1520 = vpack.c.bf16 %v1514, %v1513
      %v1521 = vpack.c.bf16 %v1516, %v1515
      %v1522 = vpack.c.bf16 %v1518, %v1517
      %v1527 = vunpack.c.l.b16 %v1519
      %v1528 = vunpack.c.h.b16 %v1519
      %v1529 = vunpack.c.l.b16 %v1520
      %v1530 = vunpack.c.h.b16 %v1520
      %v1531 = vunpack.c.l.b16 %v1521
      %v1532 = vunpack.c.h.b16 %v1521
      %v1533 = vunpack.c.l.b16 %v1522
      %v1534 = vunpack.c.h.b16 %v1522
      %v1535 = vpack.c.b16 %v1527, %v1527
      %v1536 = vpack.c.b16 %v1528, %v1528
      %v1537 = vpack.c.b16 %v1529, %v1529
      %v1538 = vpack.c.b16 %v1530, %v1530
      %v1539 = vpack.c.b16 %v1531, %v1531
      %v1540 = vpack.c.b16 %v1532, %v1532
      %v1541 = vpack.c.b16 %v1533, %v1533
      %v1542 = vpack.c.b16 %v1534, %v1534
      %1551 = vst [vmem:[%s197] sm:$0xf] %v1535
      %1552 = vst [vmem:[%s197 + $0x4] sm:$0xf] %v1536
      %1553 = vst [vmem:[%s197 + $0x8] sm:$0xf] %v1537
      %1554 = vst [vmem:[%s197 + $0xc] sm:$0xf] %v1538
      %1555 = vst [vmem:[%s197 + $0x10] sm:$0xf] %v1539
      %1556 = vst [vmem:[%s197 + $0x14] sm:$0xf] %v1540
      %1557 = vst [vmem:[%s197 + $0x18] sm:$0xf] %v1541
      %1558 = vst [vmem:[%s197 + $0x1c] sm:$0xf] %v1542
      %p1559 = scmp.lt.s32.totalorder %s15, 1
      %s1560 = scalar_select %p1559, %s15, 1
      %s1561 = smul.addr %s1560, 8
      %s1562 = smul.addr %s1561, 4
      %s1563 = scalar_lea.vmem %s4, %s1562
      // Predicated region
      $region37: #{_lambda_.15} parent=35 // pred_check
        %p1564 = pneg %p122
      $region38: #{_lambda_.15} parent=35 // pred_check_branch
        %1566 = sbr.rel (%p1564) target = $region40
      $region39: #{_lambda_.15} parent=35 // pred_region
        _
      $region40: #{_lambda_.15} parent=35 // pred_fallthru
        _
    $region36: #{_lambda_.15} parent=5 // pred_fallthru
      _
    %p1567 = scmp.le.s32.totalorder 2, %s10
    // Predicated region
    $region41: #{_lambda_.15} parent=5 // pred_check
      %p1568 = pneg %p1567
    $region42: #{_lambda_.15} parent=5 // pred_check_branch
      %1570 = sbr.rel (%p1568) target = $region44
    $region43: #{_lambda_.15} parent=5 // pred_region
      %s1571 = ssub.s32 %s10, 2
      // Predicated region
      $region45: #{_lambda_.15} parent=43 // pred_check
        %p1572 = pneg %p128
      $region46: #{_lambda_.15} parent=43 // pred_check_branch
        %1574 = sbr.rel (%p1572) target = $region48
      $region47: #{_lambda_.15} parent=43 // pred_region
        %p1575 = scmp.lt.s32.totalorder %s16, 1
        %s1576 = scalar_select %p1575, %s16, 1
        %s1577 = smul.addr %s1576, 8
        %s1578 = smul.addr %s1577, 4
        %s1579 = scalar_lea.vmem %s4, %s1578
      $region48: #{_lambda_.15} parent=43 // pred_fallthru
        _
    $region44: #{_lambda_.15} parent=5 // pred_fallthru
      _
  $region6: #{_lambda_.15} parent=0 // loop_footer
    %s14 = sadd.s32 1, %s10
  $region7: #{_lambda_.15} parent=0 // loop_footer_branch
    %9 = sbr.rel target = $region3
  $region8: #{_lambda_.15} parent=0 // loop_exit
    _

// kernel: _lambda_.17
$region0: #{_lambda_.17}
  #allocation0 [shape = 'u32[]', space=smem, size = 0x4, offset = 0x4, fixed_abs, tag = 'smem constant byte address 0x4 - core index']
  #allocation1 [shape = 'u32[144,128]{1,0:T(1,128)}', space=vmem, size = 0x12000, scoped, tag = 'internal scratch']
  %s0 = inlined_call_operand.vmem [shape: bf16[2,3,80,128], index: 0, kind: input, shape index: {}]
  %s1 = inlined_call_operand.vmem [shape: bf16[9,128,128], index: 1, kind: input, shape index: {}]
  %s2 = inlined_call_operand.vmem [shape: f32[1,128], index: 2, kind: input, shape index: {}]
  %s3 = inlined_call_operand.vmem [shape: f32[1,128], index: 3, kind: input, shape index: {}]
  %s4 = inlined_call_operand.vmem [shape: bf16[2,64,128], index: 4, kind: output, shape index: {}]
  %s5 = sld [smem:[#allocation0]]
  $region49: #{_lambda_.17} parent=0
    _
  %s7 = ssub.s32 1, %s5
  %s8 = scalar_select 0, %s7, %s5
  loop: start=0, step=1, limit=4
  $region2: #{_lambda_.17} parent=0 // loop_pre_header
    _
  $region3: #{_lambda_.17} parent=0 // loop_header
    %s10 = sphi 0, %s14
    %p11 = scmp.ge.s32.totalorder %s10, 4
    %s20 = sphi 0, %s22
    %s23 = sphi 0, %s20
    %s24 = sphi 0, %s23
    %s40 = sphi 0, %s24
    %s44 = sphi 0, %s44
    %s46 = sphi 0, %s44
    %s47 = sphi 0, %s46
    %s61 = sphi 0, %s47
    %s65 = sphi 0, %s65
    %s67 = sphi 0, %s65
    %s68 = sphi 0, %s67
    %s82 = sphi 0, %s68
    %s86 = sphi 0, %s86
    %s88 = sphi 0, %s86
    %s89 = sphi 0, %s88
    %s103 = sphi 0, %s89
    %s109 = sphi 0, %s111
    %s112 = sphi 0, %s109
    %s113 = sphi 0, %s112
    %s129 = sphi 0, %s113
  $region4: #{_lambda_.17} parent=0 // loop_header_branch
    %13 = sbr.rel (%p11) target = $region8
  $region5: #{_lambda_.17} parent=0 // loop_body
    %s15 = ssub.s32 %s10, 1
    %s16 = ssub.s32 %s10, 2
    %s17 = sadd.s32 %s10, 1
    %s18 = ssub.s32 %s10, %s17
    %p19 = scmp.eq.s32.totalorder %s18, 0
    %s21 = sadd.s32 %s20, 1
    %s22 = scalar_select %p19, %s20, %s21
    %p25 = pneg %p19
    %p26 = scmp.eq.s32.totalorder %s10, 1
    %p27 = por %p25, %p26
    %p28 = scmp.ne.s32.totalorder %s20, %s23
    %p29 = scmp.eq.s32.totalorder %s10, 0
    %p30 = por %p28, %p29
    %p31 = scmp.ne.s32.totalorder %s20, %s23
    %p32 = scmp.eq.s32.totalorder %s15, 1
    %p33 = por %p31, %p32
    %p34 = scmp.ne.s32.totalorder %s23, %s24
    %p35 = scmp.eq.s32.totalorder %s15, 0
    %p36 = por %p34, %p35
    %p37 = scmp.ne.s32.totalorder %s23, %s24
    %p38 = scmp.eq.s32.totalorder %s16, 1
    %p39 = por %p37, %p38
    %p41 = scmp.ne.s32.totalorder %s24, %s40
    %p42 = scmp.eq.s32.totalorder %s16, 0
    %p43 = por %p41, %p42
    %s45 = sadd.s32 %s44, 1
    %p48 = scmp.eq.s32.totalorder %s10, 1
    %p49 = scmp.ne.s32.totalorder %s44, %s46
    %p50 = scmp.eq.s32.totalorder %s10, 0
    %p51 = por %p49, %p50
    %p52 = scmp.ne.s32.totalorder %s44, %s46
    %p53 = scmp.eq.s32.totalorder %s15, 1
    %p54 = por %p52, %p53
    %p55 = scmp.ne.s32.totalorder %s46, %s47
    %p56 = scmp.eq.s32.totalorder %s15, 0
    %p57 = por %p55, %p56
    %p58 = scmp.ne.s32.totalorder %s46, %s47
    %p59 = scmp.eq.s32.totalorder %s16, 1
    %p60 = por %p58, %p59
    %p62 = scmp.ne.s32.totalorder %s47, %s61
    %p63 = scmp.eq.s32.totalorder %s16, 0
    %p64 = por %p62, %p63
    %s66 = sadd.s32 %s65, 1
    %p69 = scmp.eq.s32.totalorder %s10, 1
    %p70 = scmp.ne.s32.totalorder %s65, %s67
    %p71 = scmp.eq.s32.totalorder %s10, 0
    %p72 = por %p70, %p71
    %p73 = scmp.ne.s32.totalorder %s65, %s67
    %p74 = scmp.eq.s32.totalorder %s15, 1
    %p75 = por %p73, %p74
    %p76 = scmp.ne.s32.totalorder %s67, %s68
    %p77 = scmp.eq.s32.totalorder %s15, 0
    %p78 = por %p76, %p77
    %p79 = scmp.ne.s32.totalorder %s67, %s68
    %p80 = scmp.eq.s32.totalorder %s16, 1
    %p81 = por %p79, %p80
    %p83 = scmp.ne.s32.totalorder %s68, %s82
    %p84 = scmp.eq.s32.totalorder %s16, 0
    %p85 = por %p83, %p84
    %s87 = sadd.s32 %s86, 1
    %p90 = scmp.eq.s32.totalorder %s10, 1
    %p91 = scmp.ne.s32.totalorder %s86, %s88
    %p92 = scmp.eq.s32.totalorder %s10, 0
    %p93 = por %p91, %p92
    %p94 = scmp.ne.s32.totalorder %s86, %s88
    %p95 = scmp.eq.s32.totalorder %s15, 1
    %p96 = por %p94, %p95
    %p97 = scmp.ne.s32.totalorder %s88, %s89
    %p98 = scmp.eq.s32.totalorder %s15, 0
    %p99 = por %p97, %p98
    %p100 = scmp.ne.s32.totalorder %s88, %s89
    %p101 = scmp.eq.s32.totalorder %s16, 1
    %p102 = por %p100, %p101
    %p104 = scmp.ne.s32.totalorder %s89, %s103
    %p105 = scmp.eq.s32.totalorder %s16, 0
    %p106 = por %p104, %p105
    %s107 = ssub.s32 %s10, %s17
    %p108 = scmp.eq.s32.totalorder %s107, 0
    %s110 = sadd.s32 %s109, 1
    %s111 = scalar_select %p108, %s109, %s110
    %p114 = pneg %p108
    %p115 = scmp.eq.s32.totalorder %s10, 1
    %p116 = por %p114, %p115
    %p117 = scmp.ne.s32.totalorder %s109, %s112
    %p118 = scmp.eq.s32.totalorder %s10, 0
    %p119 = por %p117, %p118
    %p120 = scmp.ne.s32.totalorder %s109, %s112
    %p121 = scmp.eq.s32.totalorder %s15, 1
    %p122 = por %p120, %p121
    %p123 = scmp.ne.s32.totalorder %s112, %s113
    %p124 = scmp.eq.s32.totalorder %s15, 0
    %p125 = por %p123, %p124
    %p126 = scmp.ne.s32.totalorder %s112, %s113
    %p127 = scmp.eq.s32.totalorder %s16, 1
    %p128 = por %p126, %p127
    %p130 = scmp.ne.s32.totalorder %s113, %s129
    %p131 = scmp.eq.s32.totalorder %s16, 0
    %p132 = por %p130, %p131
    %p133 = scmp.le.s32.totalorder 1, %s10
    %p134 = scmp.lt.s32.totalorder %s10, 3
    %p135 = pnand %p133, %p134
    %p136 = pneg %p135
    // Predicated region
    $region9: #{_lambda_.17} parent=5 // pred_check
      _
    $region10: #{_lambda_.17} parent=5 // pred_check_branch
      %138 = sbr.rel (%p135) target = $region12
    $region11: #{_lambda_.17} parent=5 // pred_region
      %s139 = ssub.s32 %s10, 1
      // Predicated region
      $region13: #{_lambda_.17} parent=11 // pred_check
        %p140 = pneg %p57
      $region14: #{_lambda_.17} parent=11 // pred_check_branch
        %142 = sbr.rel (%p140) target = $region16
      $region15: #{_lambda_.17} parent=11 // pred_region
        _
      $region16: #{_lambda_.17} parent=11 // pred_fallthru
        _
      // Predicated region
      $region17: #{_lambda_.17} parent=11 // pred_check
        %p143 = pneg %p78
      $region18: #{_lambda_.17} parent=11 // pred_check_branch
        %145 = sbr.rel (%p143) target = $region20
      $region19: #{_lambda_.17} parent=11 // pred_region
        _
      $region20: #{_lambda_.17} parent=11 // pred_fallthru
        _
      // Predicated region
      $region21: #{_lambda_.17} parent=11 // pred_check
        %p146 = pneg %p99
      $region22: #{_lambda_.17} parent=11 // pred_check_branch
        %148 = sbr.rel (%p146) target = $region24
      $region23: #{_lambda_.17} parent=11 // pred_region
        _
      $region24: #{_lambda_.17} parent=11 // pred_fallthru
        _
    $region12: #{_lambda_.17} parent=5 // pred_fallthru
      _
    %p149 = scmp.lt.s32.totalorder %s10, 2
    // Predicated region
    $region25: #{_lambda_.17} parent=5 // pred_check
      %p150 = pneg %p149
    $region26: #{_lambda_.17} parent=5 // pred_check_branch
      %152 = sbr.rel (%p150) target = $region28
    $region27: #{_lambda_.17} parent=5 // pred_region
      // Predicated region
      $region29: #{_lambda_.17} parent=27 // pred_check
        %p153 = pneg %p30
      $region30: #{_lambda_.17} parent=27 // pred_check_branch
        %155 = sbr.rel (%p153) target = $region32
      $region31: #{_lambda_.17} parent=27 // pred_region
        %p156 = scmp.lt.s32.totalorder %s10, 1
        %s157 = scalar_select %p156, %s10, 1
        %s158 = smul.addr %s157, 30
        %s159 = smul.addr %s158, 4
        %s160 = scalar_lea.vmem %s0, %s159
      $region32: #{_lambda_.17} parent=27 // pred_fallthru
        _
    $region28: #{_lambda_.17} parent=5 // pred_fallthru
      _
    %p161 = scmp.le.s32.totalorder 1, %s10
    %p162 = scmp.lt.s32.totalorder %s10, 3
    %p163 = pnand %p161, %p162
    %p164 = pneg %p163
    // Predicated region
    $region33: #{_lambda_.17} parent=5 // pred_check
      _
    $region34: #{_lambda_.17} parent=5 // pred_check_branch
      %166 = sbr.rel (%p163) target = $region36
    $region35: #{_lambda_.17} parent=5 // pred_region
      %s167 = ssub.s32 %s10, 1
      %p168 = scmp.lt.s32.totalorder %s15, 1
      %s169 = scalar_select %p168, %s15, 1
      %s170 = smul.addr %s169, 30
      %s171 = smul.addr %s170, 4
      %s172 = scalar_lea.vmem %s0, %s171
      %p173 = pneg %p36
      %p174 = pneg %p33
      %p175 = pneg %p57
      %p176 = pneg %p54
      %p177 = pneg %p78
      %p178 = pneg %p75
      %p179 = pneg %p99
      %p180 = pneg %p96
      %p181 = pneg %p125
      %p182 = pneg %p122
      %p183 = scmp.lt.s32.totalorder %s15, 1
      %s184 = scalar_select %p183, %s15, 1
      %s185 = smul.addr %s184, 8
      %s186 = smul.addr %s185, 4
      %s187 = scalar_lea.vmem %s4, %s186
      %p188 = scmp.lt.s32.totalorder %s15, 1
      %s189 = scalar_select %p188, %s15, 1
      %s190 = smul.addr %s189, 30
      %s191 = smul.addr %s190, 4
      %s192 = scalar_lea.vmem %s0, %s191
      %p193 = scmp.lt.s32.totalorder %s15, 1
      %s194 = scalar_select %p193, %s15, 1
      %s195 = smul.addr %s194, 8
      %s196 = smul.addr %s195, 4
      %s197 = scalar_lea.vmem %s4, %s196
      %v199 = vld [vmem:[%s192] sm:$0xf]
      %v200 = vld [vmem:[%s192 + $0x4] sm:$0xf]
      %v201 = vld [vmem:[%s192 + $0x8] sm:$0xf]
      %v202 = vld [vmem:[%s192 + $0xc] sm:$0xf]
      %v203 = vld [vmem:[%s192 + $0x10] sm:$0xf]
      %v204 = vld [vmem:[%s192 + $0x14] sm:$0xf]
      %v205 = vld [vmem:[%s192 + $0x18] sm:$0xf]
      %v206 = vld [vmem:[%s192 + $0x1c] sm:$0xf]
      %v207 = vld [vmem:[%s1] sm:$0xf]
      %v208 = vld [vmem:[%s1 + $0x4] sm:$0xf]
      %v209 = vld [vmem:[%s1 + $0x8] sm:$0xf]
      %v210 = vld [vmem:[%s1 + $0xc] sm:$0xf]
      %v211 = vld [vmem:[%s1 + $0x10] sm:$0xf]
      %v212 = vld [vmem:[%s1 + $0x14] sm:$0xf]
      %v213 = vld [vmem:[%s1 + $0x18] sm:$0xf]
      %v214 = vld [vmem:[%s1 + $0x1c] sm:$0xf]
      %v215 = vld [vmem:[%s1 + $0x20] sm:$0xf]
      %v216 = vld [vmem:[%s1 + $0x24] sm:$0xf]
      %v217 = vld [vmem:[%s1 + $0x28] sm:$0xf]
      %v218 = vld [vmem:[%s1 + $0x2c] sm:$0xf]
      %v219 = vld [vmem:[%s1 + $0x30] sm:$0xf]
      %v220 = vld [vmem:[%s1 + $0x34] sm:$0xf]
      %v221 = vld [vmem:[%s1 + $0x38] sm:$0xf]
      %v222 = vld [vmem:[%s1 + $0x3c] sm:$0xf]
      %v223 = vld [vmem:[%s192 + $0x20] sm:$0xf]
      %s224 = scalar_lea.vmem %s1, 64
      %v225 = vld [vmem:[%s224] sm:$0xf]
      %v226 = vld [vmem:[%s224 + $0x4] sm:$0xf]
      %v227 = vld [vmem:[%s224 + $0x8] sm:$0xf]
      %v228 = vld [vmem:[%s224 + $0xc] sm:$0xf]
      %v229 = vld [vmem:[%s224 + $0x10] sm:$0xf]
      %v230 = vld [vmem:[%s224 + $0x14] sm:$0xf]
      %v231 = vld [vmem:[%s224 + $0x18] sm:$0xf]
      %v232 = vld [vmem:[%s224 + $0x1c] sm:$0xf]
      %v233 = vld [vmem:[%s224 + $0x20] sm:$0xf]
      %v234 = vld [vmem:[%s224 + $0x24] sm:$0xf]
      %v235 = vld [vmem:[%s224 + $0x28] sm:$0xf]
      %v236 = vld [vmem:[%s224 + $0x2c] sm:$0xf]
      %v237 = vld [vmem:[%s224 + $0x30] sm:$0xf]
      %v238 = vld [vmem:[%s224 + $0x34] sm:$0xf]
      %v239 = vld [vmem:[%s224 + $0x38] sm:$0xf]
      %v240 = vld [vmem:[%s224 + $0x3c] sm:$0xf]
      %v249 = vunpack.c.l.b16 %v200
      %v250 = vunpack.c.l.b16 %v201
      %v251 = vunpack.c.l.b16 %v202
      %v252 = vunpack.c.l.b16 %v203
      %v253 = vunpack.c.l.b16 %v204
      %v254 = vunpack.c.l.b16 %v205
      %v255 = vunpack.c.l.b16 %v206
      %v256 = vunpack.c.l.b16 %v223
      %v257 = vpack.c.b16 %v250, %v249
      %v258 = vpack.c.b16 %v252, %v251
      %v259 = vpack.c.b16 %v254, %v253
      %v260 = vpack.c.b16 %v256, %v255
      %v281 = vunpack.c.l.b16 %v225
      %v282 = vunpack.c.l.b16 %v226
      %v283 = vunpack.c.l.b16 %v227
      %v284 = vunpack.c.l.b16 %v228
      %v285 = vunpack.c.l.b16 %v229
      %v286 = vunpack.c.l.b16 %v230
      %v287 = vunpack.c.l.b16 %v231
      %v288 = vunpack.c.l.b16 %v232
      %v289 = vunpack.c.l.b16 %v233
      %v290 = vunpack.c.l.b16 %v234
      %v291 = vunpack.c.l.b16 %v235
      %v292 = vunpack.c.l.b16 %v236
      %v293 = vunpack.c.l.b16 %v237
      %v294 = vunpack.c.l.b16 %v238
      %v295 = vunpack.c.l.b16 %v239
      %v296 = vunpack.c.l.b16 %v240
      %v297 = vpack.c.b16 %v282, %v281
      %v298 = vpack.c.b16 %v284, %v283
      %v299 = vpack.c.b16 %v286, %v285
      %v300 = vpack.c.b16 %v288, %v287
      %v301 = vpack.c.b16 %v290, %v289
      %v302 = vpack.c.b16 %v292, %v291
      %v303 = vpack.c.b16 %v294, %v293
      %v304 = vpack.c.b16 %v296, %v295
      %313 = vmatprep.subr.bf16.mxu0 0
      %314 = vmatpush1.bf16.msra.mxu0 %v304
      %315 = vmatprep.subr.bf16.mxu0 0
      %316 = vmatpush1.bf16.msra.mxu0 %v303
      %317 = vmatprep.subr.bf16.mxu0 0
      %318 = vmatpush1.bf16.msra.mxu0 %v302
      %319 = vmatprep.subr.bf16.mxu0 0
      %320 = vmatpush1.bf16.msra.mxu0 %v301
      %321 = vmatprep.subr.bf16.mxu0 0
      %322 = vmatpush1.bf16.msra.mxu0 %v300
      %323 = vmatprep.subr.bf16.mxu0 0
      %324 = vmatpush1.bf16.msra.mxu0 %v299
      %325 = vmatprep.subr.bf16.mxu0 0
      %326 = vmatpush1.bf16.msra.mxu0 %v298
      %327 = vmatprep.subr.bf16.mxu0 0
      %328 = vmatpush1.bf16.msra.mxu0 %v297
      %329 = vmatprep.subr.bf16.mxu0 0
      %330 = vmatpush2.bf16.msra.mxu0 0
      %331 = vmatprep.subr.bf16.mxu0 0
      %332 = vmatpush2.bf16.msra.mxu0 0
      %333 = vmatprep.subr.bf16.mxu0 0
      %334 = vmatpush2.bf16.msra.mxu0 0
      %335 = vmatprep.subr.bf16.mxu0 0
      %336 = vmatpush2.bf16.msra.mxu0 0
      %337 = vmatprep.subr.bf16.mxu0 0
      %338 = vmatpush2.bf16.msra.mxu0 0
      %339 = vmatprep.subr.bf16.mxu0 0
      %340 = vmatpush2.bf16.msra.mxu0 0
      %341 = vmatprep.subr.bf16.mxu0 0
      %342 = vmatpush2.bf16.msra.mxu0 0
      %343 = vmatprep.subr.bf16.mxu0 0
      %344 = vmatpush2.bf16.msra.mxu0 0
      %345 = vmatprep.mubr.bf16.mxu0 0
      %346 = vmatmul.mubr.bf16.gmra.mxu0 %v257
      %v347 = vpop.f32.mrf.mxu0
      %v348 = vadd.f32 0.0, %v347
      %v349 = vpop.f32.mrf.mxu0
      %v350 = vpop.f32.mrf.mxu0
      %v351 = vadd.f32 0.0, %v350
      %v352 = vpop.f32.mrf.mxu0
      %353 = vmatprep.mubr.bf16.mxu0 0
      %354 = vmatmul.mubr.bf16.gmra.mxu0 %v258
      %v355 = vpop.f32.mrf.mxu0
      %v356 = vadd.f32 0.0, %v355
      %v357 = vpop.f32.mrf.mxu0
      %v358 = vpop.f32.mrf.mxu0
      %v359 = vadd.f32 0.0, %v358
      %v360 = vpop.f32.mrf.mxu0
      %361 = vmatprep.mubr.bf16.mxu0 0
      %362 = vmatmul.mubr.bf16.gmra.mxu0 %v259
      %v363 = vpop.f32.mrf.mxu0
      %v364 = vadd.f32 0.0, %v363
      %v365 = vpop.f32.mrf.mxu0
      %v366 = vpop.f32.mrf.mxu0
      %v367 = vadd.f32 0.0, %v366
      %v368 = vpop.f32.mrf.mxu0
      %369 = vmatprep.mubr.bf16.mxu0 0
      %370 = vmatmul.mubr.bf16.gmra.mxu0 %v260
      %v371 = vpop.f32.mrf.mxu0
      %v372 = vadd.f32 0.0, %v371
      %v373 = vpop.f32.mrf.mxu0
      %v374 = vpop.f32.mrf.mxu0
      %v375 = vadd.f32 0.0, %v374
      %v376 = vpop.f32.mrf.mxu0
      %377 = vdwg.mxu0
      %v379 = vunpack.c.l.b16 %v199
      %v380 = vpack.c.b16 %v249, %v379
      %v381 = vpack.c.b16 %v251, %v250
      %v382 = vpack.c.b16 %v253, %v252
      %v383 = vpack.c.b16 %v255, %v254
      %v404 = vunpack.c.l.b16 %v207
      %v405 = vunpack.c.l.b16 %v208
      %v406 = vunpack.c.l.b16 %v209
      %v407 = vunpack.c.l.b16 %v210
      %v408 = vunpack.c.l.b16 %v211
      %v409 = vunpack.c.l.b16 %v212
      %v410 = vunpack.c.l.b16 %v213
      %v411 = vunpack.c.l.b16 %v214
      %v412 = vunpack.c.l.b16 %v215
      %v413 = vunpack.c.l.b16 %v216
      %v414 = vunpack.c.l.b16 %v217
      %v415 = vunpack.c.l.b16 %v218
      %v416 = vunpack.c.l.b16 %v219
      %v417 = vunpack.c.l.b16 %v220
      %v418 = vunpack.c.l.b16 %v221
      %v419 = vunpack.c.l.b16 %v222
      %v420 = vpack.c.b16 %v405, %v404
      %v421 = vpack.c.b16 %v407, %v406
      %v422 = vpack.c.b16 %v409, %v408
      %v423 = vpack.c.b16 %v411, %v410
      %v424 = vpack.c.b16 %v413, %v412
      %v425 = vpack.c.b16 %v415, %v414
      %v426 = vpack.c.b16 %v417, %v416
      %v427 = vpack.c.b16 %v419, %v418
      %436 = vmatprep.subr.bf16.mxu0 0
      %437 = vmatpush1.bf16.msra.mxu0 %v427
      %438 = vmatprep.subr.bf16.mxu0 0
      %439 = vmatpush1.bf16.msra.mxu0 %v426
      %440 = vmatprep.subr.bf16.mxu0 0
      %441 = vmatpush1.bf16.msra.mxu0 %v425
      %442 = vmatprep.subr.bf16.mxu0 0
      %443 = vmatpush1.bf16.msra.mxu0 %v424
      %444 = vmatprep.subr.bf16.mxu0 0
      %445 = vmatpush1.bf16.msra.mxu0 %v423
      %446 = vmatprep.subr.bf16.mxu0 0
      %447 = vmatpush1.bf16.msra.mxu0 %v422
      %448 = vmatprep.subr.bf16.mxu0 0
      %449 = vmatpush1.bf16.msra.mxu0 %v421
      %450 = vmatprep.subr.bf16.mxu0 0
      %451 = vmatpush1.bf16.msra.mxu0 %v420
      %452 = vmatprep.subr.bf16.mxu0 0
      %453 = vmatpush2.bf16.msra.mxu0 0
      %454 = vmatprep.subr.bf16.mxu0 0
      %455 = vmatpush2.bf16.msra.mxu0 0
      %456 = vmatprep.subr.bf16.mxu0 0
      %457 = vmatpush2.bf16.msra.mxu0 0
      %458 = vmatprep.subr.bf16.mxu0 0
      %459 = vmatpush2.bf16.msra.mxu0 0
      %460 = vmatprep.subr.bf16.mxu0 0
      %461 = vmatpush2.bf16.msra.mxu0 0
      %462 = vmatprep.subr.bf16.mxu0 0
      %463 = vmatpush2.bf16.msra.mxu0 0
      %464 = vmatprep.subr.bf16.mxu0 0
      %465 = vmatpush2.bf16.msra.mxu0 0
      %466 = vmatprep.subr.bf16.mxu0 0
      %467 = vmatpush2.bf16.msra.mxu0 0
      %468 = vmatprep.mubr.bf16.mxu0 0
      %469 = vmatmul.mubr.bf16.gmra.mxu0 %v380
      %v470 = vpop.f32.mrf.mxu0
      %v471 = vadd.f32 %v348, %v470
      %v472 = vpop.f32.mrf.mxu0
      %v473 = vpop.f32.mrf.mxu0
      %v474 = vadd.f32 %v351, %v473
      %v475 = vpop.f32.mrf.mxu0
      %476 = vmatprep.mubr.bf16.mxu0 0
      %477 = vmatmul.mubr.bf16.gmra.mxu0 %v381
      %v478 = vpop.f32.mrf.mxu0
      %v479 = vadd.f32 %v356, %v478
      %v480 = vpop.f32.mrf.mxu0
      %v481 = vpop.f32.mrf.mxu0
      %v482 = vadd.f32 %v359, %v481
      %v483 = vpop.f32.mrf.mxu0
      %484 = vmatprep.mubr.bf16.mxu0 0
      %485 = vmatmul.mubr.bf16.gmra.mxu0 %v382
      %v486 = vpop.f32.mrf.mxu0
      %v487 = vadd.f32 %v364, %v486
      %v488 = vpop.f32.mrf.mxu0
      %v489 = vpop.f32.mrf.mxu0
      %v490 = vadd.f32 %v367, %v489
      %v491 = vpop.f32.mrf.mxu0
      %492 = vmatprep.mubr.bf16.mxu0 0
      %493 = vmatmul.mubr.bf16.gmra.mxu0 %v383
      %v494 = vpop.f32.mrf.mxu0
      %v495 = vadd.f32 %v372, %v494
      %v496 = vpop.f32.mrf.mxu0
      %v497 = vpop.f32.mrf.mxu0
      %v498 = vadd.f32 %v375, %v497
      %v499 = vpop.f32.mrf.mxu0
      %500 = vdwg.mxu0
      %v501 = vld [vmem:[%s192 + $0x8] sm:$0xf]
      %v502 = vld [vmem:[%s192 + $0xc] sm:$0xf]
      %v503 = vld [vmem:[%s192 + $0x10] sm:$0xf]
      %v504 = vld [vmem:[%s192 + $0x14] sm:$0xf]
      %v505 = vld [vmem:[%s192 + $0x18] sm:$0xf]
      %v506 = vld [vmem:[%s192 + $0x1c] sm:$0xf]
      %v507 = vld [vmem:[%s192 + $0x20] sm:$0xf]
      %v508 = vld [vmem:[%s192 + $0x24] sm:$0xf]
      %s509 = scalar_lea.vmem %s1, 128
      %v510 = vld [vmem:[%s509] sm:$0xf]
      %v511 = vld [vmem:[%s509 + $0x4] sm:$0xf]
      %v512 = vld [vmem:[%s509 + $0x8] sm:$0xf]
      %v513 = vld [vmem:[%s509 + $0xc] sm:$0xf]
      %v514 = vld [vmem:[%s509 + $0x10] sm:$0xf]
      %v515 = vld [vmem:[%s509 + $0x14] sm:$0xf]
      %v516 = vld [vmem:[%s509 + $0x18] sm:$0xf]
      %v517 = vld [vmem:[%s509 + $0x1c] sm:$0xf]
      %v518 = vld [vmem:[%s509 + $0x20] sm:$0xf]
      %v519 = vld [vmem:[%s509 + $0x24] sm:$0xf]
      %v520 = vld [vmem:[%s509 + $0x28] sm:$0xf]
      %v521 = vld [vmem:[%s509 + $0x2c] sm:$0xf]
      %v522 = vld [vmem:[%s509 + $0x30] sm:$0xf]
      %v523 = vld [vmem:[%s509 + $0x34] sm:$0xf]
      %v524 = vld [vmem:[%s509 + $0x38] sm:$0xf]
      %v525 = vld [vmem:[%s509 + $0x3c] sm:$0xf]
      %v534 = vunpack.c.l.b16 %v501
      %v535 = vunpack.c.l.b16 %v502
      %v536 = vunpack.c.l.b16 %v503
      %v537 = vunpack.c.l.b16 %v504
      %v538 = vunpack.c.l.b16 %v505
      %v539 = vunpack.c.l.b16 %v506
      %v540 = vunpack.c.l.b16 %v507
      %v541 = vunpack.c.l.b16 %v508
      %v542 = vpack.c.b16 %v535, %v534
      %v543 = vpack.c.b16 %v537, %v536
      %v544 = vpack.c.b16 %v539, %v538
      %v545 = vpack.c.b16 %v541, %v540
      %v566 = vunpack.c.l.b16 %v510
      %v567 = vunpack.c.l.b16 %v511
      %v568 = vunpack.c.l.b16 %v512
      %v569 = vunpack.c.l.b16 %v513
      %v570 = vunpack.c.l.b16 %v514
      %v571 = vunpack.c.l.b16 %v515
      %v572 = vunpack.c.l.b16 %v516
      %v573 = vunpack.c.l.b16 %v517
      %v574 = vunpack.c.l.b16 %v518
      %v575 = vunpack.c.l.b16 %v519
      %v576 = vunpack.c.l.b16 %v520
      %v577 = vunpack.c.l.b16 %v521
      %v578 = vunpack.c.l.b16 %v522
      %v579 = vunpack.c.l.b16 %v523
      %v580 = vunpack.c.l.b16 %v524
      %v581 = vunpack.c.l.b16 %v525
      %v582 = vpack.c.b16 %v567, %v566
      %v583 = vpack.c.b16 %v569, %v568
      %v584 = vpack.c.b16 %v571, %v570
      %v585 = vpack.c.b16 %v573, %v572
      %v586 = vpack.c.b16 %v575, %v574
      %v587 = vpack.c.b16 %v577, %v576
      %v588 = vpack.c.b16 %v579, %v578
      %v589 = vpack.c.b16 %v581, %v580
      %598 = vmatprep.subr.bf16.mxu0 0
      %599 = vmatpush1.bf16.msra.mxu0 %v589
      %600 = vmatprep.subr.bf16.mxu0 0
      %601 = vmatpush1.bf16.msra.mxu0 %v588
      %602 = vmatprep.subr.bf16.mxu0 0
      %603 = vmatpush1.bf16.msra.mxu0 %v587
      %604 = vmatprep.subr.bf16.mxu0 0
      %605 = vmatpush1.bf16.msra.mxu0 %v586
      %606 = vmatprep.subr.bf16.mxu0 0
      %607 = vmatpush1.bf16.msra.mxu0 %v585
      %608 = vmatprep.subr.bf16.mxu0 0
      %609 = vmatpush1.bf16.msra.mxu0 %v584
      %610 = vmatprep.subr.bf16.mxu0 0
      %611 = vmatpush1.bf16.msra.mxu0 %v583
      %612 = vmatprep.subr.bf16.mxu0 0
      %613 = vmatpush1.bf16.msra.mxu0 %v582
      %614 = vmatprep.subr.bf16.mxu0 0
      %615 = vmatpush2.bf16.msra.mxu0 0
      %616 = vmatprep.subr.bf16.mxu0 0
      %617 = vmatpush2.bf16.msra.mxu0 0
      %618 = vmatprep.subr.bf16.mxu0 0
      %619 = vmatpush2.bf16.msra.mxu0 0
      %620 = vmatprep.subr.bf16.mxu0 0
      %621 = vmatpush2.bf16.msra.mxu0 0
      %622 = vmatprep.subr.bf16.mxu0 0
      %623 = vmatpush2.bf16.msra.mxu0 0
      %624 = vmatprep.subr.bf16.mxu0 0
      %625 = vmatpush2.bf16.msra.mxu0 0
      %626 = vmatprep.subr.bf16.mxu0 0
      %627 = vmatpush2.bf16.msra.mxu0 0
      %628 = vmatprep.subr.bf16.mxu0 0
      %629 = vmatpush2.bf16.msra.mxu0 0
      %630 = vmatprep.mubr.bf16.mxu0 0
      %631 = vmatmul.mubr.bf16.gmra.mxu0 %v542
      %v632 = vpop.f32.mrf.mxu0
      %v633 = vadd.f32 0.0, %v632
      %v634 = vpop.f32.mrf.mxu0
      %v635 = vpop.f32.mrf.mxu0
      %v636 = vadd.f32 0.0, %v635
      %v637 = vpop.f32.mrf.mxu0
      %638 = vmatprep.mubr.bf16.mxu0 0
      %639 = vmatmul.mubr.bf16.gmra.mxu0 %v543
      %v640 = vpop.f32.mrf.mxu0
      %v641 = vadd.f32 0.0, %v640
      %v642 = vpop.f32.mrf.mxu0
      %v643 = vpop.f32.mrf.mxu0
      %v644 = vadd.f32 0.0, %v643
      %v645 = vpop.f32.mrf.mxu0
      %646 = vmatprep.mubr.bf16.mxu0 0
      %647 = vmatmul.mubr.bf16.gmra.mxu0 %v544
      %v648 = vpop.f32.mrf.mxu0
      %v649 = vadd.f32 0.0, %v648
      %v650 = vpop.f32.mrf.mxu0
      %v651 = vpop.f32.mrf.mxu0
      %v652 = vadd.f32 0.0, %v651
      %v653 = vpop.f32.mrf.mxu0
      %654 = vmatprep.mubr.bf16.mxu0 0
      %655 = vmatmul.mubr.bf16.gmra.mxu0 %v545
      %v656 = vpop.f32.mrf.mxu0
      %v657 = vadd.f32 0.0, %v656
      %v658 = vpop.f32.mrf.mxu0
      %v659 = vpop.f32.mrf.mxu0
      %v660 = vadd.f32 0.0, %v659
      %v661 = vpop.f32.mrf.mxu0
      %662 = vdwg.mxu0
      %v663 = vadd.f32 %v471, %v633
      %v664 = vadd.f32 %v474, %v636
      %v665 = vadd.f32 %v479, %v641
      %v666 = vadd.f32 %v482, %v644
      %v667 = vadd.f32 %v487, %v649
      %v668 = vadd.f32 %v490, %v652
      %v669 = vadd.f32 %v495, %v657
      %v670 = vadd.f32 %v498, %v660
      %s671 = scalar_lea.vmem %s192, 40
      %v672 = vld [vmem:[%s671] sm:$0xf]
      %v673 = vld [vmem:[%s671 + $0x4] sm:$0xf]
      %v674 = vld [vmem:[%s671 + $0x8] sm:$0xf]
      %v675 = vld [vmem:[%s671 + $0xc] sm:$0xf]
      %v676 = vld [vmem:[%s671 + $0x10] sm:$0xf]
      %v677 = vld [vmem:[%s671 + $0x14] sm:$0xf]
      %v678 = vld [vmem:[%s671 + $0x18] sm:$0xf]
      %v679 = vld [vmem:[%s671 + $0x1c] sm:$0xf]
      %s680 = scalar_lea.vmem %s1, 192
      %v681 = vld [vmem:[%s680] sm:$0xf]
      %v682 = vld [vmem:[%s680 + $0x4] sm:$0xf]
      %v683 = vld [vmem:[%s680 + $0x8] sm:$0xf]
      %v684 = vld [vmem:[%s680 + $0xc] sm:$0xf]
      %v685 = vld [vmem:[%s680 + $0x10] sm:$0xf]
      %v686 = vld [vmem:[%s680 + $0x14] sm:$0xf]
      %v687 = vld [vmem:[%s680 + $0x18] sm:$0xf]
      %v688 = vld [vmem:[%s680 + $0x1c] sm:$0xf]
      %v689 = vld [vmem:[%s680 + $0x20] sm:$0xf]
      %v690 = vld [vmem:[%s680 + $0x24] sm:$0xf]
      %v691 = vld [vmem:[%s680 + $0x28] sm:$0xf]
      %v692 = vld [vmem:[%s680 + $0x2c] sm:$0xf]
      %v693 = vld [vmem:[%s680 + $0x30] sm:$0xf]
      %v694 = vld [vmem:[%s680 + $0x34] sm:$0xf]
      %v695 = vld [vmem:[%s680 + $0x38] sm:$0xf]
      %v696 = vld [vmem:[%s680 + $0x3c] sm:$0xf]
      %v705 = vunpack.c.l.b16 %v672
      %v706 = vunpack.c.l.b16 %v673
      %v707 = vunpack.c.l.b16 %v674
      %v708 = vunpack.c.l.b16 %v675
      %v709 = vunpack.c.l.b16 %v676
      %v710 = vunpack.c.l.b16 %v677
      %v711 = vunpack.c.l.b16 %v678
      %v712 = vunpack.c.l.b16 %v679
      %v713 = vpack.c.b16 %v706, %v705
      %v714 = vpack.c.b16 %v708, %v707
      %v715 = vpack.c.b16 %v710, %v709
      %v716 = vpack.c.b16 %v712, %v711
      %v737 = vunpack.c.l.b16 %v681
      %v738 = vunpack.c.l.b16 %v682
      %v739 = vunpack.c.l.b16 %v683
      %v740 = vunpack.c.l.b16 %v684
      %v741 = vunpack.c.l.b16 %v685
      %v742 = vunpack.c.l.b16 %v686
      %v743 = vunpack.c.l.b16 %v687
      %v744 = vunpack.c.l.b16 %v688
      %v745 = vunpack.c.l.b16 %v689
      %v746 = vunpack.c.l.b16 %v690
      %v747 = vunpack.c.l.b16 %v691
      %v748 = vunpack.c.l.b16 %v692
      %v749 = vunpack.c.l.b16 %v693
      %v750 = vunpack.c.l.b16 %v694
      %v751 = vunpack.c.l.b16 %v695
      %v752 = vunpack.c.l.b16 %v696
      %v753 = vpack.c.b16 %v738, %v737
      %v754 = vpack.c.b16 %v740, %v739
      %v755 = vpack.c.b16 %v742, %v741
      %v756 = vpack.c.b16 %v744, %v743
      %v757 = vpack.c.b16 %v746, %v745
      %v758 = vpack.c.b16 %v748, %v747
      %v759 = vpack.c.b16 %v750, %v749
      %v760 = vpack.c.b16 %v752, %v751
      %769 = vmatprep.subr.bf16.mxu0 0
      %770 = vmatpush1.bf16.msra.mxu0 %v760
      %771 = vmatprep.subr.bf16.mxu0 0
      %772 = vmatpush1.bf16.msra.mxu0 %v759
      %773 = vmatprep.subr.bf16.mxu0 0
      %774 = vmatpush1.bf16.msra.mxu0 %v758
      %775 = vmatprep.subr.bf16.mxu0 0
      %776 = vmatpush1.bf16.msra.mxu0 %v757
      %777 = vmatprep.subr.bf16.mxu0 0
      %778 = vmatpush1.bf16.msra.mxu0 %v756
      %779 = vmatprep.subr.bf16.mxu0 0
      %780 = vmatpush1.bf16.msra.mxu0 %v755
      %781 = vmatprep.subr.bf16.mxu0 0
      %782 = vmatpush1.bf16.msra.mxu0 %v754
      %783 = vmatprep.subr.bf16.mxu0 0
      %784 = vmatpush1.bf16.msra.mxu0 %v753
      %785 = vmatprep.subr.bf16.mxu0 0
      %786 = vmatpush2.bf16.msra.mxu0 0
      %787 = vmatprep.subr.bf16.mxu0 0
      %788 = vmatpush2.bf16.msra.mxu0 0
      %789 = vmatprep.subr.bf16.mxu0 0
      %790 = vmatpush2.bf16.msra.mxu0 0
      %791 = vmatprep.subr.bf16.mxu0 0
      %792 = vmatpush2.bf16.msra.mxu0 0
      %793 = vmatprep.subr.bf16.mxu0 0
      %794 = vmatpush2.bf16.msra.mxu0 0
      %795 = vmatprep.subr.bf16.mxu0 0
      %796 = vmatpush2.bf16.msra.mxu0 0
      %797 = vmatprep.subr.bf16.mxu0 0
      %798 = vmatpush2.bf16.msra.mxu0 0
      %799 = vmatprep.subr.bf16.mxu0 0
      %800 = vmatpush2.bf16.msra.mxu0 0
      %801 = vmatprep.mubr.bf16.mxu0 0
      %802 = vmatmul.mubr.bf16.gmra.mxu0 %v713
      %v803 = vpop.f32.mrf.mxu0
      %v804 = vadd.f32 0.0, %v803
      %v805 = vpop.f32.mrf.mxu0
      %v806 = vpop.f32.mrf.mxu0
      %v807 = vadd.f32 0.0, %v806
      %v808 = vpop.f32.mrf.mxu0
      %809 = vmatprep.mubr.bf16.mxu0 0
      %810 = vmatmul.mubr.bf16.gmra.mxu0 %v714
      %v811 = vpop.f32.mrf.mxu0
      %v812 = vadd.f32 0.0, %v811
      %v813 = vpop.f32.mrf.mxu0
      %v814 = vpop.f32.mrf.mxu0
      %v815 = vadd.f32 0.0, %v814
      %v816 = vpop.f32.mrf.mxu0
      %817 = vmatprep.mubr.bf16.mxu0 0
      %818 = vmatmul.mubr.bf16.gmra.mxu0 %v715
      %v819 = vpop.f32.mrf.mxu0
      %v820 = vadd.f32 0.0, %v819
      %v821 = vpop.f32.mrf.mxu0
      %v822 = vpop.f32.mrf.mxu0
      %v823 = vadd.f32 0.0, %v822
      %v824 = vpop.f32.mrf.mxu0
      %825 = vmatprep.mubr.bf16.mxu0 0
      %826 = vmatmul.mubr.bf16.gmra.mxu0 %v716
      %v827 = vpop.f32.mrf.mxu0
      %v828 = vadd.f32 0.0, %v827
      %v829 = vpop.f32.mrf.mxu0
      %v830 = vpop.f32.mrf.mxu0
      %v831 = vadd.f32 0.0, %v830
      %v832 = vpop.f32.mrf.mxu0
      %833 = vdwg.mxu0
      %v834 = vadd.f32 %v663, %v804
      %v835 = vadd.f32 %v664, %v807
      %v836 = vadd.f32 %v665, %v812
      %v837 = vadd.f32 %v666, %v815
      %v838 = vadd.f32 %v667, %v820
      %v839 = vadd.f32 %v668, %v823
      %v840 = vadd.f32 %v669, %v828
      %v841 = vadd.f32 %v670, %v831
      %v842 = vld [vmem:[%s671 + $0x4] sm:$0xf]
      %v843 = vld [vmem:[%s671 + $0x8] sm:$0xf]
      %v844 = vld [vmem:[%s671 + $0xc] sm:$0xf]
      %v845 = vld [vmem:[%s671 + $0x10] sm:$0xf]
      %v846 = vld [vmem:[%s671 + $0x14] sm:$0xf]
      %v847 = vld [vmem:[%s671 + $0x18] sm:$0xf]
      %v848 = vld [vmem:[%s671 + $0x1c] sm:$0xf]
      %v849 = vld [vmem:[%s671 + $0x20] sm:$0xf]
      %s850 = scalar_lea.vmem %s1, 256
      %v851 = vld [vmem:[%s850] sm:$0xf]
      %v852 = vld [vmem:[%s850 + $0x4] sm:$0xf]
      %v853 = vld [vmem:[%s850 + $0x8] sm:$0xf]
      %v854 = vld [vmem:[%s850 + $0xc] sm:$0xf]
      %v855 = vld [vmem:[%s850 + $0x10] sm:$0xf]
      %v856 = vld [vmem:[%s850 + $0x14] sm:$0xf]
      %v857 = vld [vmem:[%s850 + $0x18] sm:$0xf]
      %v858 = vld [vmem:[%s850 + $0x1c] sm:$0xf]
      %v859 = vld [vmem:[%s850 + $0x20] sm:$0xf]
      %v860 = vld [vmem:[%s850 + $0x24] sm:$0xf]
      %v861 = vld [vmem:[%s850 + $0x28] sm:$0xf]
      %v862 = vld [vmem:[%s850 + $0x2c] sm:$0xf]
      %v863 = vld [vmem:[%s850 + $0x30] sm:$0xf]
      %v864 = vld [vmem:[%s850 + $0x34] sm:$0xf]
      %v865 = vld [vmem:[%s850 + $0x38] sm:$0xf]
      %v866 = vld [vmem:[%s850 + $0x3c] sm:$0xf]
      %v875 = vunpack.c.l.b16 %v842
      %v876 = vunpack.c.l.b16 %v843
      %v877 = vunpack.c.l.b16 %v844
      %v878 = vunpack.c.l.b16 %v845
      %v879 = vunpack.c.l.b16 %v846
      %v880 = vunpack.c.l.b16 %v847
      %v881 = vunpack.c.l.b16 %v848
      %v882 = vunpack.c.l.b16 %v849
      %v883 = vpack.c.b16 %v876, %v875
      %v884 = vpack.c.b16 %v878, %v877
      %v885 = vpack.c.b16 %v880, %v879
      %v886 = vpack.c.b16 %v882, %v881
      %v907 = vunpack.c.l.b16 %v851
      %v908 = vunpack.c.l.b16 %v852
      %v909 = vunpack.c.l.b16 %v853
      %v910 = vunpack.c.l.b16 %v854
      %v911 = vunpack.c.l.b16 %v855
      %v912 = vunpack.c.l.b16 %v856
      %v913 = vunpack.c.l.b16 %v857
      %v914 = vunpack.c.l.b16 %v858
      %v915 = vunpack.c.l.b16 %v859
      %v916 = vunpack.c.l.b16 %v860
      %v917 = vunpack.c.l.b16 %v861
      %v918 = vunpack.c.l.b16 %v862
      %v919 = vunpack.c.l.b16 %v863
      %v920 = vunpack.c.l.b16 %v864
      %v921 = vunpack.c.l.b16 %v865
      %v922 = vunpack.c.l.b16 %v866
      %v923 = vpack.c.b16 %v908, %v907
      %v924 = vpack.c.b16 %v910, %v909
      %v925 = vpack.c.b16 %v912, %v911
      %v926 = vpack.c.b16 %v914, %v913
      %v927 = vpack.c.b16 %v916, %v915
      %v928 = vpack.c.b16 %v918, %v917
      %v929 = vpack.c.b16 %v920, %v919
      %v930 = vpack.c.b16 %v922, %v921
      %939 = vmatprep.subr.bf16.mxu0 0
      %940 = vmatpush1.bf16.msra.mxu0 %v930
      %941 = vmatprep.subr.bf16.mxu0 0
      %942 = vmatpush1.bf16.msra.mxu0 %v929
      %943 = vmatprep.subr.bf16.mxu0 0
      %944 = vmatpush1.bf16.msra.mxu0 %v928
      %945 = vmatprep.subr.bf16.mxu0 0
      %946 = vmatpush1.bf16.msra.mxu0 %v927
      %947 = vmatprep.subr.bf16.mxu0 0
      %948 = vmatpush1.bf16.msra.mxu0 %v926
      %949 = vmatprep.subr.bf16.mxu0 0
      %950 = vmatpush1.bf16.msra.mxu0 %v925
      %951 = vmatprep.subr.bf16.mxu0 0
      %952 = vmatpush1.bf16.msra.mxu0 %v924
      %953 = vmatprep.subr.bf16.mxu0 0
      %954 = vmatpush1.bf16.msra.mxu0 %v923
      %955 = vmatprep.subr.bf16.mxu0 0
      %956 = vmatpush2.bf16.msra.mxu0 0
      %957 = vmatprep.subr.bf16.mxu0 0
      %958 = vmatpush2.bf16.msra.mxu0 0
      %959 = vmatprep.subr.bf16.mxu0 0
      %960 = vmatpush2.bf16.msra.mxu0 0
      %961 = vmatprep.subr.bf16.mxu0 0
      %962 = vmatpush2.bf16.msra.mxu0 0
      %963 = vmatprep.subr.bf16.mxu0 0
      %964 = vmatpush2.bf16.msra.mxu0 0
      %965 = vmatprep.subr.bf16.mxu0 0
      %966 = vmatpush2.bf16.msra.mxu0 0
      %967 = vmatprep.subr.bf16.mxu0 0
      %968 = vmatpush2.bf16.msra.mxu0 0
      %969 = vmatprep.subr.bf16.mxu0 0
      %970 = vmatpush2.bf16.msra.mxu0 0
      %971 = vmatprep.mubr.bf16.mxu0 0
      %972 = vmatmul.mubr.bf16.gmra.mxu0 %v883
      %v973 = vpop.f32.mrf.mxu0
      %v974 = vadd.f32 0.0, %v973
      %v975 = vpop.f32.mrf.mxu0
      %v976 = vpop.f32.mrf.mxu0
      %v977 = vadd.f32 0.0, %v976
      %v978 = vpop.f32.mrf.mxu0
      %979 = vmatprep.mubr.bf16.mxu0 0
      %980 = vmatmul.mubr.bf16.gmra.mxu0 %v884
      %v981 = vpop.f32.mrf.mxu0
      %v982 = vadd.f32 0.0, %v981
      %v983 = vpop.f32.mrf.mxu0
      %v984 = vpop.f32.mrf.mxu0
      %v985 = vadd.f32 0.0, %v984
      %v986 = vpop.f32.mrf.mxu0
      %987 = vmatprep.mubr.bf16.mxu0 0
      %988 = vmatmul.mubr.bf16.gmra.mxu0 %v885
      %v989 = vpop.f32.mrf.mxu0
      %v990 = vadd.f32 0.0, %v989
      %v991 = vpop.f32.mrf.mxu0
      %v992 = vpop.f32.mrf.mxu0
      %v993 = vadd.f32 0.0, %v992
      %v994 = vpop.f32.mrf.mxu0
      %995 = vmatprep.mubr.bf16.mxu0 0
      %996 = vmatmul.mubr.bf16.gmra.mxu0 %v886
      %v997 = vpop.f32.mrf.mxu0
      %v998 = vadd.f32 0.0, %v997
      %v999 = vpop.f32.mrf.mxu0
      %v1000 = vpop.f32.mrf.mxu0
      %v1001 = vadd.f32 0.0, %v1000
      %v1002 = vpop.f32.mrf.mxu0
      %1003 = vdwg.mxu0
      %v1004 = vadd.f32 %v834, %v974
      %v1005 = vadd.f32 %v835, %v977
      %v1006 = vadd.f32 %v836, %v982
      %v1007 = vadd.f32 %v837, %v985
      %v1008 = vadd.f32 %v838, %v990
      %v1009 = vadd.f32 %v839, %v993
      %v1010 = vadd.f32 %v840, %v998
      %v1011 = vadd.f32 %v841, %v1001
      %v1012 = vld [vmem:[%s671 + $0x8] sm:$0xf]
      %v1013 = vld [vmem:[%s671 + $0xc] sm:$0xf]
      %v1014 = vld [vmem:[%s671 + $0x10] sm:$0xf]
      %v1015 = vld [vmem:[%s671 + $0x14] sm:$0xf]
      %v1016 = vld [vmem:[%s671 + $0x18] sm:$0xf]
      %v1017 = vld [vmem:[%s671 + $0x1c] sm:$0xf]
      %v1018 = vld [vmem:[%s671 + $0x20] sm:$0xf]
      %v1019 = vld [vmem:[%s671 + $0x24] sm:$0xf]
      %s1020 = scalar_lea.vmem %s1, 320
      %v1021 = vld [vmem:[%s1020] sm:$0xf]
      %v1022 = vld [vmem:[%s1020 + $0x4] sm:$0xf]
      %v1023 = vld [vmem:[%s1020 + $0x8] sm:$0xf]
      %v1024 = vld [vmem:[%s1020 + $0xc] sm:$0xf]
      %v1025 = vld [vmem:[%s1020 + $0x10] sm:$0xf]
      %v1026 = vld [vmem:[%s1020 + $0x14] sm:$0xf]
      %v1027 = vld [vmem:[%s1020 + $0x18] sm:$0xf]
      %v1028 = vld [vmem:[%s1020 + $0x1c] sm:$0xf]
      %v1029 = vld [vmem:[%s1020 + $0x20] sm:$0xf]
      %v1030 = vld [vmem:[%s1020 + $0x24] sm:$0xf]
      %v1031 = vld [vmem:[%s1020 + $0x28] sm:$0xf]
      %v1032 = vld [vmem:[%s1020 + $0x2c] sm:$0xf]
      %v1033 = vld [vmem:[%s1020 + $0x30] sm:$0xf]
      %v1034 = vld [vmem:[%s1020 + $0x34] sm:$0xf]
      %v1035 = vld [vmem:[%s1020 + $0x38] sm:$0xf]
      %v1036 = vld [vmem:[%s1020 + $0x3c] sm:$0xf]
      %v1045 = vunpack.c.l.b16 %v1012
      %v1046 = vunpack.c.l.b16 %v1013
      %v1047 = vunpack.c.l.b16 %v1014
      %v1048 = vunpack.c.l.b16 %v1015
      %v1049 = vunpack.c.l.b16 %v1016
      %v1050 = vunpack.c.l.b16 %v1017
      %v1051 = vunpack.c.l.b16 %v1018
      %v1052 = vunpack.c.l.b16 %v1019
      %v1053 = vpack.c.b16 %v1046, %v1045
      %v1054 = vpack.c.b16 %v1048, %v1047
      %v1055 = vpack.c.b16 %v1050, %v1049
      %v1056 = vpack.c.b16 %v1052, %v1051
      %v1077 = vunpack.c.l.b16 %v1021
      %v1078 = vunpack.c.l.b16 %v1022
      %v1079 = vunpack.c.l.b16 %v1023
      %v1080 = vunpack.c.l.b16 %v1024
      %v1081 = vunpack.c.l.b16 %v1025
      %v1082 = vunpack.c.l.b16 %v1026
      %v1083 = vunpack.c.l.b16 %v1027
      %v1084 = vunpack.c.l.b16 %v1028
      %v1085 = vunpack.c.l.b16 %v1029
      %v1086 = vunpack.c.l.b16 %v1030
      %v1087 = vunpack.c.l.b16 %v1031
      %v1088 = vunpack.c.l.b16 %v1032
      %v1089 = vunpack.c.l.b16 %v1033
      %v1090 = vunpack.c.l.b16 %v1034
      %v1091 = vunpack.c.l.b16 %v1035
      %v1092 = vunpack.c.l.b16 %v1036
      %v1093 = vpack.c.b16 %v1078, %v1077
      %v1094 = vpack.c.b16 %v1080, %v1079
      %v1095 = vpack.c.b16 %v1082, %v1081
      %v1096 = vpack.c.b16 %v1084, %v1083
      %v1097 = vpack.c.b16 %v1086, %v1085
      %v1098 = vpack.c.b16 %v1088, %v1087
      %v1099 = vpack.c.b16 %v1090, %v1089
      %v1100 = vpack.c.b16 %v1092, %v1091
      %1109 = vmatprep.subr.bf16.mxu0 0
      %1110 = vmatpush1.bf16.msra.mxu0 %v1100
      %1111 = vmatprep.subr.bf16.mxu0 0
      %1112 = vmatpush1.bf16.msra.mxu0 %v1099
      %1113 = vmatprep.subr.bf16.mxu0 0
      %1114 = vmatpush1.bf16.msra.mxu0 %v1098
      %1115 = vmatprep.subr.bf16.mxu0 0
      %1116 = vmatpush1.bf16.msra.mxu0 %v1097
      %1117 = vmatprep.subr.bf16.mxu0 0
      %1118 = vmatpush1.bf16.msra.mxu0 %v1096
      %1119 = vmatprep.subr.bf16.mxu0 0
      %1120 = vmatpush1.bf16.msra.mxu0 %v1095
      %1121 = vmatprep.subr.bf16.mxu0 0
      %1122 = vmatpush1.bf16.msra.mxu0 %v1094
      %1123 = vmatprep.subr.bf16.mxu0 0
      %1124 = vmatpush1.bf16.msra.mxu0 %v1093
      %1125 = vmatprep.subr.bf16.mxu0 0
      %1126 = vmatpush2.bf16.msra.mxu0 0
      %1127 = vmatprep.subr.bf16.mxu0 0
      %1128 = vmatpush2.bf16.msra.mxu0 0
      %1129 = vmatprep.subr.bf16.mxu0 0
      %1130 = vmatpush2.bf16.msra.mxu0 0
      %1131 = vmatprep.subr.bf16.mxu0 0
      %1132 = vmatpush2.bf16.msra.mxu0 0
      %1133 = vmatprep.subr.bf16.mxu0 0
      %1134 = vmatpush2.bf16.msra.mxu0 0
      %1135 = vmatprep.subr.bf16.mxu0 0
      %1136 = vmatpush2.bf16.msra.mxu0 0
      %1137 = vmatprep.subr.bf16.mxu0 0
      %1138 = vmatpush2.bf16.msra.mxu0 0
      %1139 = vmatprep.subr.bf16.mxu0 0
      %1140 = vmatpush2.bf16.msra.mxu0 0
      %1141 = vmatprep.mubr.bf16.mxu0 0
      %1142 = vmatmul.mubr.bf16.gmra.mxu0 %v1053
      %v1143 = vpop.f32.mrf.mxu0
      %v1144 = vadd.f32 0.0, %v1143
      %v1145 = vpop.f32.mrf.mxu0
      %v1146 = vpop.f32.mrf.mxu0
      %v1147 = vadd.f32 0.0, %v1146
      %v1148 = vpop.f32.mrf.mxu0
      %1149 = vmatprep.mubr.bf16.mxu0 0
      %1150 = vmatmul.mubr.bf16.gmra.mxu0 %v1054
      %v1151 = vpop.f32.mrf.mxu0
      %v1152 = vadd.f32 0.0, %v1151
      %v1153 = vpop.f32.mrf.mxu0
      %v1154 = vpop.f32.mrf.mxu0
      %v1155 = vadd.f32 0.0, %v1154
      %v1156 = vpop.f32.mrf.mxu0
      %1157 = vmatprep.mubr.bf16.mxu0 0
      %1158 = vmatmul.mubr.bf16.gmra.mxu0 %v1055
      %v1159 = vpop.f32.mrf.mxu0
      %v1160 = vadd.f32 0.0, %v1159
      %v1161 = vpop.f32.mrf.mxu0
      %v1162 = vpop.f32.mrf.mxu0
      %v1163 = vadd.f32 0.0, %v1162
      %v1164 = vpop.f32.mrf.mxu0
      %1165 = vmatprep.mubr.bf16.mxu0 0
      %1166 = vmatmul.mubr.bf16.gmra.mxu0 %v1056
      %v1167 = vpop.f32.mrf.mxu0
      %v1168 = vadd.f32 0.0, %v1167
      %v1169 = vpop.f32.mrf.mxu0
      %v1170 = vpop.f32.mrf.mxu0
      %v1171 = vadd.f32 0.0, %v1170
      %v1172 = vpop.f32.mrf.mxu0
      %1173 = vdwg.mxu0
      %v1174 = vadd.f32 %v1004, %v1144
      %v1175 = vadd.f32 %v1005, %v1147
      %v1176 = vadd.f32 %v1006, %v1152
      %v1177 = vadd.f32 %v1007, %v1155
      %v1178 = vadd.f32 %v1008, %v1160
      %v1179 = vadd.f32 %v1009, %v1163
      %v1180 = vadd.f32 %v1010, %v1168
      %v1181 = vadd.f32 %v1011, %v1171
      %s1182 = scalar_lea.vmem %s192, 80
      %v1183 = vld [vmem:[%s1182] sm:$0xf]
      %v1184 = vld [vmem:[%s1182 + $0x4] sm:$0xf]
      %v1185 = vld [vmem:[%s1182 + $0x8] sm:$0xf]
      %v1186 = vld [vmem:[%s1182 + $0xc] sm:$0xf]
      %v1187 = vld [vmem:[%s1182 + $0x10] sm:$0xf]
      %v1188 = vld [vmem:[%s1182 + $0x14] sm:$0xf]
      %v1189 = vld [vmem:[%s1182 + $0x18] sm:$0xf]
      %v1190 = vld [vmem:[%s1182 + $0x1c] sm:$0xf]
      %s1191 = scalar_lea.vmem %s1, 384
      %v1192 = vld [vmem:[%s1191] sm:$0xf]
      %v1193 = vld [vmem:[%s1191 + $0x4] sm:$0xf]
      %v1194 = vld [vmem:[%s1191 + $0x8] sm:$0xf]
      %v1195 = vld [vmem:[%s1191 + $0xc] sm:$0xf]
      %v1196 = vld [vmem:[%s1191 + $0x10] sm:$0xf]
      %v1197 = vld [vmem:[%s1191 + $0x14] sm:$0xf]
      %v1198 = vld [vmem:[%s1191 + $0x18] sm:$0xf]
      %v1199 = vld [vmem:[%s1191 + $0x1c] sm:$0xf]
      %v1200 = vld [vmem:[%s1191 + $0x20] sm:$0xf]
      %v1201 = vld [vmem:[%s1191 + $0x24] sm:$0xf]
      %v1202 = vld [vmem:[%s1191 + $0x28] sm:$0xf]
      %v1203 = vld [vmem:[%s1191 + $0x2c] sm:$0xf]
      %v1204 = vld [vmem:[%s1191 + $0x30] sm:$0xf]
      %v1205 = vld [vmem:[%s1191 + $0x34] sm:$0xf]
      %v1206 = vld [vmem:[%s1191 + $0x38] sm:$0xf]
      %v1207 = vld [vmem:[%s1191 + $0x3c] sm:$0xf]
      %v1216 = vunpack.c.l.b16 %v1183
      %v1217 = vunpack.c.l.b16 %v1184
      %v1218 = vunpack.c.l.b16 %v1185
      %v1219 = vunpack.c.l.b16 %v1186
      %v1220 = vunpack.c.l.b16 %v1187
      %v1221 = vunpack.c.l.b16 %v1188
      %v1222 = vunpack.c.l.b16 %v1189
      %v1223 = vunpack.c.l.b16 %v1190
      %v1224 = vpack.c.b16 %v1217, %v1216
      %v1225 = vpack.c.b16 %v1219, %v1218
      %v1226 = vpack.c.b16 %v1221, %v1220
      %v1227 = vpack.c.b16 %v1223, %v1222
      %v1248 = vunpack.c.l.b16 %v1192
      %v1249 = vunpack.c.l.b16 %v1193
      %v1250 = vunpack.c.l.b16 %v1194
      %v1251 = vunpack.c.l.b16 %v1195
      %v1252 = vunpack.c.l.b16 %v1196
      %v1253 = vunpack.c.l.b16 %v1197
      %v1254 = vunpack.c.l.b16 %v1198
      %v1255 = vunpack.c.l.b16 %v1199
      %v1256 = vunpack.c.l.b16 %v1200
      %v1257 = vunpack.c.l.b16 %v1201
      %v1258 = vunpack.c.l.b16 %v1202
      %v1259 = vunpack.c.l.b16 %v1203
      %v1260 = vunpack.c.l.b16 %v1204
      %v1261 = vunpack.c.l.b16 %v1205
      %v1262 = vunpack.c.l.b16 %v1206
      %v1263 = vunpack.c.l.b16 %v1207
      %v1264 = vpack.c.b16 %v1249, %v1248
      %v1265 = vpack.c.b16 %v1251, %v1250
      %v1266 = vpack.c.b16 %v1253, %v1252
      %v1267 = vpack.c.b16 %v1255, %v1254
      %v1268 = vpack.c.b16 %v1257, %v1256
      %v1269 = vpack.c.b16 %v1259, %v1258
      %v1270 = vpack.c.b16 %v1261, %v1260
      %v1271 = vpack.c.b16 %v1263, %v1262
      %1280 = vmatprep.subr.bf16.mxu0 0
      %1281 = vmatpush1.bf16.msra.mxu0 %v1271
      %1282 = vmatprep.subr.bf16.mxu0 0
      %1283 = vmatpush1.bf16.msra.mxu0 %v1270
      %1284 = vmatprep.subr.bf16.mxu0 0
      %1285 = vmatpush1.bf16.msra.mxu0 %v1269
      %1286 = vmatprep.subr.bf16.mxu0 0
      %1287 = vmatpush1.bf16.msra.mxu0 %v1268
      %1288 = vmatprep.subr.bf16.mxu0 0
      %1289 = vmatpush1.bf16.msra.mxu0 %v1267
      %1290 = vmatprep.subr.bf16.mxu0 0
      %1291 = vmatpush1.bf16.msra.mxu0 %v1266
      %1292 = vmatprep.subr.bf16.mxu0 0
      %1293 = vmatpush1.bf16.msra.mxu0 %v1265
      %1294 = vmatprep.subr.bf16.mxu0 0
      %1295 = vmatpush1.bf16.msra.mxu0 %v1264
      %1296 = vmatprep.subr.bf16.mxu0 0
      %1297 = vmatpush2.bf16.msra.mxu0 0
      %1298 = vmatprep.subr.bf16.mxu0 0
      %1299 = vmatpush2.bf16.msra.mxu0 0
      %1300 = vmatprep.subr.bf16.mxu0 0
      %1301 = vmatpush2.bf16.msra.mxu0 0
      %1302 = vmatprep.subr.bf16.mxu0 0
      %1303 = vmatpush2.bf16.msra.mxu0 0
      %1304 = vmatprep.subr.bf16.mxu0 0
      %1305 = vmatpush2.bf16.msra.mxu0 0
      %1306 = vmatprep.subr.bf16.mxu0 0
      %1307 = vmatpush2.bf16.msra.mxu0 0
      %1308 = vmatprep.subr.bf16.mxu0 0
      %1309 = vmatpush2.bf16.msra.mxu0 0
      %1310 = vmatprep.subr.bf16.mxu0 0
      %1311 = vmatpush2.bf16.msra.mxu0 0
      %1312 = vmatprep.mubr.bf16.mxu0 0
      %1313 = vmatmul.mubr.bf16.gmra.mxu0 %v1224
      %v1314 = vpop.f32.mrf.mxu0
      %v1315 = vadd.f32 0.0, %v1314
      %v1316 = vpop.f32.mrf.mxu0
      %v1317 = vpop.f32.mrf.mxu0
      %v1318 = vadd.f32 0.0, %v1317
      %v1319 = vpop.f32.mrf.mxu0
      %1320 = vmatprep.mubr.bf16.mxu0 0
      %1321 = vmatmul.mubr.bf16.gmra.mxu0 %v1225
      %v1322 = vpop.f32.mrf.mxu0
      %v1323 = vadd.f32 0.0, %v1322
      %v1324 = vpop.f32.mrf.mxu0
      %v1325 = vpop.f32.mrf.mxu0
      %v1326 = vadd.f32 0.0, %v1325
      %v1327 = vpop.f32.mrf.mxu0
      %1328 = vmatprep.mubr.bf16.mxu0 0
      %1329 = vmatmul.mubr.bf16.gmra.mxu0 %v1226
      %v1330 = vpop.f32.mrf.mxu0
      %v1331 = vadd.f32 0.0, %v1330
      %v1332 = vpop.f32.mrf.mxu0
      %v1333 = vpop.f32.mrf.mxu0
      %v1334 = vadd.f32 0.0, %v1333
      %v1335 = vpop.f32.mrf.mxu0
      %1336 = vmatprep.mubr.bf16.mxu0 0
      %1337 = vmatmul.mubr.bf16.gmra.mxu0 %v1227
      %v1338 = vpop.f32.mrf.mxu0
      %v1339 = vadd.f32 0.0, %v1338
      %v1340 = vpop.f32.mrf.mxu0
      %v1341 = vpop.f32.mrf.mxu0
      %v1342 = vadd.f32 0.0, %v1341
      %v1343 = vpop.f32.mrf.mxu0
      %1344 = vdwg.mxu0
      %v1345 = vadd.f32 %v1174, %v1315
      %v1346 = vadd.f32 %v1175, %v1318
      %v1347 = vadd.f32 %v1176, %v1323
      %v1348 = vadd.f32 %v1177, %v1326
      %v1349 = vadd.f32 %v1178, %v1331
      %v1350 = vadd.f32 %v1179, %v1334
      %v1351 = vadd.f32 %v1180, %v1339
      %v1352 = vadd.f32 %v1181, %v1342
      %v1353 = vld [vmem:[%s1182 + $0x4] sm:$0xf]
      %v1354 = vld [vmem:[%s1182 + $0x8] sm:$0xf]
      %v1355 = vld [vmem:[%s1182 + $0xc] sm:$0xf]
      %v1356 = vld [vmem:[%s1182 + $0x10] sm:$0xf]
      %v1357 = vld [vmem:[%s1182 + $0x14] sm:$0xf]
      %v1358 = vld [vmem:[%s1182 + $0x18] sm:$0xf]
      %v1359 = vld [vmem:[%s1182 + $0x1c] sm:$0xf]
      %v1360 = vld [vmem:[%s1182 + $0x20] sm:$0xf]
      %s1361 = scalar_lea.vmem %s1, 448
      %v1362 = vld [vmem:[%s1361] sm:$0xf]
      %v1363 = vld [vmem:[%s1361 + $0x4] sm:$0xf]
      %v1364 = vld [vmem:[%s1361 + $0x8] sm:$0xf]
      %v1365 = vld [vmem:[%s1361 + $0xc] sm:$0xf]
      %v1366 = vld [vmem:[%s1361 + $0x10] sm:$0xf]
      %v1367 = vld [vmem:[%s1361 + $0x14] sm:$0xf]
      %v1368 = vld [vmem:[%s1361 + $0x18] sm:$0xf]
      %v1369 = vld [vmem:[%s1361 + $0x1c] sm:$0xf]
      %v1370 = vld [vmem:[%s1361 + $0x20] sm:$0xf]
      %v1371 = vld [vmem:[%s1361 + $0x24] sm:$0xf]
      %v1372 = vld [vmem:[%s1361 + $0x28] sm:$0xf]
      %v1373 = vld [vmem:[%s1361 + $0x2c] sm:$0xf]
      %v1374 = vld [vmem:[%s1361 + $0x30] sm:$0xf]
      %v1375 = vld [vmem:[%s1361 + $0x34] sm:$0xf]
      %v1376 = vld [vmem:[%s1361 + $0x38] sm:$0xf]
      %v1377 = vld [vmem:[%s1361 + $0x3c] sm:$0xf]
      %v1386 = vunpack.c.l.b16 %v1353
      %v1387 = vunpack.c.l.b16 %v1354
      %v1388 = vunpack.c.l.b16 %v1355
      %v1389 = vunpack.c.l.b16 %v1356
      %v1390 = vunpack.c.l.b16 %v1357
      %v1391 = vunpack.c.l.b16 %v1358
      %v1392 = vunpack.c.l.b16 %v1359
      %v1393 = vunpack.c.l.b16 %v1360
      %v1394 = vpack.c.b16 %v1387, %v1386
      %v1395 = vpack.c.b16 %v1389, %v1388
      %v1396 = vpack.c.b16 %v1391, %v1390
      %v1397 = vpack.c.b16 %v1393, %v1392
      %v1418 = vunpack.c.l.b16 %v1362
      %v1419 = vunpack.c.l.b16 %v1363
      %v1420 = vunpack.c.l.b16 %v1364
      %v1421 = vunpack.c.l.b16 %v1365
      %v1422 = vunpack.c.l.b16 %v1366
      %v1423 = vunpack.c.l.b16 %v1367
      %v1424 = vunpack.c.l.b16 %v1368
      %v1425 = vunpack.c.l.b16 %v1369
      %v1426 = vunpack.c.l.b16 %v1370
      %v1427 = vunpack.c.l.b16 %v1371
      %v1428 = vunpack.c.l.b16 %v1372
      %v1429 = vunpack.c.l.b16 %v1373
      %v1430 = vunpack.c.l.b16 %v1374
      %v1431 = vunpack.c.l.b16 %v1375
      %v1432 = vunpack.c.l.b16 %v1376
      %v1433 = vunpack.c.l.b16 %v1377
      %v1434 = vpack.c.b16 %v1419, %v1418
      %v1435 = vpack.c.b16 %v1421, %v1420
      %v1436 = vpack.c.b16 %v1423, %v1422
      %v1437 = vpack.c.b16 %v1425, %v1424
      %v1438 = vpack.c.b16 %v1427, %v1426
      %v1439 = vpack.c.b16 %v1429, %v1428
      %v1440 = vpack.c.b16 %v1431, %v1430
      %v1441 = vpack.c.b16 %v1433, %v1432
      %1450 = vmatprep.subr.bf16.mxu0 0
      %1451 = vmatpush1.bf16.msra.mxu0 %v1441
      %1452 = vmatprep.subr.bf16.mxu0 0
      %1453 = vmatpush1.bf16.msra.mxu0 %v1440
      %1454 = vmatprep.subr.bf16.mxu0 0
      %1455 = vmatpush1.bf16.msra.mxu0 %v1439
      %1456 = vmatprep.subr.bf16.mxu0 0
      %1457 = vmatpush1.bf16.msra.mxu0 %v1438
      %1458 = vmatprep.subr.bf16.mxu0 0
      %1459 = vmatpush1.bf16.msra.mxu0 %v1437
      %1460 = vmatprep.subr.bf16.mxu0 0
      %1461 = vmatpush1.bf16.msra.mxu0 %v1436
      %1462 = vmatprep.subr.bf16.mxu0 0
      %1463 = vmatpush1.bf16.msra.mxu0 %v1435
      %1464 = vmatprep.subr.bf16.mxu0 0
      %1465 = vmatpush1.bf16.msra.mxu0 %v1434
      %1466 = vmatprep.subr.bf16.mxu0 0
      %1467 = vmatpush2.bf16.msra.mxu0 0
      %1468 = vmatprep.subr.bf16.mxu0 0
      %1469 = vmatpush2.bf16.msra.mxu0 0
      %1470 = vmatprep.subr.bf16.mxu0 0
      %1471 = vmatpush2.bf16.msra.mxu0 0
      %1472 = vmatprep.subr.bf16.mxu0 0
      %1473 = vmatpush2.bf16.msra.mxu0 0
      %1474 = vmatprep.subr.bf16.mxu0 0
      %1475 = vmatpush2.bf16.msra.mxu0 0
      %1476 = vmatprep.subr.bf16.mxu0 0
      %1477 = vmatpush2.bf16.msra.mxu0 0
      %1478 = vmatprep.subr.bf16.mxu0 0
      %1479 = vmatpush2.bf16.msra.mxu0 0
      %1480 = vmatprep.subr.bf16.mxu0 0
      %1481 = vmatpush2.bf16.msra.mxu0 0
      %1482 = vmatprep.mubr.bf16.mxu0 0
      %1483 = vmatmul.mubr.bf16.gmra.mxu0 %v1394
      %v1484 = vpop.f32.mrf.mxu0
      %v1485 = vadd.f32 0.0, %v1484
      %v1486 = vpop.f32.mrf.mxu0
      %v1487 = vpop.f32.mrf.mxu0
      %v1488 = vadd.f32 0.0, %v1487
      %v1489 = vpop.f32.mrf.mxu0
      %1490 = vmatprep.mubr.bf16.mxu0 0
      %1491 = vmatmul.mubr.bf16.gmra.mxu0 %v1395
      %v1492 = vpop.f32.mrf.mxu0
      %v1493 = vadd.f32 0.0, %v1492
      %v1494 = vpop.f32.mrf.mxu0
      %v1495 = vpop.f32.mrf.mxu0
      %v1496 = vadd.f32 0.0, %v1495
      %v1497 = vpop.f32.mrf.mxu0
      %1498 = vmatprep.mubr.bf16.mxu0 0
      %1499 = vmatmul.mubr.bf16.gmra.mxu0 %v1396
      %v1500 = vpop.f32.mrf.mxu0
      %v1501 = vadd.f32 0.0, %v1500
      %v1502 = vpop.f32.mrf.mxu0
      %v1503 = vpop.f32.mrf.mxu0
      %v1504 = vadd.f32 0.0, %v1503
      %v1505 = vpop.f32.mrf.mxu0
      %1506 = vmatprep.mubr.bf16.mxu0 0
      %1507 = vmatmul.mubr.bf16.gmra.mxu0 %v1397
      %v1508 = vpop.f32.mrf.mxu0
      %v1509 = vadd.f32 0.0, %v1508
      %v1510 = vpop.f32.mrf.mxu0
      %v1511 = vpop.f32.mrf.mxu0
      %v1512 = vadd.f32 0.0, %v1511
      %v1513 = vpop.f32.mrf.mxu0
      %1514 = vdwg.mxu0
      %v1515 = vadd.f32 %v1345, %v1485
      %v1516 = vadd.f32 %v1346, %v1488
      %v1517 = vadd.f32 %v1347, %v1493
      %v1518 = vadd.f32 %v1348, %v1496
      %v1519 = vadd.f32 %v1349, %v1501
      %v1520 = vadd.f32 %v1350, %v1504
      %v1521 = vadd.f32 %v1351, %v1509
      %v1522 = vadd.f32 %v1352, %v1512
      %v1523 = vld [vmem:[%s1182 + $0x8] sm:$0xf]
      %v1524 = vld [vmem:[%s1182 + $0xc] sm:$0xf]
      %v1525 = vld [vmem:[%s1182 + $0x10] sm:$0xf]
      %v1526 = vld [vmem:[%s1182 + $0x14] sm:$0xf]
      %v1527 = vld [vmem:[%s1182 + $0x18] sm:$0xf]
      %v1528 = vld [vmem:[%s1182 + $0x1c] sm:$0xf]
      %v1529 = vld [vmem:[%s1182 + $0x20] sm:$0xf]
      %v1530 = vld [vmem:[%s1182 + $0x24] sm:$0xf]
      %s1531 = scalar_lea.vmem %s1, 512
      %v1532 = vld [vmem:[%s1531] sm:$0xf]
      %v1533 = vld [vmem:[%s1531 + $0x4] sm:$0xf]
      %v1534 = vld [vmem:[%s1531 + $0x8] sm:$0xf]
      %v1535 = vld [vmem:[%s1531 + $0xc] sm:$0xf]
      %v1536 = vld [vmem:[%s1531 + $0x10] sm:$0xf]
      %v1537 = vld [vmem:[%s1531 + $0x14] sm:$0xf]
      %v1538 = vld [vmem:[%s1531 + $0x18] sm:$0xf]
      %v1539 = vld [vmem:[%s1531 + $0x1c] sm:$0xf]
      %v1540 = vld [vmem:[%s1531 + $0x20] sm:$0xf]
      %v1541 = vld [vmem:[%s1531 + $0x24] sm:$0xf]
      %v1542 = vld [vmem:[%s1531 + $0x28] sm:$0xf]
      %v1543 = vld [vmem:[%s1531 + $0x2c] sm:$0xf]
      %v1544 = vld [vmem:[%s1531 + $0x30] sm:$0xf]
      %v1545 = vld [vmem:[%s1531 + $0x34] sm:$0xf]
      %v1546 = vld [vmem:[%s1531 + $0x38] sm:$0xf]
      %v1547 = vld [vmem:[%s1531 + $0x3c] sm:$0xf]
      %v1556 = vunpack.c.l.b16 %v1523
      %v1557 = vunpack.c.l.b16 %v1524
      %v1558 = vunpack.c.l.b16 %v1525
      %v1559 = vunpack.c.l.b16 %v1526
      %v1560 = vunpack.c.l.b16 %v1527
      %v1561 = vunpack.c.l.b16 %v1528
      %v1562 = vunpack.c.l.b16 %v1529
      %v1563 = vunpack.c.l.b16 %v1530
      %v1564 = vpack.c.b16 %v1557, %v1556
      %v1565 = vpack.c.b16 %v1559, %v1558
      %v1566 = vpack.c.b16 %v1561, %v1560
      %v1567 = vpack.c.b16 %v1563, %v1562
      %v1588 = vunpack.c.l.b16 %v1532
      %v1589 = vunpack.c.l.b16 %v1533
      %v1590 = vunpack.c.l.b16 %v1534
      %v1591 = vunpack.c.l.b16 %v1535
      %v1592 = vunpack.c.l.b16 %v1536
      %v1593 = vunpack.c.l.b16 %v1537
      %v1594 = vunpack.c.l.b16 %v1538
      %v1595 = vunpack.c.l.b16 %v1539
      %v1596 = vunpack.c.l.b16 %v1540
      %v1597 = vunpack.c.l.b16 %v1541
      %v1598 = vunpack.c.l.b16 %v1542
      %v1599 = vunpack.c.l.b16 %v1543
      %v1600 = vunpack.c.l.b16 %v1544
      %v1601 = vunpack.c.l.b16 %v1545
      %v1602 = vunpack.c.l.b16 %v1546
      %v1603 = vunpack.c.l.b16 %v1547
      %v1604 = vpack.c.b16 %v1589, %v1588
      %v1605 = vpack.c.b16 %v1591, %v1590
      %v1606 = vpack.c.b16 %v1593, %v1592
      %v1607 = vpack.c.b16 %v1595, %v1594
      %v1608 = vpack.c.b16 %v1597, %v1596
      %v1609 = vpack.c.b16 %v1599, %v1598
      %v1610 = vpack.c.b16 %v1601, %v1600
      %v1611 = vpack.c.b16 %v1603, %v1602
      %1620 = vmatprep.subr.bf16.mxu0 0
      %1621 = vmatpush1.bf16.msra.mxu0 %v1611
      %1622 = vmatprep.subr.bf16.mxu0 0
      %1623 = vmatpush1.bf16.msra.mxu0 %v1610
      %1624 = vmatprep.subr.bf16.mxu0 0
      %1625 = vmatpush1.bf16.msra.mxu0 %v1609
      %1626 = vmatprep.subr.bf16.mxu0 0
      %1627 = vmatpush1.bf16.msra.mxu0 %v1608
      %1628 = vmatprep.subr.bf16.mxu0 0
      %1629 = vmatpush1.bf16.msra.mxu0 %v1607
      %1630 = vmatprep.subr.bf16.mxu0 0
      %1631 = vmatpush1.bf16.msra.mxu0 %v1606
      %1632 = vmatprep.subr.bf16.mxu0 0
      %1633 = vmatpush1.bf16.msra.mxu0 %v1605
      %1634 = vmatprep.subr.bf16.mxu0 0
      %1635 = vmatpush1.bf16.msra.mxu0 %v1604
      %1636 = vmatprep.subr.bf16.mxu0 0
      %1637 = vmatpush2.bf16.msra.mxu0 0
      %1638 = vmatprep.subr.bf16.mxu0 0
      %1639 = vmatpush2.bf16.msra.mxu0 0
      %1640 = vmatprep.subr.bf16.mxu0 0
      %1641 = vmatpush2.bf16.msra.mxu0 0
      %1642 = vmatprep.subr.bf16.mxu0 0
      %1643 = vmatpush2.bf16.msra.mxu0 0
      %1644 = vmatprep.subr.bf16.mxu0 0
      %1645 = vmatpush2.bf16.msra.mxu0 0
      %1646 = vmatprep.subr.bf16.mxu0 0
      %1647 = vmatpush2.bf16.msra.mxu0 0
      %1648 = vmatprep.subr.bf16.mxu0 0
      %1649 = vmatpush2.bf16.msra.mxu0 0
      %1650 = vmatprep.subr.bf16.mxu0 0
      %1651 = vmatpush2.bf16.msra.mxu0 0
      %1652 = vmatprep.mubr.bf16.mxu0 0
      %1653 = vmatmul.mubr.bf16.gmra.mxu0 %v1564
      %v1654 = vpop.f32.mrf.mxu0
      %v1655 = vadd.f32 0.0, %v1654
      %v1656 = vpop.f32.mrf.mxu0
      %v1657 = vpop.f32.mrf.mxu0
      %v1658 = vadd.f32 0.0, %v1657
      %v1659 = vpop.f32.mrf.mxu0
      %1660 = vmatprep.mubr.bf16.mxu0 0
      %1661 = vmatmul.mubr.bf16.gmra.mxu0 %v1565
      %v1662 = vpop.f32.mrf.mxu0
      %v1663 = vadd.f32 0.0, %v1662
      %v1664 = vpop.f32.mrf.mxu0
      %v1665 = vpop.f32.mrf.mxu0
      %v1666 = vadd.f32 0.0, %v1665
      %v1667 = vpop.f32.mrf.mxu0
      %1668 = vmatprep.mubr.bf16.mxu0 0
      %1669 = vmatmul.mubr.bf16.gmra.mxu0 %v1566
      %v1670 = vpop.f32.mrf.mxu0
      %v1671 = vadd.f32 0.0, %v1670
      %v1672 = vpop.f32.mrf.mxu0
      %v1673 = vpop.f32.mrf.mxu0
      %v1674 = vadd.f32 0.0, %v1673
      %v1675 = vpop.f32.mrf.mxu0
      %1676 = vmatprep.mubr.bf16.mxu0 0
      %1677 = vmatmul.mubr.bf16.gmra.mxu0 %v1567
      %v1678 = vpop.f32.mrf.mxu0
      %v1679 = vadd.f32 0.0, %v1678
      %v1680 = vpop.f32.mrf.mxu0
      %v1681 = vpop.f32.mrf.mxu0
      %v1682 = vadd.f32 0.0, %v1681
      %v1683 = vpop.f32.mrf.mxu0
      %1684 = vdwg.mxu0
      %v1685 = vadd.f32 %v1515, %v1655
      %v1686 = vadd.f32 %v1516, %v1658
      %v1687 = vadd.f32 %v1517, %v1663
      %v1688 = vadd.f32 %v1518, %v1666
      %v1689 = vadd.f32 %v1519, %v1671
      %v1690 = vadd.f32 %v1520, %v1674
      %v1691 = vadd.f32 %v1521, %v1679
      %v1692 = vadd.f32 %v1522, %v1682
      %v1693 = vld [vmem:[%s2] sm:$0x1]
      %v1695 = vlaneseq
      %v1696 = vshrl.u32 %v1695, 7
      %v1697 = vsub.s32 0, %v1696
      %v1698 = vrot.slane %v1693, %v1697
      %v1700 = vmul.f32 %v1685, %v1698
      %v1701 = vmul.f32 %v1686, %v1698
      %v1702 = vmul.f32 %v1687, %v1698
      %v1703 = vmul.f32 %v1688, %v1698
      %v1704 = vmul.f32 %v1689, %v1698
      %v1705 = vmul.f32 %v1690, %v1698
      %v1706 = vmul.f32 %v1691, %v1698
      %v1707 = vmul.f32 %v1692, %v1698
      %v1708 = vld [vmem:[%s3] sm:$0x1]
      %v1710 = vlaneseq
      %v1711 = vshrl.u32 %v1710, 7
      %v1712 = vsub.s32 0, %v1711
      %v1713 = vrot.slane %v1708, %v1712
      %v1715 = vadd.f32 %v1700, %v1713
      %v1716 = vadd.f32 %v1701, %v1713
      %v1717 = vadd.f32 %v1702, %v1713
      %v1718 = vadd.f32 %v1703, %v1713
      %v1719 = vadd.f32 %v1704, %v1713
      %v1720 = vadd.f32 %v1705, %v1713
      %v1721 = vadd.f32 %v1706, %v1713
      %v1722 = vadd.f32 %v1707, %v1713
      %v1723 = vmax.f32 %v1715, 0.0
      %v1724 = vmax.f32 %v1716, 0.0
      %v1725 = vmax.f32 %v1717, 0.0
      %v1726 = vmax.f32 %v1718, 0.0
      %v1727 = vmax.f32 %v1719, 0.0
      %v1728 = vmax.f32 %v1720, 0.0
      %v1729 = vmax.f32 %v1721, 0.0
      %v1730 = vmax.f32 %v1722, 0.0
      %v1731 = vpack.c.bf16 %v1724, %v1723
      %v1732 = vpack.c.bf16 %v1726, %v1725
      %v1733 = vpack.c.bf16 %v1728, %v1727
      %v1734 = vpack.c.bf16 %v1730, %v1729
      %v1739 = vunpack.c.l.b16 %v1731
      %v1740 = vunpack.c.h.b16 %v1731
      %v1741 = vunpack.c.l.b16 %v1732
      %v1742 = vunpack.c.h.b16 %v1732
      %v1743 = vunpack.c.l.b16 %v1733
      %v1744 = vunpack.c.h.b16 %v1733
      %v1745 = vunpack.c.l.b16 %v1734
      %v1746 = vunpack.c.h.b16 %v1734
      %v1747 = vpack.c.b16 %v1739, %v1739
      %v1748 = vpack.c.b16 %v1740, %v1740
      %v1749 = vpack.c.b16 %v1741, %v1741
      %v1750 = vpack.c.b16 %v1742, %v1742
      %v1751 = vpack.c.b16 %v1743, %v1743
      %v1752 = vpack.c.b16 %v1744, %v1744
      %v1753 = vpack.c.b16 %v1745, %v1745
      %v1754 = vpack.c.b16 %v1746, %v1746
      %1763 = vst [vmem:[%s197] sm:$0xf] %v1747
      %1764 = vst [vmem:[%s197 + $0x4] sm:$0xf] %v1748
      %1765 = vst [vmem:[%s197 + $0x8] sm:$0xf] %v1749
      %1766 = vst [vmem:[%s197 + $0xc] sm:$0xf] %v1750
      %1767 = vst [vmem:[%s197 + $0x10] sm:$0xf] %v1751
      %1768 = vst [vmem:[%s197 + $0x14] sm:$0xf] %v1752
      %1769 = vst [vmem:[%s197 + $0x18] sm:$0xf] %v1753
      %1770 = vst [vmem:[%s197 + $0x1c] sm:$0xf] %v1754
      %p1771 = scmp.lt.s32.totalorder %s15, 1
      %s1772 = scalar_select %p1771, %s15, 1
      %s1773 = smul.addr %s1772, 8
      %s1774 = smul.addr %s1773, 4
      %s1775 = scalar_lea.vmem %s4, %s1774
      // Predicated region
      $region37: #{_lambda_.17} parent=35 // pred_check
        %p1776 = pneg %p122
      $region38: #{_lambda_.17} parent=35 // pred_check_branch
        %1778 = sbr.rel (%p1776) target = $region40
      $region39: #{_lambda_.17} parent=35 // pred_region
        _
      $region40: #{_lambda_.17} parent=35 // pred_fallthru
        _
    $region36: #{_lambda_.17} parent=5 // pred_fallthru
      _
    %p1779 = scmp.le.s32.totalorder 2, %s10
    // Predicated region
    $region41: #{_lambda_.17} parent=5 // pred_check
      %p1780 = pneg %p1779
    $region42: #{_lambda_.17} parent=5 // pred_check_branch
      %1782 = sbr.rel (%p1780) target = $region44
    $region43: #{_lambda_.17} parent=5 // pred_region
      %s1783 = ssub.s32 %s10, 2
      // Predicated region
      $region45: #{_lambda_.17} parent=43 // pred_check
        %p1784 = pneg %p128
      $region46: #{_lambda_.17} parent=43 // pred_check_branch
        %1786 = sbr.rel (%p1784) target = $region48
      $region47: #{_lambda_.17} parent=43 // pred_region
        %p1787 = scmp.lt.s32.totalorder %s16, 1
        %s1788 = scalar_select %p1787, %s16, 1
        %s1789 = smul.addr %s1788, 8
        %s1790 = smul.addr %s1789, 4
        %s1791 = scalar_lea.vmem %s4, %s1790
      $region48: #{_lambda_.17} parent=43 // pred_fallthru
        _
    $region44: #{_lambda_.17} parent=5 // pred_fallthru
      _
  $region6: #{_lambda_.17} parent=0 // loop_footer
    %s14 = sadd.s32 1, %s10
  $region7: #{_lambda_.17} parent=0 // loop_footer_branch
    %9 = sbr.rel target = $region3
  $region8: #{_lambda_.17} parent=0 // loop_exit
    _

// kernel: _lambda_.16
$region0: #{_lambda_.16}
  #allocation0 [shape = 'u32[]', space=smem, size = 0x4, offset = 0x4, fixed_abs, tag = 'smem constant byte address 0x4 - core index']
  #allocation1 [shape = 'u32[144,128]{1,0:T(1,128)}', space=vmem, size = 0x12000, scoped, tag = 'internal scratch']
  %s0 = inlined_call_operand.vmem [shape: bf16[2,3,80,128], index: 0, kind: input, shape index: {}]
  %s1 = inlined_call_operand.vmem [shape: bf16[9,128,128], index: 1, kind: input, shape index: {}]
  %s2 = inlined_call_operand.vmem [shape: f32[1,128], index: 2, kind: input, shape index: {}]
  %s3 = inlined_call_operand.vmem [shape: f32[1,128], index: 3, kind: input, shape index: {}]
  %s4 = inlined_call_operand.vmem [shape: bf16[2,64,128], index: 4, kind: input, shape index: {}]
  %s5 = inlined_call_operand.vmem [shape: bf16[2,64,128], index: 5, kind: output, shape index: {}]
  %s6 = sld [smem:[#allocation0]]
  $region53: #{_lambda_.16} parent=0
    _
  %s8 = ssub.s32 1, %s6
  %s9 = scalar_select 0, %s8, %s6
  loop: start=0, step=1, limit=4
  $region2: #{_lambda_.16} parent=0 // loop_pre_header
    _
  $region3: #{_lambda_.16} parent=0 // loop_header
    %s11 = sphi 0, %s15
    %p12 = scmp.ge.s32.totalorder %s11, 4
    %s21 = sphi 0, %s23
    %s24 = sphi 0, %s21
    %s25 = sphi 0, %s24
    %s41 = sphi 0, %s25
    %s45 = sphi 0, %s45
    %s47 = sphi 0, %s45
    %s48 = sphi 0, %s47
    %s62 = sphi 0, %s48
    %s66 = sphi 0, %s66
    %s68 = sphi 0, %s66
    %s69 = sphi 0, %s68
    %s83 = sphi 0, %s69
    %s87 = sphi 0, %s87
    %s89 = sphi 0, %s87
    %s90 = sphi 0, %s89
    %s104 = sphi 0, %s90
    %s110 = sphi 0, %s112
    %s113 = sphi 0, %s110
    %s114 = sphi 0, %s113
    %s130 = sphi 0, %s114
    %s136 = sphi 0, %s138
    %s139 = sphi 0, %s136
    %s140 = sphi 0, %s139
    %s156 = sphi 0, %s140
  $region4: #{_lambda_.16} parent=0 // loop_header_branch
    %14 = sbr.rel (%p12) target = $region8
  $region5: #{_lambda_.16} parent=0 // loop_body
    %s16 = ssub.s32 %s11, 1
    %s17 = ssub.s32 %s11, 2
    %s18 = sadd.s32 %s11, 1
    %s19 = ssub.s32 %s11, %s18
    %p20 = scmp.eq.s32.totalorder %s19, 0
    %s22 = sadd.s32 %s21, 1
    %s23 = scalar_select %p20, %s21, %s22
    %p26 = pneg %p20
    %p27 = scmp.eq.s32.totalorder %s11, 1
    %p28 = por %p26, %p27
    %p29 = scmp.ne.s32.totalorder %s21, %s24
    %p30 = scmp.eq.s32.totalorder %s11, 0
    %p31 = por %p29, %p30
    %p32 = scmp.ne.s32.totalorder %s21, %s24
    %p33 = scmp.eq.s32.totalorder %s16, 1
    %p34 = por %p32, %p33
    %p35 = scmp.ne.s32.totalorder %s24, %s25
    %p36 = scmp.eq.s32.totalorder %s16, 0
    %p37 = por %p35, %p36
    %p38 = scmp.ne.s32.totalorder %s24, %s25
    %p39 = scmp.eq.s32.totalorder %s17, 1
    %p40 = por %p38, %p39
    %p42 = scmp.ne.s32.totalorder %s25, %s41
    %p43 = scmp.eq.s32.totalorder %s17, 0
    %p44 = por %p42, %p43
    %s46 = sadd.s32 %s45, 1
    %p49 = scmp.eq.s32.totalorder %s11, 1
    %p50 = scmp.ne.s32.totalorder %s45, %s47
    %p51 = scmp.eq.s32.totalorder %s11, 0
    %p52 = por %p50, %p51
    %p53 = scmp.ne.s32.totalorder %s45, %s47
    %p54 = scmp.eq.s32.totalorder %s16, 1
    %p55 = por %p53, %p54
    %p56 = scmp.ne.s32.totalorder %s47, %s48
    %p57 = scmp.eq.s32.totalorder %s16, 0
    %p58 = por %p56, %p57
    %p59 = scmp.ne.s32.totalorder %s47, %s48
    %p60 = scmp.eq.s32.totalorder %s17, 1
    %p61 = por %p59, %p60
    %p63 = scmp.ne.s32.totalorder %s48, %s62
    %p64 = scmp.eq.s32.totalorder %s17, 0
    %p65 = por %p63, %p64
    %s67 = sadd.s32 %s66, 1
    %p70 = scmp.eq.s32.totalorder %s11, 1
    %p71 = scmp.ne.s32.totalorder %s66, %s68
    %p72 = scmp.eq.s32.totalorder %s11, 0
    %p73 = por %p71, %p72
    %p74 = scmp.ne.s32.totalorder %s66, %s68
    %p75 = scmp.eq.s32.totalorder %s16, 1
    %p76 = por %p74, %p75
    %p77 = scmp.ne.s32.totalorder %s68, %s69
    %p78 = scmp.eq.s32.totalorder %s16, 0
    %p79 = por %p77, %p78
    %p80 = scmp.ne.s32.totalorder %s68, %s69
    %p81 = scmp.eq.s32.totalorder %s17, 1
    %p82 = por %p80, %p81
    %p84 = scmp.ne.s32.totalorder %s69, %s83
    %p85 = scmp.eq.s32.totalorder %s17, 0
    %p86 = por %p84, %p85
    %s88 = sadd.s32 %s87, 1
    %p91 = scmp.eq.s32.totalorder %s11, 1
    %p92 = scmp.ne.s32.totalorder %s87, %s89
    %p93 = scmp.eq.s32.totalorder %s11, 0
    %p94 = por %p92, %p93
    %p95 = scmp.ne.s32.totalorder %s87, %s89
    %p96 = scmp.eq.s32.totalorder %s16, 1
    %p97 = por %p95, %p96
    %p98 = scmp.ne.s32.totalorder %s89, %s90
    %p99 = scmp.eq.s32.totalorder %s16, 0
    %p100 = por %p98, %p99
    %p101 = scmp.ne.s32.totalorder %s89, %s90
    %p102 = scmp.eq.s32.totalorder %s17, 1
    %p103 = por %p101, %p102
    %p105 = scmp.ne.s32.totalorder %s90, %s104
    %p106 = scmp.eq.s32.totalorder %s17, 0
    %p107 = por %p105, %p106
    %s108 = ssub.s32 %s11, %s18
    %p109 = scmp.eq.s32.totalorder %s108, 0
    %s111 = sadd.s32 %s110, 1
    %s112 = scalar_select %p109, %s110, %s111
    %p115 = pneg %p109
    %p116 = scmp.eq.s32.totalorder %s11, 1
    %p117 = por %p115, %p116
    %p118 = scmp.ne.s32.totalorder %s110, %s113
    %p119 = scmp.eq.s32.totalorder %s11, 0
    %p120 = por %p118, %p119
    %p121 = scmp.ne.s32.totalorder %s110, %s113
    %p122 = scmp.eq.s32.totalorder %s16, 1
    %p123 = por %p121, %p122
    %p124 = scmp.ne.s32.totalorder %s113, %s114
    %p125 = scmp.eq.s32.totalorder %s16, 0
    %p126 = por %p124, %p125
    %p127 = scmp.ne.s32.totalorder %s113, %s114
    %p128 = scmp.eq.s32.totalorder %s17, 1
    %p129 = por %p127, %p128
    %p131 = scmp.ne.s32.totalorder %s114, %s130
    %p132 = scmp.eq.s32.totalorder %s17, 0
    %p133 = por %p131, %p132
    %s134 = ssub.s32 %s11, %s18
    %p135 = scmp.eq.s32.totalorder %s134, 0
    %s137 = sadd.s32 %s136, 1
    %s138 = scalar_select %p135, %s136, %s137
    %p141 = pneg %p135
    %p142 = scmp.eq.s32.totalorder %s11, 1
    %p143 = por %p141, %p142
    %p144 = scmp.ne.s32.totalorder %s136, %s139
    %p145 = scmp.eq.s32.totalorder %s11, 0
    %p146 = por %p144, %p145
    %p147 = scmp.ne.s32.totalorder %s136, %s139
    %p148 = scmp.eq.s32.totalorder %s16, 1
    %p149 = por %p147, %p148
    %p150 = scmp.ne.s32.totalorder %s139, %s140
    %p151 = scmp.eq.s32.totalorder %s16, 0
    %p152 = por %p150, %p151
    %p153 = scmp.ne.s32.totalorder %s139, %s140
    %p154 = scmp.eq.s32.totalorder %s17, 1
    %p155 = por %p153, %p154
    %p157 = scmp.ne.s32.totalorder %s140, %s156
    %p158 = scmp.eq.s32.totalorder %s17, 0
    %p159 = por %p157, %p158
    %p160 = scmp.le.s32.totalorder 1, %s11
    %p161 = scmp.lt.s32.totalorder %s11, 3
    %p162 = pnand %p160, %p161
    %p163 = pneg %p162
    // Predicated region
    $region9: #{_lambda_.16} parent=5 // pred_check
      _
    $region10: #{_lambda_.16} parent=5 // pred_check_branch
      %165 = sbr.rel (%p162) target = $region12
    $region11: #{_lambda_.16} parent=5 // pred_region
      %s166 = ssub.s32 %s11, 1
      // Predicated region
      $region13: #{_lambda_.16} parent=11 // pred_check
        %p167 = pneg %p58
      $region14: #{_lambda_.16} parent=11 // pred_check_branch
        %169 = sbr.rel (%p167) target = $region16
      $region15: #{_lambda_.16} parent=11 // pred_region
        _
      $region16: #{_lambda_.16} parent=11 // pred_fallthru
        _
      // Predicated region
      $region17: #{_lambda_.16} parent=11 // pred_check
        %p170 = pneg %p79
      $region18: #{_lambda_.16} parent=11 // pred_check_branch
        %172 = sbr.rel (%p170) target = $region20
      $region19: #{_lambda_.16} parent=11 // pred_region
        _
      $region20: #{_lambda_.16} parent=11 // pred_fallthru
        _
      // Predicated region
      $region21: #{_lambda_.16} parent=11 // pred_check
        %p173 = pneg %p100
      $region22: #{_lambda_.16} parent=11 // pred_check_branch
        %175 = sbr.rel (%p173) target = $region24
      $region23: #{_lambda_.16} parent=11 // pred_region
        _
      $region24: #{_lambda_.16} parent=11 // pred_fallthru
        _
    $region12: #{_lambda_.16} parent=5 // pred_fallthru
      _
    %p176 = scmp.lt.s32.totalorder %s11, 2
    // Predicated region
    $region25: #{_lambda_.16} parent=5 // pred_check
      %p177 = pneg %p176
    $region26: #{_lambda_.16} parent=5 // pred_check_branch
      %179 = sbr.rel (%p177) target = $region28
    $region27: #{_lambda_.16} parent=5 // pred_region
      // Predicated region
      $region29: #{_lambda_.16} parent=27 // pred_check
        %p180 = pneg %p31
      $region30: #{_lambda_.16} parent=27 // pred_check_branch
        %182 = sbr.rel (%p180) target = $region32
      $region31: #{_lambda_.16} parent=27 // pred_region
        %p183 = scmp.lt.s32.totalorder %s11, 1
        %s184 = scalar_select %p183, %s11, 1
        %s185 = smul.addr %s184, 30
        %s186 = smul.addr %s185, 4
        %s187 = scalar_lea.vmem %s0, %s186
      $region32: #{_lambda_.16} parent=27 // pred_fallthru
        _
      // Predicated region
      $region33: #{_lambda_.16} parent=27 // pred_check
        %p188 = pneg %p120
      $region34: #{_lambda_.16} parent=27 // pred_check_branch
        %190 = sbr.rel (%p188) target = $region36
      $region35: #{_lambda_.16} parent=27 // pred_region
        %p191 = scmp.lt.s32.totalorder %s11, 1
        %s192 = scalar_select %p191, %s11, 1
        %s193 = smul.addr %s192, 8
        %s194 = smul.addr %s193, 4
        %s195 = scalar_lea.vmem %s4, %s194
      $region36: #{_lambda_.16} parent=27 // pred_fallthru
        _
    $region28: #{_lambda_.16} parent=5 // pred_fallthru
      _
    %p196 = scmp.le.s32.totalorder 1, %s11
    %p197 = scmp.lt.s32.totalorder %s11, 3
    %p198 = pnand %p196, %p197
    %p199 = pneg %p198
    // Predicated region
    $region37: #{_lambda_.16} parent=5 // pred_check
      _
    $region38: #{_lambda_.16} parent=5 // pred_check_branch
      %201 = sbr.rel (%p198) target = $region40
    $region39: #{_lambda_.16} parent=5 // pred_region
      %s202 = ssub.s32 %s11, 1
      %p203 = scmp.lt.s32.totalorder %s16, 1
      %s204 = scalar_select %p203, %s16, 1
      %s205 = smul.addr %s204, 30
      %s206 = smul.addr %s205, 4
      %s207 = scalar_lea.vmem %s0, %s206
      %p208 = pneg %p37
      %p209 = pneg %p34
      %p210 = pneg %p58
      %p211 = pneg %p55
      %p212 = pneg %p79
      %p213 = pneg %p76
      %p214 = pneg %p100
      %p215 = pneg %p97
      %p216 = scmp.lt.s32.totalorder %s16, 1
      %s217 = scalar_select %p216, %s16, 1
      %s218 = smul.addr %s217, 8
      %s219 = smul.addr %s218, 4
      %s220 = scalar_lea.vmem %s4, %s219
      %p221 = pneg %p126
      %p222 = pneg %p123
      %p223 = pneg %p152
      %p224 = pneg %p149
      %p225 = scmp.lt.s32.totalorder %s16, 1
      %s226 = scalar_select %p225, %s16, 1
      %s227 = smul.addr %s226, 8
      %s228 = smul.addr %s227, 4
      %s229 = scalar_lea.vmem %s5, %s228
      %p230 = scmp.lt.s32.totalorder %s16, 1
      %s231 = scalar_select %p230, %s16, 1
      %s232 = smul.addr %s231, 30
      %s233 = smul.addr %s232, 4
      %s234 = scalar_lea.vmem %s0, %s233
      %p235 = scmp.lt.s32.totalorder %s16, 1
      %s236 = scalar_select %p235, %s16, 1
      %s237 = smul.addr %s236, 8
      %s238 = smul.addr %s237, 4
      %s239 = scalar_lea.vmem %s4, %s238
      %p240 = scmp.lt.s32.totalorder %s16, 1
      %s241 = scalar_select %p240, %s16, 1
      %s242 = smul.addr %s241, 8
      %s243 = smul.addr %s242, 4
      %s244 = scalar_lea.vmem %s5, %s243
      %v246 = vld [vmem:[%s234] sm:$0xf]
      %v247 = vld [vmem:[%s234 + $0x4] sm:$0xf]
      %v248 = vld [vmem:[%s234 + $0x8] sm:$0xf]
      %v249 = vld [vmem:[%s234 + $0xc] sm:$0xf]
      %v250 = vld [vmem:[%s234 + $0x10] sm:$0xf]
      %v251 = vld [vmem:[%s234 + $0x14] sm:$0xf]
      %v252 = vld [vmem:[%s234 + $0x18] sm:$0xf]
      %v253 = vld [vmem:[%s234 + $0x1c] sm:$0xf]
      %v254 = vld [vmem:[%s1] sm:$0xf]
      %v255 = vld [vmem:[%s1 + $0x4] sm:$0xf]
      %v256 = vld [vmem:[%s1 + $0x8] sm:$0xf]
      %v257 = vld [vmem:[%s1 + $0xc] sm:$0xf]
      %v258 = vld [vmem:[%s1 + $0x10] sm:$0xf]
      %v259 = vld [vmem:[%s1 + $0x14] sm:$0xf]
      %v260 = vld [vmem:[%s1 + $0x18] sm:$0xf]
      %v261 = vld [vmem:[%s1 + $0x1c] sm:$0xf]
      %v262 = vld [vmem:[%s1 + $0x20] sm:$0xf]
      %v263 = vld [vmem:[%s1 + $0x24] sm:$0xf]
      %v264 = vld [vmem:[%s1 + $0x28] sm:$0xf]
      %v265 = vld [vmem:[%s1 + $0x2c] sm:$0xf]
      %v266 = vld [vmem:[%s1 + $0x30] sm:$0xf]
      %v267 = vld [vmem:[%s1 + $0x34] sm:$0xf]
      %v268 = vld [vmem:[%s1 + $0x38] sm:$0xf]
      %v269 = vld [vmem:[%s1 + $0x3c] sm:$0xf]
      %v270 = vld [vmem:[%s234 + $0x20] sm:$0xf]
      %s271 = scalar_lea.vmem %s1, 64
      %v272 = vld [vmem:[%s271] sm:$0xf]
      %v273 = vld [vmem:[%s271 + $0x4] sm:$0xf]
      %v274 = vld [vmem:[%s271 + $0x8] sm:$0xf]
      %v275 = vld [vmem:[%s271 + $0xc] sm:$0xf]
      %v276 = vld [vmem:[%s271 + $0x10] sm:$0xf]
      %v277 = vld [vmem:[%s271 + $0x14] sm:$0xf]
      %v278 = vld [vmem:[%s271 + $0x18] sm:$0xf]
      %v279 = vld [vmem:[%s271 + $0x1c] sm:$0xf]
      %v280 = vld [vmem:[%s271 + $0x20] sm:$0xf]
      %v281 = vld [vmem:[%s271 + $0x24] sm:$0xf]
      %v282 = vld [vmem:[%s271 + $0x28] sm:$0xf]
      %v283 = vld [vmem:[%s271 + $0x2c] sm:$0xf]
      %v284 = vld [vmem:[%s271 + $0x30] sm:$0xf]
      %v285 = vld [vmem:[%s271 + $0x34] sm:$0xf]
      %v286 = vld [vmem:[%s271 + $0x38] sm:$0xf]
      %v287 = vld [vmem:[%s271 + $0x3c] sm:$0xf]
      %v296 = vunpack.c.l.b16 %v247
      %v297 = vunpack.c.l.b16 %v248
      %v298 = vunpack.c.l.b16 %v249
      %v299 = vunpack.c.l.b16 %v250
      %v300 = vunpack.c.l.b16 %v251
      %v301 = vunpack.c.l.b16 %v252
      %v302 = vunpack.c.l.b16 %v253
      %v303 = vunpack.c.l.b16 %v270
      %v304 = vpack.c.b16 %v297, %v296
      %v305 = vpack.c.b16 %v299, %v298
      %v306 = vpack.c.b16 %v301, %v300
      %v307 = vpack.c.b16 %v303, %v302
      %v328 = vunpack.c.l.b16 %v272
      %v329 = vunpack.c.l.b16 %v273
      %v330 = vunpack.c.l.b16 %v274
      %v331 = vunpack.c.l.b16 %v275
      %v332 = vunpack.c.l.b16 %v276
      %v333 = vunpack.c.l.b16 %v277
      %v334 = vunpack.c.l.b16 %v278
      %v335 = vunpack.c.l.b16 %v279
      %v336 = vunpack.c.l.b16 %v280
      %v337 = vunpack.c.l.b16 %v281
      %v338 = vunpack.c.l.b16 %v282
      %v339 = vunpack.c.l.b16 %v283
      %v340 = vunpack.c.l.b16 %v284
      %v341 = vunpack.c.l.b16 %v285
      %v342 = vunpack.c.l.b16 %v286
      %v343 = vunpack.c.l.b16 %v287
      %v344 = vpack.c.b16 %v329, %v328
      %v345 = vpack.c.b16 %v331, %v330
      %v346 = vpack.c.b16 %v333, %v332
      %v347 = vpack.c.b16 %v335, %v334
      %v348 = vpack.c.b16 %v337, %v336
      %v349 = vpack.c.b16 %v339, %v338
      %v350 = vpack.c.b16 %v341, %v340
      %v351 = vpack.c.b16 %v343, %v342
      %360 = vmatprep.subr.bf16.mxu0 0
      %361 = vmatpush1.bf16.msra.mxu0 %v351
      %362 = vmatprep.subr.bf16.mxu0 0
      %363 = vmatpush1.bf16.msra.mxu0 %v350
      %364 = vmatprep.subr.bf16.mxu0 0
      %365 = vmatpush1.bf16.msra.mxu0 %v349
      %366 = vmatprep.subr.bf16.mxu0 0
      %367 = vmatpush1.bf16.msra.mxu0 %v348
      %368 = vmatprep.subr.bf16.mxu0 0
      %369 = vmatpush1.bf16.msra.mxu0 %v347
      %370 = vmatprep.subr.bf16.mxu0 0
      %371 = vmatpush1.bf16.msra.mxu0 %v346
      %372 = vmatprep.subr.bf16.mxu0 0
      %373 = vmatpush1.bf16.msra.mxu0 %v345
      %374 = vmatprep.subr.bf16.mxu0 0
      %375 = vmatpush1.bf16.msra.mxu0 %v344
      %376 = vmatprep.subr.bf16.mxu0 0
      %377 = vmatpush2.bf16.msra.mxu0 0
      %378 = vmatprep.subr.bf16.mxu0 0
      %379 = vmatpush2.bf16.msra.mxu0 0
      %380 = vmatprep.subr.bf16.mxu0 0
      %381 = vmatpush2.bf16.msra.mxu0 0
      %382 = vmatprep.subr.bf16.mxu0 0
      %383 = vmatpush2.bf16.msra.mxu0 0
      %384 = vmatprep.subr.bf16.mxu0 0
      %385 = vmatpush2.bf16.msra.mxu0 0
      %386 = vmatprep.subr.bf16.mxu0 0
      %387 = vmatpush2.bf16.msra.mxu0 0
      %388 = vmatprep.subr.bf16.mxu0 0
      %389 = vmatpush2.bf16.msra.mxu0 0
      %390 = vmatprep.subr.bf16.mxu0 0
      %391 = vmatpush2.bf16.msra.mxu0 0
      %392 = vmatprep.mubr.bf16.mxu0 0
      %393 = vmatmul.mubr.bf16.gmra.mxu0 %v304
      %v394 = vpop.f32.mrf.mxu0
      %v395 = vadd.f32 0.0, %v394
      %v396 = vpop.f32.mrf.mxu0
      %v397 = vpop.f32.mrf.mxu0
      %v398 = vadd.f32 0.0, %v397
      %v399 = vpop.f32.mrf.mxu0
      %400 = vmatprep.mubr.bf16.mxu0 0
      %401 = vmatmul.mubr.bf16.gmra.mxu0 %v305
      %v402 = vpop.f32.mrf.mxu0
      %v403 = vadd.f32 0.0, %v402
      %v404 = vpop.f32.mrf.mxu0
      %v405 = vpop.f32.mrf.mxu0
      %v406 = vadd.f32 0.0, %v405
      %v407 = vpop.f32.mrf.mxu0
      %408 = vmatprep.mubr.bf16.mxu0 0
      %409 = vmatmul.mubr.bf16.gmra.mxu0 %v306
      %v410 = vpop.f32.mrf.mxu0
      %v411 = vadd.f32 0.0, %v410
      %v412 = vpop.f32.mrf.mxu0
      %v413 = vpop.f32.mrf.mxu0
      %v414 = vadd.f32 0.0, %v413
      %v415 = vpop.f32.mrf.mxu0
      %416 = vmatprep.mubr.bf16.mxu0 0
      %417 = vmatmul.mubr.bf16.gmra.mxu0 %v307
      %v418 = vpop.f32.mrf.mxu0
      %v419 = vadd.f32 0.0, %v418
      %v420 = vpop.f32.mrf.mxu0
      %v421 = vpop.f32.mrf.mxu0
      %v422 = vadd.f32 0.0, %v421
      %v423 = vpop.f32.mrf.mxu0
      %424 = vdwg.mxu0
      %v426 = vunpack.c.l.b16 %v246
      %v427 = vpack.c.b16 %v296, %v426
      %v428 = vpack.c.b16 %v298, %v297
      %v429 = vpack.c.b16 %v300, %v299
      %v430 = vpack.c.b16 %v302, %v301
      %v451 = vunpack.c.l.b16 %v254
      %v452 = vunpack.c.l.b16 %v255
      %v453 = vunpack.c.l.b16 %v256
      %v454 = vunpack.c.l.b16 %v257
      %v455 = vunpack.c.l.b16 %v258
      %v456 = vunpack.c.l.b16 %v259
      %v457 = vunpack.c.l.b16 %v260
      %v458 = vunpack.c.l.b16 %v261
      %v459 = vunpack.c.l.b16 %v262
      %v460 = vunpack.c.l.b16 %v263
      %v461 = vunpack.c.l.b16 %v264
      %v462 = vunpack.c.l.b16 %v265
      %v463 = vunpack.c.l.b16 %v266
      %v464 = vunpack.c.l.b16 %v267
      %v465 = vunpack.c.l.b16 %v268
      %v466 = vunpack.c.l.b16 %v269
      %v467 = vpack.c.b16 %v452, %v451
      %v468 = vpack.c.b16 %v454, %v453
      %v469 = vpack.c.b16 %v456, %v455
      %v470 = vpack.c.b16 %v458, %v457
      %v471 = vpack.c.b16 %v460, %v459
      %v472 = vpack.c.b16 %v462, %v461
      %v473 = vpack.c.b16 %v464, %v463
      %v474 = vpack.c.b16 %v466, %v465
      %483 = vmatprep.subr.bf16.mxu0 0
      %484 = vmatpush1.bf16.msra.mxu0 %v474
      %485 = vmatprep.subr.bf16.mxu0 0
      %486 = vmatpush1.bf16.msra.mxu0 %v473
      %487 = vmatprep.subr.bf16.mxu0 0
      %488 = vmatpush1.bf16.msra.mxu0 %v472
      %489 = vmatprep.subr.bf16.mxu0 0
      %490 = vmatpush1.bf16.msra.mxu0 %v471
      %491 = vmatprep.subr.bf16.mxu0 0
      %492 = vmatpush1.bf16.msra.mxu0 %v470
      %493 = vmatprep.subr.bf16.mxu0 0
      %494 = vmatpush1.bf16.msra.mxu0 %v469
      %495 = vmatprep.subr.bf16.mxu0 0
      %496 = vmatpush1.bf16.msra.mxu0 %v468
      %497 = vmatprep.subr.bf16.mxu0 0
      %498 = vmatpush1.bf16.msra.mxu0 %v467
      %499 = vmatprep.subr.bf16.mxu0 0
      %500 = vmatpush2.bf16.msra.mxu0 0
      %501 = vmatprep.subr.bf16.mxu0 0
      %502 = vmatpush2.bf16.msra.mxu0 0
      %503 = vmatprep.subr.bf16.mxu0 0
      %504 = vmatpush2.bf16.msra.mxu0 0
      %505 = vmatprep.subr.bf16.mxu0 0
      %506 = vmatpush2.bf16.msra.mxu0 0
      %507 = vmatprep.subr.bf16.mxu0 0
      %508 = vmatpush2.bf16.msra.mxu0 0
      %509 = vmatprep.subr.bf16.mxu0 0
      %510 = vmatpush2.bf16.msra.mxu0 0
      %511 = vmatprep.subr.bf16.mxu0 0
      %512 = vmatpush2.bf16.msra.mxu0 0
      %513 = vmatprep.subr.bf16.mxu0 0
      %514 = vmatpush2.bf16.msra.mxu0 0
      %515 = vmatprep.mubr.bf16.mxu0 0
      %516 = vmatmul.mubr.bf16.gmra.mxu0 %v427
      %v517 = vpop.f32.mrf.mxu0
      %v518 = vadd.f32 %v395, %v517
      %v519 = vpop.f32.mrf.mxu0
      %v520 = vpop.f32.mrf.mxu0
      %v521 = vadd.f32 %v398, %v520
      %v522 = vpop.f32.mrf.mxu0
      %523 = vmatprep.mubr.bf16.mxu0 0
      %524 = vmatmul.mubr.bf16.gmra.mxu0 %v428
      %v525 = vpop.f32.mrf.mxu0
      %v526 = vadd.f32 %v403, %v525
      %v527 = vpop.f32.mrf.mxu0
      %v528 = vpop.f32.mrf.mxu0
      %v529 = vadd.f32 %v406, %v528
      %v530 = vpop.f32.mrf.mxu0
      %531 = vmatprep.mubr.bf16.mxu0 0
      %532 = vmatmul.mubr.bf16.gmra.mxu0 %v429
      %v533 = vpop.f32.mrf.mxu0
      %v534 = vadd.f32 %v411, %v533
      %v535 = vpop.f32.mrf.mxu0
      %v536 = vpop.f32.mrf.mxu0
      %v537 = vadd.f32 %v414, %v536
      %v538 = vpop.f32.mrf.mxu0
      %539 = vmatprep.mubr.bf16.mxu0 0
      %540 = vmatmul.mubr.bf16.gmra.mxu0 %v430
      %v541 = vpop.f32.mrf.mxu0
      %v542 = vadd.f32 %v419, %v541
      %v543 = vpop.f32.mrf.mxu0
      %v544 = vpop.f32.mrf.mxu0
      %v545 = vadd.f32 %v422, %v544
      %v546 = vpop.f32.mrf.mxu0
      %547 = vdwg.mxu0
      %v548 = vld [vmem:[%s234 + $0x8] sm:$0xf]
      %v549 = vld [vmem:[%s234 + $0xc] sm:$0xf]
      %v550 = vld [vmem:[%s234 + $0x10] sm:$0xf]
      %v551 = vld [vmem:[%s234 + $0x14] sm:$0xf]
      %v552 = vld [vmem:[%s234 + $0x18] sm:$0xf]
      %v553 = vld [vmem:[%s234 + $0x1c] sm:$0xf]
      %v554 = vld [vmem:[%s234 + $0x20] sm:$0xf]
      %v555 = vld [vmem:[%s234 + $0x24] sm:$0xf]
      %s556 = scalar_lea.vmem %s1, 128
      %v557 = vld [vmem:[%s556] sm:$0xf]
      %v558 = vld [vmem:[%s556 + $0x4] sm:$0xf]
      %v559 = vld [vmem:[%s556 + $0x8] sm:$0xf]
      %v560 = vld [vmem:[%s556 + $0xc] sm:$0xf]
      %v561 = vld [vmem:[%s556 + $0x10] sm:$0xf]
      %v562 = vld [vmem:[%s556 + $0x14] sm:$0xf]
      %v563 = vld [vmem:[%s556 + $0x18] sm:$0xf]
      %v564 = vld [vmem:[%s556 + $0x1c] sm:$0xf]
      %v565 = vld [vmem:[%s556 + $0x20] sm:$0xf]
      %v566 = vld [vmem:[%s556 + $0x24] sm:$0xf]
      %v567 = vld [vmem:[%s556 + $0x28] sm:$0xf]
      %v568 = vld [vmem:[%s556 + $0x2c] sm:$0xf]
      %v569 = vld [vmem:[%s556 + $0x30] sm:$0xf]
      %v570 = vld [vmem:[%s556 + $0x34] sm:$0xf]
      %v571 = vld [vmem:[%s556 + $0x38] sm:$0xf]
      %v572 = vld [vmem:[%s556 + $0x3c] sm:$0xf]
      %v581 = vunpack.c.l.b16 %v548
      %v582 = vunpack.c.l.b16 %v549
      %v583 = vunpack.c.l.b16 %v550
      %v584 = vunpack.c.l.b16 %v551
      %v585 = vunpack.c.l.b16 %v552
      %v586 = vunpack.c.l.b16 %v553
      %v587 = vunpack.c.l.b16 %v554
      %v588 = vunpack.c.l.b16 %v555
      %v589 = vpack.c.b16 %v582, %v581
      %v590 = vpack.c.b16 %v584, %v583
      %v591 = vpack.c.b16 %v586, %v585
      %v592 = vpack.c.b16 %v588, %v587
      %v613 = vunpack.c.l.b16 %v557
      %v614 = vunpack.c.l.b16 %v558
      %v615 = vunpack.c.l.b16 %v559
      %v616 = vunpack.c.l.b16 %v560
      %v617 = vunpack.c.l.b16 %v561
      %v618 = vunpack.c.l.b16 %v562
      %v619 = vunpack.c.l.b16 %v563
      %v620 = vunpack.c.l.b16 %v564
      %v621 = vunpack.c.l.b16 %v565
      %v622 = vunpack.c.l.b16 %v566
      %v623 = vunpack.c.l.b16 %v567
      %v624 = vunpack.c.l.b16 %v568
      %v625 = vunpack.c.l.b16 %v569
      %v626 = vunpack.c.l.b16 %v570
      %v627 = vunpack.c.l.b16 %v571
      %v628 = vunpack.c.l.b16 %v572
      %v629 = vpack.c.b16 %v614, %v613
      %v630 = vpack.c.b16 %v616, %v615
      %v631 = vpack.c.b16 %v618, %v617
      %v632 = vpack.c.b16 %v620, %v619
      %v633 = vpack.c.b16 %v622, %v621
      %v634 = vpack.c.b16 %v624, %v623
      %v635 = vpack.c.b16 %v626, %v625
      %v636 = vpack.c.b16 %v628, %v627
      %645 = vmatprep.subr.bf16.mxu0 0
      %646 = vmatpush1.bf16.msra.mxu0 %v636
      %647 = vmatprep.subr.bf16.mxu0 0
      %648 = vmatpush1.bf16.msra.mxu0 %v635
      %649 = vmatprep.subr.bf16.mxu0 0
      %650 = vmatpush1.bf16.msra.mxu0 %v634
      %651 = vmatprep.subr.bf16.mxu0 0
      %652 = vmatpush1.bf16.msra.mxu0 %v633
      %653 = vmatprep.subr.bf16.mxu0 0
      %654 = vmatpush1.bf16.msra.mxu0 %v632
      %655 = vmatprep.subr.bf16.mxu0 0
      %656 = vmatpush1.bf16.msra.mxu0 %v631
      %657 = vmatprep.subr.bf16.mxu0 0
      %658 = vmatpush1.bf16.msra.mxu0 %v630
      %659 = vmatprep.subr.bf16.mxu0 0
      %660 = vmatpush1.bf16.msra.mxu0 %v629
      %661 = vmatprep.subr.bf16.mxu0 0
      %662 = vmatpush2.bf16.msra.mxu0 0
      %663 = vmatprep.subr.bf16.mxu0 0
      %664 = vmatpush2.bf16.msra.mxu0 0
      %665 = vmatprep.subr.bf16.mxu0 0
      %666 = vmatpush2.bf16.msra.mxu0 0
      %667 = vmatprep.subr.bf16.mxu0 0
      %668 = vmatpush2.bf16.msra.mxu0 0
      %669 = vmatprep.subr.bf16.mxu0 0
      %670 = vmatpush2.bf16.msra.mxu0 0
      %671 = vmatprep.subr.bf16.mxu0 0
      %672 = vmatpush2.bf16.msra.mxu0 0
      %673 = vmatprep.subr.bf16.mxu0 0
      %674 = vmatpush2.bf16.msra.mxu0 0
      %675 = vmatprep.subr.bf16.mxu0 0
      %676 = vmatpush2.bf16.msra.mxu0 0
      %677 = vmatprep.mubr.bf16.mxu0 0
      %678 = vmatmul.mubr.bf16.gmra.mxu0 %v589
      %v679 = vpop.f32.mrf.mxu0
      %v680 = vadd.f32 0.0, %v679
      %v681 = vpop.f32.mrf.mxu0
      %v682 = vpop.f32.mrf.mxu0
      %v683 = vadd.f32 0.0, %v682
      %v684 = vpop.f32.mrf.mxu0
      %685 = vmatprep.mubr.bf16.mxu0 0
      %686 = vmatmul.mubr.bf16.gmra.mxu0 %v590
      %v687 = vpop.f32.mrf.mxu0
      %v688 = vadd.f32 0.0, %v687
      %v689 = vpop.f32.mrf.mxu0
      %v690 = vpop.f32.mrf.mxu0
      %v691 = vadd.f32 0.0, %v690
      %v692 = vpop.f32.mrf.mxu0
      %693 = vmatprep.mubr.bf16.mxu0 0
      %694 = vmatmul.mubr.bf16.gmra.mxu0 %v591
      %v695 = vpop.f32.mrf.mxu0
      %v696 = vadd.f32 0.0, %v695
      %v697 = vpop.f32.mrf.mxu0
      %v698 = vpop.f32.mrf.mxu0
      %v699 = vadd.f32 0.0, %v698
      %v700 = vpop.f32.mrf.mxu0
      %701 = vmatprep.mubr.bf16.mxu0 0
      %702 = vmatmul.mubr.bf16.gmra.mxu0 %v592
      %v703 = vpop.f32.mrf.mxu0
      %v704 = vadd.f32 0.0, %v703
      %v705 = vpop.f32.mrf.mxu0
      %v706 = vpop.f32.mrf.mxu0
      %v707 = vadd.f32 0.0, %v706
      %v708 = vpop.f32.mrf.mxu0
      %709 = vdwg.mxu0
      %v710 = vadd.f32 %v518, %v680
      %v711 = vadd.f32 %v521, %v683
      %v712 = vadd.f32 %v526, %v688
      %v713 = vadd.f32 %v529, %v691
      %v714 = vadd.f32 %v534, %v696
      %v715 = vadd.f32 %v537, %v699
      %v716 = vadd.f32 %v542, %v704
      %v717 = vadd.f32 %v545, %v707
      %s718 = scalar_lea.vmem %s234, 40
      %v719 = vld [vmem:[%s718] sm:$0xf]
      %v720 = vld [vmem:[%s718 + $0x4] sm:$0xf]
      %v721 = vld [vmem:[%s718 + $0x8] sm:$0xf]
      %v722 = vld [vmem:[%s718 + $0xc] sm:$0xf]
      %v723 = vld [vmem:[%s718 + $0x10] sm:$0xf]
      %v724 = vld [vmem:[%s718 + $0x14] sm:$0xf]
      %v725 = vld [vmem:[%s718 + $0x18] sm:$0xf]
      %v726 = vld [vmem:[%s718 + $0x1c] sm:$0xf]
      %s727 = scalar_lea.vmem %s1, 192
      %v728 = vld [vmem:[%s727] sm:$0xf]
      %v729 = vld [vmem:[%s727 + $0x4] sm:$0xf]
      %v730 = vld [vmem:[%s727 + $0x8] sm:$0xf]
      %v731 = vld [vmem:[%s727 + $0xc] sm:$0xf]
      %v732 = vld [vmem:[%s727 + $0x10] sm:$0xf]
      %v733 = vld [vmem:[%s727 + $0x14] sm:$0xf]
      %v734 = vld [vmem:[%s727 + $0x18] sm:$0xf]
      %v735 = vld [vmem:[%s727 + $0x1c] sm:$0xf]
      %v736 = vld [vmem:[%s727 + $0x20] sm:$0xf]
      %v737 = vld [vmem:[%s727 + $0x24] sm:$0xf]
      %v738 = vld [vmem:[%s727 + $0x28] sm:$0xf]
      %v739 = vld [vmem:[%s727 + $0x2c] sm:$0xf]
      %v740 = vld [vmem:[%s727 + $0x30] sm:$0xf]
      %v741 = vld [vmem:[%s727 + $0x34] sm:$0xf]
      %v742 = vld [vmem:[%s727 + $0x38] sm:$0xf]
      %v743 = vld [vmem:[%s727 + $0x3c] sm:$0xf]
      %v752 = vunpack.c.l.b16 %v719
      %v753 = vunpack.c.l.b16 %v720
      %v754 = vunpack.c.l.b16 %v721
      %v755 = vunpack.c.l.b16 %v722
      %v756 = vunpack.c.l.b16 %v723
      %v757 = vunpack.c.l.b16 %v724
      %v758 = vunpack.c.l.b16 %v725
      %v759 = vunpack.c.l.b16 %v726
      %v760 = vpack.c.b16 %v753, %v752
      %v761 = vpack.c.b16 %v755, %v754
      %v762 = vpack.c.b16 %v757, %v756
      %v763 = vpack.c.b16 %v759, %v758
      %v784 = vunpack.c.l.b16 %v728
      %v785 = vunpack.c.l.b16 %v729
      %v786 = vunpack.c.l.b16 %v730
      %v787 = vunpack.c.l.b16 %v731
      %v788 = vunpack.c.l.b16 %v732
      %v789 = vunpack.c.l.b16 %v733
      %v790 = vunpack.c.l.b16 %v734
      %v791 = vunpack.c.l.b16 %v735
      %v792 = vunpack.c.l.b16 %v736
      %v793 = vunpack.c.l.b16 %v737
      %v794 = vunpack.c.l.b16 %v738
      %v795 = vunpack.c.l.b16 %v739
      %v796 = vunpack.c.l.b16 %v740
      %v797 = vunpack.c.l.b16 %v741
      %v798 = vunpack.c.l.b16 %v742
      %v799 = vunpack.c.l.b16 %v743
      %v800 = vpack.c.b16 %v785, %v784
      %v801 = vpack.c.b16 %v787, %v786
      %v802 = vpack.c.b16 %v789, %v788
      %v803 = vpack.c.b16 %v791, %v790
      %v804 = vpack.c.b16 %v793, %v792
      %v805 = vpack.c.b16 %v795, %v794
      %v806 = vpack.c.b16 %v797, %v796
      %v807 = vpack.c.b16 %v799, %v798
      %816 = vmatprep.subr.bf16.mxu0 0
      %817 = vmatpush1.bf16.msra.mxu0 %v807
      %818 = vmatprep.subr.bf16.mxu0 0
      %819 = vmatpush1.bf16.msra.mxu0 %v806
      %820 = vmatprep.subr.bf16.mxu0 0
      %821 = vmatpush1.bf16.msra.mxu0 %v805
      %822 = vmatprep.subr.bf16.mxu0 0
      %823 = vmatpush1.bf16.msra.mxu0 %v804
      %824 = vmatprep.subr.bf16.mxu0 0
      %825 = vmatpush1.bf16.msra.mxu0 %v803
      %826 = vmatprep.subr.bf16.mxu0 0
      %827 = vmatpush1.bf16.msra.mxu0 %v802
      %828 = vmatprep.subr.bf16.mxu0 0
      %829 = vmatpush1.bf16.msra.mxu0 %v801
      %830 = vmatprep.subr.bf16.mxu0 0
      %831 = vmatpush1.bf16.msra.mxu0 %v800
      %832 = vmatprep.subr.bf16.mxu0 0
      %833 = vmatpush2.bf16.msra.mxu0 0
      %834 = vmatprep.subr.bf16.mxu0 0
      %835 = vmatpush2.bf16.msra.mxu0 0
      %836 = vmatprep.subr.bf16.mxu0 0
      %837 = vmatpush2.bf16.msra.mxu0 0
      %838 = vmatprep.subr.bf16.mxu0 0
      %839 = vmatpush2.bf16.msra.mxu0 0
      %840 = vmatprep.subr.bf16.mxu0 0
      %841 = vmatpush2.bf16.msra.mxu0 0
      %842 = vmatprep.subr.bf16.mxu0 0
      %843 = vmatpush2.bf16.msra.mxu0 0
      %844 = vmatprep.subr.bf16.mxu0 0
      %845 = vmatpush2.bf16.msra.mxu0 0
      %846 = vmatprep.subr.bf16.mxu0 0
      %847 = vmatpush2.bf16.msra.mxu0 0
      %848 = vmatprep.mubr.bf16.mxu0 0
      %849 = vmatmul.mubr.bf16.gmra.mxu0 %v760
      %v850 = vpop.f32.mrf.mxu0
      %v851 = vadd.f32 0.0, %v850
      %v852 = vpop.f32.mrf.mxu0
      %v853 = vpop.f32.mrf.mxu0
      %v854 = vadd.f32 0.0, %v853
      %v855 = vpop.f32.mrf.mxu0
      %856 = vmatprep.mubr.bf16.mxu0 0
      %857 = vmatmul.mubr.bf16.gmra.mxu0 %v761
      %v858 = vpop.f32.mrf.mxu0
      %v859 = vadd.f32 0.0, %v858
      %v860 = vpop.f32.mrf.mxu0
      %v861 = vpop.f32.mrf.mxu0
      %v862 = vadd.f32 0.0, %v861
      %v863 = vpop.f32.mrf.mxu0
      %864 = vmatprep.mubr.bf16.mxu0 0
      %865 = vmatmul.mubr.bf16.gmra.mxu0 %v762
      %v866 = vpop.f32.mrf.mxu0
      %v867 = vadd.f32 0.0, %v866
      %v868 = vpop.f32.mrf.mxu0
      %v869 = vpop.f32.mrf.mxu0
      %v870 = vadd.f32 0.0, %v869
      %v871 = vpop.f32.mrf.mxu0
      %872 = vmatprep.mubr.bf16.mxu0 0
      %873 = vmatmul.mubr.bf16.gmra.mxu0 %v763
      %v874 = vpop.f32.mrf.mxu0
      %v875 = vadd.f32 0.0, %v874
      %v876 = vpop.f32.mrf.mxu0
      %v877 = vpop.f32.mrf.mxu0
      %v878 = vadd.f32 0.0, %v877
      %v879 = vpop.f32.mrf.mxu0
      %880 = vdwg.mxu0
      %v881 = vadd.f32 %v710, %v851
      %v882 = vadd.f32 %v711, %v854
      %v883 = vadd.f32 %v712, %v859
      %v884 = vadd.f32 %v713, %v862
      %v885 = vadd.f32 %v714, %v867
      %v886 = vadd.f32 %v715, %v870
      %v887 = vadd.f32 %v716, %v875
      %v888 = vadd.f32 %v717, %v878
      %v889 = vld [vmem:[%s718 + $0x4] sm:$0xf]
      %v890 = vld [vmem:[%s718 + $0x8] sm:$0xf]
      %v891 = vld [vmem:[%s718 + $0xc] sm:$0xf]
      %v892 = vld [vmem:[%s718 + $0x10] sm:$0xf]
      %v893 = vld [vmem:[%s718 + $0x14] sm:$0xf]
      %v894 = vld [vmem:[%s718 + $0x18] sm:$0xf]
      %v895 = vld [vmem:[%s718 + $0x1c] sm:$0xf]
      %v896 = vld [vmem:[%s718 + $0x20] sm:$0xf]
      %s897 = scalar_lea.vmem %s1, 256
      %v898 = vld [vmem:[%s897] sm:$0xf]
      %v899 = vld [vmem:[%s897 + $0x4] sm:$0xf]
      %v900 = vld [vmem:[%s897 + $0x8] sm:$0xf]
      %v901 = vld [vmem:[%s897 + $0xc] sm:$0xf]
      %v902 = vld [vmem:[%s897 + $0x10] sm:$0xf]
      %v903 = vld [vmem:[%s897 + $0x14] sm:$0xf]
      %v904 = vld [vmem:[%s897 + $0x18] sm:$0xf]
      %v905 = vld [vmem:[%s897 + $0x1c] sm:$0xf]
      %v906 = vld [vmem:[%s897 + $0x20] sm:$0xf]
      %v907 = vld [vmem:[%s897 + $0x24] sm:$0xf]
      %v908 = vld [vmem:[%s897 + $0x28] sm:$0xf]
      %v909 = vld [vmem:[%s897 + $0x2c] sm:$0xf]
      %v910 = vld [vmem:[%s897 + $0x30] sm:$0xf]
      %v911 = vld [vmem:[%s897 + $0x34] sm:$0xf]
      %v912 = vld [vmem:[%s897 + $0x38] sm:$0xf]
      %v913 = vld [vmem:[%s897 + $0x3c] sm:$0xf]
      %v922 = vunpack.c.l.b16 %v889
      %v923 = vunpack.c.l.b16 %v890
      %v924 = vunpack.c.l.b16 %v891
      %v925 = vunpack.c.l.b16 %v892
      %v926 = vunpack.c.l.b16 %v893
      %v927 = vunpack.c.l.b16 %v894
      %v928 = vunpack.c.l.b16 %v895
      %v929 = vunpack.c.l.b16 %v896
      %v930 = vpack.c.b16 %v923, %v922
      %v931 = vpack.c.b16 %v925, %v924
      %v932 = vpack.c.b16 %v927, %v926
      %v933 = vpack.c.b16 %v929, %v928
      %v954 = vunpack.c.l.b16 %v898
      %v955 = vunpack.c.l.b16 %v899
      %v956 = vunpack.c.l.b16 %v900
      %v957 = vunpack.c.l.b16 %v901
      %v958 = vunpack.c.l.b16 %v902
      %v959 = vunpack.c.l.b16 %v903
      %v960 = vunpack.c.l.b16 %v904
      %v961 = vunpack.c.l.b16 %v905
      %v962 = vunpack.c.l.b16 %v906
      %v963 = vunpack.c.l.b16 %v907
      %v964 = vunpack.c.l.b16 %v908
      %v965 = vunpack.c.l.b16 %v909
      %v966 = vunpack.c.l.b16 %v910
      %v967 = vunpack.c.l.b16 %v911
      %v968 = vunpack.c.l.b16 %v912
      %v969 = vunpack.c.l.b16 %v913
      %v970 = vpack.c.b16 %v955, %v954
      %v971 = vpack.c.b16 %v957, %v956
      %v972 = vpack.c.b16 %v959, %v958
      %v973 = vpack.c.b16 %v961, %v960
      %v974 = vpack.c.b16 %v963, %v962
      %v975 = vpack.c.b16 %v965, %v964
      %v976 = vpack.c.b16 %v967, %v966
      %v977 = vpack.c.b16 %v969, %v968
      %986 = vmatprep.subr.bf16.mxu0 0
      %987 = vmatpush1.bf16.msra.mxu0 %v977
      %988 = vmatprep.subr.bf16.mxu0 0
      %989 = vmatpush1.bf16.msra.mxu0 %v976
      %990 = vmatprep.subr.bf16.mxu0 0
      %991 = vmatpush1.bf16.msra.mxu0 %v975
      %992 = vmatprep.subr.bf16.mxu0 0
      %993 = vmatpush1.bf16.msra.mxu0 %v974
      %994 = vmatprep.subr.bf16.mxu0 0
      %995 = vmatpush1.bf16.msra.mxu0 %v973
      %996 = vmatprep.subr.bf16.mxu0 0
      %997 = vmatpush1.bf16.msra.mxu0 %v972
      %998 = vmatprep.subr.bf16.mxu0 0
      %999 = vmatpush1.bf16.msra.mxu0 %v971
      %1000 = vmatprep.subr.bf16.mxu0 0
      %1001 = vmatpush1.bf16.msra.mxu0 %v970
      %1002 = vmatprep.subr.bf16.mxu0 0
      %1003 = vmatpush2.bf16.msra.mxu0 0
      %1004 = vmatprep.subr.bf16.mxu0 0
      %1005 = vmatpush2.bf16.msra.mxu0 0
      %1006 = vmatprep.subr.bf16.mxu0 0
      %1007 = vmatpush2.bf16.msra.mxu0 0
      %1008 = vmatprep.subr.bf16.mxu0 0
      %1009 = vmatpush2.bf16.msra.mxu0 0
      %1010 = vmatprep.subr.bf16.mxu0 0
      %1011 = vmatpush2.bf16.msra.mxu0 0
      %1012 = vmatprep.subr.bf16.mxu0 0
      %1013 = vmatpush2.bf16.msra.mxu0 0
      %1014 = vmatprep.subr.bf16.mxu0 0
      %1015 = vmatpush2.bf16.msra.mxu0 0
      %1016 = vmatprep.subr.bf16.mxu0 0
      %1017 = vmatpush2.bf16.msra.mxu0 0
      %1018 = vmatprep.mubr.bf16.mxu0 0
      %1019 = vmatmul.mubr.bf16.gmra.mxu0 %v930
      %v1020 = vpop.f32.mrf.mxu0
      %v1021 = vadd.f32 0.0, %v1020
      %v1022 = vpop.f32.mrf.mxu0
      %v1023 = vpop.f32.mrf.mxu0
      %v1024 = vadd.f32 0.0, %v1023
      %v1025 = vpop.f32.mrf.mxu0
      %1026 = vmatprep.mubr.bf16.mxu0 0
      %1027 = vmatmul.mubr.bf16.gmra.mxu0 %v931
      %v1028 = vpop.f32.mrf.mxu0
      %v1029 = vadd.f32 0.0, %v1028
      %v1030 = vpop.f32.mrf.mxu0
      %v1031 = vpop.f32.mrf.mxu0
      %v1032 = vadd.f32 0.0, %v1031
      %v1033 = vpop.f32.mrf.mxu0
      %1034 = vmatprep.mubr.bf16.mxu0 0
      %1035 = vmatmul.mubr.bf16.gmra.mxu0 %v932
      %v1036 = vpop.f32.mrf.mxu0
      %v1037 = vadd.f32 0.0, %v1036
      %v1038 = vpop.f32.mrf.mxu0
      %v1039 = vpop.f32.mrf.mxu0
      %v1040 = vadd.f32 0.0, %v1039
      %v1041 = vpop.f32.mrf.mxu0
      %1042 = vmatprep.mubr.bf16.mxu0 0
      %1043 = vmatmul.mubr.bf16.gmra.mxu0 %v933
      %v1044 = vpop.f32.mrf.mxu0
      %v1045 = vadd.f32 0.0, %v1044
      %v1046 = vpop.f32.mrf.mxu0
      %v1047 = vpop.f32.mrf.mxu0
      %v1048 = vadd.f32 0.0, %v1047
      %v1049 = vpop.f32.mrf.mxu0
      %1050 = vdwg.mxu0
      %v1051 = vadd.f32 %v881, %v1021
      %v1052 = vadd.f32 %v882, %v1024
      %v1053 = vadd.f32 %v883, %v1029
      %v1054 = vadd.f32 %v884, %v1032
      %v1055 = vadd.f32 %v885, %v1037
      %v1056 = vadd.f32 %v886, %v1040
      %v1057 = vadd.f32 %v887, %v1045
      %v1058 = vadd.f32 %v888, %v1048
      %v1059 = vld [vmem:[%s718 + $0x8] sm:$0xf]
      %v1060 = vld [vmem:[%s718 + $0xc] sm:$0xf]
      %v1061 = vld [vmem:[%s718 + $0x10] sm:$0xf]
      %v1062 = vld [vmem:[%s718 + $0x14] sm:$0xf]
      %v1063 = vld [vmem:[%s718 + $0x18] sm:$0xf]
      %v1064 = vld [vmem:[%s718 + $0x1c] sm:$0xf]
      %v1065 = vld [vmem:[%s718 + $0x20] sm:$0xf]
      %v1066 = vld [vmem:[%s718 + $0x24] sm:$0xf]
      %s1067 = scalar_lea.vmem %s1, 320
      %v1068 = vld [vmem:[%s1067] sm:$0xf]
      %v1069 = vld [vmem:[%s1067 + $0x4] sm:$0xf]
      %v1070 = vld [vmem:[%s1067 + $0x8] sm:$0xf]
      %v1071 = vld [vmem:[%s1067 + $0xc] sm:$0xf]
      %v1072 = vld [vmem:[%s1067 + $0x10] sm:$0xf]
      %v1073 = vld [vmem:[%s1067 + $0x14] sm:$0xf]
      %v1074 = vld [vmem:[%s1067 + $0x18] sm:$0xf]
      %v1075 = vld [vmem:[%s1067 + $0x1c] sm:$0xf]
      %v1076 = vld [vmem:[%s1067 + $0x20] sm:$0xf]
      %v1077 = vld [vmem:[%s1067 + $0x24] sm:$0xf]
      %v1078 = vld [vmem:[%s1067 + $0x28] sm:$0xf]
      %v1079 = vld [vmem:[%s1067 + $0x2c] sm:$0xf]
      %v1080 = vld [vmem:[%s1067 + $0x30] sm:$0xf]
      %v1081 = vld [vmem:[%s1067 + $0x34] sm:$0xf]
      %v1082 = vld [vmem:[%s1067 + $0x38] sm:$0xf]
      %v1083 = vld [vmem:[%s1067 + $0x3c] sm:$0xf]
      %v1092 = vunpack.c.l.b16 %v1059
      %v1093 = vunpack.c.l.b16 %v1060
      %v1094 = vunpack.c.l.b16 %v1061
      %v1095 = vunpack.c.l.b16 %v1062
      %v1096 = vunpack.c.l.b16 %v1063
      %v1097 = vunpack.c.l.b16 %v1064
      %v1098 = vunpack.c.l.b16 %v1065
      %v1099 = vunpack.c.l.b16 %v1066
      %v1100 = vpack.c.b16 %v1093, %v1092
      %v1101 = vpack.c.b16 %v1095, %v1094
      %v1102 = vpack.c.b16 %v1097, %v1096
      %v1103 = vpack.c.b16 %v1099, %v1098
      %v1124 = vunpack.c.l.b16 %v1068
      %v1125 = vunpack.c.l.b16 %v1069
      %v1126 = vunpack.c.l.b16 %v1070
      %v1127 = vunpack.c.l.b16 %v1071
      %v1128 = vunpack.c.l.b16 %v1072
      %v1129 = vunpack.c.l.b16 %v1073
      %v1130 = vunpack.c.l.b16 %v1074
      %v1131 = vunpack.c.l.b16 %v1075
      %v1132 = vunpack.c.l.b16 %v1076
      %v1133 = vunpack.c.l.b16 %v1077
      %v1134 = vunpack.c.l.b16 %v1078
      %v1135 = vunpack.c.l.b16 %v1079
      %v1136 = vunpack.c.l.b16 %v1080
      %v1137 = vunpack.c.l.b16 %v1081
      %v1138 = vunpack.c.l.b16 %v1082
      %v1139 = vunpack.c.l.b16 %v1083
      %v1140 = vpack.c.b16 %v1125, %v1124
      %v1141 = vpack.c.b16 %v1127, %v1126
      %v1142 = vpack.c.b16 %v1129, %v1128
      %v1143 = vpack.c.b16 %v1131, %v1130
      %v1144 = vpack.c.b16 %v1133, %v1132
      %v1145 = vpack.c.b16 %v1135, %v1134
      %v1146 = vpack.c.b16 %v1137, %v1136
      %v1147 = vpack.c.b16 %v1139, %v1138
      %1156 = vmatprep.subr.bf16.mxu0 0
      %1157 = vmatpush1.bf16.msra.mxu0 %v1147
      %1158 = vmatprep.subr.bf16.mxu0 0
      %1159 = vmatpush1.bf16.msra.mxu0 %v1146
      %1160 = vmatprep.subr.bf16.mxu0 0
      %1161 = vmatpush1.bf16.msra.mxu0 %v1145
      %1162 = vmatprep.subr.bf16.mxu0 0
      %1163 = vmatpush1.bf16.msra.mxu0 %v1144
      %1164 = vmatprep.subr.bf16.mxu0 0
      %1165 = vmatpush1.bf16.msra.mxu0 %v1143
      %1166 = vmatprep.subr.bf16.mxu0 0
      %1167 = vmatpush1.bf16.msra.mxu0 %v1142
      %1168 = vmatprep.subr.bf16.mxu0 0
      %1169 = vmatpush1.bf16.msra.mxu0 %v1141
      %1170 = vmatprep.subr.bf16.mxu0 0
      %1171 = vmatpush1.bf16.msra.mxu0 %v1140
      %1172 = vmatprep.subr.bf16.mxu0 0
      %1173 = vmatpush2.bf16.msra.mxu0 0
      %1174 = vmatprep.subr.bf16.mxu0 0
      %1175 = vmatpush2.bf16.msra.mxu0 0
      %1176 = vmatprep.subr.bf16.mxu0 0
      %1177 = vmatpush2.bf16.msra.mxu0 0
      %1178 = vmatprep.subr.bf16.mxu0 0
      %1179 = vmatpush2.bf16.msra.mxu0 0
      %1180 = vmatprep.subr.bf16.mxu0 0
      %1181 = vmatpush2.bf16.msra.mxu0 0
      %1182 = vmatprep.subr.bf16.mxu0 0
      %1183 = vmatpush2.bf16.msra.mxu0 0
      %1184 = vmatprep.subr.bf16.mxu0 0
      %1185 = vmatpush2.bf16.msra.mxu0 0
      %1186 = vmatprep.subr.bf16.mxu0 0
      %1187 = vmatpush2.bf16.msra.mxu0 0
      %1188 = vmatprep.mubr.bf16.mxu0 0
      %1189 = vmatmul.mubr.bf16.gmra.mxu0 %v1100
      %v1190 = vpop.f32.mrf.mxu0
      %v1191 = vadd.f32 0.0, %v1190
      %v1192 = vpop.f32.mrf.mxu0
      %v1193 = vpop.f32.mrf.mxu0
      %v1194 = vadd.f32 0.0, %v1193
      %v1195 = vpop.f32.mrf.mxu0
      %1196 = vmatprep.mubr.bf16.mxu0 0
      %1197 = vmatmul.mubr.bf16.gmra.mxu0 %v1101
      %v1198 = vpop.f32.mrf.mxu0
      %v1199 = vadd.f32 0.0, %v1198
      %v1200 = vpop.f32.mrf.mxu0
      %v1201 = vpop.f32.mrf.mxu0
      %v1202 = vadd.f32 0.0, %v1201
      %v1203 = vpop.f32.mrf.mxu0
      %1204 = vmatprep.mubr.bf16.mxu0 0
      %1205 = vmatmul.mubr.bf16.gmra.mxu0 %v1102
      %v1206 = vpop.f32.mrf.mxu0
      %v1207 = vadd.f32 0.0, %v1206
      %v1208 = vpop.f32.mrf.mxu0
      %v1209 = vpop.f32.mrf.mxu0
      %v1210 = vadd.f32 0.0, %v1209
      %v1211 = vpop.f32.mrf.mxu0
      %1212 = vmatprep.mubr.bf16.mxu0 0
      %1213 = vmatmul.mubr.bf16.gmra.mxu0 %v1103
      %v1214 = vpop.f32.mrf.mxu0
      %v1215 = vadd.f32 0.0, %v1214
      %v1216 = vpop.f32.mrf.mxu0
      %v1217 = vpop.f32.mrf.mxu0
      %v1218 = vadd.f32 0.0, %v1217
      %v1219 = vpop.f32.mrf.mxu0
      %1220 = vdwg.mxu0
      %v1221 = vadd.f32 %v1051, %v1191
      %v1222 = vadd.f32 %v1052, %v1194
      %v1223 = vadd.f32 %v1053, %v1199
      %v1224 = vadd.f32 %v1054, %v1202
      %v1225 = vadd.f32 %v1055, %v1207
      %v1226 = vadd.f32 %v1056, %v1210
      %v1227 = vadd.f32 %v1057, %v1215
      %v1228 = vadd.f32 %v1058, %v1218
      %s1229 = scalar_lea.vmem %s234, 80
      %v1230 = vld [vmem:[%s1229] sm:$0xf]
      %v1231 = vld [vmem:[%s1229 + $0x4] sm:$0xf]
      %v1232 = vld [vmem:[%s1229 + $0x8] sm:$0xf]
      %v1233 = vld [vmem:[%s1229 + $0xc] sm:$0xf]
      %v1234 = vld [vmem:[%s1229 + $0x10] sm:$0xf]
      %v1235 = vld [vmem:[%s1229 + $0x14] sm:$0xf]
      %v1236 = vld [vmem:[%s1229 + $0x18] sm:$0xf]
      %v1237 = vld [vmem:[%s1229 + $0x1c] sm:$0xf]
      %s1238 = scalar_lea.vmem %s1, 384
      %v1239 = vld [vmem:[%s1238] sm:$0xf]
      %v1240 = vld [vmem:[%s1238 + $0x4] sm:$0xf]
      %v1241 = vld [vmem:[%s1238 + $0x8] sm:$0xf]
      %v1242 = vld [vmem:[%s1238 + $0xc] sm:$0xf]
      %v1243 = vld [vmem:[%s1238 + $0x10] sm:$0xf]
      %v1244 = vld [vmem:[%s1238 + $0x14] sm:$0xf]
      %v1245 = vld [vmem:[%s1238 + $0x18] sm:$0xf]
      %v1246 = vld [vmem:[%s1238 + $0x1c] sm:$0xf]
      %v1247 = vld [vmem:[%s1238 + $0x20] sm:$0xf]
      %v1248 = vld [vmem:[%s1238 + $0x24] sm:$0xf]
      %v1249 = vld [vmem:[%s1238 + $0x28] sm:$0xf]
      %v1250 = vld [vmem:[%s1238 + $0x2c] sm:$0xf]
      %v1251 = vld [vmem:[%s1238 + $0x30] sm:$0xf]
      %v1252 = vld [vmem:[%s1238 + $0x34] sm:$0xf]
      %v1253 = vld [vmem:[%s1238 + $0x38] sm:$0xf]
      %v1254 = vld [vmem:[%s1238 + $0x3c] sm:$0xf]
      %v1263 = vunpack.c.l.b16 %v1230
      %v1264 = vunpack.c.l.b16 %v1231
      %v1265 = vunpack.c.l.b16 %v1232
      %v1266 = vunpack.c.l.b16 %v1233
      %v1267 = vunpack.c.l.b16 %v1234
      %v1268 = vunpack.c.l.b16 %v1235
      %v1269 = vunpack.c.l.b16 %v1236
      %v1270 = vunpack.c.l.b16 %v1237
      %v1271 = vpack.c.b16 %v1264, %v1263
      %v1272 = vpack.c.b16 %v1266, %v1265
      %v1273 = vpack.c.b16 %v1268, %v1267
      %v1274 = vpack.c.b16 %v1270, %v1269
      %v1295 = vunpack.c.l.b16 %v1239
      %v1296 = vunpack.c.l.b16 %v1240
      %v1297 = vunpack.c.l.b16 %v1241
      %v1298 = vunpack.c.l.b16 %v1242
      %v1299 = vunpack.c.l.b16 %v1243
      %v1300 = vunpack.c.l.b16 %v1244
      %v1301 = vunpack.c.l.b16 %v1245
      %v1302 = vunpack.c.l.b16 %v1246
      %v1303 = vunpack.c.l.b16 %v1247
      %v1304 = vunpack.c.l.b16 %v1248
      %v1305 = vunpack.c.l.b16 %v1249
      %v1306 = vunpack.c.l.b16 %v1250
      %v1307 = vunpack.c.l.b16 %v1251
      %v1308 = vunpack.c.l.b16 %v1252
      %v1309 = vunpack.c.l.b16 %v1253
      %v1310 = vunpack.c.l.b16 %v1254
      %v1311 = vpack.c.b16 %v1296, %v1295
      %v1312 = vpack.c.b16 %v1298, %v1297
      %v1313 = vpack.c.b16 %v1300, %v1299
      %v1314 = vpack.c.b16 %v1302, %v1301
      %v1315 = vpack.c.b16 %v1304, %v1303
      %v1316 = vpack.c.b16 %v1306, %v1305
      %v1317 = vpack.c.b16 %v1308, %v1307
      %v1318 = vpack.c.b16 %v1310, %v1309
      %1327 = vmatprep.subr.bf16.mxu0 0
      %1328 = vmatpush1.bf16.msra.mxu0 %v1318
      %1329 = vmatprep.subr.bf16.mxu0 0
      %1330 = vmatpush1.bf16.msra.mxu0 %v1317
      %1331 = vmatprep.subr.bf16.mxu0 0
      %1332 = vmatpush1.bf16.msra.mxu0 %v1316
      %1333 = vmatprep.subr.bf16.mxu0 0
      %1334 = vmatpush1.bf16.msra.mxu0 %v1315
      %1335 = vmatprep.subr.bf16.mxu0 0
      %1336 = vmatpush1.bf16.msra.mxu0 %v1314
      %1337 = vmatprep.subr.bf16.mxu0 0
      %1338 = vmatpush1.bf16.msra.mxu0 %v1313
      %1339 = vmatprep.subr.bf16.mxu0 0
      %1340 = vmatpush1.bf16.msra.mxu0 %v1312
      %1341 = vmatprep.subr.bf16.mxu0 0
      %1342 = vmatpush1.bf16.msra.mxu0 %v1311
      %1343 = vmatprep.subr.bf16.mxu0 0
      %1344 = vmatpush2.bf16.msra.mxu0 0
      %1345 = vmatprep.subr.bf16.mxu0 0
      %1346 = vmatpush2.bf16.msra.mxu0 0
      %1347 = vmatprep.subr.bf16.mxu0 0
      %1348 = vmatpush2.bf16.msra.mxu0 0
      %1349 = vmatprep.subr.bf16.mxu0 0
      %1350 = vmatpush2.bf16.msra.mxu0 0
      %1351 = vmatprep.subr.bf16.mxu0 0
      %1352 = vmatpush2.bf16.msra.mxu0 0
      %1353 = vmatprep.subr.bf16.mxu0 0
      %1354 = vmatpush2.bf16.msra.mxu0 0
      %1355 = vmatprep.subr.bf16.mxu0 0
      %1356 = vmatpush2.bf16.msra.mxu0 0
      %1357 = vmatprep.subr.bf16.mxu0 0
      %1358 = vmatpush2.bf16.msra.mxu0 0
      %1359 = vmatprep.mubr.bf16.mxu0 0
      %1360 = vmatmul.mubr.bf16.gmra.mxu0 %v1271
      %v1361 = vpop.f32.mrf.mxu0
      %v1362 = vadd.f32 0.0, %v1361
      %v1363 = vpop.f32.mrf.mxu0
      %v1364 = vpop.f32.mrf.mxu0
      %v1365 = vadd.f32 0.0, %v1364
      %v1366 = vpop.f32.mrf.mxu0
      %1367 = vmatprep.mubr.bf16.mxu0 0
      %1368 = vmatmul.mubr.bf16.gmra.mxu0 %v1272
      %v1369 = vpop.f32.mrf.mxu0
      %v1370 = vadd.f32 0.0, %v1369
      %v1371 = vpop.f32.mrf.mxu0
      %v1372 = vpop.f32.mrf.mxu0
      %v1373 = vadd.f32 0.0, %v1372
      %v1374 = vpop.f32.mrf.mxu0
      %1375 = vmatprep.mubr.bf16.mxu0 0
      %1376 = vmatmul.mubr.bf16.gmra.mxu0 %v1273
      %v1377 = vpop.f32.mrf.mxu0
      %v1378 = vadd.f32 0.0, %v1377
      %v1379 = vpop.f32.mrf.mxu0
      %v1380 = vpop.f32.mrf.mxu0
      %v1381 = vadd.f32 0.0, %v1380
      %v1382 = vpop.f32.mrf.mxu0
      %1383 = vmatprep.mubr.bf16.mxu0 0
      %1384 = vmatmul.mubr.bf16.gmra.mxu0 %v1274
      %v1385 = vpop.f32.mrf.mxu0
      %v1386 = vadd.f32 0.0, %v1385
      %v1387 = vpop.f32.mrf.mxu0
      %v1388 = vpop.f32.mrf.mxu0
      %v1389 = vadd.f32 0.0, %v1388
      %v1390 = vpop.f32.mrf.mxu0
      %1391 = vdwg.mxu0
      %v1392 = vadd.f32 %v1221, %v1362
      %v1393 = vadd.f32 %v1222, %v1365
      %v1394 = vadd.f32 %v1223, %v1370
      %v1395 = vadd.f32 %v1224, %v1373
      %v1396 = vadd.f32 %v1225, %v1378
      %v1397 = vadd.f32 %v1226, %v1381
      %v1398 = vadd.f32 %v1227, %v1386
      %v1399 = vadd.f32 %v1228, %v1389
      %v1400 = vld [vmem:[%s1229 + $0x4] sm:$0xf]
      %v1401 = vld [vmem:[%s1229 + $0x8] sm:$0xf]
      %v1402 = vld [vmem:[%s1229 + $0xc] sm:$0xf]
      %v1403 = vld [vmem:[%s1229 + $0x10] sm:$0xf]
      %v1404 = vld [vmem:[%s1229 + $0x14] sm:$0xf]
      %v1405 = vld [vmem:[%s1229 + $0x18] sm:$0xf]
      %v1406 = vld [vmem:[%s1229 + $0x1c] sm:$0xf]
      %v1407 = vld [vmem:[%s1229 + $0x20] sm:$0xf]
      %s1408 = scalar_lea.vmem %s1, 448
      %v1409 = vld [vmem:[%s1408] sm:$0xf]
      %v1410 = vld [vmem:[%s1408 + $0x4] sm:$0xf]
      %v1411 = vld [vmem:[%s1408 + $0x8] sm:$0xf]
      %v1412 = vld [vmem:[%s1408 + $0xc] sm:$0xf]
      %v1413 = vld [vmem:[%s1408 + $0x10] sm:$0xf]
      %v1414 = vld [vmem:[%s1408 + $0x14] sm:$0xf]
      %v1415 = vld [vmem:[%s1408 + $0x18] sm:$0xf]
      %v1416 = vld [vmem:[%s1408 + $0x1c] sm:$0xf]
      %v1417 = vld [vmem:[%s1408 + $0x20] sm:$0xf]
      %v1418 = vld [vmem:[%s1408 + $0x24] sm:$0xf]
      %v1419 = vld [vmem:[%s1408 + $0x28] sm:$0xf]
      %v1420 = vld [vmem:[%s1408 + $0x2c] sm:$0xf]
      %v1421 = vld [vmem:[%s1408 + $0x30] sm:$0xf]
      %v1422 = vld [vmem:[%s1408 + $0x34] sm:$0xf]
      %v1423 = vld [vmem:[%s1408 + $0x38] sm:$0xf]
      %v1424 = vld [vmem:[%s1408 + $0x3c] sm:$0xf]
      %v1433 = vunpack.c.l.b16 %v1400
      %v1434 = vunpack.c.l.b16 %v1401
      %v1435 = vunpack.c.l.b16 %v1402
      %v1436 = vunpack.c.l.b16 %v1403
      %v1437 = vunpack.c.l.b16 %v1404
      %v1438 = vunpack.c.l.b16 %v1405
      %v1439 = vunpack.c.l.b16 %v1406
      %v1440 = vunpack.c.l.b16 %v1407
      %v1441 = vpack.c.b16 %v1434, %v1433
      %v1442 = vpack.c.b16 %v1436, %v1435
      %v1443 = vpack.c.b16 %v1438, %v1437
      %v1444 = vpack.c.b16 %v1440, %v1439
      %v1465 = vunpack.c.l.b16 %v1409
      %v1466 = vunpack.c.l.b16 %v1410
      %v1467 = vunpack.c.l.b16 %v1411
      %v1468 = vunpack.c.l.b16 %v1412
      %v1469 = vunpack.c.l.b16 %v1413
      %v1470 = vunpack.c.l.b16 %v1414
      %v1471 = vunpack.c.l.b16 %v1415
      %v1472 = vunpack.c.l.b16 %v1416
      %v1473 = vunpack.c.l.b16 %v1417
      %v1474 = vunpack.c.l.b16 %v1418
      %v1475 = vunpack.c.l.b16 %v1419
      %v1476 = vunpack.c.l.b16 %v1420
      %v1477 = vunpack.c.l.b16 %v1421
      %v1478 = vunpack.c.l.b16 %v1422
      %v1479 = vunpack.c.l.b16 %v1423
      %v1480 = vunpack.c.l.b16 %v1424
      %v1481 = vpack.c.b16 %v1466, %v1465
      %v1482 = vpack.c.b16 %v1468, %v1467
      %v1483 = vpack.c.b16 %v1470, %v1469
      %v1484 = vpack.c.b16 %v1472, %v1471
      %v1485 = vpack.c.b16 %v1474, %v1473
      %v1486 = vpack.c.b16 %v1476, %v1475
      %v1487 = vpack.c.b16 %v1478, %v1477
      %v1488 = vpack.c.b16 %v1480, %v1479
      %1497 = vmatprep.subr.bf16.mxu0 0
      %1498 = vmatpush1.bf16.msra.mxu0 %v1488
      %1499 = vmatprep.subr.bf16.mxu0 0
      %1500 = vmatpush1.bf16.msra.mxu0 %v1487
      %1501 = vmatprep.subr.bf16.mxu0 0
      %1502 = vmatpush1.bf16.msra.mxu0 %v1486
      %1503 = vmatprep.subr.bf16.mxu0 0
      %1504 = vmatpush1.bf16.msra.mxu0 %v1485
      %1505 = vmatprep.subr.bf16.mxu0 0
      %1506 = vmatpush1.bf16.msra.mxu0 %v1484
      %1507 = vmatprep.subr.bf16.mxu0 0
      %1508 = vmatpush1.bf16.msra.mxu0 %v1483
      %1509 = vmatprep.subr.bf16.mxu0 0
      %1510 = vmatpush1.bf16.msra.mxu0 %v1482
      %1511 = vmatprep.subr.bf16.mxu0 0
      %1512 = vmatpush1.bf16.msra.mxu0 %v1481
      %1513 = vmatprep.subr.bf16.mxu0 0
      %1514 = vmatpush2.bf16.msra.mxu0 0
      %1515 = vmatprep.subr.bf16.mxu0 0
      %1516 = vmatpush2.bf16.msra.mxu0 0
      %1517 = vmatprep.subr.bf16.mxu0 0
      %1518 = vmatpush2.bf16.msra.mxu0 0
      %1519 = vmatprep.subr.bf16.mxu0 0
      %1520 = vmatpush2.bf16.msra.mxu0 0
      %1521 = vmatprep.subr.bf16.mxu0 0
      %1522 = vmatpush2.bf16.msra.mxu0 0
      %1523 = vmatprep.subr.bf16.mxu0 0
      %1524 = vmatpush2.bf16.msra.mxu0 0
      %1525 = vmatprep.subr.bf16.mxu0 0
      %1526 = vmatpush2.bf16.msra.mxu0 0
      %1527 = vmatprep.subr.bf16.mxu0 0
      %1528 = vmatpush2.bf16.msra.mxu0 0
      %1529 = vmatprep.mubr.bf16.mxu0 0
      %1530 = vmatmul.mubr.bf16.gmra.mxu0 %v1441
      %v1531 = vpop.f32.mrf.mxu0
      %v1532 = vadd.f32 0.0, %v1531
      %v1533 = vpop.f32.mrf.mxu0
      %v1534 = vpop.f32.mrf.mxu0
      %v1535 = vadd.f32 0.0, %v1534
      %v1536 = vpop.f32.mrf.mxu0
      %1537 = vmatprep.mubr.bf16.mxu0 0
      %1538 = vmatmul.mubr.bf16.gmra.mxu0 %v1442
      %v1539 = vpop.f32.mrf.mxu0
      %v1540 = vadd.f32 0.0, %v1539
      %v1541 = vpop.f32.mrf.mxu0
      %v1542 = vpop.f32.mrf.mxu0
      %v1543 = vadd.f32 0.0, %v1542
      %v1544 = vpop.f32.mrf.mxu0
      %1545 = vmatprep.mubr.bf16.mxu0 0
      %1546 = vmatmul.mubr.bf16.gmra.mxu0 %v1443
      %v1547 = vpop.f32.mrf.mxu0
      %v1548 = vadd.f32 0.0, %v1547
      %v1549 = vpop.f32.mrf.mxu0
      %v1550 = vpop.f32.mrf.mxu0
      %v1551 = vadd.f32 0.0, %v1550
      %v1552 = vpop.f32.mrf.mxu0
      %1553 = vmatprep.mubr.bf16.mxu0 0
      %1554 = vmatmul.mubr.bf16.gmra.mxu0 %v1444
      %v1555 = vpop.f32.mrf.mxu0
      %v1556 = vadd.f32 0.0, %v1555
      %v1557 = vpop.f32.mrf.mxu0
      %v1558 = vpop.f32.mrf.mxu0
      %v1559 = vadd.f32 0.0, %v1558
      %v1560 = vpop.f32.mrf.mxu0
      %1561 = vdwg.mxu0
      %v1562 = vadd.f32 %v1392, %v1532
      %v1563 = vadd.f32 %v1393, %v1535
      %v1564 = vadd.f32 %v1394, %v1540
      %v1565 = vadd.f32 %v1395, %v1543
      %v1566 = vadd.f32 %v1396, %v1548
      %v1567 = vadd.f32 %v1397, %v1551
      %v1568 = vadd.f32 %v1398, %v1556
      %v1569 = vadd.f32 %v1399, %v1559
      %v1570 = vld [vmem:[%s1229 + $0x8] sm:$0xf]
      %v1571 = vld [vmem:[%s1229 + $0xc] sm:$0xf]
      %v1572 = vld [vmem:[%s1229 + $0x10] sm:$0xf]
      %v1573 = vld [vmem:[%s1229 + $0x14] sm:$0xf]
      %v1574 = vld [vmem:[%s1229 + $0x18] sm:$0xf]
      %v1575 = vld [vmem:[%s1229 + $0x1c] sm:$0xf]
      %v1576 = vld [vmem:[%s1229 + $0x20] sm:$0xf]
      %v1577 = vld [vmem:[%s1229 + $0x24] sm:$0xf]
      %s1578 = scalar_lea.vmem %s1, 512
      %v1579 = vld [vmem:[%s1578] sm:$0xf]
      %v1580 = vld [vmem:[%s1578 + $0x4] sm:$0xf]
      %v1581 = vld [vmem:[%s1578 + $0x8] sm:$0xf]
      %v1582 = vld [vmem:[%s1578 + $0xc] sm:$0xf]
      %v1583 = vld [vmem:[%s1578 + $0x10] sm:$0xf]
      %v1584 = vld [vmem:[%s1578 + $0x14] sm:$0xf]
      %v1585 = vld [vmem:[%s1578 + $0x18] sm:$0xf]
      %v1586 = vld [vmem:[%s1578 + $0x1c] sm:$0xf]
      %v1587 = vld [vmem:[%s1578 + $0x20] sm:$0xf]
      %v1588 = vld [vmem:[%s1578 + $0x24] sm:$0xf]
      %v1589 = vld [vmem:[%s1578 + $0x28] sm:$0xf]
      %v1590 = vld [vmem:[%s1578 + $0x2c] sm:$0xf]
      %v1591 = vld [vmem:[%s1578 + $0x30] sm:$0xf]
      %v1592 = vld [vmem:[%s1578 + $0x34] sm:$0xf]
      %v1593 = vld [vmem:[%s1578 + $0x38] sm:$0xf]
      %v1594 = vld [vmem:[%s1578 + $0x3c] sm:$0xf]
      %v1603 = vunpack.c.l.b16 %v1570
      %v1604 = vunpack.c.l.b16 %v1571
      %v1605 = vunpack.c.l.b16 %v1572
      %v1606 = vunpack.c.l.b16 %v1573
      %v1607 = vunpack.c.l.b16 %v1574
      %v1608 = vunpack.c.l.b16 %v1575
      %v1609 = vunpack.c.l.b16 %v1576
      %v1610 = vunpack.c.l.b16 %v1577
      %v1611 = vpack.c.b16 %v1604, %v1603
      %v1612 = vpack.c.b16 %v1606, %v1605
      %v1613 = vpack.c.b16 %v1608, %v1607
      %v1614 = vpack.c.b16 %v1610, %v1609
      %v1635 = vunpack.c.l.b16 %v1579
      %v1636 = vunpack.c.l.b16 %v1580
      %v1637 = vunpack.c.l.b16 %v1581
      %v1638 = vunpack.c.l.b16 %v1582
      %v1639 = vunpack.c.l.b16 %v1583
      %v1640 = vunpack.c.l.b16 %v1584
      %v1641 = vunpack.c.l.b16 %v1585
      %v1642 = vunpack.c.l.b16 %v1586
      %v1643 = vunpack.c.l.b16 %v1587
      %v1644 = vunpack.c.l.b16 %v1588
      %v1645 = vunpack.c.l.b16 %v1589
      %v1646 = vunpack.c.l.b16 %v1590
      %v1647 = vunpack.c.l.b16 %v1591
      %v1648 = vunpack.c.l.b16 %v1592
      %v1649 = vunpack.c.l.b16 %v1593
      %v1650 = vunpack.c.l.b16 %v1594
      %v1651 = vpack.c.b16 %v1636, %v1635
      %v1652 = vpack.c.b16 %v1638, %v1637
      %v1653 = vpack.c.b16 %v1640, %v1639
      %v1654 = vpack.c.b16 %v1642, %v1641
      %v1655 = vpack.c.b16 %v1644, %v1643
      %v1656 = vpack.c.b16 %v1646, %v1645
      %v1657 = vpack.c.b16 %v1648, %v1647
      %v1658 = vpack.c.b16 %v1650, %v1649
      %1667 = vmatprep.subr.bf16.mxu0 0
      %1668 = vmatpush1.bf16.msra.mxu0 %v1658
      %1669 = vmatprep.subr.bf16.mxu0 0
      %1670 = vmatpush1.bf16.msra.mxu0 %v1657
      %1671 = vmatprep.subr.bf16.mxu0 0
      %1672 = vmatpush1.bf16.msra.mxu0 %v1656
      %1673 = vmatprep.subr.bf16.mxu0 0
      %1674 = vmatpush1.bf16.msra.mxu0 %v1655
      %1675 = vmatprep.subr.bf16.mxu0 0
      %1676 = vmatpush1.bf16.msra.mxu0 %v1654
      %1677 = vmatprep.subr.bf16.mxu0 0
      %1678 = vmatpush1.bf16.msra.mxu0 %v1653
      %1679 = vmatprep.subr.bf16.mxu0 0
      %1680 = vmatpush1.bf16.msra.mxu0 %v1652
      %1681 = vmatprep.subr.bf16.mxu0 0
      %1682 = vmatpush1.bf16.msra.mxu0 %v1651
      %1683 = vmatprep.subr.bf16.mxu0 0
      %1684 = vmatpush2.bf16.msra.mxu0 0
      %1685 = vmatprep.subr.bf16.mxu0 0
      %1686 = vmatpush2.bf16.msra.mxu0 0
      %1687 = vmatprep.subr.bf16.mxu0 0
      %1688 = vmatpush2.bf16.msra.mxu0 0
      %1689 = vmatprep.subr.bf16.mxu0 0
      %1690 = vmatpush2.bf16.msra.mxu0 0
      %1691 = vmatprep.subr.bf16.mxu0 0
      %1692 = vmatpush2.bf16.msra.mxu0 0
      %1693 = vmatprep.subr.bf16.mxu0 0
      %1694 = vmatpush2.bf16.msra.mxu0 0
      %1695 = vmatprep.subr.bf16.mxu0 0
      %1696 = vmatpush2.bf16.msra.mxu0 0
      %1697 = vmatprep.subr.bf16.mxu0 0
      %1698 = vmatpush2.bf16.msra.mxu0 0
      %1699 = vmatprep.mubr.bf16.mxu0 0
      %1700 = vmatmul.mubr.bf16.gmra.mxu0 %v1611
      %v1701 = vpop.f32.mrf.mxu0
      %v1702 = vadd.f32 0.0, %v1701
      %v1703 = vpop.f32.mrf.mxu0
      %v1704 = vpop.f32.mrf.mxu0
      %v1705 = vadd.f32 0.0, %v1704
      %v1706 = vpop.f32.mrf.mxu0
      %1707 = vmatprep.mubr.bf16.mxu0 0
      %1708 = vmatmul.mubr.bf16.gmra.mxu0 %v1612
      %v1709 = vpop.f32.mrf.mxu0
      %v1710 = vadd.f32 0.0, %v1709
      %v1711 = vpop.f32.mrf.mxu0
      %v1712 = vpop.f32.mrf.mxu0
      %v1713 = vadd.f32 0.0, %v1712
      %v1714 = vpop.f32.mrf.mxu0
      %1715 = vmatprep.mubr.bf16.mxu0 0
      %1716 = vmatmul.mubr.bf16.gmra.mxu0 %v1613
      %v1717 = vpop.f32.mrf.mxu0
      %v1718 = vadd.f32 0.0, %v1717
      %v1719 = vpop.f32.mrf.mxu0
      %v1720 = vpop.f32.mrf.mxu0
      %v1721 = vadd.f32 0.0, %v1720
      %v1722 = vpop.f32.mrf.mxu0
      %1723 = vmatprep.mubr.bf16.mxu0 0
      %1724 = vmatmul.mubr.bf16.gmra.mxu0 %v1614
      %v1725 = vpop.f32.mrf.mxu0
      %v1726 = vadd.f32 0.0, %v1725
      %v1727 = vpop.f32.mrf.mxu0
      %v1728 = vpop.f32.mrf.mxu0
      %v1729 = vadd.f32 0.0, %v1728
      %v1730 = vpop.f32.mrf.mxu0
      %1731 = vdwg.mxu0
      %v1732 = vadd.f32 %v1562, %v1702
      %v1733 = vadd.f32 %v1563, %v1705
      %v1734 = vadd.f32 %v1564, %v1710
      %v1735 = vadd.f32 %v1565, %v1713
      %v1736 = vadd.f32 %v1566, %v1718
      %v1737 = vadd.f32 %v1567, %v1721
      %v1738 = vadd.f32 %v1568, %v1726
      %v1739 = vadd.f32 %v1569, %v1729
      %v1740 = vld [vmem:[%s2] sm:$0x1]
      %v1742 = vlaneseq
      %v1743 = vshrl.u32 %v1742, 7
      %v1744 = vsub.s32 0, %v1743
      %v1745 = vrot.slane %v1740, %v1744
      %v1747 = vmul.f32 %v1732, %v1745
      %v1748 = vmul.f32 %v1733, %v1745
      %v1749 = vmul.f32 %v1734, %v1745
      %v1750 = vmul.f32 %v1735, %v1745
      %v1751 = vmul.f32 %v1736, %v1745
      %v1752 = vmul.f32 %v1737, %v1745
      %v1753 = vmul.f32 %v1738, %v1745
      %v1754 = vmul.f32 %v1739, %v1745
      %v1755 = vld [vmem:[%s3] sm:$0x1]
      %v1757 = vlaneseq
      %v1758 = vshrl.u32 %v1757, 7
      %v1759 = vsub.s32 0, %v1758
      %v1760 = vrot.slane %v1755, %v1759
      %v1762 = vadd.f32 %v1747, %v1760
      %v1763 = vadd.f32 %v1748, %v1760
      %v1764 = vadd.f32 %v1749, %v1760
      %v1765 = vadd.f32 %v1750, %v1760
      %v1766 = vadd.f32 %v1751, %v1760
      %v1767 = vadd.f32 %v1752, %v1760
      %v1768 = vadd.f32 %v1753, %v1760
      %v1769 = vadd.f32 %v1754, %v1760
      %v1770 = vld [vmem:[%s239] sm:$0xf]
      %v1771 = vld [vmem:[%s239 + $0x4] sm:$0xf]
      %v1772 = vld [vmem:[%s239 + $0x8] sm:$0xf]
      %v1773 = vld [vmem:[%s239 + $0xc] sm:$0xf]
      %v1774 = vld [vmem:[%s239 + $0x10] sm:$0xf]
      %v1775 = vld [vmem:[%s239 + $0x14] sm:$0xf]
      %v1776 = vld [vmem:[%s239 + $0x18] sm:$0xf]
      %v1777 = vld [vmem:[%s239 + $0x1c] sm:$0xf]
      %v1778 = vunpack.c.l.bf16 %v1770
      %v1779 = vunpack.c.l.bf16 %v1771
      %v1780 = vunpack.c.l.bf16 %v1772
      %v1781 = vunpack.c.l.bf16 %v1773
      %v1782 = vunpack.c.l.bf16 %v1774
      %v1783 = vunpack.c.l.bf16 %v1775
      %v1784 = vunpack.c.l.bf16 %v1776
      %v1785 = vunpack.c.l.bf16 %v1777
      %v1786 = vadd.f32 %v1762, %v1778
      %v1787 = vadd.f32 %v1763, %v1779
      %v1788 = vadd.f32 %v1764, %v1780
      %v1789 = vadd.f32 %v1765, %v1781
      %v1790 = vadd.f32 %v1766, %v1782
      %v1791 = vadd.f32 %v1767, %v1783
      %v1792 = vadd.f32 %v1768, %v1784
      %v1793 = vadd.f32 %v1769, %v1785
      %v1794 = vmax.f32 %v1786, 0.0
      %v1795 = vmax.f32 %v1787, 0.0
      %v1796 = vmax.f32 %v1788, 0.0
      %v1797 = vmax.f32 %v1789, 0.0
      %v1798 = vmax.f32 %v1790, 0.0
      %v1799 = vmax.f32 %v1791, 0.0
      %v1800 = vmax.f32 %v1792, 0.0
      %v1801 = vmax.f32 %v1793, 0.0
      %v1802 = vpack.c.bf16 %v1795, %v1794
      %v1803 = vpack.c.bf16 %v1797, %v1796
      %v1804 = vpack.c.bf16 %v1799, %v1798
      %v1805 = vpack.c.bf16 %v1801, %v1800
      %v1810 = vunpack.c.l.b16 %v1802
      %v1811 = vunpack.c.h.b16 %v1802
      %v1812 = vunpack.c.l.b16 %v1803
      %v1813 = vunpack.c.h.b16 %v1803
      %v1814 = vunpack.c.l.b16 %v1804
      %v1815 = vunpack.c.h.b16 %v1804
      %v1816 = vunpack.c.l.b16 %v1805
      %v1817 = vunpack.c.h.b16 %v1805
      %v1818 = vpack.c.b16 %v1810, %v1810
      %v1819 = vpack.c.b16 %v1811, %v1811
      %v1820 = vpack.c.b16 %v1812, %v1812
      %v1821 = vpack.c.b16 %v1813, %v1813
      %v1822 = vpack.c.b16 %v1814, %v1814
      %v1823 = vpack.c.b16 %v1815, %v1815
      %v1824 = vpack.c.b16 %v1816, %v1816
      %v1825 = vpack.c.b16 %v1817, %v1817
      %1834 = vst [vmem:[%s244] sm:$0xf] %v1818
      %1835 = vst [vmem:[%s244 + $0x4] sm:$0xf] %v1819
      %1836 = vst [vmem:[%s244 + $0x8] sm:$0xf] %v1820
      %1837 = vst [vmem:[%s244 + $0xc] sm:$0xf] %v1821
      %1838 = vst [vmem:[%s244 + $0x10] sm:$0xf] %v1822
      %1839 = vst [vmem:[%s244 + $0x14] sm:$0xf] %v1823
      %1840 = vst [vmem:[%s244 + $0x18] sm:$0xf] %v1824
      %1841 = vst [vmem:[%s244 + $0x1c] sm:$0xf] %v1825
      %p1842 = scmp.lt.s32.totalorder %s16, 1
      %s1843 = scalar_select %p1842, %s16, 1
      %s1844 = smul.addr %s1843, 8
      %s1845 = smul.addr %s1844, 4
      %s1846 = scalar_lea.vmem %s5, %s1845
      // Predicated region
      $region41: #{_lambda_.16} parent=39 // pred_check
        %p1847 = pneg %p149
      $region42: #{_lambda_.16} parent=39 // pred_check_branch
        %1849 = sbr.rel (%p1847) target = $region44
      $region43: #{_lambda_.16} parent=39 // pred_region
        _
      $region44: #{_lambda_.16} parent=39 // pred_fallthru
        _
    $region40: #{_lambda_.16} parent=5 // pred_fallthru
      _
    %p1850 = scmp.le.s32.totalorder 2, %s11
    // Predicated region
    $region45: #{_lambda_.16} parent=5 // pred_check
      %p1851 = pneg %p1850
    $region46: #{_lambda_.16} parent=5 // pred_check_branch
      %1853 = sbr.rel (%p1851) target = $region48
    $region47: #{_lambda_.16} parent=5 // pred_region
      %s1854 = ssub.s32 %s11, 2
      // Predicated region
      $region49: #{_lambda_.16} parent=47 // pred_check
        %p1855 = pneg %p155
      $region50: #{_lambda_.16} parent=47 // pred_check_branch
        %1857 = sbr.rel (%p1855) target = $region52
      $region51: #{_lambda_.16} parent=47 // pred_region
        %p1858 = scmp.lt.s32.totalorder %s17, 1
        %s1859 = scalar_select %p1858, %s17, 1
        %s1860 = smul.addr %s1859, 8
        %s1861 = smul.addr %s1860, 4
        %s1862 = scalar_lea.vmem %s5, %s1861
      $region52: #{_lambda_.16} parent=47 // pred_fallthru
        _
    $region48: #{_lambda_.16} parent=5 // pred_fallthru
      _
  $region6: #{_lambda_.16} parent=0 // loop_footer
    %s15 = sadd.s32 1, %s11
  $region7: #{_lambda_.16} parent=0 // loop_footer_branch
    %10 = sbr.rel target = $region3
  $region8: #{_lambda_.16} parent=0 // loop_exit
    _

// kernel: _lambda_.24
$region0: #{_lambda_.24}
  #allocation0 [shape = 'u32[]', space=smem, size = 0x4, offset = 0x4, fixed_abs, tag = 'smem constant byte address 0x4 - core index']
  #allocation1 [shape = 'u32[144,128]{1,0:T(1,128)}', space=vmem, size = 0x12000, scoped, tag = 'internal scratch']
  %s0 = inlined_call_operand.vmem [shape: bf16[2,64,128], index: 0, kind: input, shape index: {}]
  %s1 = inlined_call_operand.vmem [shape: bf16[2,64,128], index: 1, kind: input, shape index: {}]
  %s2 = inlined_call_operand.vmem [shape: bf16[2,64,64], index: 2, kind: input, shape index: {}]
  %s3 = inlined_call_operand.vmem [shape: bf16[2,64,128], index: 3, kind: input, shape index: {}]
  %s4 = inlined_call_operand.vmem [shape: bf16[128,128], index: 4, kind: input, shape index: {}]
  %s5 = inlined_call_operand.vmem [shape: bf16[128,128], index: 5, kind: input, shape index: {}]
  %s6 = inlined_call_operand.vmem [shape: bf16[64,128], index: 6, kind: input, shape index: {}]
  %s7 = inlined_call_operand.vmem [shape: bf16[128,128], index: 7, kind: input, shape index: {}]
  %s8 = inlined_call_operand.vmem [shape: f32[1,128], index: 8, kind: input, shape index: {}]
  %s9 = inlined_call_operand.vmem [shape: f32[1,128], index: 9, kind: input, shape index: {}]
  %s10 = inlined_call_operand.vmem [shape: bf16[2,64,128], index: 10, kind: output, shape index: {}]
  %s11 = sld [smem:[#allocation0]]
  $region73: #{_lambda_.24} parent=0
    _
  %s13 = ssub.s32 1, %s11
  %s14 = scalar_select 0, %s13, %s11
  loop: start=0, step=1, limit=4
  $region2: #{_lambda_.24} parent=0 // loop_pre_header
    _
  $region3: #{_lambda_.24} parent=0 // loop_header
    %s16 = sphi 0, %s20
    %p17 = scmp.ge.s32.totalorder %s16, 4
    %s26 = sphi 0, %s28
    %s29 = sphi 0, %s26
    %s30 = sphi 0, %s29
    %s46 = sphi 0, %s30
    %s52 = sphi 0, %s54
    %s55 = sphi 0, %s52
    %s56 = sphi 0, %s55
    %s72 = sphi 0, %s56
    %s78 = sphi 0, %s80
    %s81 = sphi 0, %s78
    %s82 = sphi 0, %s81
    %s98 = sphi 0, %s82
    %s104 = sphi 0, %s106
    %s107 = sphi 0, %s104
    %s108 = sphi 0, %s107
    %s124 = sphi 0, %s108
    %s128 = sphi 0, %s128
    %s130 = sphi 0, %s128
    %s131 = sphi 0, %s130
    %s145 = sphi 0, %s131
    %s149 = sphi 0, %s149
    %s151 = sphi 0, %s149
    %s152 = sphi 0, %s151
    %s166 = sphi 0, %s152
    %s170 = sphi 0, %s170
    %s172 = sphi 0, %s170
    %s173 = sphi 0, %s172
    %s187 = sphi 0, %s173
    %s191 = sphi 0, %s191
    %s193 = sphi 0, %s191
    %s194 = sphi 0, %s193
    %s208 = sphi 0, %s194
    %s212 = sphi 0, %s212
    %s214 = sphi 0, %s212
    %s215 = sphi 0, %s214
    %s229 = sphi 0, %s215
    %s233 = sphi 0, %s233
    %s235 = sphi 0, %s233
    %s236 = sphi 0, %s235
    %s250 = sphi 0, %s236
    %s256 = sphi 0, %s258
    %s259 = sphi 0, %s256
    %s260 = sphi 0, %s259
    %s276 = sphi 0, %s260
  $region4: #{_lambda_.24} parent=0 // loop_header_branch
    %19 = sbr.rel (%p17) target = $region8
  $region5: #{_lambda_.24} parent=0 // loop_body
    %s21 = ssub.s32 %s16, 1
    %s22 = ssub.s32 %s16, 2
    %s23 = sadd.s32 %s16, 1
    %s24 = ssub.s32 %s16, %s23
    %p25 = scmp.eq.s32.totalorder %s24, 0
    %s27 = sadd.s32 %s26, 1
    %s28 = scalar_select %p25, %s26, %s27
    %p31 = pneg %p25
    %p32 = scmp.eq.s32.totalorder %s16, 1
    %p33 = por %p31, %p32
    %p34 = scmp.ne.s32.totalorder %s26, %s29
    %p35 = scmp.eq.s32.totalorder %s16, 0
    %p36 = por %p34, %p35
    %p37 = scmp.ne.s32.totalorder %s26, %s29
    %p38 = scmp.eq.s32.totalorder %s21, 1
    %p39 = por %p37, %p38
    %p40 = scmp.ne.s32.totalorder %s29, %s30
    %p41 = scmp.eq.s32.totalorder %s21, 0
    %p42 = por %p40, %p41
    %p43 = scmp.ne.s32.totalorder %s29, %s30
    %p44 = scmp.eq.s32.totalorder %s22, 1
    %p45 = por %p43, %p44
    %p47 = scmp.ne.s32.totalorder %s30, %s46
    %p48 = scmp.eq.s32.totalorder %s22, 0
    %p49 = por %p47, %p48
    %s50 = ssub.s32 %s16, %s23
    %p51 = scmp.eq.s32.totalorder %s50, 0
    %s53 = sadd.s32 %s52, 1
    %s54 = scalar_select %p51, %s52, %s53
    %p57 = pneg %p51
    %p58 = scmp.eq.s32.totalorder %s16, 1
    %p59 = por %p57, %p58
    %p60 = scmp.ne.s32.totalorder %s52, %s55
    %p61 = scmp.eq.s32.totalorder %s16, 0
    %p62 = por %p60, %p61
    %p63 = scmp.ne.s32.totalorder %s52, %s55
    %p64 = scmp.eq.s32.totalorder %s21, 1
    %p65 = por %p63, %p64
    %p66 = scmp.ne.s32.totalorder %s55, %s56
    %p67 = scmp.eq.s32.totalorder %s21, 0
    %p68 = por %p66, %p67
    %p69 = scmp.ne.s32.totalorder %s55, %s56
    %p70 = scmp.eq.s32.totalorder %s22, 1
    %p71 = por %p69, %p70
    %p73 = scmp.ne.s32.totalorder %s56, %s72
    %p74 = scmp.eq.s32.totalorder %s22, 0
    %p75 = por %p73, %p74
    %s76 = ssub.s32 %s16, %s23
    %p77 = scmp.eq.s32.totalorder %s76, 0
    %s79 = sadd.s32 %s78, 1
    %s80 = scalar_select %p77, %s78, %s79
    %p83 = pneg %p77
    %p84 = scmp.eq.s32.totalorder %s16, 1
    %p85 = por %p83, %p84
    %p86 = scmp.ne.s32.totalorder %s78, %s81
    %p87 = scmp.eq.s32.totalorder %s16, 0
    %p88 = por %p86, %p87
    %p89 = scmp.ne.s32.totalorder %s78, %s81
    %p90 = scmp.eq.s32.totalorder %s21, 1
    %p91 = por %p89, %p90
    %p92 = scmp.ne.s32.totalorder %s81, %s82
    %p93 = scmp.eq.s32.totalorder %s21, 0
    %p94 = por %p92, %p93
    %p95 = scmp.ne.s32.totalorder %s81, %s82
    %p96 = scmp.eq.s32.totalorder %s22, 1
    %p97 = por %p95, %p96
    %p99 = scmp.ne.s32.totalorder %s82, %s98
    %p100 = scmp.eq.s32.totalorder %s22, 0
    %p101 = por %p99, %p100
    %s102 = ssub.s32 %s16, %s23
    %p103 = scmp.eq.s32.totalorder %s102, 0
    %s105 = sadd.s32 %s104, 1
    %s106 = scalar_select %p103, %s104, %s105
    %p109 = pneg %p103
    %p110 = scmp.eq.s32.totalorder %s16, 1
    %p111 = por %p109, %p110
    %p112 = scmp.ne.s32.totalorder %s104, %s107
    %p113 = scmp.eq.s32.totalorder %s16, 0
    %p114 = por %p112, %p113
    %p115 = scmp.ne.s32.totalorder %s104, %s107
    %p116 = scmp.eq.s32.totalorder %s21, 1
    %p117 = por %p115, %p116
    %p118 = scmp.ne.s32.totalorder %s107, %s108
    %p119 = scmp.eq.s32.totalorder %s21, 0
    %p120 = por %p118, %p119
    %p121 = scmp.ne.s32.totalorder %s107, %s108
    %p122 = scmp.eq.s32.totalorder %s22, 1
    %p123 = por %p121, %p122
    %p125 = scmp.ne.s32.totalorder %s108, %s124
    %p126 = scmp.eq.s32.totalorder %s22, 0
    %p127 = por %p125, %p126
    %s129 = sadd.s32 %s128, 1
    %p132 = scmp.eq.s32.totalorder %s16, 1
    %p133 = scmp.ne.s32.totalorder %s128, %s130
    %p134 = scmp.eq.s32.totalorder %s16, 0
    %p135 = por %p133, %p134
    %p136 = scmp.ne.s32.totalorder %s128, %s130
    %p137 = scmp.eq.s32.totalorder %s21, 1
    %p138 = por %p136, %p137
    %p139 = scmp.ne.s32.totalorder %s130, %s131
    %p140 = scmp.eq.s32.totalorder %s21, 0
    %p141 = por %p139, %p140
    %p142 = scmp.ne.s32.totalorder %s130, %s131
    %p143 = scmp.eq.s32.totalorder %s22, 1
    %p144 = por %p142, %p143
    %p146 = scmp.ne.s32.totalorder %s131, %s145
    %p147 = scmp.eq.s32.totalorder %s22, 0
    %p148 = por %p146, %p147
    %s150 = sadd.s32 %s149, 1
    %p153 = scmp.eq.s32.totalorder %s16, 1
    %p154 = scmp.ne.s32.totalorder %s149, %s151
    %p155 = scmp.eq.s32.totalorder %s16, 0
    %p156 = por %p154, %p155
    %p157 = scmp.ne.s32.totalorder %s149, %s151
    %p158 = scmp.eq.s32.totalorder %s21, 1
    %p159 = por %p157, %p158
    %p160 = scmp.ne.s32.totalorder %s151, %s152
    %p161 = scmp.eq.s32.totalorder %s21, 0
    %p162 = por %p160, %p161
    %p163 = scmp.ne.s32.totalorder %s151, %s152
    %p164 = scmp.eq.s32.totalorder %s22, 1
    %p165 = por %p163, %p164
    %p167 = scmp.ne.s32.totalorder %s152, %s166
    %p168 = scmp.eq.s32.totalorder %s22, 0
    %p169 = por %p167, %p168
    %s171 = sadd.s32 %s170, 1
    %p174 = scmp.eq.s32.totalorder %s16, 1
    %p175 = scmp.ne.s32.totalorder %s170, %s172
    %p176 = scmp.eq.s32.totalorder %s16, 0
    %p177 = por %p175, %p176
    %p178 = scmp.ne.s32.totalorder %s170, %s172
    %p179 = scmp.eq.s32.totalorder %s21, 1
    %p180 = por %p178, %p179
    %p181 = scmp.ne.s32.totalorder %s172, %s173
    %p182 = scmp.eq.s32.totalorder %s21, 0
    %p183 = por %p181, %p182
    %p184 = scmp.ne.s32.totalorder %s172, %s173
    %p185 = scmp.eq.s32.totalorder %s22, 1
    %p186 = por %p184, %p185
    %p188 = scmp.ne.s32.totalorder %s173, %s187
    %p189 = scmp.eq.s32.totalorder %s22, 0
    %p190 = por %p188, %p189
    %s192 = sadd.s32 %s191, 1
    %p195 = scmp.eq.s32.totalorder %s16, 1
    %p196 = scmp.ne.s32.totalorder %s191, %s193
    %p197 = scmp.eq.s32.totalorder %s16, 0
    %p198 = por %p196, %p197
    %p199 = scmp.ne.s32.totalorder %s191, %s193
    %p200 = scmp.eq.s32.totalorder %s21, 1
    %p201 = por %p199, %p200
    %p202 = scmp.ne.s32.totalorder %s193, %s194
    %p203 = scmp.eq.s32.totalorder %s21, 0
    %p204 = por %p202, %p203
    %p205 = scmp.ne.s32.totalorder %s193, %s194
    %p206 = scmp.eq.s32.totalorder %s22, 1
    %p207 = por %p205, %p206
    %p209 = scmp.ne.s32.totalorder %s194, %s208
    %p210 = scmp.eq.s32.totalorder %s22, 0
    %p211 = por %p209, %p210
    %s213 = sadd.s32 %s212, 1
    %p216 = scmp.eq.s32.totalorder %s16, 1
    %p217 = scmp.ne.s32.totalorder %s212, %s214
    %p218 = scmp.eq.s32.totalorder %s16, 0
    %p219 = por %p217, %p218
    %p220 = scmp.ne.s32.totalorder %s212, %s214
    %p221 = scmp.eq.s32.totalorder %s21, 1
    %p222 = por %p220, %p221
    %p223 = scmp.ne.s32.totalorder %s214, %s215
    %p224 = scmp.eq.s32.totalorder %s21, 0
    %p225 = por %p223, %p224
    %p226 = scmp.ne.s32.totalorder %s214, %s215
    %p227 = scmp.eq.s32.totalorder %s22, 1
    %p228 = por %p226, %p227
    %p230 = scmp.ne.s32.totalorder %s215, %s229
    %p231 = scmp.eq.s32.totalorder %s22, 0
    %p232 = por %p230, %p231
    %s234 = sadd.s32 %s233, 1
    %p237 = scmp.eq.s32.totalorder %s16, 1
    %p238 = scmp.ne.s32.totalorder %s233, %s235
    %p239 = scmp.eq.s32.totalorder %s16, 0
    %p240 = por %p238, %p239
    %p241 = scmp.ne.s32.totalorder %s233, %s235
    %p242 = scmp.eq.s32.totalorder %s21, 1
    %p243 = por %p241, %p242
    %p244 = scmp.ne.s32.totalorder %s235, %s236
    %p245 = scmp.eq.s32.totalorder %s21, 0
    %p246 = por %p244, %p245
    %p247 = scmp.ne.s32.totalorder %s235, %s236
    %p248 = scmp.eq.s32.totalorder %s22, 1
    %p249 = por %p247, %p248
    %p251 = scmp.ne.s32.totalorder %s236, %s250
    %p252 = scmp.eq.s32.totalorder %s22, 0
    %p253 = por %p251, %p252
    %s254 = ssub.s32 %s16, %s23
    %p255 = scmp.eq.s32.totalorder %s254, 0
    %s257 = sadd.s32 %s256, 1
    %s258 = scalar_select %p255, %s256, %s257
    %p261 = pneg %p255
    %p262 = scmp.eq.s32.totalorder %s16, 1
    %p263 = por %p261, %p262
    %p264 = scmp.ne.s32.totalorder %s256, %s259
    %p265 = scmp.eq.s32.totalorder %s16, 0
    %p266 = por %p264, %p265
    %p267 = scmp.ne.s32.totalorder %s256, %s259
    %p268 = scmp.eq.s32.totalorder %s21, 1
    %p269 = por %p267, %p268
    %p270 = scmp.ne.s32.totalorder %s259, %s260
    %p271 = scmp.eq.s32.totalorder %s21, 0
    %p272 = por %p270, %p271
    %p273 = scmp.ne.s32.totalorder %s259, %s260
    %p274 = scmp.eq.s32.totalorder %s22, 1
    %p275 = por %p273, %p274
    %p277 = scmp.ne.s32.totalorder %s260, %s276
    %p278 = scmp.eq.s32.totalorder %s22, 0
    %p279 = por %p277, %p278
    %p280 = scmp.le.s32.totalorder 1, %s16
    %p281 = scmp.lt.s32.totalorder %s16, 3
    %p282 = pnand %p280, %p281
    %p283 = pneg %p282
    // Predicated region
    $region9: #{_lambda_.24} parent=5 // pred_check
      _
    $region10: #{_lambda_.24} parent=5 // pred_check_branch
      %285 = sbr.rel (%p282) target = $region12
    $region11: #{_lambda_.24} parent=5 // pred_region
      %s286 = ssub.s32 %s16, 1
      // Predicated region
      $region13: #{_lambda_.24} parent=11 // pred_check
        %p287 = pneg %p141
      $region14: #{_lambda_.24} parent=11 // pred_check_branch
        %289 = sbr.rel (%p287) target = $region16
      $region15: #{_lambda_.24} parent=11 // pred_region
        _
      $region16: #{_lambda_.24} parent=11 // pred_fallthru
        _
      // Predicated region
      $region17: #{_lambda_.24} parent=11 // pred_check
        %p290 = pneg %p162
      $region18: #{_lambda_.24} parent=11 // pred_check_branch
        %292 = sbr.rel (%p290) target = $region20
      $region19: #{_lambda_.24} parent=11 // pred_region
        _
      $region20: #{_lambda_.24} parent=11 // pred_fallthru
        _
      // Predicated region
      $region21: #{_lambda_.24} parent=11 // pred_check
        %p293 = pneg %p183
      $region22: #{_lambda_.24} parent=11 // pred_check_branch
        %295 = sbr.rel (%p293) target = $region24
      $region23: #{_lambda_.24} parent=11 // pred_region
        _
      $region24: #{_lambda_.24} parent=11 // pred_fallthru
        _
      // Predicated region
      $region25: #{_lambda_.24} parent=11 // pred_check
        %p296 = pneg %p204
      $region26: #{_lambda_.24} parent=11 // pred_check_branch
        %298 = sbr.rel (%p296) target = $region28
      $region27: #{_lambda_.24} parent=11 // pred_region
        _
      $region28: #{_lambda_.24} parent=11 // pred_fallthru
        _
      // Predicated region
      $region29: #{_lambda_.24} parent=11 // pred_check
        %p299 = pneg %p225
      $region30: #{_lambda_.24} parent=11 // pred_check_branch
        %301 = sbr.rel (%p299) target = $region32
      $region31: #{_lambda_.24} parent=11 // pred_region
        _
      $region32: #{_lambda_.24} parent=11 // pred_fallthru
        _
      // Predicated region
      $region33: #{_lambda_.24} parent=11 // pred_check
        %p302 = pneg %p246
      $region34: #{_lambda_.24} parent=11 // pred_check_branch
        %304 = sbr.rel (%p302) target = $region36
      $region35: #{_lambda_.24} parent=11 // pred_region
        _
      $region36: #{_lambda_.24} parent=11 // pred_fallthru
        _
    $region12: #{_lambda_.24} parent=5 // pred_fallthru
      _
    %p305 = scmp.lt.s32.totalorder %s16, 2
    // Predicated region
    $region37: #{_lambda_.24} parent=5 // pred_check
      %p306 = pneg %p305
    $region38: #{_lambda_.24} parent=5 // pred_check_branch
      %308 = sbr.rel (%p306) target = $region40
    $region39: #{_lambda_.24} parent=5 // pred_region
      // Predicated region
      $region41: #{_lambda_.24} parent=39 // pred_check
        %p309 = pneg %p36
      $region42: #{_lambda_.24} parent=39 // pred_check_branch
        %311 = sbr.rel (%p309) target = $region44
      $region43: #{_lambda_.24} parent=39 // pred_region
        %p312 = scmp.lt.s32.totalorder %s16, 1
        %s313 = scalar_select %p312, %s16, 1
        %s314 = smul.addr %s313, 8
        %s315 = smul.addr %s314, 4
        %s316 = scalar_lea.vmem %s0, %s315
      $region44: #{_lambda_.24} parent=39 // pred_fallthru
        _
      // Predicated region
      $region45: #{_lambda_.24} parent=39 // pred_check
        %p317 = pneg %p62
      $region46: #{_lambda_.24} parent=39 // pred_check_branch
        %319 = sbr.rel (%p317) target = $region48
      $region47: #{_lambda_.24} parent=39 // pred_region
        %p320 = scmp.lt.s32.totalorder %s16, 1
        %s321 = scalar_select %p320, %s16, 1
        %s322 = smul.addr %s321, 8
        %s323 = smul.addr %s322, 4
        %s324 = scalar_lea.vmem %s1, %s323
      $region48: #{_lambda_.24} parent=39 // pred_fallthru
        _
      // Predicated region
      $region49: #{_lambda_.24} parent=39 // pred_check
        %p325 = pneg %p88
      $region50: #{_lambda_.24} parent=39 // pred_check_branch
        %327 = sbr.rel (%p325) target = $region52
      $region51: #{_lambda_.24} parent=39 // pred_region
        %p328 = scmp.lt.s32.totalorder %s16, 1
        %s329 = scalar_select %p328, %s16, 1
        %s330 = smul.addr %s329, 8
        %s331 = smul.addr %s330, 4
        %s332 = scalar_lea.vmem %s2, %s331
      $region52: #{_lambda_.24} parent=39 // pred_fallthru
        _
      // Predicated region
      $region53: #{_lambda_.24} parent=39 // pred_check
        %p333 = pneg %p114
      $region54: #{_lambda_.24} parent=39 // pred_check_branch
        %335 = sbr.rel (%p333) target = $region56
      $region55: #{_lambda_.24} parent=39 // pred_region
        %p336 = scmp.lt.s32.totalorder %s16, 1
        %s337 = scalar_select %p336, %s16, 1
        %s338 = smul.addr %s337, 8
        %s339 = smul.addr %s338, 4
        %s340 = scalar_lea.vmem %s3, %s339
      $region56: #{_lambda_.24} parent=39 // pred_fallthru
        _
    $region40: #{_lambda_.24} parent=5 // pred_fallthru
      _
    %p341 = scmp.le.s32.totalorder 1, %s16
    %p342 = scmp.lt.s32.totalorder %s16, 3
    %p343 = pnand %p341, %p342
    %p344 = pneg %p343
    // Predicated region
    $region57: #{_lambda_.24} parent=5 // pred_check
      _
    $region58: #{_lambda_.24} parent=5 // pred_check_branch
      %346 = sbr.rel (%p343) target = $region60
    $region59: #{_lambda_.24} parent=5 // pred_region
      %s347 = ssub.s32 %s16, 1
      %p348 = scmp.lt.s32.totalorder %s21, 1
      %s349 = scalar_select %p348, %s21, 1
      %s350 = smul.addr %s349, 8
      %s351 = smul.addr %s350, 4
      %s352 = scalar_lea.vmem %s0, %s351
      %p353 = pneg %p42
      %p354 = pneg %p39
      %p355 = scmp.lt.s32.totalorder %s21, 1
      %s356 = scalar_select %p355, %s21, 1
      %s357 = smul.addr %s356, 8
      %s358 = smul.addr %s357, 4
      %s359 = scalar_lea.vmem %s1, %s358
      %p360 = pneg %p68
      %p361 = pneg %p65
      %p362 = scmp.lt.s32.totalorder %s21, 1
      %s363 = scalar_select %p362, %s21, 1
      %s364 = smul.addr %s363, 8
      %s365 = smul.addr %s364, 4
      %s366 = scalar_lea.vmem %s2, %s365
      %p367 = pneg %p94
      %p368 = pneg %p91
      %p369 = scmp.lt.s32.totalorder %s21, 1
      %s370 = scalar_select %p369, %s21, 1
      %s371 = smul.addr %s370, 8
      %s372 = smul.addr %s371, 4
      %s373 = scalar_lea.vmem %s3, %s372
      %p374 = pneg %p120
      %p375 = pneg %p117
      %p376 = pneg %p141
      %p377 = pneg %p138
      %p378 = pneg %p162
      %p379 = pneg %p159
      %p380 = pneg %p183
      %p381 = pneg %p180
      %p382 = pneg %p204
      %p383 = pneg %p201
      %p384 = pneg %p225
      %p385 = pneg %p222
      %p386 = pneg %p246
      %p387 = pneg %p243
      %p388 = pneg %p272
      %p389 = pneg %p269
      %p390 = scmp.lt.s32.totalorder %s21, 1
      %s391 = scalar_select %p390, %s21, 1
      %s392 = smul.addr %s391, 8
      %s393 = smul.addr %s392, 4
      %s394 = scalar_lea.vmem %s10, %s393
      %p395 = scmp.lt.s32.totalorder %s21, 1
      %s396 = scalar_select %p395, %s21, 1
      %s397 = smul.addr %s396, 8
      %s398 = smul.addr %s397, 4
      %s399 = scalar_lea.vmem %s0, %s398
      %p400 = scmp.lt.s32.totalorder %s21, 1
      %s401 = scalar_select %p400, %s21, 1
      %s402 = smul.addr %s401, 8
      %s403 = smul.addr %s402, 4
      %s404 = scalar_lea.vmem %s1, %s403
      %p405 = scmp.lt.s32.totalorder %s21, 1
      %s406 = scalar_select %p405, %s21, 1
      %s407 = smul.addr %s406, 8
      %s408 = smul.addr %s407, 4
      %s409 = scalar_lea.vmem %s2, %s408
      %p410 = scmp.lt.s32.totalorder %s21, 1
      %s411 = scalar_select %p410, %s21, 1
      %s412 = smul.addr %s411, 8
      %s413 = smul.addr %s412, 4
      %s414 = scalar_lea.vmem %s3, %s413
      %p415 = scmp.lt.s32.totalorder %s21, 1
      %s416 = scalar_select %p415, %s21, 1
      %s417 = smul.addr %s416, 8
      %s418 = smul.addr %s417, 4
      %s419 = scalar_lea.vmem %s10, %s418
      %v421 = vld [vmem:[%s399] sm:$0xf]
      %v422 = vld [vmem:[%s399 + $0x4] sm:$0xf]
      %v423 = vld [vmem:[%s399 + $0x8] sm:$0xf]
      %v424 = vld [vmem:[%s399 + $0xc] sm:$0xf]
      %v425 = vld [vmem:[%s399 + $0x10] sm:$0xf]
      %v426 = vld [vmem:[%s399 + $0x14] sm:$0xf]
      %v427 = vld [vmem:[%s399 + $0x18] sm:$0xf]
      %v428 = vld [vmem:[%s399 + $0x1c] sm:$0xf]
      %v429 = vld [vmem:[%s4] sm:$0xf]
      %v430 = vld [vmem:[%s4 + $0x4] sm:$0xf]
      %v431 = vld [vmem:[%s4 + $0x8] sm:$0xf]
      %v432 = vld [vmem:[%s4 + $0xc] sm:$0xf]
      %v433 = vld [vmem:[%s4 + $0x10] sm:$0xf]
      %v434 = vld [vmem:[%s4 + $0x14] sm:$0xf]
      %v435 = vld [vmem:[%s4 + $0x18] sm:$0xf]
      %v436 = vld [vmem:[%s4 + $0x1c] sm:$0xf]
      %v437 = vld [vmem:[%s4 + $0x20] sm:$0xf]
      %v438 = vld [vmem:[%s4 + $0x24] sm:$0xf]
      %v439 = vld [vmem:[%s4 + $0x28] sm:$0xf]
      %v440 = vld [vmem:[%s4 + $0x2c] sm:$0xf]
      %v441 = vld [vmem:[%s4 + $0x30] sm:$0xf]
      %v442 = vld [vmem:[%s4 + $0x34] sm:$0xf]
      %v443 = vld [vmem:[%s4 + $0x38] sm:$0xf]
      %v444 = vld [vmem:[%s4 + $0x3c] sm:$0xf]
      %v445 = vld [vmem:[%s404] sm:$0xf]
      %v446 = vld [vmem:[%s404 + $0x4] sm:$0xf]
      %v447 = vld [vmem:[%s404 + $0x8] sm:$0xf]
      %v448 = vld [vmem:[%s404 + $0xc] sm:$0xf]
      %v449 = vld [vmem:[%s404 + $0x10] sm:$0xf]
      %v450 = vld [vmem:[%s404 + $0x14] sm:$0xf]
      %v451 = vld [vmem:[%s404 + $0x18] sm:$0xf]
      %v452 = vld [vmem:[%s404 + $0x1c] sm:$0xf]
      %v453 = vld [vmem:[%s5] sm:$0xf]
      %v454 = vld [vmem:[%s5 + $0x4] sm:$0xf]
      %v455 = vld [vmem:[%s5 + $0x8] sm:$0xf]
      %v456 = vld [vmem:[%s5 + $0xc] sm:$0xf]
      %v457 = vld [vmem:[%s5 + $0x10] sm:$0xf]
      %v458 = vld [vmem:[%s5 + $0x14] sm:$0xf]
      %v459 = vld [vmem:[%s5 + $0x18] sm:$0xf]
      %v460 = vld [vmem:[%s5 + $0x1c] sm:$0xf]
      %v461 = vld [vmem:[%s5 + $0x20] sm:$0xf]
      %v462 = vld [vmem:[%s5 + $0x24] sm:$0xf]
      %v463 = vld [vmem:[%s5 + $0x28] sm:$0xf]
      %v464 = vld [vmem:[%s5 + $0x2c] sm:$0xf]
      %v465 = vld [vmem:[%s5 + $0x30] sm:$0xf]
      %v466 = vld [vmem:[%s5 + $0x34] sm:$0xf]
      %v467 = vld [vmem:[%s5 + $0x38] sm:$0xf]
      %v468 = vld [vmem:[%s5 + $0x3c] sm:$0xf]
      %v477 = vunpack.c.l.b16 %v445
      %v478 = vunpack.c.l.b16 %v446
      %v479 = vunpack.c.l.b16 %v447
      %v480 = vunpack.c.l.b16 %v448
      %v481 = vunpack.c.l.b16 %v449
      %v482 = vunpack.c.l.b16 %v450
      %v483 = vunpack.c.l.b16 %v451
      %v484 = vunpack.c.l.b16 %v452
      %v485 = vpack.c.b16 %v478, %v477
      %v486 = vpack.c.b16 %v480, %v479
      %v487 = vpack.c.b16 %v482, %v481
      %v488 = vpack.c.b16 %v484, %v483
      %v509 = vunpack.c.l.b16 %v453
      %v510 = vunpack.c.l.b16 %v454
      %v511 = vunpack.c.l.b16 %v455
      %v512 = vunpack.c.l.b16 %v456
      %v513 = vunpack.c.l.b16 %v457
      %v514 = vunpack.c.l.b16 %v458
      %v515 = vunpack.c.l.b16 %v459
      %v516 = vunpack.c.l.b16 %v460
      %v517 = vunpack.c.l.b16 %v461
      %v518 = vunpack.c.l.b16 %v462
      %v519 = vunpack.c.l.b16 %v463
      %v520 = vunpack.c.l.b16 %v464
      %v521 = vunpack.c.l.b16 %v465
      %v522 = vunpack.c.l.b16 %v466
      %v523 = vunpack.c.l.b16 %v467
      %v524 = vunpack.c.l.b16 %v468
      %v525 = vpack.c.b16 %v510, %v509
      %v526 = vpack.c.b16 %v512, %v511
      %v527 = vpack.c.b16 %v514, %v513
      %v528 = vpack.c.b16 %v516, %v515
      %v529 = vpack.c.b16 %v518, %v517
      %v530 = vpack.c.b16 %v520, %v519
      %v531 = vpack.c.b16 %v522, %v521
      %v532 = vpack.c.b16 %v524, %v523
      %541 = vmatprep.subr.bf16.mxu0 0
      %542 = vmatpush1.bf16.msra.mxu0 %v532
      %543 = vmatprep.subr.bf16.mxu0 0
      %544 = vmatpush1.bf16.msra.mxu0 %v531
      %545 = vmatprep.subr.bf16.mxu0 0
      %546 = vmatpush1.bf16.msra.mxu0 %v530
      %547 = vmatprep.subr.bf16.mxu0 0
      %548 = vmatpush1.bf16.msra.mxu0 %v529
      %549 = vmatprep.subr.bf16.mxu0 0
      %550 = vmatpush1.bf16.msra.mxu0 %v528
      %551 = vmatprep.subr.bf16.mxu0 0
      %552 = vmatpush1.bf16.msra.mxu0 %v527
      %553 = vmatprep.subr.bf16.mxu0 0
      %554 = vmatpush1.bf16.msra.mxu0 %v526
      %555 = vmatprep.subr.bf16.mxu0 0
      %556 = vmatpush1.bf16.msra.mxu0 %v525
      %557 = vmatprep.subr.bf16.mxu0 0
      %558 = vmatpush2.bf16.msra.mxu0 0
      %559 = vmatprep.subr.bf16.mxu0 0
      %560 = vmatpush2.bf16.msra.mxu0 0
      %561 = vmatprep.subr.bf16.mxu0 0
      %562 = vmatpush2.bf16.msra.mxu0 0
      %563 = vmatprep.subr.bf16.mxu0 0
      %564 = vmatpush2.bf16.msra.mxu0 0
      %565 = vmatprep.subr.bf16.mxu0 0
      %566 = vmatpush2.bf16.msra.mxu0 0
      %567 = vmatprep.subr.bf16.mxu0 0
      %568 = vmatpush2.bf16.msra.mxu0 0
      %569 = vmatprep.subr.bf16.mxu0 0
      %570 = vmatpush2.bf16.msra.mxu0 0
      %571 = vmatprep.subr.bf16.mxu0 0
      %572 = vmatpush2.bf16.msra.mxu0 0
      %573 = vmatprep.mubr.bf16.mxu0 0
      %574 = vmatmul.mubr.bf16.gmra.mxu0 %v485
      %v575 = vpop.f32.mrf.mxu0
      %v576 = vadd.f32 0.0, %v575
      %v577 = vpop.f32.mrf.mxu0
      %v578 = vpop.f32.mrf.mxu0
      %v579 = vadd.f32 0.0, %v578
      %v580 = vpop.f32.mrf.mxu0
      %581 = vmatprep.mubr.bf16.mxu0 0
      %582 = vmatmul.mubr.bf16.gmra.mxu0 %v486
      %v583 = vpop.f32.mrf.mxu0
      %v584 = vadd.f32 0.0, %v583
      %v585 = vpop.f32.mrf.mxu0
      %v586 = vpop.f32.mrf.mxu0
      %v587 = vadd.f32 0.0, %v586
      %v588 = vpop.f32.mrf.mxu0
      %589 = vmatprep.mubr.bf16.mxu0 0
      %590 = vmatmul.mubr.bf16.gmra.mxu0 %v487
      %v591 = vpop.f32.mrf.mxu0
      %v592 = vadd.f32 0.0, %v591
      %v593 = vpop.f32.mrf.mxu0
      %v594 = vpop.f32.mrf.mxu0
      %v595 = vadd.f32 0.0, %v594
      %v596 = vpop.f32.mrf.mxu0
      %597 = vmatprep.mubr.bf16.mxu0 0
      %598 = vmatmul.mubr.bf16.gmra.mxu0 %v488
      %v599 = vpop.f32.mrf.mxu0
      %v600 = vadd.f32 0.0, %v599
      %v601 = vpop.f32.mrf.mxu0
      %v602 = vpop.f32.mrf.mxu0
      %v603 = vadd.f32 0.0, %v602
      %v604 = vpop.f32.mrf.mxu0
      %605 = vdwg.mxu0
      %v614 = vunpack.c.l.b16 %v421
      %v615 = vunpack.c.l.b16 %v422
      %v616 = vunpack.c.l.b16 %v423
      %v617 = vunpack.c.l.b16 %v424
      %v618 = vunpack.c.l.b16 %v425
      %v619 = vunpack.c.l.b16 %v426
      %v620 = vunpack.c.l.b16 %v427
      %v621 = vunpack.c.l.b16 %v428
      %v622 = vpack.c.b16 %v615, %v614
      %v623 = vpack.c.b16 %v617, %v616
      %v624 = vpack.c.b16 %v619, %v618
      %v625 = vpack.c.b16 %v621, %v620
      %v646 = vunpack.c.l.b16 %v429
      %v647 = vunpack.c.l.b16 %v430
      %v648 = vunpack.c.l.b16 %v431
      %v649 = vunpack.c.l.b16 %v432
      %v650 = vunpack.c.l.b16 %v433
      %v651 = vunpack.c.l.b16 %v434
      %v652 = vunpack.c.l.b16 %v435
      %v653 = vunpack.c.l.b16 %v436
      %v654 = vunpack.c.l.b16 %v437
      %v655 = vunpack.c.l.b16 %v438
      %v656 = vunpack.c.l.b16 %v439
      %v657 = vunpack.c.l.b16 %v440
      %v658 = vunpack.c.l.b16 %v441
      %v659 = vunpack.c.l.b16 %v442
      %v660 = vunpack.c.l.b16 %v443
      %v661 = vunpack.c.l.b16 %v444
      %v662 = vpack.c.b16 %v647, %v646
      %v663 = vpack.c.b16 %v649, %v648
      %v664 = vpack.c.b16 %v651, %v650
      %v665 = vpack.c.b16 %v653, %v652
      %v666 = vpack.c.b16 %v655, %v654
      %v667 = vpack.c.b16 %v657, %v656
      %v668 = vpack.c.b16 %v659, %v658
      %v669 = vpack.c.b16 %v661, %v660
      %678 = vmatprep.subr.bf16.mxu0 0
      %679 = vmatpush1.bf16.msra.mxu0 %v669
      %680 = vmatprep.subr.bf16.mxu0 0
      %681 = vmatpush1.bf16.msra.mxu0 %v668
      %682 = vmatprep.subr.bf16.mxu0 0
      %683 = vmatpush1.bf16.msra.mxu0 %v667
      %684 = vmatprep.subr.bf16.mxu0 0
      %685 = vmatpush1.bf16.msra.mxu0 %v666
      %686 = vmatprep.subr.bf16.mxu0 0
      %687 = vmatpush1.bf16.msra.mxu0 %v665
      %688 = vmatprep.subr.bf16.mxu0 0
      %689 = vmatpush1.bf16.msra.mxu0 %v664
      %690 = vmatprep.subr.bf16.mxu0 0
      %691 = vmatpush1.bf16.msra.mxu0 %v663
      %692 = vmatprep.subr.bf16.mxu0 0
      %693 = vmatpush1.bf16.msra.mxu0 %v662
      %694 = vmatprep.subr.bf16.mxu0 0
      %695 = vmatpush2.bf16.msra.mxu0 0
      %696 = vmatprep.subr.bf16.mxu0 0
      %697 = vmatpush2.bf16.msra.mxu0 0
      %698 = vmatprep.subr.bf16.mxu0 0
      %699 = vmatpush2.bf16.msra.mxu0 0
      %700 = vmatprep.subr.bf16.mxu0 0
      %701 = vmatpush2.bf16.msra.mxu0 0
      %702 = vmatprep.subr.bf16.mxu0 0
      %703 = vmatpush2.bf16.msra.mxu0 0
      %704 = vmatprep.subr.bf16.mxu0 0
      %705 = vmatpush2.bf16.msra.mxu0 0
      %706 = vmatprep.subr.bf16.mxu0 0
      %707 = vmatpush2.bf16.msra.mxu0 0
      %708 = vmatprep.subr.bf16.mxu0 0
      %709 = vmatpush2.bf16.msra.mxu0 0
      %710 = vmatprep.mubr.bf16.mxu0 0
      %711 = vmatmul.mubr.bf16.gmra.mxu0 %v622
      %v712 = vpop.f32.mrf.mxu0
      %v713 = vadd.f32 %v576, %v712
      %v714 = vpop.f32.mrf.mxu0
      %v715 = vpop.f32.mrf.mxu0
      %v716 = vadd.f32 %v579, %v715
      %v717 = vpop.f32.mrf.mxu0
      %718 = vmatprep.mubr.bf16.mxu0 0
      %719 = vmatmul.mubr.bf16.gmra.mxu0 %v623
      %v720 = vpop.f32.mrf.mxu0
      %v721 = vadd.f32 %v584, %v720
      %v722 = vpop.f32.mrf.mxu0
      %v723 = vpop.f32.mrf.mxu0
      %v724 = vadd.f32 %v587, %v723
      %v725 = vpop.f32.mrf.mxu0
      %726 = vmatprep.mubr.bf16.mxu0 0
      %727 = vmatmul.mubr.bf16.gmra.mxu0 %v624
      %v728 = vpop.f32.mrf.mxu0
      %v729 = vadd.f32 %v592, %v728
      %v730 = vpop.f32.mrf.mxu0
      %v731 = vpop.f32.mrf.mxu0
      %v732 = vadd.f32 %v595, %v731
      %v733 = vpop.f32.mrf.mxu0
      %734 = vmatprep.mubr.bf16.mxu0 0
      %735 = vmatmul.mubr.bf16.gmra.mxu0 %v625
      %v736 = vpop.f32.mrf.mxu0
      %v737 = vadd.f32 %v600, %v736
      %v738 = vpop.f32.mrf.mxu0
      %v739 = vpop.f32.mrf.mxu0
      %v740 = vadd.f32 %v603, %v739
      %v741 = vpop.f32.mrf.mxu0
      %742 = vdwg.mxu0
      %v743 = vld [vmem:[%s409] sm:$0xf]
      %v744 = vld [vmem:[%s409 + $0x4] sm:$0xf]
      %v745 = vld [vmem:[%s409 + $0x8] sm:$0xf]
      %v746 = vld [vmem:[%s409 + $0xc] sm:$0xf]
      %v747 = vld [vmem:[%s409 + $0x10] sm:$0xf]
      %v748 = vld [vmem:[%s409 + $0x14] sm:$0xf]
      %v749 = vld [vmem:[%s409 + $0x18] sm:$0xf]
      %v750 = vld [vmem:[%s409 + $0x1c] sm:$0xf]
      %v751 = vld [vmem:[%s6] sm:$0xf]
      %v752 = vld [vmem:[%s6 + $0x4] sm:$0xf]
      %v753 = vld [vmem:[%s6 + $0x8] sm:$0xf]
      %v754 = vld [vmem:[%s6 + $0xc] sm:$0xf]
      %v755 = vld [vmem:[%s6 + $0x10] sm:$0xf]
      %v756 = vld [vmem:[%s6 + $0x14] sm:$0xf]
      %v757 = vld [vmem:[%s6 + $0x18] sm:$0xf]
      %v758 = vld [vmem:[%s6 + $0x1c] sm:$0xf]
      %v767 = vunpack.c.l.b16 %v743
      %v768 = vunpack.c.l.b16 %v744
      %v769 = vunpack.c.l.b16 %v745
      %v770 = vunpack.c.l.b16 %v746
      %v771 = vunpack.c.l.b16 %v747
      %v772 = vunpack.c.l.b16 %v748
      %v773 = vunpack.c.l.b16 %v749
      %v774 = vunpack.c.l.b16 %v750
      %v775 = vpack.c.b16 %v768, %v767
      %v776 = vpack.c.b16 %v770, %v769
      %v777 = vpack.c.b16 %v772, %v771
      %v778 = vpack.c.b16 %v774, %v773
      %v787 = vunpack.c.l.b16 %v751
      %v788 = vunpack.c.l.b16 %v752
      %v789 = vunpack.c.l.b16 %v753
      %v790 = vunpack.c.l.b16 %v754
      %v791 = vunpack.c.l.b16 %v755
      %v792 = vunpack.c.l.b16 %v756
      %v793 = vunpack.c.l.b16 %v757
      %v794 = vunpack.c.l.b16 %v758
      %v795 = vpack.c.b16 %v788, %v787
      %v796 = vpack.c.b16 %v790, %v789
      %v797 = vpack.c.b16 %v792, %v791
      %v798 = vpack.c.b16 %v794, %v793
      %vm803 = vcmask 523264
      %v805 = vsel %vm803, %v775, 0
      %v808 = vsel %vm803, %v776, 0
      %v811 = vsel %vm803, %v777, 0
      %v814 = vsel %vm803, %v778, 0
      %816 = vmatprep.subr.bf16.mxu0 0
      %817 = vmatpush1.bf16.msra.mxu0 0
      %818 = vmatprep.subr.bf16.mxu0 0
      %819 = vmatpush1.bf16.msra.mxu0 0
      %820 = vmatprep.subr.bf16.mxu0 0
      %821 = vmatpush1.bf16.msra.mxu0 0
      %822 = vmatprep.subr.bf16.mxu0 0
      %823 = vmatpush1.bf16.msra.mxu0 0
      %824 = vmatprep.subr.bf16.mxu0 0
      %825 = vmatpush1.bf16.msra.mxu0 %v798
      %826 = vmatprep.subr.bf16.mxu0 0
      %827 = vmatpush1.bf16.msra.mxu0 %v797
      %828 = vmatprep.subr.bf16.mxu0 0
      %829 = vmatpush1.bf16.msra.mxu0 %v796
      %830 = vmatprep.subr.bf16.mxu0 0
      %831 = vmatpush1.bf16.msra.mxu0 %v795
      %832 = vmatprep.subr.bf16.mxu0 0
      %833 = vmatpush2.bf16.msra.mxu0 0
      %834 = vmatprep.subr.bf16.mxu0 0
      %835 = vmatpush2.bf16.msra.mxu0 0
      %836 = vmatprep.subr.bf16.mxu0 0
      %837 = vmatpush2.bf16.msra.mxu0 0
      %838 = vmatprep.subr.bf16.mxu0 0
      %839 = vmatpush2.bf16.msra.mxu0 0
      %840 = vmatprep.subr.bf16.mxu0 0
      %841 = vmatpush2.bf16.msra.mxu0 0
      %842 = vmatprep.subr.bf16.mxu0 0
      %843 = vmatpush2.bf16.msra.mxu0 0
      %844 = vmatprep.subr.bf16.mxu0 0
      %845 = vmatpush2.bf16.msra.mxu0 0
      %846 = vmatprep.subr.bf16.mxu0 0
      %847 = vmatpush2.bf16.msra.mxu0 0
      %848 = vmatprep.mubr.bf16.mxu0 0
      %849 = vmatmul.mubr.bf16.gmra.mxu0 %v805
      %v850 = vpop.f32.mrf.mxu0
      %v851 = vadd.f32 0.0, %v850
      %v852 = vpop.f32.mrf.mxu0
      %v853 = vpop.f32.mrf.mxu0
      %v854 = vadd.f32 0.0, %v853
      %v855 = vpop.f32.mrf.mxu0
      %856 = vmatprep.mubr.bf16.mxu0 0
      %857 = vmatmul.mubr.bf16.gmra.mxu0 %v808
      %v858 = vpop.f32.mrf.mxu0
      %v859 = vadd.f32 0.0, %v858
      %v860 = vpop.f32.mrf.mxu0
      %v861 = vpop.f32.mrf.mxu0
      %v862 = vadd.f32 0.0, %v861
      %v863 = vpop.f32.mrf.mxu0
      %864 = vmatprep.mubr.bf16.mxu0 0
      %865 = vmatmul.mubr.bf16.gmra.mxu0 %v811
      %v866 = vpop.f32.mrf.mxu0
      %v867 = vadd.f32 0.0, %v866
      %v868 = vpop.f32.mrf.mxu0
      %v869 = vpop.f32.mrf.mxu0
      %v870 = vadd.f32 0.0, %v869
      %v871 = vpop.f32.mrf.mxu0
      %872 = vmatprep.mubr.bf16.mxu0 0
      %873 = vmatmul.mubr.bf16.gmra.mxu0 %v814
      %v874 = vpop.f32.mrf.mxu0
      %v875 = vadd.f32 0.0, %v874
      %v876 = vpop.f32.mrf.mxu0
      %v877 = vpop.f32.mrf.mxu0
      %v878 = vadd.f32 0.0, %v877
      %v879 = vpop.f32.mrf.mxu0
      %880 = vdwg.mxu0
      %v881 = vadd.f32 %v713, %v851
      %v882 = vadd.f32 %v716, %v854
      %v883 = vadd.f32 %v721, %v859
      %v884 = vadd.f32 %v724, %v862
      %v885 = vadd.f32 %v729, %v867
      %v886 = vadd.f32 %v732, %v870
      %v887 = vadd.f32 %v737, %v875
      %v888 = vadd.f32 %v740, %v878
      %v889 = vld [vmem:[%s414] sm:$0xf]
      %v890 = vld [vmem:[%s414 + $0x4] sm:$0xf]
      %v891 = vld [vmem:[%s414 + $0x8] sm:$0xf]
      %v892 = vld [vmem:[%s414 + $0xc] sm:$0xf]
      %v893 = vld [vmem:[%s414 + $0x10] sm:$0xf]
      %v894 = vld [vmem:[%s414 + $0x14] sm:$0xf]
      %v895 = vld [vmem:[%s414 + $0x18] sm:$0xf]
      %v896 = vld [vmem:[%s414 + $0x1c] sm:$0xf]
      %v897 = vld [vmem:[%s7] sm:$0xf]
      %v898 = vld [vmem:[%s7 + $0x4] sm:$0xf]
      %v899 = vld [vmem:[%s7 + $0x8] sm:$0xf]
      %v900 = vld [vmem:[%s7 + $0xc] sm:$0xf]
      %v901 = vld [vmem:[%s7 + $0x10] sm:$0xf]
      %v902 = vld [vmem:[%s7 + $0x14] sm:$0xf]
      %v903 = vld [vmem:[%s7 + $0x18] sm:$0xf]
      %v904 = vld [vmem:[%s7 + $0x1c] sm:$0xf]
      %v905 = vld [vmem:[%s7 + $0x20] sm:$0xf]
      %v906 = vld [vmem:[%s7 + $0x24] sm:$0xf]
      %v907 = vld [vmem:[%s7 + $0x28] sm:$0xf]
      %v908 = vld [vmem:[%s7 + $0x2c] sm:$0xf]
      %v909 = vld [vmem:[%s7 + $0x30] sm:$0xf]
      %v910 = vld [vmem:[%s7 + $0x34] sm:$0xf]
      %v911 = vld [vmem:[%s7 + $0x38] sm:$0xf]
      %v912 = vld [vmem:[%s7 + $0x3c] sm:$0xf]
      %v921 = vunpack.c.l.b16 %v889
      %v922 = vunpack.c.l.b16 %v890
      %v923 = vunpack.c.l.b16 %v891
      %v924 = vunpack.c.l.b16 %v892
      %v925 = vunpack.c.l.b16 %v893
      %v926 = vunpack.c.l.b16 %v894
      %v927 = vunpack.c.l.b16 %v895
      %v928 = vunpack.c.l.b16 %v896
      %v929 = vpack.c.b16 %v922, %v921
      %v930 = vpack.c.b16 %v924, %v923
      %v931 = vpack.c.b16 %v926, %v925
      %v932 = vpack.c.b16 %v928, %v927
      %v953 = vunpack.c.l.b16 %v897
      %v954 = vunpack.c.l.b16 %v898
      %v955 = vunpack.c.l.b16 %v899
      %v956 = vunpack.c.l.b16 %v900
      %v957 = vunpack.c.l.b16 %v901
      %v958 = vunpack.c.l.b16 %v902
      %v959 = vunpack.c.l.b16 %v903
      %v960 = vunpack.c.l.b16 %v904
      %v961 = vunpack.c.l.b16 %v905
      %v962 = vunpack.c.l.b16 %v906
      %v963 = vunpack.c.l.b16 %v907
      %v964 = vunpack.c.l.b16 %v908
      %v965 = vunpack.c.l.b16 %v909
      %v966 = vunpack.c.l.b16 %v910
      %v967 = vunpack.c.l.b16 %v911
      %v968 = vunpack.c.l.b16 %v912
      %v969 = vpack.c.b16 %v954, %v953
      %v970 = vpack.c.b16 %v956, %v955
      %v971 = vpack.c.b16 %v958, %v957
      %v972 = vpack.c.b16 %v960, %v959
      %v973 = vpack.c.b16 %v962, %v961
      %v974 = vpack.c.b16 %v964, %v963
      %v975 = vpack.c.b16 %v966, %v965
      %v976 = vpack.c.b16 %v968, %v967
      %985 = vmatprep.subr.bf16.mxu0 0
      %986 = vmatpush1.bf16.msra.mxu0 %v976
      %987 = vmatprep.subr.bf16.mxu0 0
      %988 = vmatpush1.bf16.msra.mxu0 %v975
      %989 = vmatprep.subr.bf16.mxu0 0
      %990 = vmatpush1.bf16.msra.mxu0 %v974
      %991 = vmatprep.subr.bf16.mxu0 0
      %992 = vmatpush1.bf16.msra.mxu0 %v973
      %993 = vmatprep.subr.bf16.mxu0 0
      %994 = vmatpush1.bf16.msra.mxu0 %v972
      %995 = vmatprep.subr.bf16.mxu0 0
      %996 = vmatpush1.bf16.msra.mxu0 %v971
      %997 = vmatprep.subr.bf16.mxu0 0
      %998 = vmatpush1.bf16.msra.mxu0 %v970
      %999 = vmatprep.subr.bf16.mxu0 0
      %1000 = vmatpush1.bf16.msra.mxu0 %v969
      %1001 = vmatprep.subr.bf16.mxu0 0
      %1002 = vmatpush2.bf16.msra.mxu0 0
      %1003 = vmatprep.subr.bf16.mxu0 0
      %1004 = vmatpush2.bf16.msra.mxu0 0
      %1005 = vmatprep.subr.bf16.mxu0 0
      %1006 = vmatpush2.bf16.msra.mxu0 0
      %1007 = vmatprep.subr.bf16.mxu0 0
      %1008 = vmatpush2.bf16.msra.mxu0 0
      %1009 = vmatprep.subr.bf16.mxu0 0
      %1010 = vmatpush2.bf16.msra.mxu0 0
      %1011 = vmatprep.subr.bf16.mxu0 0
      %1012 = vmatpush2.bf16.msra.mxu0 0
      %1013 = vmatprep.subr.bf16.mxu0 0
      %1014 = vmatpush2.bf16.msra.mxu0 0
      %1015 = vmatprep.subr.bf16.mxu0 0
      %1016 = vmatpush2.bf16.msra.mxu0 0
      %1017 = vmatprep.mubr.bf16.mxu0 0
      %1018 = vmatmul.mubr.bf16.gmra.mxu0 %v929
      %v1019 = vpop.f32.mrf.mxu0
      %v1020 = vadd.f32 0.0, %v1019
      %v1021 = vpop.f32.mrf.mxu0
      %v1022 = vpop.f32.mrf.mxu0
      %v1023 = vadd.f32 0.0, %v1022
      %v1024 = vpop.f32.mrf.mxu0
      %1025 = vmatprep.mubr.bf16.mxu0 0
      %1026 = vmatmul.mubr.bf16.gmra.mxu0 %v930
      %v1027 = vpop.f32.mrf.mxu0
      %v1028 = vadd.f32 0.0, %v1027
      %v1029 = vpop.f32.mrf.mxu0
      %v1030 = vpop.f32.mrf.mxu0
      %v1031 = vadd.f32 0.0, %v1030
      %v1032 = vpop.f32.mrf.mxu0
      %1033 = vmatprep.mubr.bf16.mxu0 0
      %1034 = vmatmul.mubr.bf16.gmra.mxu0 %v931
      %v1035 = vpop.f32.mrf.mxu0
      %v1036 = vadd.f32 0.0, %v1035
      %v1037 = vpop.f32.mrf.mxu0
      %v1038 = vpop.f32.mrf.mxu0
      %v1039 = vadd.f32 0.0, %v1038
      %v1040 = vpop.f32.mrf.mxu0
      %1041 = vmatprep.mubr.bf16.mxu0 0
      %1042 = vmatmul.mubr.bf16.gmra.mxu0 %v932
      %v1043 = vpop.f32.mrf.mxu0
      %v1044 = vadd.f32 0.0, %v1043
      %v1045 = vpop.f32.mrf.mxu0
      %v1046 = vpop.f32.mrf.mxu0
      %v1047 = vadd.f32 0.0, %v1046
      %v1048 = vpop.f32.mrf.mxu0
      %1049 = vdwg.mxu0
      %v1050 = vadd.f32 %v881, %v1020
      %v1051 = vadd.f32 %v882, %v1023
      %v1052 = vadd.f32 %v883, %v1028
      %v1053 = vadd.f32 %v884, %v1031
      %v1054 = vadd.f32 %v885, %v1036
      %v1055 = vadd.f32 %v886, %v1039
      %v1056 = vadd.f32 %v887, %v1044
      %v1057 = vadd.f32 %v888, %v1047
      %v1058 = vld [vmem:[%s8] sm:$0x1]
      %v1060 = vlaneseq
      %v1061 = vshrl.u32 %v1060, 7
      %v1062 = vsub.s32 0, %v1061
      %v1063 = vrot.slane %v1058, %v1062
      %v1065 = vmul.f32 %v1050, %v1063
      %v1066 = vmul.f32 %v1051, %v1063
      %v1067 = vmul.f32 %v1052, %v1063
      %v1068 = vmul.f32 %v1053, %v1063
      %v1069 = vmul.f32 %v1054, %v1063
      %v1070 = vmul.f32 %v1055, %v1063
      %v1071 = vmul.f32 %v1056, %v1063
      %v1072 = vmul.f32 %v1057, %v1063
      %v1073 = vld [vmem:[%s9] sm:$0x1]
      %v1075 = vlaneseq
      %v1076 = vshrl.u32 %v1075, 7
      %v1077 = vsub.s32 0, %v1076
      %v1078 = vrot.slane %v1073, %v1077
      %v1080 = vadd.f32 %v1065, %v1078
      %v1081 = vadd.f32 %v1066, %v1078
      %v1082 = vadd.f32 %v1067, %v1078
      %v1083 = vadd.f32 %v1068, %v1078
      %v1084 = vadd.f32 %v1069, %v1078
      %v1085 = vadd.f32 %v1070, %v1078
      %v1086 = vadd.f32 %v1071, %v1078
      %v1087 = vadd.f32 %v1072, %v1078
      %v1088 = vmax.f32 %v1080, 0.0
      %v1089 = vmax.f32 %v1081, 0.0
      %v1090 = vmax.f32 %v1082, 0.0
      %v1091 = vmax.f32 %v1083, 0.0
      %v1092 = vmax.f32 %v1084, 0.0
      %v1093 = vmax.f32 %v1085, 0.0
      %v1094 = vmax.f32 %v1086, 0.0
      %v1095 = vmax.f32 %v1087, 0.0
      %v1096 = vpack.c.bf16 %v1089, %v1088
      %v1097 = vpack.c.bf16 %v1091, %v1090
      %v1098 = vpack.c.bf16 %v1093, %v1092
      %v1099 = vpack.c.bf16 %v1095, %v1094
      %v1104 = vunpack.c.l.b16 %v1096
      %v1105 = vunpack.c.h.b16 %v1096
      %v1106 = vunpack.c.l.b16 %v1097
      %v1107 = vunpack.c.h.b16 %v1097
      %v1108 = vunpack.c.l.b16 %v1098
      %v1109 = vunpack.c.h.b16 %v1098
      %v1110 = vunpack.c.l.b16 %v1099
      %v1111 = vunpack.c.h.b16 %v1099
      %v1112 = vpack.c.b16 %v1104, %v1104
      %v1113 = vpack.c.b16 %v1105, %v1105
      %v1114 = vpack.c.b16 %v1106, %v1106
      %v1115 = vpack.c.b16 %v1107, %v1107
      %v1116 = vpack.c.b16 %v1108, %v1108
      %v1117 = vpack.c.b16 %v1109, %v1109
      %v1118 = vpack.c.b16 %v1110, %v1110
      %v1119 = vpack.c.b16 %v1111, %v1111
      %1128 = vst [vmem:[%s419] sm:$0xf] %v1112
      %1129 = vst [vmem:[%s419 + $0x4] sm:$0xf] %v1113
      %1130 = vst [vmem:[%s419 + $0x8] sm:$0xf] %v1114
      %1131 = vst [vmem:[%s419 + $0xc] sm:$0xf] %v1115
      %1132 = vst [vmem:[%s419 + $0x10] sm:$0xf] %v1116
      %1133 = vst [vmem:[%s419 + $0x14] sm:$0xf] %v1117
      %1134 = vst [vmem:[%s419 + $0x18] sm:$0xf] %v1118
      %1135 = vst [vmem:[%s419 + $0x1c] sm:$0xf] %v1119
      %p1136 = scmp.lt.s32.totalorder %s21, 1
      %s1137 = scalar_select %p1136, %s21, 1
      %s1138 = smul.addr %s1137, 8
      %s1139 = smul.addr %s1138, 4
      %s1140 = scalar_lea.vmem %s10, %s1139
      // Predicated region
      $region61: #{_lambda_.24} parent=59 // pred_check
        %p1141 = pneg %p269
      $region62: #{_lambda_.24} parent=59 // pred_check_branch
        %1143 = sbr.rel (%p1141) target = $region64
      $region63: #{_lambda_.24} parent=59 // pred_region
        _
      $region64: #{_lambda_.24} parent=59 // pred_fallthru
        _
    $region60: #{_lambda_.24} parent=5 // pred_fallthru
      _
    %p1144 = scmp.le.s32.totalorder 2, %s16
    // Predicated region
    $region65: #{_lambda_.24} parent=5 // pred_check
      %p1145 = pneg %p1144
    $region66: #{_lambda_.24} parent=5 // pred_check_branch
      %1147 = sbr.rel (%p1145) target = $region68
    $region67: #{_lambda_.24} parent=5 // pred_region
      %s1148 = ssub.s32 %s16, 2
      // Predicated region
      $region69: #{_lambda_.24} parent=67 // pred_check
        %p1149 = pneg %p275
      $region70: #{_lambda_.24} parent=67 // pred_check_branch
        %1151 = sbr.rel (%p1149) target = $region72
      $region71: #{_lambda_.24} parent=67 // pred_region
        %p1152 = scmp.lt.s32.totalorder %s22, 1
        %s1153 = scalar_select %p1152, %s22, 1
        %s1154 = smul.addr %s1153, 8
        %s1155 = smul.addr %s1154, 4
        %s1156 = scalar_lea.vmem %s10, %s1155
      $region72: #{_lambda_.24} parent=67 // pred_fallthru
        _
    $region68: #{_lambda_.24} parent=5 // pred_fallthru
      _
  $region6: #{_lambda_.24} parent=0 // loop_footer
    %s20 = sadd.s32 1, %s16
  $region7: #{_lambda_.24} parent=0 // loop_footer_branch
    %15 = sbr.rel target = $region3
  $region8: #{_lambda_.24} parent=0 // loop_exit
    _

</llo_original>
